<compile_context>
chip_gen: v5e
topology: v5e:2x2
jax: 0.10.0
libtpu: 0.0.40
codegen_flags: <defaults>
</compile_context>

<pallas_src>
import functools

import jax
import jax.numpy as jnp
from jax.experimental import pallas as pl
from jax.experimental.pallas import tpu as pltpu


_VMEM_LIMIT_BYTES = 48 * 1024 * 1024   # re-derive per generation for large N (v7x: <64 MiB)


# ----------------------------------------------------------------------------
# helpers
# ----------------------------------------------------------------------------

def _pad_axis(a, axis, mult):
    """Zero-pad `axis` of `a` up to a multiple of `mult` (static shapes only)."""
    pad = (-a.shape[axis]) % mult
    if pad:
        widths = [(0, 0)] * a.ndim
        widths[axis] = (0, pad)
        a = jnp.pad(a, widths)
    return a


def _affine_relu(h, a_ref):
    """relu(h * scale + shift); a_ref holds [scale; shift] stacked on the sublane axis."""
    return jnp.maximum(h * a_ref[0:1, :] + a_ref[1:2, :], 0.0)


# ----------------------------------------------------------------------------
# Kernel 1: STN3d conv stack + max-pool over points
# ----------------------------------------------------------------------------

def _stn3_kernel(x_ref, w1_ref, a1_ref, w2_ref, a2_ref, w3_ref, a3_ref, pool_ref):
    h = jnp.dot(x_ref[0], w1_ref[...], preferred_element_type=jnp.float32)
    h = _affine_relu(h, a1_ref)
    h = jnp.dot(h.astype(jnp.bfloat16), w2_ref[...], preferred_element_type=jnp.float32)
    h = _affine_relu(h, a2_ref)
    h = jnp.dot(h.astype(jnp.bfloat16), w3_ref[...], preferred_element_type=jnp.float32)
    h = _affine_relu(h, a3_ref)
    pool_ref[0] = jnp.max(h, axis=0, keepdims=True)             # max over points


def stn_conv_pool(x, p):
    """x: (B, N, Cpad) bf16 -> pooled (B, 256) f32, fused conv stack + max-pool."""
    B, N, Cin = x.shape
    F3 = p["w3"].shape[1]
    const = lambda b: (0, 0)
    bspec = lambda arr: pl.BlockSpec(arr.shape, const)
    operands = [
        (x, pl.BlockSpec((1, N, Cin), lambda b: (b, 0, 0))),
        (p["w1"], bspec(p["w1"])), (p["a1"], bspec(p["a1"])),
        (p["w2"], bspec(p["w2"])), (p["a2"], bspec(p["a2"])),
        (p["w3"], bspec(p["w3"])), (p["a3"], bspec(p["a3"])),
    ]
    arrays, in_specs = zip(*operands)
    pooled = pl.pallas_call(
        _stn3_kernel,
        out_shape=jax.ShapeDtypeStruct((B, 1, F3), jnp.float32),
        grid=(B,),
        in_specs=list(in_specs),
        out_specs=pl.BlockSpec((1, 1, F3), lambda b: (b, 0, 0)),
        compiler_params=pltpu.CompilerParams(
            dimension_semantics=("parallel",),
            vmem_limit_bytes=_VMEM_LIMIT_BYTES),
    )(*arrays)
    return pooled[:, 0, :]


# ----------------------------------------------------------------------------
# Kernel 2 (fused): encoder + feature-STN (conv + FC + fold) + seg head + log_softmax
# ----------------------------------------------------------------------------

def _pointnet_fused_kernel(
        x_ref, w1b_ref, a1_ref,                               # encoder conv1 (per-batch weight)
        fw1_ref, fa1_ref, fw2_ref, fa2_ref, fw3_ref, fa3_ref,  # feature-STN conv stack
        g1w_ref, ga1_ref, g2w_ref, ga2_ref, g3w_ref,           # feature-STN FC head
        mask_ref, rw_ref, c0_ref,                              # reshape-free fold helpers
        a2_ref, w3_ref, a3_ref,                                # encoder conv2 affine, conv3
        wg_ref, sa1_ref,                                       # seg conv1 global part + affine
        sw2_ref, sa2_ref, sw3_ref, sa3_ref, sw4_ref, b4_ref,   # seg conv2..conv4
        o_ref):
    # --- encoder conv1 (3x3 input transform already folded into w1b) ---------
    h1 = jnp.dot(x_ref[0], w1b_ref[0], preferred_element_type=jnp.float32)
    h1 = _affine_relu(h1, a1_ref).astype(jnp.bfloat16)          # (N, 64) stays in VMEM

    # --- feature-STN conv stack + max-pool over points ------------------------
    f = jnp.dot(h1, fw1_ref[...], preferred_element_type=jnp.float32)
    f = _affine_relu(f, fa1_ref)
    f = jnp.dot(f.astype(jnp.bfloat16), fw2_ref[...], preferred_element_type=jnp.float32)
    f = _affine_relu(f, fa2_ref)
    f = jnp.dot(f.astype(jnp.bfloat16), fw3_ref[...], preferred_element_type=jnp.float32)
    f = _affine_relu(f, fa3_ref)
    gf = jnp.max(f, axis=0, keepdims=True)                      # (1, 256)

    # --- feature-STN FC head (runs on the pooled vector only) -----------------
    u = jnp.dot(gf.astype(jnp.bfloat16), g1w_ref[...], preferred_element_type=jnp.float32)
    u = _affine_relu(u, ga1_ref)
    u = jnp.dot(u.astype(jnp.bfloat16), g2w_ref[...], preferred_element_type=jnp.float32)
    u = _affine_relu(u, ga2_ref)
    v = jnp.dot(u.astype(jnp.bfloat16), g3w_ref[...], preferred_element_type=jnp.float32)  # (1, 4096)

    # --- fold the 64x64 feature transform into [conv2 || seg-conv1-point] -----
    # wcatb = reshape(v,(64,64)) @ wcat + C0, written reshape-free as
    #         (broadcast(v) * blockdiag_mask) @ tile(wcat,(64,1)) + C0.
    vb = jnp.broadcast_to(v.astype(jnp.bfloat16), mask_ref.shape) * mask_ref[...]
    wcatb = jnp.dot(vb, rw_ref[...], preferred_element_type=jnp.float32) + c0_ref[...]
    wcatb = wcatb.astype(jnp.bfloat16)                           # (64, 256)

    # --- transformed point features: conv2 part || seg-conv1 point part -------
    hcat = jnp.dot(h1, wcatb, preferred_element_type=jnp.float32)   # (N, 256), merged matmul
    c2 = a2_ref.shape[1]
    h2 = _affine_relu(hcat[:, :c2], a2_ref)                      # encoder conv2 epilogue
    s1p = hcat[:, c2:]                                           # seg conv1 point-part (linear)

    # --- encoder conv3 + global max-pool ---------------------------------------
    h3 = jnp.dot(h2.astype(jnp.bfloat16), w3_ref[...], preferred_element_type=jnp.float32)
    h3 = _affine_relu(h3, a3_ref)                                # (N, 96)
    g = jnp.max(h3, axis=0, keepdims=True)                       # (1, 96) global feature

    # --- seg head: conv1 global part collapses to a per-batch bias ------------
    gb = jnp.dot(g.astype(jnp.bfloat16), wg_ref[...], preferred_element_type=jnp.float32)
    s1 = _affine_relu(s1p + gb, sa1_ref)
    s2 = jnp.dot(s1.astype(jnp.bfloat16), sw2_ref[...], preferred_element_type=jnp.float32)
    s2 = _affine_relu(s2, sa2_ref)
    s3 = jnp.dot(s2.astype(jnp.bfloat16), sw3_ref[...], preferred_element_type=jnp.float32)
    s3 = _affine_relu(s3, sa3_ref)
    logits = jnp.dot(s3.astype(jnp.bfloat16), sw4_ref[...], preferred_element_type=jnp.float32)
    logits = logits + b4_ref[...]

    # --- fused, numerically-stable log_softmax over the class dim -------------
    m = jnp.max(logits, axis=-1, keepdims=True)
    lse = jnp.log(jnp.sum(jnp.exp(logits - m), axis=-1, keepdims=True))
    o_ref[0] = logits - m - lse


def pointnet_fused(x, w1b, pp, num_class):
    """x (B,N,Cpad) bf16, w1b (B,Cpad,64) bf16 -> (B, N, num_class) f32 log-probs."""
    B, N, Cin = x.shape
    enc, fstn, seg = pp["enc"], pp["fstn"], pp["seg"]
    K = num_class
    const = lambda b: (0, 0)
    bspec = lambda arr: pl.BlockSpec(arr.shape, const)
    operands = [
        (x,            pl.BlockSpec((1, N, Cin), lambda b: (b, 0, 0))),
        (w1b,          pl.BlockSpec((1, Cin, w1b.shape[2]), lambda b: (b, 0, 0))),
        (enc["a1"],    bspec(enc["a1"])),
        (fstn["w1"],   bspec(fstn["w1"])),  (fstn["a1"], bspec(fstn["a1"])),
        (fstn["w2"],   bspec(fstn["w2"])),  (fstn["a2"], bspec(fstn["a2"])),
        (fstn["w3"],   bspec(fstn["w3"])),  (fstn["a3"], bspec(fstn["a3"])),
        (fstn["g1w"],  bspec(fstn["g1w"])), (fstn["ga1"], bspec(fstn["ga1"])),
        (fstn["g2w"],  bspec(fstn["g2w"])), (fstn["ga2"], bspec(fstn["ga2"])),
        (fstn["g3w"],  bspec(fstn["g3w"])),
        (fstn["mask"], bspec(fstn["mask"])),
        (fstn["rw"],   bspec(fstn["rw"])),
        (fstn["c0"],   bspec(fstn["c0"])),
        (enc["a2"],    bspec(enc["a2"])),
        (enc["w3"],    bspec(enc["w3"])),   (enc["a3"], bspec(enc["a3"])),
        (seg["wg"],    bspec(seg["wg"])),   (seg["a1"], bspec(seg["a1"])),
        (seg["w2"],    bspec(seg["w2"])),   (seg["a2"], bspec(seg["a2"])),
        (seg["w3"],    bspec(seg["w3"])),   (seg["a3"], bspec(seg["a3"])),
        (seg["w4"],    bspec(seg["w4"])),   (seg["b4"], bspec(seg["b4"])),
    ]
    arrays, in_specs = zip(*operands)
    return pl.pallas_call(
        _pointnet_fused_kernel,
        out_shape=jax.ShapeDtypeStruct((B, N, K), jnp.float32),
        grid=(B,),
        in_specs=list(in_specs),
        out_specs=pl.BlockSpec((1, N, K), lambda b: (b, 0, 0)),
        compiler_params=pltpu.CompilerParams(
            dimension_semantics=("parallel",),
            vmem_limit_bytes=_VMEM_LIMIT_BYTES),
    )(*arrays)


# ----------------------------------------------------------------------------
# Tiny STN3d FC head (B,256)->(B,3,3): plain XLA (far below kernel-launch cost)
# ----------------------------------------------------------------------------

def _dense(x, w, a):
    return jnp.maximum(jnp.dot(x, w) * a[0] + a[1], 0.0)


def stn_fc(pooled, p, k):
    g = _dense(pooled, p["fc1_w"], p["fa1"])
    g = _dense(g, p["fc2_w"], p["fa2"])
    out = jnp.dot(g, p["fc3_w"]) + p["fc3_b"] + jnp.eye(k, dtype=jnp.float32).reshape(1, k * k)
    return out.reshape(-1, k, k)


# ----------------------------------------------------------------------------
# Deterministic synthetic parameters + one-time preparation (BN fold, splits, casts)
# ----------------------------------------------------------------------------

class KeyGen:
    def __init__(self, seed):
        self._key = jax.random.PRNGKey(seed)

    def __call__(self):
        self._key, k = jax.random.split(self._key)
        return k


def conv_params(kg, cin, cout):
    return {"w": 0.1 * jax.random.normal(kg(), (cin, cout), jnp.float32),
            "b": 0.1 * jax.random.normal(kg(), (cout,), jnp.float32)}


def bn_params(kg, c):
    return {"gamma": 1.0 + 0.1 * jax.random.normal(kg(), (c,), jnp.float32),
            "beta": 0.1 * jax.random.normal(kg(), (c,), jnp.float32),
            "mean": 0.1 * jax.random.normal(kg(), (c,), jnp.float32),
            "var": 1.0 + 0.1 * jnp.abs(jax.random.normal(kg(), (c,), jnp.float32))}


def make_raw_params(seed, channel, num_class):
    kg = KeyGen(seed)

    def stn(cin, k):
        return {"c1": conv_params(kg, cin, 64), "bn1": bn_params(kg, 64),
                "c2": conv_params(kg, 64, 128), "bn2": bn_params(kg, 128),
                "c3": conv_params(kg, 128, 256), "bn3": bn_params(kg, 256),
                "fc1": conv_params(kg, 256, 128), "bn4": bn_params(kg, 128),
                "fc2": conv_params(kg, 128, 64), "bn5": bn_params(kg, 64),
                "fc3": conv_params(kg, 64, k * k)}

    return {"stn": stn(channel, 3), "fstn": stn(64, 64),
            "e_c1": conv_params(kg, channel, 64), "e_bn1": bn_params(kg, 64),
            "e_c2": conv_params(kg, 64, 128), "e_bn2": bn_params(kg, 128),
            "e_c3": conv_params(kg, 128, 96), "e_bn3": bn_params(kg, 96),
            "s_c1": conv_params(kg, 160, 128), "s_bn1": bn_params(kg, 128),
            "s_c2": conv_params(kg, 128, 100), "s_bn2": bn_params(kg, 100),
            "s_c3": conv_params(kg, 100, 64), "s_bn3": bn_params(kg, 64),
            "s_c4": conv_params(kg, 64, num_class)}


def bn_fold(bn, bias, eps=1e-5):
    """Fold eval-mode BN (and the preceding conv bias) into a stacked [scale; shift]."""
    scale = bn["gamma"] / jnp.sqrt(bn["var"] + eps)
    shift = bn["beta"] - bn["mean"] * scale + bias * scale
    return jnp.stack([scale, shift], axis=0)                    # (2, C)


def prepare_params(raw):
    """One-time prep: BN folding, bf16 casts, weight splits/merges and lane padding.
    Only arrays in the returned pytree (it is passed through jax.jit)."""
    bf16 = jnp.bfloat16

    def fold(conv, bn):
        return bn_fold(bn, conv["b"])

    # --- STN3d (kernel 1 conv stack + XLA FC head) ----------------------------
    s = raw["stn"]
    stn = {"w1": _pad_axis(s["c1"]["w"], 0, 8).astype(bf16), "a1": fold(s["c1"], s["bn1"]),
           "w2": s["c2"]["w"].astype(bf16), "a2": fold(s["c2"], s["bn2"]),
           "w3": s["c3"]["w"].astype(bf16), "a3": fold(s["c3"], s["bn3"]),
           "fc1_w": s["fc1"]["w"], "fa1": fold(s["fc1"], s["bn4"]),
           "fc2_w": s["fc2"]["w"], "fa2": fold(s["fc2"], s["bn5"]),
           "fc3_w": s["fc3"]["w"], "fc3_b": s["fc3"]["b"].reshape(1, -1)}

    # --- seg conv1 split + merged [encoder-conv2 || seg-conv1-point] weight ---
    s1w = raw["s_c1"]["w"]                                       # (160, 128)
    wg, wp = s1w[:96], s1w[96:]                                  # global rows / point rows
    wcat = jnp.concatenate([raw["e_c2"]["w"], wp], axis=1)       # (64, 256)

    # --- feature STN: conv stack + FC head + reshape-free fold helpers --------
    f = raw["fstn"]
    kk = 64
    lane = jnp.arange(kk * kk)[None, :] // kk
    row = jnp.arange(kk)[:, None]
    fstn = {"w1": f["c1"]["w"].astype(bf16), "a1": fold(f["c1"], f["bn1"]),
            "w2": f["c2"]["w"].astype(bf16), "a2": fold(f["c2"], f["bn2"]),
            "w3": f["c3"]["w"].astype(bf16), "a3": fold(f["c3"], f["bn3"]),
            "g1w": f["fc1"]["w"].astype(bf16), "ga1": fold(f["fc1"], f["bn4"]),
            "g2w": f["fc2"]["w"].astype(bf16), "ga2": fold(f["fc2"], f["bn5"]),
            "g3w": f["fc3"]["w"].astype(bf16),                                  # (64, 4096)
            # wcatb = reshape(v,(64,64)) @ wcat + C0  ==  (bcast(v)*mask) @ tile(wcat) + C0
            "mask": (lane == row).astype(bf16),                                 # (64, 4096)
            "rw": jnp.tile(wcat, (kk, 1)).astype(bf16),                         # (4096, 256)
            "c0": (f["fc3"]["b"].reshape(kk, kk)
                   + jnp.eye(kk, dtype=jnp.float32)) @ wcat}                    # (64, 256)

    # --- encoder ---------------------------------------------------------------
    enc = {"w1": _pad_axis(raw["e_c1"]["w"], 0, 8),              # f32; folded per batch w/ trans
           "a1": fold(raw["e_c1"], raw["e_bn1"]),
           "a2": fold(raw["e_c2"], raw["e_bn2"]),
           "w3": raw["e_c3"]["w"].astype(bf16),
           "a3": fold(raw["e_c3"], raw["e_bn3"])}

    # --- seg head: pad the 100-wide hidden layer to 128 lanes (exact math) -----
    a2_100 = fold(raw["s_c2"], raw["s_bn2"])                     # (2, 100)
    pad = (-raw["s_c2"]["w"].shape[1]) % 128
    seg = {"wg": wg.astype(bf16),
           "a1": fold(raw["s_c1"], raw["s_bn1"]),
           "w2": jnp.pad(raw["s_c2"]["w"], ((0, 0), (0, pad))).astype(bf16),
           "a2": jnp.pad(a2_100, ((0, 0), (0, pad))),
           "w3": jnp.pad(raw["s_c3"]["w"], ((0, pad), (0, 0))).astype(bf16),
           "a3": fold(raw["s_c3"], raw["s_bn3"]),
           "w4": raw["s_c4"]["w"].astype(bf16),
           "b4": raw["s_c4"]["b"].reshape(1, -1)}

    return {"stn": stn, "fstn": fstn, "enc": enc, "seg": seg}


# ----------------------------------------------------------------------------
# Forward pass
# ----------------------------------------------------------------------------

def pointnet_seg_forward(x_bcn, pp, num_class):
    """x_bcn: (B, C, N) point cloud (PyTorch NCL). Returns (B, N, num_class) log-probs."""
    B = x_bcn.shape[0]
    x = jnp.transpose(x_bcn, (0, 2, 1)).astype(jnp.bfloat16)    # (B, N, C) bf16 MXU path
    x = _pad_axis(x, 2, 8)                                       # lane-align the channel dim

    # --- STN3d: fused conv+pool Pallas kernel, tiny FC head in plain XLA ---
    pooled3 = stn_conv_pool(x, pp["stn"])                        # (B, 256) f32
    trans = stn_fc(pooled3, pp["stn"], 3)                        # (B, 3, 3) f32

    # Fold the 3x3 input transform into a per-batch first-layer weight:
    # (x[:,:, :3] @ trans) @ W[:3] == x[:,:, :3] @ (trans @ W[:3])
    w1 = pp["enc"]["w1"]                                         # (Cpad, 64) f32
    w1b = jnp.einsum("bij,jk->bik", trans, w1[:3])
    rest = jnp.broadcast_to(w1[3:][None], (B,) + w1[3:].shape)
    w1b = jnp.concatenate([w1b, rest], axis=1).astype(jnp.bfloat16)   # (B, Cpad, 64)

    # --- everything else fused into ONE per-batch kernel (h1 never leaves VMEM) ---
    return pointnet_fused(x, w1b, pp, num_class)


# ----------------------------------------------------------------------------

if __name__ == "__main__":
    B, C, N, K = 2, 6, 64, 5   # batch, point_cloud_channels, n_points, num_class
    x = jax.random.normal(jax.random.PRNGKey(0), (B, C, N), jnp.float32)
    raw = make_raw_params(seed=0, channel=C, num_class=K)
    params = prepare_params(raw)   # BN fold / splits / casts done once, outside the jit

    fwd = jax.jit(functools.partial(pointnet_seg_forward, num_class=K))
    out = jax.block_until_ready(fwd(x, params))

    assert out.shape == (B, N, K), out.shape
    assert bool(jnp.all(jnp.isfinite(out)))
    # log_softmax rows should exponentiate-sum to ~1
    assert bool(jnp.allclose(jnp.sum(jnp.exp(out), axis=-1), 1.0, atol=1e-4))
    print("KERNEL_OK")
</pallas_src>

<mosaic_0001>
module attributes {stable_mosaic.version = 11 : i64} {
  func.func @_stn3_kernel(%arg0: i32, %arg1: memref<1x64x8xbf16, #tpu.memory_space<vmem>>, %arg2: memref<8x64xbf16, #tpu.memory_space<vmem>>, %arg3: memref<2x64xf32, #tpu.memory_space<vmem>>, %arg4: memref<64x128xbf16, #tpu.memory_space<vmem>>, %arg5: memref<2x128xf32, #tpu.memory_space<vmem>>, %arg6: memref<128x256xbf16, #tpu.memory_space<vmem>>, %arg7: memref<2x256xf32, #tpu.memory_space<vmem>>, %arg8: memref<1x1x256xf32, #tpu.memory_space<vmem>>) attributes {dimension_semantics = [#tpu.dimension_semantics<parallel>], iteration_bounds = array<i64: 2>, scalar_prefetch = 0 : i64, scratch_operands = 0 : i64, tpu.core_type = #tpu.core_type<tc>, window_params = [{transform_indices = @transform_0, window_bounds = array<i64: 1, 64, 8>}, {pipeline_mode = #tpu.pipeline_mode<synchronous>, transform_indices = @transform_1, window_bounds = array<i64: 8, 64>}, {pipeline_mode = #tpu.pipeline_mode<synchronous>, transform_indices = @transform_2, window_bounds = array<i64: 2, 64>}, {pipeline_mode = #tpu.pipeline_mode<synchronous>, transform_indices = @transform_3, window_bounds = array<i64: 64, 128>}, {pipeline_mode = #tpu.pipeline_mode<synchronous>, transform_indices = @transform_4, window_bounds = array<i64: 2, 128>}, {pipeline_mode = #tpu.pipeline_mode<synchronous>, transform_indices = @transform_5, window_bounds = array<i64: 128, 256>}, {pipeline_mode = #tpu.pipeline_mode<synchronous>, transform_indices = @transform_6, window_bounds = array<i64: 2, 256>}, {transform_indices = @transform_7, window_bounds = array<i64: 1, 1, 256>}]} {
    %c0 = arith.constant 0 : index
    %c0_0 = arith.constant 0 : index
    %c0_1 = arith.constant 0 : index
    %0 = vector.load %arg1[%c0, %c0_0, %c0_1] : memref<1x64x8xbf16, #tpu.memory_space<vmem>>, vector<1x64x8xbf16>
    %1 = vector.shape_cast %0 : vector<1x64x8xbf16> to vector<64x8xbf16>
    %c0_2 = arith.constant 0 : index
    %c0_3 = arith.constant 0 : index
    %2 = vector.load %arg2[%c0_2, %c0_3] : memref<8x64xbf16, #tpu.memory_space<vmem>>, vector<8x64xbf16>
    %cst = arith.constant dense<0.000000e+00> : vector<64x64xf32>
    %3 = tpu.matmul %1, %2, %cst {dimension_numbers = #tpu.dot_dimension_numbers<[1], [0], [0], [1], [0, 0, 1, 1], [], []>} : vector<64x8xbf16>, vector<8x64xbf16>, vector<64x64xf32> -> vector<64x64xf32>
    %c0_4 = arith.constant 0 : index
    %c0_5 = arith.constant 0 : index
    %4 = vector.load %arg3[%c0_4, %c0_5] : memref<2x64xf32, #tpu.memory_space<vmem>>, vector<1x64xf32>
    %5 = vector.broadcast %4 : vector<1x64xf32> to vector<64x64xf32>
    %6 = arith.mulf %3, %5 : vector<64x64xf32>
    %c1 = arith.constant 1 : index
    %c0_6 = arith.constant 0 : index
    %7 = vector.load %arg3[%c1, %c0_6] : memref<2x64xf32, #tpu.memory_space<vmem>>, vector<1x64xf32>
    %8 = vector.broadcast %7 : vector<1x64xf32> to vector<64x64xf32>
    %9 = arith.addf %6, %8 : vector<64x64xf32>
    %cst_7 = arith.constant 0.000000e+00 : f32
    %10 = vector.broadcast %cst_7 : f32 to vector<64x64xf32>
    %11 = arith.maximumf %9, %10 : vector<64x64xf32>
    %12 = arith.truncf %11 : vector<64x64xf32> to vector<64x64xbf16>
    %c0_8 = arith.constant 0 : index
    %c0_9 = arith.constant 0 : index
    %13 = vector.load %arg4[%c0_8, %c0_9] : memref<64x128xbf16, #tpu.memory_space<vmem>>, vector<64x128xbf16>
    %cst_10 = arith.constant dense<0.000000e+00> : vector<64x128xf32>
    %14 = tpu.matmul %12, %13, %cst_10 {dimension_numbers = #tpu.dot_dimension_numbers<[1], [0], [0], [1], [0, 0, 1, 1], [], []>} : vector<64x64xbf16>, vector<64x128xbf16>, vector<64x128xf32> -> vector<64x128xf32>
    %c0_11 = arith.constant 0 : index
    %c0_12 = arith.constant 0 : index
    %15 = vector.load %arg5[%c0_11, %c0_12] : memref<2x128xf32, #tpu.memory_space<vmem>>, vector<1x128xf32>
    %16 = vector.broadcast %15 : vector<1x128xf32> to vector<64x128xf32>
    %17 = arith.mulf %14, %16 : vector<64x128xf32>
    %c1_13 = arith.constant 1 : index
    %c0_14 = arith.constant 0 : index
    %18 = vector.load %arg5[%c1_13, %c0_14] : memref<2x128xf32, #tpu.memory_space<vmem>>, vector<1x128xf32>
    %19 = vector.broadcast %18 : vector<1x128xf32> to vector<64x128xf32>
    %20 = arith.addf %17, %19 : vector<64x128xf32>
    %cst_15 = arith.constant 0.000000e+00 : f32
    %21 = vector.broadcast %cst_15 : f32 to vector<64x128xf32>
    %22 = arith.maximumf %20, %21 : vector<64x128xf32>
    %23 = arith.truncf %22 : vector<64x128xf32> to vector<64x128xbf16>
    %c0_16 = arith.constant 0 : index
    %c0_17 = arith.constant 0 : index
    %24 = vector.load %arg6[%c0_16, %c0_17] : memref<128x256xbf16, #tpu.memory_space<vmem>>, vector<128x256xbf16>
    %cst_18 = arith.constant dense<0.000000e+00> : vector<64x256xf32>
    %25 = tpu.matmul %23, %24, %cst_18 {dimension_numbers = #tpu.dot_dimension_numbers<[1], [0], [0], [1], [0, 0, 1, 1], [], []>} : vector<64x128xbf16>, vector<128x256xbf16>, vector<64x256xf32> -> vector<64x256xf32>
    %c0_19 = arith.constant 0 : index
    %c0_20 = arith.constant 0 : index
    %26 = vector.load %arg7[%c0_19, %c0_20] : memref<2x256xf32, #tpu.memory_space<vmem>>, vector<1x256xf32>
    %27 = vector.broadcast %26 : vector<1x256xf32> to vector<64x256xf32>
    %28 = arith.mulf %25, %27 : vector<64x256xf32>
    %c1_21 = arith.constant 1 : index
    %c0_22 = arith.constant 0 : index
    %29 = vector.load %arg7[%c1_21, %c0_22] : memref<2x256xf32, #tpu.memory_space<vmem>>, vector<1x256xf32>
    %30 = vector.broadcast %29 : vector<1x256xf32> to vector<64x256xf32>
    %31 = arith.addf %28, %30 : vector<64x256xf32>
    %cst_23 = arith.constant 0.000000e+00 : f32
    %32 = vector.broadcast %cst_23 : f32 to vector<64x256xf32>
    %33 = arith.maximumf %31, %32 : vector<64x256xf32>
    %cst_24 = arith.constant dense<0xFF800000> : vector<256xf32>
    %34 = vector.multi_reduction <maximumf>, %33, %cst_24 [0] : vector<64x256xf32> to vector<256xf32>
    %35 = vector.shape_cast %34 : vector<256xf32> to vector<1x256xf32>
    %c0_25 = arith.constant 0 : index
    %c0_26 = arith.constant 0 : index
    %c0_27 = arith.constant 0 : index
    %36 = vector.load %arg8[%c0_25, %c0_26, %c0_27] : memref<1x1x256xf32, #tpu.memory_space<vmem>>, vector<1x1x256xf32>
    %37 = vector.shape_cast %36 : vector<1x1x256xf32> to vector<1x256xf32>
    %38 = vector.shape_cast %35 : vector<1x256xf32> to vector<1x1x256xf32>
    tpu.vector_store %arg8[%c0_25, %c0_26, %c0_27], %38 {strides = array<i32>} : memref<1x1x256xf32, #tpu.memory_space<vmem>>, vector<1x1x256xf32>,
    return
  }
  func.func @transform_0(%arg0: i32) -> (i32, i32, i32) {
    %c0_i32 = arith.constant 0 : i32
    %c0_i32_0 = arith.constant 0 : i32
    %c0_i32_1 = arith.constant 0 : i32
    return %arg0, %c0_i32, %c0_i32_0 : i32, i32, i32
  }
  func.func @transform_1(%arg0: i32) -> (i32, i32) {
    %c0_i32 = arith.constant 0 : i32
    %c0_i32_0 = arith.constant 0 : i32
    %c0_i32_1 = arith.constant 0 : i32
    return %c0_i32, %c0_i32_0 : i32, i32
  }
  func.func @transform_2(%arg0: i32) -> (i32, i32) {
    %c0_i32 = arith.constant 0 : i32
    %c0_i32_0 = arith.constant 0 : i32
    %c0_i32_1 = arith.constant 0 : i32
    return %c0_i32, %c0_i32_0 : i32, i32
  }
  func.func @transform_3(%arg0: i32) -> (i32, i32) {
    %c0_i32 = arith.constant 0 : i32
    %c0_i32_0 = arith.constant 0 : i32
    %c0_i32_1 = arith.constant 0 : i32
    return %c0_i32, %c0_i32_0 : i32, i32
  }
  func.func @transform_4(%arg0: i32) -> (i32, i32) {
    %c0_i32 = arith.constant 0 : i32
    %c0_i32_0 = arith.constant 0 : i32
    %c0_i32_1 = arith.constant 0 : i32
    return %c0_i32, %c0_i32_0 : i32, i32
  }
  func.func @transform_5(%arg0: i32) -> (i32, i32) {
    %c0_i32 = arith.constant 0 : i32
    %c0_i32_0 = arith.constant 0 : i32
    %c0_i32_1 = arith.constant 0 : i32
    return %c0_i32, %c0_i32_0 : i32, i32
  }
  func.func @transform_6(%arg0: i32) -> (i32, i32) {
    %c0_i32 = arith.constant 0 : i32
    %c0_i32_0 = arith.constant 0 : i32
    %c0_i32_1 = arith.constant 0 : i32
    return %c0_i32, %c0_i32_0 : i32, i32
  }
  func.func @transform_7(%arg0: i32) -> (i32, i32, i32) {
    %c0_i32 = arith.constant 0 : i32
    %c0_i32_0 = arith.constant 0 : i32
    %c0_i32_1 = arith.constant 0 : i32
    return %arg0, %c0_i32, %c0_i32_0 : i32, i32, i32
  }
}

module attributes {stable_mosaic.version = 11 : i64} {
  func.func @_pointnet_fused_kernel(%arg0: i32, %arg1: memref<1x64x8xbf16, #tpu.memory_space<vmem>>, %arg2: memref<1x8x64xbf16, #tpu.memory_space<vmem>>, %arg3: memref<2x64xf32, #tpu.memory_space<vmem>>, %arg4: memref<64x64xbf16, #tpu.memory_space<vmem>>, %arg5: memref<2x64xf32, #tpu.memory_space<vmem>>, %arg6: memref<64x128xbf16, #tpu.memory_space<vmem>>, %arg7: memref<2x128xf32, #tpu.memory_space<vmem>>, %arg8: memref<128x256xbf16, #tpu.memory_space<vmem>>, %arg9: memref<2x256xf32, #tpu.memory_space<vmem>>, %arg10: memref<256x128xbf16, #tpu.memory_space<vmem>>, %arg11: memref<2x128xf32, #tpu.memory_space<vmem>>, %arg12: memref<128x64xbf16, #tpu.memory_space<vmem>>, %arg13: memref<2x64xf32, #tpu.memory_space<vmem>>, %arg14: memref<64x4096xbf16, #tpu.memory_space<vmem>>, %arg15: memref<64x4096xbf16, #tpu.memory_space<vmem>>, %arg16: memref<4096x256xbf16, #tpu.memory_space<vmem>>, %arg17: memref<64x256xf32, #tpu.memory_space<vmem>>, %arg18: memref<2x128xf32, #tpu.memory_space<vmem>>, %arg19: memref<128x96xbf16, #tpu.memory_space<vmem>>, %arg20: memref<2x96xf32, #tpu.memory_space<vmem>>, %arg21: memref<96x128xbf16, #tpu.memory_space<vmem>>, %arg22: memref<2x128xf32, #tpu.memory_space<vmem>>, %arg23: memref<128x128xbf16, #tpu.memory_space<vmem>>, %arg24: memref<2x128xf32, #tpu.memory_space<vmem>>, %arg25: memref<128x64xbf16, #tpu.memory_space<vmem>>, %arg26: memref<2x64xf32, #tpu.memory_space<vmem>>, %arg27: memref<64x5xbf16, #tpu.memory_space<vmem>>, %arg28: memref<1x5xf32, #tpu.memory_space<vmem>>, %arg29: memref<1x64x5xf32, #tpu.memory_space<vmem>>) attributes {dimension_semantics = [#tpu.dimension_semantics<parallel>], iteration_bounds = array<i64: 2>, scalar_prefetch = 0 : i64, scratch_operands = 0 : i64, tpu.core_type = #tpu.core_type<tc>, window_params = [{transform_indices = @transform_0, window_bounds = array<i64: 1, 64, 8>}, {transform_indices = @transform_1, window_bounds = array<i64: 1, 8, 64>}, {pipeline_mode = #tpu.pipeline_mode<synchronous>, transform_indices = @transform_2, window_bounds = array<i64: 2, 64>}, {pipeline_mode = #tpu.pipeline_mode<synchronous>, transform_indices = @transform_3, window_bounds = array<i64: 64, 64>}, {pipeline_mode = #tpu.pipeline_mode<synchronous>, transform_indices = @transform_4, window_bounds = array<i64: 2, 64>}, {pipeline_mode = #tpu.pipeline_mode<synchronous>, transform_indices = @transform_5, window_bounds = array<i64: 64, 128>}, {pipeline_mode = #tpu.pipeline_mode<synchronous>, transform_indices = @transform_6, window_bounds = array<i64: 2, 128>}, {pipeline_mode = #tpu.pipeline_mode<synchronous>, transform_indices = @transform_7, window_bounds = array<i64: 128, 256>}, {pipeline_mode = #tpu.pipeline_mode<synchronous>, transform_indices = @transform_8, window_bounds = array<i64: 2, 256>}, {pipeline_mode = #tpu.pipeline_mode<synchronous>, transform_indices = @transform_9, window_bounds = array<i64: 256, 128>}, {pipeline_mode = #tpu.pipeline_mode<synchronous>, transform_indices = @transform_10, window_bounds = array<i64: 2, 128>}, {pipeline_mode = #tpu.pipeline_mode<synchronous>, transform_indices = @transform_11, window_bounds = array<i64: 128, 64>}, {pipeline_mode = #tpu.pipeline_mode<synchronous>, transform_indices = @transform_12, window_bounds = array<i64: 2, 64>}, {pipeline_mode = #tpu.pipeline_mode<synchronous>, transform_indices = @transform_13, window_bounds = array<i64: 64, 4096>}, {pipeline_mode = #tpu.pipeline_mode<synchronous>, transform_indices = @transform_14, window_bounds = array<i64: 64, 4096>}, {pipeline_mode = #tpu.pipeline_mode<synchronous>, transform_indices = @transform_15, window_bounds = array<i64: 4096, 256>}, {pipeline_mode = #tpu.pipeline_mode<synchronous>, transform_indices = @transform_16, window_bounds = array<i64: 64, 256>}, {pipeline_mode = #tpu.pipeline_mode<synchronous>, transform_indices = @transform_17, window_bounds = array<i64: 2, 128>}, {pipeline_mode = #tpu.pipeline_mode<synchronous>, transform_indices = @transform_18, window_bounds = array<i64: 128, 96>}, {pipeline_mode = #tpu.pipeline_mode<synchronous>, transform_indices = @transform_19, window_bounds = array<i64: 2, 96>}, {pipeline_mode = #tpu.pipeline_mode<synchronous>, transform_indices = @transform_20, window_bounds = array<i64: 96, 128>}, {pipeline_mode = #tpu.pipeline_mode<synchronous>, transform_indices = @transform_21, window_bounds = array<i64: 2, 128>}, {pipeline_mode = #tpu.pipeline_mode<synchronous>, transform_indices = @transform_22, window_bounds = array<i64: 128, 128>}, {pipeline_mode = #tpu.pipeline_mode<synchronous>, transform_indices = @transform_23, window_bounds = array<i64: 2, 128>}, {pipeline_mode = #tpu.pipeline_mode<synchronous>, transform_indices = @transform_24, window_bounds = array<i64: 128, 64>}, {pipeline_mode = #tpu.pipeline_mode<synchronous>, transform_indices = @transform_25, window_bounds = array<i64: 2, 64>}, {pipeline_mode = #tpu.pipeline_mode<synchronous>, transform_indices = @transform_26, window_bounds = array<i64: 64, 5>}, {pipeline_mode = #tpu.pipeline_mode<synchronous>, transform_indices = @transform_27, window_bounds = array<i64: 1, 5>}, {transform_indices = @transform_28, window_bounds = array<i64: 1, 64, 5>}]} {
    %c0 = arith.constant 0 : index
    %c0_0 = arith.constant 0 : index
    %c0_1 = arith.constant 0 : index
    %0 = vector.load %arg1[%c0, %c0_0, %c0_1] : memref<1x64x8xbf16, #tpu.memory_space<vmem>>, vector<1x64x8xbf16>
    %1 = vector.shape_cast %0 : vector<1x64x8xbf16> to vector<64x8xbf16>
    %c0_2 = arith.constant 0 : index
    %c0_3 = arith.constant 0 : index
    %c0_4 = arith.constant 0 : index
    %2 = vector.load %arg2[%c0_2, %c0_3, %c0_4] : memref<1x8x64xbf16, #tpu.memory_space<vmem>>, vector<1x8x64xbf16>
    %3 = vector.shape_cast %2 : vector<1x8x64xbf16> to vector<8x64xbf16>
    %cst = arith.constant dense<0.000000e+00> : vector<64x64xf32>
    %4 = tpu.matmul %1, %3, %cst {dimension_numbers = #tpu.dot_dimension_numbers<[1], [0], [0], [1], [0, 0, 1, 1], [], []>} : vector<64x8xbf16>, vector<8x64xbf16>, vector<64x64xf32> -> vector<64x64xf32>
    %c0_5 = arith.constant 0 : index
    %c0_6 = arith.constant 0 : index
    %5 = vector.load %arg3[%c0_5, %c0_6] : memref<2x64xf32, #tpu.memory_space<vmem>>, vector<1x64xf32>
    %6 = vector.broadcast %5 : vector<1x64xf32> to vector<64x64xf32>
    %7 = arith.mulf %4, %6 : vector<64x64xf32>
    %c1 = arith.constant 1 : index
    %c0_7 = arith.constant 0 : index
    %8 = vector.load %arg3[%c1, %c0_7] : memref<2x64xf32, #tpu.memory_space<vmem>>, vector<1x64xf32>
    %9 = vector.broadcast %8 : vector<1x64xf32> to vector<64x64xf32>
    %10 = arith.addf %7, %9 : vector<64x64xf32>
    %cst_8 = arith.constant 0.000000e+00 : f32
    %11 = vector.broadcast %cst_8 : f32 to vector<64x64xf32>
    %12 = arith.maximumf %10, %11 : vector<64x64xf32>
    %13 = arith.truncf %12 : vector<64x64xf32> to vector<64x64xbf16>
    %c0_9 = arith.constant 0 : index
    %c0_10 = arith.constant 0 : index
    %14 = vector.load %arg4[%c0_9, %c0_10] : memref<64x64xbf16, #tpu.memory_space<vmem>>, vector<64x64xbf16>
    %cst_11 = arith.constant dense<0.000000e+00> : vector<64x64xf32>
    %15 = tpu.matmul %13, %14, %cst_11 {dimension_numbers = #tpu.dot_dimension_numbers<[1], [0], [0], [1], [0, 0, 1, 1], [], []>} : vector<64x64xbf16>, vector<64x64xbf16>, vector<64x64xf32> -> vector<64x64xf32>
    %c0_12 = arith.constant 0 : index
    %c0_13 = arith.constant 0 : index
    %16 = vector.load %arg5[%c0_12, %c0_13] : memref<2x64xf32, #tpu.memory_space<vmem>>, vector<1x64xf32>
    %17 = vector.broadcast %16 : vector<1x64xf32> to vector<64x64xf32>
    %18 = arith.mulf %15, %17 : vector<64x64xf32>
    %c1_14 = arith.constant 1 : index
    %c0_15 = arith.constant 0 : index
    %19 = vector.load %arg5[%c1_14, %c0_15] : memref<2x64xf32, #tpu.memory_space<vmem>>, vector<1x64xf32>
    %20 = vector.broadcast %19 : vector<1x64xf32> to vector<64x64xf32>
    %21 = arith.addf %18, %20 : vector<64x64xf32>
    %cst_16 = arith.constant 0.000000e+00 : f32
    %22 = vector.broadcast %cst_16 : f32 to vector<64x64xf32>
    %23 = arith.maximumf %21, %22 : vector<64x64xf32>
    %24 = arith.truncf %23 : vector<64x64xf32> to vector<64x64xbf16>
    %c0_17 = arith.constant 0 : index
    %c0_18 = arith.constant 0 : index
    %25 = vector.load %arg6[%c0_17, %c0_18] : memref<64x128xbf16, #tpu.memory_space<vmem>>, vector<64x128xbf16>
    %cst_19 = arith.constant dense<0.000000e+00> : vector<64x128xf32>
    %26 = tpu.matmul %24, %25, %cst_19 {dimension_numbers = #tpu.dot_dimension_numbers<[1], [0], [0], [1], [0, 0, 1, 1], [], []>} : vector<64x64xbf16>, vector<64x128xbf16>, vector<64x128xf32> -> vector<64x128xf32>
    %c0_20 = arith.constant 0 : index
    %c0_21 = arith.constant 0 : index
    %27 = vector.load %arg7[%c0_20, %c0_21] : memref<2x128xf32, #tpu.memory_space<vmem>>, vector<1x128xf32>
    %28 = vector.broadcast %27 : vector<1x128xf32> to vector<64x128xf32>
    %29 = arith.mulf %26, %28 : vector<64x128xf32>
    %c1_22 = arith.constant 1 : index
    %c0_23 = arith.constant 0 : index
    %30 = vector.load %arg7[%c1_22, %c0_23] : memref<2x128xf32, #tpu.memory_space<vmem>>, vector<1x128xf32>
    %31 = vector.broadcast %30 : vector<1x128xf32> to vector<64x128xf32>
    %32 = arith.addf %29, %31 : vector<64x128xf32>
    %cst_24 = arith.constant 0.000000e+00 : f32
    %33 = vector.broadcast %cst_24 : f32 to vector<64x128xf32>
    %34 = arith.maximumf %32, %33 : vector<64x128xf32>
    %35 = arith.truncf %34 : vector<64x128xf32> to vector<64x128xbf16>
    %c0_25 = arith.constant 0 : index
    %c0_26 = arith.constant 0 : index
    %36 = vector.load %arg8[%c0_25, %c0_26] : memref<128x256xbf16, #tpu.memory_space<vmem>>, vector<128x256xbf16>
    %cst_27 = arith.constant dense<0.000000e+00> : vector<64x256xf32>
    %37 = tpu.matmul %35, %36, %cst_27 {dimension_numbers = #tpu.dot_dimension_numbers<[1], [0], [0], [1], [0, 0, 1, 1], [], []>} : vector<64x128xbf16>, vector<128x256xbf16>, vector<64x256xf32> -> vector<64x256xf32>
    %c0_28 = arith.constant 0 : index
    %c0_29 = arith.constant 0 : index
    %38 = vector.load %arg9[%c0_28, %c0_29] : memref<2x256xf32, #tpu.memory_space<vmem>>, vector<1x256xf32>
    %39 = vector.broadcast %38 : vector<1x256xf32> to vector<64x256xf32>
    %40 = arith.mulf %37, %39 : vector<64x256xf32>
    %c1_30 = arith.constant 1 : index
    %c0_31 = arith.constant 0 : index
    %41 = vector.load %arg9[%c1_30, %c0_31] : memref<2x256xf32, #tpu.memory_space<vmem>>, vector<1x256xf32>
    %42 = vector.broadcast %41 : vector<1x256xf32> to vector<64x256xf32>
    %43 = arith.addf %40, %42 : vector<64x256xf32>
    %cst_32 = arith.constant 0.000000e+00 : f32
    %44 = vector.broadcast %cst_32 : f32 to vector<64x256xf32>
    %45 = arith.maximumf %43, %44 : vector<64x256xf32>
    %cst_33 = arith.constant dense<0xFF800000> : vector<256xf32>
    %46 = vector.multi_reduction <maximumf>, %45, %cst_33 [0] : vector<64x256xf32> to vector<256xf32>
    %47 = vector.shape_cast %46 : vector<256xf32> to vector<1x256xf32>
    %48 = arith.truncf %47 : vector<1x256xf32> to vector<1x256xbf16>
    %c0_34 = arith.constant 0 : index
    %c0_35 = arith.constant 0 : index
    %49 = vector.load %arg10[%c0_34, %c0_35] : memref<256x128xbf16, #tpu.memory_space<vmem>>, vector<256x128xbf16>
    %cst_36 = arith.constant dense<0.000000e+00> : vector<1x128xf32>
    %50 = tpu.matmul %48, %49, %cst_36 {dimension_numbers = #tpu.dot_dimension_numbers<[1], [0], [0], [1], [0, 0, 1, 1], [], []>} : vector<1x256xbf16>, vector<256x128xbf16>, vector<1x128xf32> -> vector<1x128xf32>
    %c0_37 = arith.constant 0 : index
    %c0_38 = arith.constant 0 : index
    %51 = vector.load %arg11[%c0_37, %c0_38] : memref<2x128xf32, #tpu.memory_space<vmem>>, vector<1x128xf32>
    %52 = arith.mulf %50, %51 : vector<1x128xf32>
    %c1_39 = arith.constant 1 : index
    %c0_40 = arith.constant 0 : index
    %53 = vector.load %arg11[%c1_39, %c0_40] : memref<2x128xf32, #tpu.memory_space<vmem>>, vector<1x128xf32>
    %54 = arith.addf %52, %53 : vector<1x128xf32>
    %cst_41 = arith.constant 0.000000e+00 : f32
    %55 = vector.broadcast %cst_41 : f32 to vector<1x128xf32>
    %56 = arith.maximumf %54, %55 : vector<1x128xf32>
    %57 = arith.truncf %56 : vector<1x128xf32> to vector<1x128xbf16>
    %c0_42 = arith.constant 0 : index
    %c0_43 = arith.constant 0 : index
    %58 = vector.load %arg12[%c0_42, %c0_43] : memref<128x64xbf16, #tpu.memory_space<vmem>>, vector<128x64xbf16>
    %cst_44 = arith.constant dense<0.000000e+00> : vector<1x64xf32>
    %59 = tpu.matmul %57, %58, %cst_44 {dimension_numbers = #tpu.dot_dimension_numbers<[1], [0], [0], [1], [0, 0, 1, 1], [], []>} : vector<1x128xbf16>, vector<128x64xbf16>, vector<1x64xf32> -> vector<1x64xf32>
    %c0_45 = arith.constant 0 : index
    %c0_46 = arith.constant 0 : index
    %60 = vector.load %arg13[%c0_45, %c0_46] : memref<2x64xf32, #tpu.memory_space<vmem>>, vector<1x64xf32>
    %61 = arith.mulf %59, %60 : vector<1x64xf32>
    %c1_47 = arith.constant 1 : index
    %c0_48 = arith.constant 0 : index
    %62 = vector.load %arg13[%c1_47, %c0_48] : memref<2x64xf32, #tpu.memory_space<vmem>>, vector<1x64xf32>
    %63 = arith.addf %61, %62 : vector<1x64xf32>
    %cst_49 = arith.constant 0.000000e+00 : f32
    %64 = vector.broadcast %cst_49 : f32 to vector<1x64xf32>
    %65 = arith.maximumf %63, %64 : vector<1x64xf32>
    %66 = arith.truncf %65 : vector<1x64xf32> to vector<1x64xbf16>
    %c0_50 = arith.constant 0 : index
    %c0_51 = arith.constant 0 : index
    %67 = vector.load %arg14[%c0_50, %c0_51] : memref<64x4096xbf16, #tpu.memory_space<vmem>>, vector<64x4096xbf16>
    %cst_52 = arith.constant dense<0.000000e+00> : vector<1x4096xf32>
    %68 = tpu.matmul %66, %67, %cst_52 {dimension_numbers = #tpu.dot_dimension_numbers<[1], [0], [0], [1], [0, 0, 1, 1], [], []>} : vector<1x64xbf16>, vector<64x4096xbf16>, vector<1x4096xf32> -> vector<1x4096xf32>
    %69 = arith.truncf %68 : vector<1x4096xf32> to vector<1x4096xbf16>
    %70 = vector.shape_cast %69 : vector<1x4096xbf16> to vector<1x4096xbf16>
    %71 = vector.broadcast %70 : vector<1x4096xbf16> to vector<64x4096xbf16>
    %c0_53 = arith.constant 0 : index
    %c0_54 = arith.constant 0 : index
    %72 = vector.load %arg15[%c0_53, %c0_54] : memref<64x4096xbf16, #tpu.memory_space<vmem>>, vector<64x4096xbf16>
    %73 = arith.mulf %71, %72 : vector<64x4096xbf16>
    %c0_55 = arith.constant 0 : index
    %c0_56 = arith.constant 0 : index
    %74 = vector.load %arg16[%c0_55, %c0_56] : memref<4096x256xbf16, #tpu.memory_space<vmem>>, vector<4096x256xbf16>
    %cst_57 = arith.constant dense<0.000000e+00> : vector<64x256xf32>
    %75 = tpu.matmul %73, %74, %cst_57 {dimension_numbers = #tpu.dot_dimension_numbers<[1], [0], [0], [1], [0, 0, 1, 1], [], []>} : vector<64x4096xbf16>, vector<4096x256xbf16>, vector<64x256xf32> -> vector<64x256xf32>
    %c0_58 = arith.constant 0 : index
    %c0_59 = arith.constant 0 : index
    %76 = vector.load %arg17[%c0_58, %c0_59] : memref<64x256xf32, #tpu.memory_space<vmem>>, vector<64x256xf32>
    %77 = arith.addf %75, %76 : vector<64x256xf32>
    %78 = arith.truncf %77 : vector<64x256xf32> to vector<64x256xbf16>
    %cst_60 = arith.constant dense<0.000000e+00> : vector<64x256xf32>
    %79 = tpu.matmul %13, %78, %cst_60 {dimension_numbers = #tpu.dot_dimension_numbers<[1], [0], [0], [1], [0, 0, 1, 1], [], []>} : vector<64x64xbf16>, vector<64x256xbf16>, vector<64x256xf32> -> vector<64x256xf32>
    %80 = vector.extract_strided_slice %79 {offsets = [0, 0], sizes = [64, 128], strides = [1, 1]} : vector<64x256xf32> to vector<64x128xf32>
    %c0_61 = arith.constant 0 : index
    %c0_62 = arith.constant 0 : index
    %81 = vector.load %arg18[%c0_61, %c0_62] : memref<2x128xf32, #tpu.memory_space<vmem>>, vector<1x128xf32>
    %82 = vector.broadcast %81 : vector<1x128xf32> to vector<64x128xf32>
    %83 = arith.mulf %80, %82 : vector<64x128xf32>
    %c1_63 = arith.constant 1 : index
    %c0_64 = arith.constant 0 : index
    %84 = vector.load %arg18[%c1_63, %c0_64] : memref<2x128xf32, #tpu.memory_space<vmem>>, vector<1x128xf32>
    %85 = vector.broadcast %84 : vector<1x128xf32> to vector<64x128xf32>
    %86 = arith.addf %83, %85 : vector<64x128xf32>
    %cst_65 = arith.constant 0.000000e+00 : f32
    %87 = vector.broadcast %cst_65 : f32 to vector<64x128xf32>
    %88 = arith.maximumf %86, %87 : vector<64x128xf32>
    %89 = vector.extract_strided_slice %79 {offsets = [0, 128], sizes = [64, 128], strides = [1, 1]} : vector<64x256xf32> to vector<64x128xf32>
    %90 = arith.truncf %88 : vector<64x128xf32> to vector<64x128xbf16>
    %c0_66 = arith.constant 0 : index
    %c0_67 = arith.constant 0 : index
    %91 = vector.load %arg19[%c0_66, %c0_67] : memref<128x96xbf16, #tpu.memory_space<vmem>>, vector<128x96xbf16>
    %cst_68 = arith.constant dense<0.000000e+00> : vector<64x96xf32>
    %92 = tpu.matmul %90, %91, %cst_68 {dimension_numbers = #tpu.dot_dimension_numbers<[1], [0], [0], [1], [0, 0, 1, 1], [], []>} : vector<64x128xbf16>, vector<128x96xbf16>, vector<64x96xf32> -> vector<64x96xf32>
    %c0_69 = arith.constant 0 : index
    %c0_70 = arith.constant 0 : index
    %93 = vector.load %arg20[%c0_69, %c0_70] : memref<2x96xf32, #tpu.memory_space<vmem>>, vector<1x96xf32>
    %94 = vector.broadcast %93 : vector<1x96xf32> to vector<64x96xf32>
    %95 = arith.mulf %92, %94 : vector<64x96xf32>
    %c1_71 = arith.constant 1 : index
    %c0_72 = arith.constant 0 : index
    %96 = vector.load %arg20[%c1_71, %c0_72] : memref<2x96xf32, #tpu.memory_space<vmem>>, vector<1x96xf32>
    %97 = vector.broadcast %96 : vector<1x96xf32> to vector<64x96xf32>
    %98 = arith.addf %95, %97 : vector<64x96xf32>
    %cst_73 = arith.constant 0.000000e+00 : f32
    %99 = vector.broadcast %cst_73 : f32 to vector<64x96xf32>
    %100 = arith.maximumf %98, %99 : vector<64x96xf32>
    %cst_74 = arith.constant dense<0xFF800000> : vector<96xf32>
    %101 = vector.multi_reduction <maximumf>, %100, %cst_74 [0] : vector<64x96xf32> to vector<96xf32>
    %102 = vector.shape_cast %101 : vector<96xf32> to vector<1x96xf32>
    %103 = arith.truncf %102 : vector<1x96xf32> to vector<1x96xbf16>
    %c0_75 = arith.constant 0 : index
    %c0_76 = arith.constant 0 : index
    %104 = vector.load %arg21[%c0_75, %c0_76] : memref<96x128xbf16, #tpu.memory_space<vmem>>, vector<96x128xbf16>
    %cst_77 = arith.constant dense<0.000000e+00> : vector<1x128xf32>
    %105 = tpu.matmul %103, %104, %cst_77 {dimension_numbers = #tpu.dot_dimension_numbers<[1], [0], [0], [1], [0, 0, 1, 1], [], []>} : vector<1x96xbf16>, vector<96x128xbf16>, vector<1x128xf32> -> vector<1x128xf32>
    %106 = vector.broadcast %105 : vector<1x128xf32> to vector<64x128xf32>
    %107 = arith.addf %89, %106 : vector<64x128xf32>
    %c0_78 = arith.constant 0 : index
    %c0_79 = arith.constant 0 : index
    %108 = vector.load %arg22[%c0_78, %c0_79] : memref<2x128xf32, #tpu.memory_space<vmem>>, vector<1x128xf32>
    %109 = vector.broadcast %108 : vector<1x128xf32> to vector<64x128xf32>
    %110 = arith.mulf %107, %109 : vector<64x128xf32>
    %c1_80 = arith.constant 1 : index
    %c0_81 = arith.constant 0 : index
    %111 = vector.load %arg22[%c1_80, %c0_81] : memref<2x128xf32, #tpu.memory_space<vmem>>, vector<1x128xf32>
    %112 = vector.broadcast %111 : vector<1x128xf32> to vector<64x128xf32>
    %113 = arith.addf %110, %112 : vector<64x128xf32>
    %cst_82 = arith.constant 0.000000e+00 : f32
    %114 = vector.broadcast %cst_82 : f32 to vector<64x128xf32>
    %115 = arith.maximumf %113, %114 : vector<64x128xf32>
    %116 = arith.truncf %115 : vector<64x128xf32> to vector<64x128xbf16>
    %c0_83 = arith.constant 0 : index
    %c0_84 = arith.constant 0 : index
    %117 = vector.load %arg23[%c0_83, %c0_84] : memref<128x128xbf16, #tpu.memory_space<vmem>>, vector<128x128xbf16>
    %cst_85 = arith.constant dense<0.000000e+00> : vector<64x128xf32>
    %118 = tpu.matmul %116, %117, %cst_85 {dimension_numbers = #tpu.dot_dimension_numbers<[1], [0], [0], [1], [0, 0, 1, 1], [], []>} : vector<64x128xbf16>, vector<128x128xbf16>, vector<64x128xf32> -> vector<64x128xf32>
    %c0_86 = arith.constant 0 : index
    %c0_87 = arith.constant 0 : index
    %119 = vector.load %arg24[%c0_86, %c0_87] : memref<2x128xf32, #tpu.memory_space<vmem>>, vector<1x128xf32>
    %120 = vector.broadcast %119 : vector<1x128xf32> to vector<64x128xf32>
    %121 = arith.mulf %118, %120 : vector<64x128xf32>
    %c1_88 = arith.constant 1 : index
    %c0_89 = arith.constant 0 : index
    %122 = vector.load %arg24[%c1_88, %c0_89] : memref<2x128xf32, #tpu.memory_space<vmem>>, vector<1x128xf32>
    %123 = vector.broadcast %122 : vector<1x128xf32> to vector<64x128xf32>
    %124 = arith.addf %121, %123 : vector<64x128xf32>
    %cst_90 = arith.constant 0.000000e+00 : f32
    %125 = vector.broadcast %cst_90 : f32 to vector<64x128xf32>
    %126 = arith.maximumf %124, %125 : vector<64x128xf32>
    %127 = arith.truncf %126 : vector<64x128xf32> to vector<64x128xbf16>
    %c0_91 = arith.constant 0 : index
    %c0_92 = arith.constant 0 : index
    %128 = vector.load %arg25[%c0_91, %c0_92] : memref<128x64xbf16, #tpu.memory_space<vmem>>, vector<128x64xbf16>
    %cst_93 = arith.constant dense<0.000000e+00> : vector<64x64xf32>
    %129 = tpu.matmul %127, %128, %cst_93 {dimension_numbers = #tpu.dot_dimension_numbers<[1], [0], [0], [1], [0, 0, 1, 1], [], []>} : vector<64x128xbf16>, vector<128x64xbf16>, vector<64x64xf32> -> vector<64x64xf32>
    %c0_94 = arith.constant 0 : index
    %c0_95 = arith.constant 0 : index
    %130 = vector.load %arg26[%c0_94, %c0_95] : memref<2x64xf32, #tpu.memory_space<vmem>>, vector<1x64xf32>
    %131 = vector.broadcast %130 : vector<1x64xf32> to vector<64x64xf32>
    %132 = arith.mulf %129, %131 : vector<64x64xf32>
    %c1_96 = arith.constant 1 : index
    %c0_97 = arith.constant 0 : index
    %133 = vector.load %arg26[%c1_96, %c0_97] : memref<2x64xf32, #tpu.memory_space<vmem>>, vector<1x64xf32>
    %134 = vector.broadcast %133 : vector<1x64xf32> to vector<64x64xf32>
    %135 = arith.addf %132, %134 : vector<64x64xf32>
    %cst_98 = arith.constant 0.000000e+00 : f32
    %136 = vector.broadcast %cst_98 : f32 to vector<64x64xf32>
    %137 = arith.maximumf %135, %136 : vector<64x64xf32>
    %138 = arith.truncf %137 : vector<64x64xf32> to vector<64x64xbf16>
    %c0_99 = arith.constant 0 : index
    %c0_100 = arith.constant 0 : index
    %139 = vector.load %arg27[%c0_99, %c0_100] : memref<64x5xbf16, #tpu.memory_space<vmem>>, vector<64x5xbf16>
    %cst_101 = arith.constant dense<0.000000e+00> : vector<64x5xf32>
    %140 = tpu.matmul %138, %139, %cst_101 {dimension_numbers = #tpu.dot_dimension_numbers<[1], [0], [0], [1], [0, 0, 1, 1], [], []>} : vector<64x64xbf16>, vector<64x5xbf16>, vector<64x5xf32> -> vector<64x5xf32>
    %c0_102 = arith.constant 0 : index
    %c0_103 = arith.constant 0 : index
    %141 = vector.load %arg28[%c0_102, %c0_103] : memref<1x5xf32, #tpu.memory_space<vmem>>, vector<1x5xf32>
    %142 = vector.broadcast %141 : vector<1x5xf32> to vector<64x5xf32>
    %143 = arith.addf %140, %142 : vector<64x5xf32>
    %cst_104 = arith.constant dense<0xFF800000> : vector<64xf32>
    %144 = vector.multi_reduction <maximumf>, %143, %cst_104 [1] : vector<64x5xf32> to vector<64xf32>
    %145 = vector.shape_cast %144 : vector<64xf32> to vector<64x1xf32>
    %146 = vector.broadcast %145 : vector<64x1xf32> to vector<64x5xf32>
    %147 = arith.subf %143, %146 : vector<64x5xf32>
    %148 = math.exp %147 : vector<64x5xf32>
    %cst_105 = arith.constant dense<0.000000e+00> : vector<64xf32>
    %149 = vector.multi_reduction <add>, %148, %cst_105 [1] : vector<64x5xf32> to vector<64xf32>
    %150 = vector.shape_cast %149 : vector<64xf32> to vector<64x1xf32>
    %151 = math.log %150 : vector<64x1xf32>
    %152 = vector.broadcast %145 : vector<64x1xf32> to vector<64x5xf32>
    %153 = arith.subf %143, %152 : vector<64x5xf32>
    %154 = vector.broadcast %151 : vector<64x1xf32> to vector<64x5xf32>
    %155 = arith.subf %153, %154 : vector<64x5xf32>
    %c0_106 = arith.constant 0 : index
    %c0_107 = arith.constant 0 : index
    %c0_108 = arith.constant 0 : index
    %156 = vector.load %arg29[%c0_106, %c0_107, %c0_108] : memref<1x64x5xf32, #tpu.memory_space<vmem>>, vector<1x64x5xf32>
    %157 = vector.shape_cast %156 : vector<1x64x5xf32> to vector<64x5xf32>
    %158 = vector.shape_cast %155 : vector<64x5xf32> to vector<1x64x5xf32>
    tpu.vector_store %arg29[%c0_106, %c0_107, %c0_108], %158 {strides = array<i32>} : memref<1x64x5xf32, #tpu.memory_space<vmem>>, vector<1x64x5xf32>,
    return
  }
  func.func @transform_0(%arg0: i32) -> (i32, i32, i32) {
    %c0_i32 = arith.constant 0 : i32
    %c0_i32_0 = arith.constant 0 : i32
    %c0_i32_1 = arith.constant 0 : i32
    return %arg0, %c0_i32, %c0_i32_0 : i32, i32, i32
  }
  func.func @transform_1(%arg0: i32) -> (i32, i32, i32) {
    %c0_i32 = arith.constant 0 : i32
    %c0_i32_0 = arith.constant 0 : i32
    %c0_i32_1 = arith.constant 0 : i32
    return %arg0, %c0_i32, %c0_i32_0 : i32, i32, i32
  }
  func.func @transform_2(%arg0: i32) -> (i32, i32) {
    %c0_i32 = arith.constant 0 : i32
    %c0_i32_0 = arith.constant 0 : i32
    %c0_i32_1 = arith.constant 0 : i32
    return %c0_i32, %c0_i32_0 : i32, i32
  }
  func.func @transform_3(%arg0: i32) -> (i32, i32) {
    %c0_i32 = arith.constant 0 : i32
    %c0_i32_0 = arith.constant 0 : i32
    %c0_i32_1 = arith.constant 0 : i32
    return %c0_i32, %c0_i32_0 : i32, i32
  }
  func.func @transform_4(%arg0: i32) -> (i32, i32) {
    %c0_i32 = arith.constant 0 : i32
    %c0_i32_0 = arith.constant 0 : i32
    %c0_i32_1 = arith.constant 0 : i32
    return %c0_i32, %c0_i32_0 : i32, i32
  }
  func.func @transform_5(%arg0: i32) -> (i32, i32) {
    %c0_i32 = arith.constant 0 : i32
    %c0_i32_0 = arith.constant 0 : i32
    %c0_i32_1 = arith.constant 0 : i32
    return %c0_i32, %c0_i32_0 : i32, i32
  }
  func.func @transform_6(%arg0: i32) -> (i32, i32) {
    %c0_i32 = arith.constant 0 : i32
    %c0_i32_0 = arith.constant 0 : i32
    %c0_i32_1 = arith.constant 0 : i32
    return %c0_i32, %c0_i32_0 : i32, i32
  }
  func.func @transform_7(%arg0: i32) -> (i32, i32) {
    %c0_i32 = arith.constant 0 : i32
    %c0_i32_0 = arith.constant 0 : i32
    %c0_i32_1 = arith.constant 0 : i32
    return %c0_i32, %c0_i32_0 : i32, i32
  }
  func.func @transform_8(%arg0: i32) -> (i32, i32) {
    %c0_i32 = arith.constant 0 : i32
    %c0_i32_0 = arith.constant 0 : i32
    %c0_i32_1 = arith.constant 0 : i32
    return %c0_i32, %c0_i32_0 : i32, i32
  }
  func.func @transform_9(%arg0: i32) -> (i32, i32) {
    %c0_i32 = arith.constant 0 : i32
    %c0_i32_0 = arith.constant 0 : i32
    %c0_i32_1 = arith.constant 0 : i32
    return %c0_i32, %c0_i32_0 : i32, i32
  }
  func.func @transform_10(%arg0: i32) -> (i32, i32) {
    %c0_i32 = arith.constant 0 : i32
    %c0_i32_0 = arith.constant 0 : i32
    %c0_i32_1 = arith.constant 0 : i32
    return %c0_i32, %c0_i32_0 : i32, i32
  }
  func.func @transform_11(%arg0: i32) -> (i32, i32) {
    %c0_i32 = arith.constant 0 : i32
    %c0_i32_0 = arith.constant 0 : i32
    %c0_i32_1 = arith.constant 0 : i32
    return %c0_i32, %c0_i32_0 : i32, i32
  }
  func.func @transform_12(%arg0: i32) -> (i32, i32) {
    %c0_i32 = arith.constant 0 : i32
    %c0_i32_0 = arith.constant 0 : i32
    %c0_i32_1 = arith.constant 0 : i32
    return %c0_i32, %c0_i32_0 : i32, i32
  }
  func.func @transform_13(%arg0: i32) -> (i32, i32) {
    %c0_i32 = arith.constant 0 : i32
    %c0_i32_0 = arith.constant 0 : i32
    %c0_i32_1 = arith.constant 0 : i32
    return %c0_i32, %c0_i32_0 : i32, i32
  }
  func.func @transform_14(%arg0: i32) -> (i32, i32) {
    %c0_i32 = arith.constant 0 : i32
    %c0_i32_0 = arith.constant 0 : i32
    %c0_i32_1 = arith.constant 0 : i32
    return %c0_i32, %c0_i32_0 : i32, i32
  }
  func.func @transform_15(%arg0: i32) -> (i32, i32) {
    %c0_i32 = arith.constant 0 : i32
    %c0_i32_0 = arith.constant 0 : i32
    %c0_i32_1 = arith.constant 0 : i32
    return %c0_i32, %c0_i32_0 : i32, i32
  }
  func.func @transform_16(%arg0: i32) -> (i32, i32) {
    %c0_i32 = arith.constant 0 : i32
    %c0_i32_0 = arith.constant 0 : i32
    %c0_i32_1 = arith.constant 0 : i32
    return %c0_i32, %c0_i32_0 : i32, i32
  }
  func.func @transform_17(%arg0: i32) -> (i32, i32) {
    %c0_i32 = arith.constant 0 : i32
    %c0_i32_0 = arith.constant 0 : i32
    %c0_i32_1 = arith.constant 0 : i32
    return %c0_i32, %c0_i32_0 : i32, i32
  }
  func.func @transform_18(%arg0: i32) -> (i32, i32) {
    %c0_i32 = arith.constant 0 : i32
    %c0_i32_0 = arith.constant 0 : i32
    %c0_i32_1 = arith.constant 0 : i32
    return %c0_i32, %c0_i32_0 : i32, i32
  }
  func.func @transform_19(%arg0: i32) -> (i32, i32) {
    %c0_i32 = arith.constant 0 : i32
    %c0_i32_0 = arith.constant 0 : i32
    %c0_i32_1 = arith.constant 0 : i32
    return %c0_i32, %c0_i32_0 : i32, i32
  }
  func.func @transform_20(%arg0: i32) -> (i32, i32) {
    %c0_i32 = arith.constant 0 : i32
    %c0_i32_0 = arith.constant 0 : i32
    %c0_i32_1 = arith.constant 0 : i32
    return %c0_i32, %c0_i32_0 : i32, i32
  }
  func.func @transform_21(%arg0: i32) -> (i32, i32) {
    %c0_i32 = arith.constant 0 : i32
    %c0_i32_0 = arith.constant 0 : i32
    %c0_i32_1 = arith.constant 0 : i32
    return %c0_i32, %c0_i32_0 : i32, i32
  }
  func.func @transform_22(%arg0: i32) -> (i32, i32) {
    %c0_i32 = arith.constant 0 : i32
    %c0_i32_0 = arith.constant 0 : i32
    %c0_i32_1 = arith.constant 0 : i32
    return %c0_i32, %c0_i32_0 : i32, i32
  }
  func.func @transform_23(%arg0: i32) -> (i32, i32) {
    %c0_i32 = arith.constant 0 : i32
    %c0_i32_0 = arith.constant 0 : i32
    %c0_i32_1 = arith.constant 0 : i32
    return %c0_i32, %c0_i32_0 : i32, i32
  }
  func.func @transform_24(%arg0: i32) -> (i32, i32) {
    %c0_i32 = arith.constant 0 : i32
    %c0_i32_0 = arith.constant 0 : i32
    %c0_i32_1 = arith.constant 0 : i32
    return %c0_i32, %c0_i32_0 : i32, i32
  }
  func.func @transform_25(%arg0: i32) -> (i32, i32) {
    %c0_i32 = arith.constant 0 : i32
    %c0_i32_0 = arith.constant 0 : i32
    %c0_i32_1 = arith.constant 0 : i32
    return %c0_i32, %c0_i32_0 : i32, i32
  }
  func.func @transform_26(%arg0: i32) -> (i32, i32) {
    %c0_i32 = arith.constant 0 : i32
    %c0_i32_0 = arith.constant 0 : i32
    %c0_i32_1 = arith.constant 0 : i32
    return %c0_i32, %c0_i32_0 : i32, i32
  }
  func.func @transform_27(%arg0: i32) -> (i32, i32) {
    %c0_i32 = arith.constant 0 : i32
    %c0_i32_0 = arith.constant 0 : i32
    %c0_i32_1 = arith.constant 0 : i32
    return %c0_i32, %c0_i32_0 : i32, i32
  }
  func.func @transform_28(%arg0: i32) -> (i32, i32, i32) {
    %c0_i32 = arith.constant 0 : i32
    %c0_i32_0 = arith.constant 0 : i32
    %c0_i32_1 = arith.constant 0 : i32
    return %arg0, %c0_i32, %c0_i32_0 : i32, i32, i32
  }
}

</mosaic_0001>

<llo_original>
// kernel: pointnet_seg_forward.2
$region0: #{pointnet_seg_forward.2}
  #allocation0 [shape = 'u32[]', space=smem, size = 0x4, offset = 0x4, fixed_abs, tag = 'smem constant byte address 0x4 - core index']
  #allocation1 [shape = 'u32[72,128]{1,0:T(1,128)}', space=vmem, size = 0x9000, scoped, tag = 'internal scratch']
  %s0 = inlined_call_operand.vmem [shape: bf16[2,64,8], index: 0, kind: input, shape index: {}]
  %s1 = inlined_call_operand.hbm [shape: bf16[8,64], index: 1, kind: input, shape index: {}]
  %s2 = inlined_call_operand.hbm [shape: f32[2,64], index: 2, kind: input, shape index: {}]
  %s3 = inlined_call_operand.hbm [shape: bf16[64,128], index: 3, kind: input, shape index: {}]
  %s4 = inlined_call_operand.hbm [shape: f32[2,128], index: 4, kind: input, shape index: {}]
  %s5 = inlined_call_operand.hbm [shape: bf16[128,256], index: 5, kind: input, shape index: {}]
  %s6 = inlined_call_operand.hbm [shape: f32[2,256], index: 6, kind: input, shape index: {}]
  %s7 = inlined_call_operand.vmem [shape: f32[2,1,256], index: 7, kind: output, shape index: {}]
  %s8 = sld [smem:[#allocation0]]
  $region85: #{pointnet_seg_forward.2} parent=0
    _
  %s10 = ssub.s32 1, %s8
  %s11 = scalar_select 0, %s10, %s8
  $region1: #{pointnet_seg_forward.2} parent=0
    #allocation2 [shape = 'u8[2048]{0}', space=vmem, size = 0x800, scoped, tag = 'input window, operand 1, single buffered']
    #allocation3 [shape = 's32[2]{0}', space=sflag, size = 0x8, scoped, tag = 'scoped memory for pointnet_seg_forward.2']
    #allocation4 [shape = 'u8[1024]{0}', space=vmem, size = 0x400, scoped, tag = 'input window, operand 2, single buffered']
    #allocation5 [shape = 's32[1]{0}', space=sflag, size = 0x4, scoped, tag = 'scoped memory for pointnet_seg_forward.2']
    #allocation6 [shape = 'u8[16384]{0}', space=vmem, size = 0x4000, scoped, tag = 'input window, operand 3, single buffered']
    #allocation7 [shape = 'u8[1024]{0}', space=vmem, size = 0x400, scoped, tag = 'input window, operand 4, single buffered']
    #allocation8 [shape = 's32[1]{0}', space=sflag, size = 0x4, scoped, tag = 'scoped memory for pointnet_seg_forward.2']
    #allocation9 [shape = 'u8[65536]{0}', space=vmem, size = 0x10000, scoped, tag = 'input window, operand 5, single buffered']
    #allocation10 [shape = 'u8[2048]{0}', space=vmem, size = 0x800, scoped, tag = 'input window, operand 6, single buffered']
    #allocation11 [shape = 's32[1]{0}', space=sflag, size = 0x4, scoped, tag = 'scoped memory for pointnet_seg_forward.2']
    %12 = vsyncpa [#allocation3], 0
    %13 = vsyncpa [#allocation5], 0
    %14 = vsyncpa [#allocation8], 0
    %15 = vsyncpa [#allocation11], 0
    loop: start=0, step=1, limit=4
    $region2: #{pointnet_seg_forward.2} parent=1 // loop_pre_header
      _
    $region3: #{pointnet_seg_forward.2} parent=1 // loop_header
      %s17 = sphi 0, %s21
      %p18 = scmp.ge.s32.totalorder %s17, 4
      %s27 = sphi 0, %s29
      %s30 = sphi 0, %s27
      %s31 = sphi 0, %s30
      %s47 = sphi 0, %s31
      %s51 = sphi 0, %s51
      %s53 = sphi 0, %s51
      %s54 = sphi 0, %s53
      %s68 = sphi 0, %s54
      %s72 = sphi 0, %s72
      %s74 = sphi 0, %s72
      %s75 = sphi 0, %s74
      %s89 = sphi 0, %s75
      %s93 = sphi 0, %s93
      %s95 = sphi 0, %s93
      %s96 = sphi 0, %s95
      %s110 = sphi 0, %s96
      %s114 = sphi 0, %s114
      %s116 = sphi 0, %s114
      %s117 = sphi 0, %s116
      %s131 = sphi 0, %s117
      %s135 = sphi 0, %s135
      %s137 = sphi 0, %s135
      %s138 = sphi 0, %s137
      %s152 = sphi 0, %s138
      %s156 = sphi 0, %s156
      %s158 = sphi 0, %s156
      %s159 = sphi 0, %s158
      %s173 = sphi 0, %s159
      %s179 = sphi 0, %s181
      %s182 = sphi 0, %s179
      %s183 = sphi 0, %s182
      %s199 = sphi 0, %s183
    $region4: #{pointnet_seg_forward.2} parent=1 // loop_header_branch
      %20 = sbr.rel (%p18) target = $region8
    $region5: #{pointnet_seg_forward.2} parent=1 // loop_body
      %s22 = ssub.s32 %s17, 1
      %s23 = ssub.s32 %s17, 2
      %s24 = sadd.s32 %s17, 1
      %s25 = ssub.s32 %s17, %s24
      %p26 = scmp.eq.s32.totalorder %s25, 0
      %s28 = sadd.s32 %s27, 1
      %s29 = scalar_select %p26, %s27, %s28
      %p32 = pneg %p26
      %p33 = scmp.eq.s32.totalorder %s17, 1
      %p34 = por %p32, %p33
      %p35 = scmp.ne.s32.totalorder %s27, %s30
      %p36 = scmp.eq.s32.totalorder %s17, 0
      %p37 = por %p35, %p36
      %p38 = scmp.ne.s32.totalorder %s27, %s30
      %p39 = scmp.eq.s32.totalorder %s22, 1
      %p40 = por %p38, %p39
      %p41 = scmp.ne.s32.totalorder %s30, %s31
      %p42 = scmp.eq.s32.totalorder %s22, 0
      %p43 = por %p41, %p42
      %p44 = scmp.ne.s32.totalorder %s30, %s31
      %p45 = scmp.eq.s32.totalorder %s23, 1
      %p46 = por %p44, %p45
      %p48 = scmp.ne.s32.totalorder %s31, %s47
      %p49 = scmp.eq.s32.totalorder %s23, 0
      %p50 = por %p48, %p49
      %s52 = sadd.s32 %s51, 1
      %p55 = scmp.eq.s32.totalorder %s17, 1
      %p56 = scmp.ne.s32.totalorder %s51, %s53
      %p57 = scmp.eq.s32.totalorder %s17, 0
      %p58 = por %p56, %p57
      %p59 = scmp.ne.s32.totalorder %s51, %s53
      %p60 = scmp.eq.s32.totalorder %s22, 1
      %p61 = por %p59, %p60
      %p62 = scmp.ne.s32.totalorder %s53, %s54
      %p63 = scmp.eq.s32.totalorder %s22, 0
      %p64 = por %p62, %p63
      %p65 = scmp.ne.s32.totalorder %s53, %s54
      %p66 = scmp.eq.s32.totalorder %s23, 1
      %p67 = por %p65, %p66
      %p69 = scmp.ne.s32.totalorder %s54, %s68
      %p70 = scmp.eq.s32.totalorder %s23, 0
      %p71 = por %p69, %p70
      %s73 = sadd.s32 %s72, 1
      %p76 = scmp.eq.s32.totalorder %s17, 1
      %p77 = scmp.ne.s32.totalorder %s72, %s74
      %p78 = scmp.eq.s32.totalorder %s17, 0
      %p79 = por %p77, %p78
      %p80 = scmp.ne.s32.totalorder %s72, %s74
      %p81 = scmp.eq.s32.totalorder %s22, 1
      %p82 = por %p80, %p81
      %p83 = scmp.ne.s32.totalorder %s74, %s75
      %p84 = scmp.eq.s32.totalorder %s22, 0
      %p85 = por %p83, %p84
      %p86 = scmp.ne.s32.totalorder %s74, %s75
      %p87 = scmp.eq.s32.totalorder %s23, 1
      %p88 = por %p86, %p87
      %p90 = scmp.ne.s32.totalorder %s75, %s89
      %p91 = scmp.eq.s32.totalorder %s23, 0
      %p92 = por %p90, %p91
      %s94 = sadd.s32 %s93, 1
      %p97 = scmp.eq.s32.totalorder %s17, 1
      %p98 = scmp.ne.s32.totalorder %s93, %s95
      %p99 = scmp.eq.s32.totalorder %s17, 0
      %p100 = por %p98, %p99
      %p101 = scmp.ne.s32.totalorder %s93, %s95
      %p102 = scmp.eq.s32.totalorder %s22, 1
      %p103 = por %p101, %p102
      %p104 = scmp.ne.s32.totalorder %s95, %s96
      %p105 = scmp.eq.s32.totalorder %s22, 0
      %p106 = por %p104, %p105
      %p107 = scmp.ne.s32.totalorder %s95, %s96
      %p108 = scmp.eq.s32.totalorder %s23, 1
      %p109 = por %p107, %p108
      %p111 = scmp.ne.s32.totalorder %s96, %s110
      %p112 = scmp.eq.s32.totalorder %s23, 0
      %p113 = por %p111, %p112
      %s115 = sadd.s32 %s114, 1
      %p118 = scmp.eq.s32.totalorder %s17, 1
      %p119 = scmp.ne.s32.totalorder %s114, %s116
      %p120 = scmp.eq.s32.totalorder %s17, 0
      %p121 = por %p119, %p120
      %p122 = scmp.ne.s32.totalorder %s114, %s116
      %p123 = scmp.eq.s32.totalorder %s22, 1
      %p124 = por %p122, %p123
      %p125 = scmp.ne.s32.totalorder %s116, %s117
      %p126 = scmp.eq.s32.totalorder %s22, 0
      %p127 = por %p125, %p126
      %p128 = scmp.ne.s32.totalorder %s116, %s117
      %p129 = scmp.eq.s32.totalorder %s23, 1
      %p130 = por %p128, %p129
      %p132 = scmp.ne.s32.totalorder %s117, %s131
      %p133 = scmp.eq.s32.totalorder %s23, 0
      %p134 = por %p132, %p133
      %s136 = sadd.s32 %s135, 1
      %p139 = scmp.eq.s32.totalorder %s17, 1
      %p140 = scmp.ne.s32.totalorder %s135, %s137
      %p141 = scmp.eq.s32.totalorder %s17, 0
      %p142 = por %p140, %p141
      %p143 = scmp.ne.s32.totalorder %s135, %s137
      %p144 = scmp.eq.s32.totalorder %s22, 1
      %p145 = por %p143, %p144
      %p146 = scmp.ne.s32.totalorder %s137, %s138
      %p147 = scmp.eq.s32.totalorder %s22, 0
      %p148 = por %p146, %p147
      %p149 = scmp.ne.s32.totalorder %s137, %s138
      %p150 = scmp.eq.s32.totalorder %s23, 1
      %p151 = por %p149, %p150
      %p153 = scmp.ne.s32.totalorder %s138, %s152
      %p154 = scmp.eq.s32.totalorder %s23, 0
      %p155 = por %p153, %p154
      %s157 = sadd.s32 %s156, 1
      %p160 = scmp.eq.s32.totalorder %s17, 1
      %p161 = scmp.ne.s32.totalorder %s156, %s158
      %p162 = scmp.eq.s32.totalorder %s17, 0
      %p163 = por %p161, %p162
      %p164 = scmp.ne.s32.totalorder %s156, %s158
      %p165 = scmp.eq.s32.totalorder %s22, 1
      %p166 = por %p164, %p165
      %p167 = scmp.ne.s32.totalorder %s158, %s159
      %p168 = scmp.eq.s32.totalorder %s22, 0
      %p169 = por %p167, %p168
      %p170 = scmp.ne.s32.totalorder %s158, %s159
      %p171 = scmp.eq.s32.totalorder %s23, 1
      %p172 = por %p170, %p171
      %p174 = scmp.ne.s32.totalorder %s159, %s173
      %p175 = scmp.eq.s32.totalorder %s23, 0
      %p176 = por %p174, %p175
      %s177 = ssub.s32 %s17, %s24
      %p178 = scmp.eq.s32.totalorder %s177, 0
      %s180 = sadd.s32 %s179, 1
      %s181 = scalar_select %p178, %s179, %s180
      %p184 = pneg %p178
      %p185 = scmp.eq.s32.totalorder %s17, 1
      %p186 = por %p184, %p185
      %p187 = scmp.ne.s32.totalorder %s179, %s182
      %p188 = scmp.eq.s32.totalorder %s17, 0
      %p189 = por %p187, %p188
      %p190 = scmp.ne.s32.totalorder %s179, %s182
      %p191 = scmp.eq.s32.totalorder %s22, 1
      %p192 = por %p190, %p191
      %p193 = scmp.ne.s32.totalorder %s182, %s183
      %p194 = scmp.eq.s32.totalorder %s22, 0
      %p195 = por %p193, %p194
      %p196 = scmp.ne.s32.totalorder %s182, %s183
      %p197 = scmp.eq.s32.totalorder %s23, 1
      %p198 = por %p196, %p197
      %p200 = scmp.ne.s32.totalorder %s183, %s199
      %p201 = scmp.eq.s32.totalorder %s23, 0
      %p202 = por %p200, %p201
      %p203 = scmp.le.s32.totalorder 1, %s17
      %p204 = scmp.lt.s32.totalorder %s17, 3
      %p205 = pnand %p203, %p204
      %p206 = pneg %p205
      // Predicated region
      $region9: #{pointnet_seg_forward.2} parent=5 // pred_check
        _
      $region10: #{pointnet_seg_forward.2} parent=5 // pred_check_branch
        %208 = sbr.rel (%p205) target = $region12
      $region11: #{pointnet_seg_forward.2} parent=5 // pred_region
        %s209 = ssub.s32 %s17, 1
        // Predicated region
        $region13: #{pointnet_seg_forward.2} parent=11 // pred_check
          %p210 = pneg %p64
        $region14: #{pointnet_seg_forward.2} parent=11 // pred_check_branch
          %212 = sbr.rel (%p210) target = $region16
        $region15: #{pointnet_seg_forward.2} parent=11 // pred_region
          %214 = vsyncadd [#allocation3], 0
          %s216 = sshll.u32 %s1, 4
          %s217 = int_to_ptr.hbm [resolvable:$true] %s216
          %s218 = sshll.u32 [#allocation2], 4
          %s219 = int_to_ptr.vmem [resolvable:$true] %s218
          %221 = dma.hbm_to_vmem [thread:$0]  %s217, 64, %s219, [#allocation3]
        $region16: #{pointnet_seg_forward.2} parent=11 // pred_fallthru
          _
        // Predicated region
        $region17: #{pointnet_seg_forward.2} parent=11 // pred_check
          %p222 = pneg %p85
        $region18: #{pointnet_seg_forward.2} parent=11 // pred_check_branch
          %224 = sbr.rel (%p222) target = $region20
        $region19: #{pointnet_seg_forward.2} parent=11 // pred_region
          %226 = vsyncadd [#allocation5], 0
          %s228 = sshll.u32 %s2, 4
          %s229 = int_to_ptr.hbm [resolvable:$true] %s228
          %s230 = sshll.u32 [#allocation4], 4
          %s231 = int_to_ptr.vmem [resolvable:$true] %s230
          %233 = dma.hbm_to_vmem [thread:$0]  %s229, 32, %s231, [#allocation5]
        $region20: #{pointnet_seg_forward.2} parent=11 // pred_fallthru
          _
        // Predicated region
        $region21: #{pointnet_seg_forward.2} parent=11 // pred_check
          %p234 = pneg %p106
        $region22: #{pointnet_seg_forward.2} parent=11 // pred_check_branch
          %236 = sbr.rel (%p234) target = $region24
        $region23: #{pointnet_seg_forward.2} parent=11 // pred_region
          %238 = vsyncadd [#allocation5], 0
          %s239 = sshll.u32 %s3, 4
          %s240 = int_to_ptr.hbm [resolvable:$true] %s239
          %s241 = sshll.u32 [#allocation6], 4
          %s242 = int_to_ptr.vmem [resolvable:$true] %s241
          %247 = dma.hbm_to_vmem [thread:$0]  %s240, 512, %s242, [#allocation5], 64, 64, 4
        $region24: #{pointnet_seg_forward.2} parent=11 // pred_fallthru
          _
        // Predicated region
        $region25: #{pointnet_seg_forward.2} parent=11 // pred_check
          %p248 = pneg %p127
        $region26: #{pointnet_seg_forward.2} parent=11 // pred_check_branch
          %250 = sbr.rel (%p248) target = $region28
        $region27: #{pointnet_seg_forward.2} parent=11 // pred_region
          %252 = vsyncadd [#allocation8], 0
          %s254 = sshll.u32 %s4, 4
          %s255 = int_to_ptr.hbm [resolvable:$true] %s254
          %s256 = sshll.u32 [#allocation7], 4
          %s257 = int_to_ptr.vmem [resolvable:$true] %s256
          %259 = dma.hbm_to_vmem [thread:$0]  %s255, 32, %s257, [#allocation8]
        $region28: #{pointnet_seg_forward.2} parent=11 // pred_fallthru
          _
        // Predicated region
        $region29: #{pointnet_seg_forward.2} parent=11 // pred_check
          %p260 = pneg %p148
        $region30: #{pointnet_seg_forward.2} parent=11 // pred_check_branch
          %262 = sbr.rel (%p260) target = $region32
        $region31: #{pointnet_seg_forward.2} parent=11 // pred_region
          %264 = vsyncadd [#allocation8], 0
          %s265 = sshll.u32 %s5, 4
          %s266 = int_to_ptr.hbm [resolvable:$true] %s265
          %s267 = sshll.u32 [#allocation9], 4
          %s268 = int_to_ptr.vmem [resolvable:$true] %s267
          %273 = dma.hbm_to_vmem [thread:$0]  %s266, 2048, %s268, [#allocation8], 128, 128, 8
        $region32: #{pointnet_seg_forward.2} parent=11 // pred_fallthru
          _
        // Predicated region
        $region33: #{pointnet_seg_forward.2} parent=11 // pred_check
          %p274 = pneg %p169
        $region34: #{pointnet_seg_forward.2} parent=11 // pred_check_branch
          %276 = sbr.rel (%p274) target = $region36
        $region35: #{pointnet_seg_forward.2} parent=11 // pred_region
          %278 = vsyncadd [#allocation11], 0
          %s280 = sshll.u32 %s6, 4
          %s281 = int_to_ptr.hbm [resolvable:$true] %s280
          %s282 = sshll.u32 [#allocation10], 4
          %s283 = int_to_ptr.vmem [resolvable:$true] %s282
          %285 = dma.hbm_to_vmem [thread:$0]  %s281, 64, %s283, [#allocation11]
        $region36: #{pointnet_seg_forward.2} parent=11 // pred_fallthru
          _
      $region12: #{pointnet_seg_forward.2} parent=5 // pred_fallthru
        _
      %p286 = scmp.lt.s32.totalorder %s17, 2
      // Predicated region
      $region37: #{pointnet_seg_forward.2} parent=5 // pred_check
        %p287 = pneg %p286
      $region38: #{pointnet_seg_forward.2} parent=5 // pred_check_branch
        %289 = sbr.rel (%p287) target = $region40
      $region39: #{pointnet_seg_forward.2} parent=5 // pred_region
        // Predicated region
        $region41: #{pointnet_seg_forward.2} parent=39 // pred_check
          %p290 = pneg %p37
        $region42: #{pointnet_seg_forward.2} parent=39 // pred_check_branch
          %292 = sbr.rel (%p290) target = $region44
        $region43: #{pointnet_seg_forward.2} parent=39 // pred_region
          %p293 = scmp.lt.s32.totalorder %s17, 1
          %s294 = scalar_select %p293, %s17, 1
          %s295 = smul.addr %s294, 8
          %s296 = smul.addr %s295, 4
          %s297 = scalar_lea.vmem %s0, %s296
        $region44: #{pointnet_seg_forward.2} parent=39 // pred_fallthru
          _
      $region40: #{pointnet_seg_forward.2} parent=5 // pred_fallthru
        _
      %p298 = scmp.le.s32.totalorder 1, %s17
      %p299 = scmp.lt.s32.totalorder %s17, 3
      %p300 = pnand %p298, %p299
      %p301 = pneg %p300
      // Predicated region
      $region45: #{pointnet_seg_forward.2} parent=5 // pred_check
        _
      $region46: #{pointnet_seg_forward.2} parent=5 // pred_check_branch
        %303 = sbr.rel (%p300) target = $region48
      $region47: #{pointnet_seg_forward.2} parent=5 // pred_region
        %s304 = ssub.s32 %s17, 1
        // Predicated region
        $region49: #{pointnet_seg_forward.2} parent=47 // pred_check
          %p305 = pneg %p64
        $region50: #{pointnet_seg_forward.2} parent=47 // pred_check_branch
          %307 = sbr.rel (%p305) target = $region52
        $region51: #{pointnet_seg_forward.2} parent=47 // pred_region
          %309 = dma.done [#allocation3], 64
        $region52: #{pointnet_seg_forward.2} parent=47 // pred_fallthru
          _
        // Predicated region
        $region53: #{pointnet_seg_forward.2} parent=47 // pred_check
          %p310 = pneg %p85
        $region54: #{pointnet_seg_forward.2} parent=47 // pred_check_branch
          %312 = sbr.rel (%p310) target = $region56
        $region55: #{pointnet_seg_forward.2} parent=47 // pred_region
          %314 = dma.done [#allocation5], 32
        $region56: #{pointnet_seg_forward.2} parent=47 // pred_fallthru
          _
        // Predicated region
        $region57: #{pointnet_seg_forward.2} parent=47 // pred_check
          %p315 = pneg %p106
        $region58: #{pointnet_seg_forward.2} parent=47 // pred_check_branch
          %317 = sbr.rel (%p315) target = $region60
        $region59: #{pointnet_seg_forward.2} parent=47 // pred_region
          %319 = dma.done [#allocation5], 512
        $region60: #{pointnet_seg_forward.2} parent=47 // pred_fallthru
          _
        // Predicated region
        $region61: #{pointnet_seg_forward.2} parent=47 // pred_check
          %p320 = pneg %p127
        $region62: #{pointnet_seg_forward.2} parent=47 // pred_check_branch
          %322 = sbr.rel (%p320) target = $region64
        $region63: #{pointnet_seg_forward.2} parent=47 // pred_region
          %324 = dma.done [#allocation8], 32
        $region64: #{pointnet_seg_forward.2} parent=47 // pred_fallthru
          _
        // Predicated region
        $region65: #{pointnet_seg_forward.2} parent=47 // pred_check
          %p325 = pneg %p148
        $region66: #{pointnet_seg_forward.2} parent=47 // pred_check_branch
          %327 = sbr.rel (%p325) target = $region68
        $region67: #{pointnet_seg_forward.2} parent=47 // pred_region
          %329 = dma.done [#allocation8], 2048
        $region68: #{pointnet_seg_forward.2} parent=47 // pred_fallthru
          _
        // Predicated region
        $region69: #{pointnet_seg_forward.2} parent=47 // pred_check
          %p330 = pneg %p169
        $region70: #{pointnet_seg_forward.2} parent=47 // pred_check_branch
          %332 = sbr.rel (%p330) target = $region72
        $region71: #{pointnet_seg_forward.2} parent=47 // pred_region
          %334 = dma.done [#allocation11], 64
        $region72: #{pointnet_seg_forward.2} parent=47 // pred_fallthru
          _
        %p335 = scmp.lt.s32.totalorder %s22, 1
        %s336 = scalar_select %p335, %s22, 1
        %s337 = smul.addr %s336, 8
        %s338 = smul.addr %s337, 4
        %s339 = scalar_lea.vmem %s0, %s338
        %p340 = pneg %p43
        %p341 = pneg %p40
        %p342 = pneg %p64
        %p343 = pneg %p61
        %p344 = pneg %p85
        %p345 = pneg %p82
        %p346 = pneg %p106
        %p347 = pneg %p103
        %p348 = pneg %p127
        %p349 = pneg %p124
        %p350 = pneg %p148
        %p351 = pneg %p145
        %p352 = pneg %p169
        %p353 = pneg %p166
        %p354 = pneg %p195
        %p355 = pneg %p192
        %p356 = scmp.lt.s32.totalorder %s22, 1
        %s357 = scalar_select %p356, %s22, 1
        %s358 = smul.addr %s357, 2
        %s359 = scalar_lea.vmem %s7, %s358
        %p360 = scmp.lt.s32.totalorder %s22, 1
        %s361 = scalar_select %p360, %s22, 1
        %s362 = smul.addr %s361, 8
        %s363 = smul.addr %s362, 4
        %s364 = scalar_lea.vmem %s0, %s363
        %p365 = scmp.lt.s32.totalorder %s22, 1
        %s366 = scalar_select %p365, %s22, 1
        %s367 = smul.addr %s366, 2
        %s368 = scalar_lea.vmem %s7, %s367
        %v370 = vld [vmem:[%s364] sm:$0xf]
        %v371 = vld [vmem:[%s364 + $0x4] sm:$0xf]
        %v372 = vld [vmem:[%s364 + $0x8] sm:$0xf]
        %v373 = vld [vmem:[%s364 + $0xc] sm:$0xf]
        %v374 = vld [vmem:[%s364 + $0x10] sm:$0xf]
        %v375 = vld [vmem:[%s364 + $0x14] sm:$0xf]
        %v376 = vld [vmem:[%s364 + $0x18] sm:$0xf]
        %v377 = vld [vmem:[%s364 + $0x1c] sm:$0xf]
        %v378 = vld [vmem:[#allocation2] sm:$0xf]
        %v387 = vunpack.c.l.b16 %v370
        %v388 = vunpack.c.l.b16 %v371
        %v389 = vunpack.c.l.b16 %v372
        %v390 = vunpack.c.l.b16 %v373
        %v391 = vunpack.c.l.b16 %v374
        %v392 = vunpack.c.l.b16 %v375
        %v393 = vunpack.c.l.b16 %v376
        %v394 = vunpack.c.l.b16 %v377
        %v395 = vpack.c.b16 %v388, %v387
        %v396 = vpack.c.b16 %v390, %v389
        %v397 = vpack.c.b16 %v392, %v391
        %v398 = vpack.c.b16 %v394, %v393
        %vm399 = vcmask 64512
        %v401 = vsel %vm399, %v395, 0
        %v404 = vsel %vm399, %v396, 0
        %v407 = vsel %vm399, %v397, 0
        %v410 = vsel %vm399, %v398, 0
        %vm412 = vcmask 1043456
        %v414 = vsel %vm412, %v378, 0
        %416 = vmatpush.bf16.msra.mxu0 0
        %417 = vmatpush.bf16.msra.mxu0 0
        %418 = vmatpush.bf16.msra.mxu0 0
        %419 = vmatpush.bf16.msra.mxu0 0
        %420 = vmatpush.bf16.msra.mxu0 0
        %421 = vmatpush.bf16.msra.mxu0 0
        %422 = vmatpush.bf16.msra.mxu0 0
        %423 = vmatpush.bf16.msra.mxu0 %v414
        %424 = vmatmul.bf16.gmra.mxu0 %v401
        %v425 = vpop.f32.mrf.mxu0
        %v426 = vadd.f32 0.0, %v425
        %v427 = vpop.f32.mrf.mxu0
        %v428 = vadd.f32 0.0, %v427
        %429 = vmatmul.bf16.gmra.mxu0 %v404
        %v430 = vpop.f32.mrf.mxu0
        %v431 = vadd.f32 0.0, %v430
        %v432 = vpop.f32.mrf.mxu0
        %v433 = vadd.f32 0.0, %v432
        %434 = vmatmul.bf16.gmra.mxu0 %v407
        %v435 = vpop.f32.mrf.mxu0
        %v436 = vadd.f32 0.0, %v435
        %v437 = vpop.f32.mrf.mxu0
        %v438 = vadd.f32 0.0, %v437
        %439 = vmatmul.bf16.gmra.mxu0 %v410
        %v440 = vpop.f32.mrf.mxu0
        %v441 = vadd.f32 0.0, %v440
        %v442 = vpop.f32.mrf.mxu0
        %v443 = vadd.f32 0.0, %v442
        %444 = vdwg.mxu0
        %v445 = vld [vmem:[#allocation4] sm:$0x1]
        %v446 = vperm.slane %v445, 0
        %v447 = vmul.f32 %v426, %v446
        %v448 = vmul.f32 %v428, %v446
        %v449 = vmul.f32 %v431, %v446
        %v450 = vmul.f32 %v433, %v446
        %v451 = vmul.f32 %v436, %v446
        %v452 = vmul.f32 %v438, %v446
        %v453 = vmul.f32 %v441, %v446
        %v454 = vmul.f32 %v443, %v446
        %v455 = vld [vmem:[#allocation4 + $0x1] sm:$0x1]
        %v456 = vperm.slane %v455, 0
        %v457 = vadd.f32 %v447, %v456
        %v458 = vadd.f32 %v448, %v456
        %v459 = vadd.f32 %v449, %v456
        %v460 = vadd.f32 %v450, %v456
        %v461 = vadd.f32 %v451, %v456
        %v462 = vadd.f32 %v452, %v456
        %v463 = vadd.f32 %v453, %v456
        %v464 = vadd.f32 %v454, %v456
        %v465 = vmax.f32 %v457, 0.0
        %v466 = vmax.f32 %v458, 0.0
        %v467 = vmax.f32 %v459, 0.0
        %v468 = vmax.f32 %v460, 0.0
        %v469 = vmax.f32 %v461, 0.0
        %v470 = vmax.f32 %v462, 0.0
        %v471 = vmax.f32 %v463, 0.0
        %v472 = vmax.f32 %v464, 0.0
        %v473 = vpack.c.bf16 %v466, %v465
        %v474 = vpack.c.bf16 %v468, %v467
        %v475 = vpack.c.bf16 %v470, %v469
        %v476 = vpack.c.bf16 %v472, %v471
        %v477 = vld [vmem:[#allocation6] sm:$0xf]
        %v478 = vld [vmem:[#allocation6 + $0x4] sm:$0xf]
        %v479 = vld [vmem:[#allocation6 + $0x8] sm:$0xf]
        %v480 = vld [vmem:[#allocation6 + $0xc] sm:$0xf]
        %v481 = vld [vmem:[#allocation6 + $0x10] sm:$0xf]
        %v482 = vld [vmem:[#allocation6 + $0x14] sm:$0xf]
        %v483 = vld [vmem:[#allocation6 + $0x18] sm:$0xf]
        %v484 = vld [vmem:[#allocation6 + $0x1c] sm:$0xf]
        %v493 = vunpack.c.l.b16 %v477
        %v494 = vunpack.c.l.b16 %v478
        %v495 = vunpack.c.l.b16 %v479
        %v496 = vunpack.c.l.b16 %v480
        %v497 = vunpack.c.l.b16 %v481
        %v498 = vunpack.c.l.b16 %v482
        %v499 = vunpack.c.l.b16 %v483
        %v500 = vunpack.c.l.b16 %v484
        %v501 = vpack.c.b16 %v494, %v493
        %v502 = vpack.c.b16 %v496, %v495
        %v503 = vpack.c.b16 %v498, %v497
        %v504 = vpack.c.b16 %v500, %v499
        %vm509 = vcmask 523264
        %v511 = vsel %vm509, %v473, 0
        %v514 = vsel %vm509, %v474, 0
        %v517 = vsel %vm509, %v475, 0
        %v520 = vsel %vm509, %v476, 0
        %522 = vmatpush.bf16.msra.mxu0 0
        %523 = vmatpush.bf16.msra.mxu0 0
        %524 = vmatpush.bf16.msra.mxu0 0
        %525 = vmatpush.bf16.msra.mxu0 0
        %526 = vmatpush.bf16.msra.mxu0 %v504
        %527 = vmatpush.bf16.msra.mxu0 %v503
        %528 = vmatpush.bf16.msra.mxu0 %v502
        %529 = vmatpush.bf16.msra.mxu0 %v501
        %530 = vmatmul.bf16.gmra.mxu0 %v511
        %v531 = vpop.f32.mrf.mxu0
        %v532 = vadd.f32 0.0, %v531
        %v533 = vpop.f32.mrf.mxu0
        %v534 = vadd.f32 0.0, %v533
        %535 = vmatmul.bf16.gmra.mxu0 %v514
        %v536 = vpop.f32.mrf.mxu0
        %v537 = vadd.f32 0.0, %v536
        %v538 = vpop.f32.mrf.mxu0
        %v539 = vadd.f32 0.0, %v538
        %540 = vmatmul.bf16.gmra.mxu0 %v517
        %v541 = vpop.f32.mrf.mxu0
        %v542 = vadd.f32 0.0, %v541
        %v543 = vpop.f32.mrf.mxu0
        %v544 = vadd.f32 0.0, %v543
        %545 = vmatmul.bf16.gmra.mxu0 %v520
        %v546 = vpop.f32.mrf.mxu0
        %v547 = vadd.f32 0.0, %v546
        %v548 = vpop.f32.mrf.mxu0
        %v549 = vadd.f32 0.0, %v548
        %550 = vdwg.mxu0
        %v551 = vld [vmem:[#allocation7] sm:$0x1]
        %v552 = vperm.slane %v551, 0
        %v553 = vmul.f32 %v532, %v552
        %v554 = vmul.f32 %v534, %v552
        %v555 = vmul.f32 %v537, %v552
        %v556 = vmul.f32 %v539, %v552
        %v557 = vmul.f32 %v542, %v552
        %v558 = vmul.f32 %v544, %v552
        %v559 = vmul.f32 %v547, %v552
        %v560 = vmul.f32 %v549, %v552
        %v561 = vld [vmem:[#allocation7 + $0x1] sm:$0x1]
        %v562 = vperm.slane %v561, 0
        %v563 = vadd.f32 %v553, %v562
        %v564 = vadd.f32 %v554, %v562
        %v565 = vadd.f32 %v555, %v562
        %v566 = vadd.f32 %v556, %v562
        %v567 = vadd.f32 %v557, %v562
        %v568 = vadd.f32 %v558, %v562
        %v569 = vadd.f32 %v559, %v562
        %v570 = vadd.f32 %v560, %v562
        %v571 = vmax.f32 %v563, 0.0
        %v572 = vmax.f32 %v564, 0.0
        %v573 = vmax.f32 %v565, 0.0
        %v574 = vmax.f32 %v566, 0.0
        %v575 = vmax.f32 %v567, 0.0
        %v576 = vmax.f32 %v568, 0.0
        %v577 = vmax.f32 %v569, 0.0
        %v578 = vmax.f32 %v570, 0.0
        %v579 = vpack.c.bf16 %v572, %v571
        %v580 = vpack.c.bf16 %v574, %v573
        %v581 = vpack.c.bf16 %v576, %v575
        %v582 = vpack.c.bf16 %v578, %v577
        %v583 = vld [vmem:[#allocation9] sm:$0xff]
        %v584 = vld [vmem:[#allocation9 + $0x8] sm:$0xff]
        %v585 = vld [vmem:[#allocation9 + $0x10] sm:$0xff]
        %v586 = vld [vmem:[#allocation9 + $0x18] sm:$0xff]
        %v587 = vld [vmem:[#allocation9 + $0x20] sm:$0xff]
        %v588 = vld [vmem:[#allocation9 + $0x28] sm:$0xff]
        %v589 = vld [vmem:[#allocation9 + $0x30] sm:$0xff]
        %v590 = vld [vmem:[#allocation9 + $0x38] sm:$0xff]
        %v591 = vld [vmem:[#allocation9 + $0x40] sm:$0xff]
        %v592 = vld [vmem:[#allocation9 + $0x48] sm:$0xff]
        %v593 = vld [vmem:[#allocation9 + $0x50] sm:$0xff]
        %v594 = vld [vmem:[#allocation9 + $0x58] sm:$0xff]
        %v595 = vld [vmem:[#allocation9 + $0x60] sm:$0xff]
        %v596 = vld [vmem:[#allocation9 + $0x68] sm:$0xff]
        %v597 = vld [vmem:[#allocation9 + $0x70] sm:$0xff]
        %v598 = vld [vmem:[#allocation9 + $0x78] sm:$0xff]
        %v615 = vunpack.c.l.b16 %v583
        %v616 = vunpack.c.h.b16 %v583
        %v617 = vunpack.c.l.b16 %v584
        %v618 = vunpack.c.h.b16 %v584
        %v619 = vunpack.c.l.b16 %v585
        %v620 = vunpack.c.h.b16 %v585
        %v621 = vunpack.c.l.b16 %v586
        %v622 = vunpack.c.h.b16 %v586
        %v623 = vunpack.c.l.b16 %v587
        %v624 = vunpack.c.h.b16 %v587
        %v625 = vunpack.c.l.b16 %v588
        %v626 = vunpack.c.h.b16 %v588
        %v627 = vunpack.c.l.b16 %v589
        %v628 = vunpack.c.h.b16 %v589
        %v629 = vunpack.c.l.b16 %v590
        %v630 = vunpack.c.h.b16 %v590
        %v631 = vunpack.c.l.b16 %v591
        %v632 = vunpack.c.h.b16 %v591
        %v633 = vunpack.c.l.b16 %v592
        %v634 = vunpack.c.h.b16 %v592
        %v635 = vunpack.c.l.b16 %v593
        %v636 = vunpack.c.h.b16 %v593
        %v637 = vunpack.c.l.b16 %v594
        %v638 = vunpack.c.h.b16 %v594
        %v639 = vunpack.c.l.b16 %v595
        %v640 = vunpack.c.h.b16 %v595
        %v641 = vunpack.c.l.b16 %v596
        %v642 = vunpack.c.h.b16 %v596
        %v643 = vunpack.c.l.b16 %v597
        %v644 = vunpack.c.h.b16 %v597
        %v645 = vunpack.c.l.b16 %v598
        %v646 = vunpack.c.h.b16 %v598
        %v647 = vpack.c.b16 %v617, %v615
        %v648 = vpack.c.b16 %v618, %v616
        %v649 = vpack.c.b16 %v621, %v619
        %v650 = vpack.c.b16 %v622, %v620
        %v651 = vpack.c.b16 %v625, %v623
        %v652 = vpack.c.b16 %v626, %v624
        %v653 = vpack.c.b16 %v629, %v627
        %v654 = vpack.c.b16 %v630, %v628
        %v655 = vpack.c.b16 %v633, %v631
        %v656 = vpack.c.b16 %v634, %v632
        %v657 = vpack.c.b16 %v637, %v635
        %v658 = vpack.c.b16 %v638, %v636
        %v659 = vpack.c.b16 %v641, %v639
        %v660 = vpack.c.b16 %v642, %v640
        %v661 = vpack.c.b16 %v645, %v643
        %v662 = vpack.c.b16 %v646, %v644
        %679 = vmatpush.bf16.msra.mxu0 %v661
        %680 = vmatpush.bf16.msra.mxu0 %v659
        %681 = vmatpush.bf16.msra.mxu0 %v657
        %682 = vmatpush.bf16.msra.mxu0 %v655
        %683 = vmatpush.bf16.msra.mxu0 %v653
        %684 = vmatpush.bf16.msra.mxu0 %v651
        %685 = vmatpush.bf16.msra.mxu0 %v649
        %686 = vmatpush.bf16.msra.mxu0 %v647
        %687 = vmatmul.bf16.gmra.mxu0 %v579
        %v688 = vpop.f32.mrf.mxu0
        %v689 = vadd.f32 0.0, %v688
        %v690 = vpop.f32.mrf.mxu0
        %v691 = vadd.f32 0.0, %v690
        %692 = vmatmul.bf16.gmra.mxu0 %v580
        %v693 = vpop.f32.mrf.mxu0
        %v694 = vadd.f32 0.0, %v693
        %v695 = vpop.f32.mrf.mxu0
        %v696 = vadd.f32 0.0, %v695
        %697 = vmatmul.bf16.gmra.mxu0 %v581
        %v698 = vpop.f32.mrf.mxu0
        %v699 = vadd.f32 0.0, %v698
        %v700 = vpop.f32.mrf.mxu0
        %v701 = vadd.f32 0.0, %v700
        %702 = vmatmul.bf16.gmra.mxu0 %v582
        %v703 = vpop.f32.mrf.mxu0
        %v704 = vadd.f32 0.0, %v703
        %v705 = vpop.f32.mrf.mxu0
        %v706 = vadd.f32 0.0, %v705
        %707 = vdwg.mxu0
        %708 = vmatpush.bf16.msra.mxu0 %v662
        %709 = vmatpush.bf16.msra.mxu0 %v660
        %710 = vmatpush.bf16.msra.mxu0 %v658
        %711 = vmatpush.bf16.msra.mxu0 %v656
        %712 = vmatpush.bf16.msra.mxu0 %v654
        %713 = vmatpush.bf16.msra.mxu0 %v652
        %714 = vmatpush.bf16.msra.mxu0 %v650
        %715 = vmatpush.bf16.msra.mxu0 %v648
        %716 = vmatmul.bf16.gmra.mxu0 %v579
        %v717 = vpop.f32.mrf.mxu0
        %v718 = vadd.f32 0.0, %v717
        %v719 = vpop.f32.mrf.mxu0
        %v720 = vadd.f32 0.0, %v719
        %721 = vmatmul.bf16.gmra.mxu0 %v580
        %v722 = vpop.f32.mrf.mxu0
        %v723 = vadd.f32 0.0, %v722
        %v724 = vpop.f32.mrf.mxu0
        %v725 = vadd.f32 0.0, %v724
        %726 = vmatmul.bf16.gmra.mxu0 %v581
        %v727 = vpop.f32.mrf.mxu0
        %v728 = vadd.f32 0.0, %v727
        %v729 = vpop.f32.mrf.mxu0
        %v730 = vadd.f32 0.0, %v729
        %731 = vmatmul.bf16.gmra.mxu0 %v582
        %v732 = vpop.f32.mrf.mxu0
        %v733 = vadd.f32 0.0, %v732
        %v734 = vpop.f32.mrf.mxu0
        %v735 = vadd.f32 0.0, %v734
        %736 = vdwg.mxu0
        %v737 = vld [vmem:[#allocation10] ss:$2 sm:$0x3]
        %v739 = vperm.slane %v737, 0
        %v740 = vperm.slane %v737, 1
        %v743 = vmul.f32 %v689, %v739
        %v744 = vmul.f32 %v718, %v740
        %v745 = vmul.f32 %v691, %v739
        %v746 = vmul.f32 %v720, %v740
        %v747 = vmul.f32 %v694, %v739
        %v748 = vmul.f32 %v723, %v740
        %v749 = vmul.f32 %v696, %v739
        %v750 = vmul.f32 %v725, %v740
        %v751 = vmul.f32 %v699, %v739
        %v752 = vmul.f32 %v728, %v740
        %v753 = vmul.f32 %v701, %v739
        %v754 = vmul.f32 %v730, %v740
        %v755 = vmul.f32 %v704, %v739
        %v756 = vmul.f32 %v733, %v740
        %v757 = vmul.f32 %v706, %v739
        %v758 = vmul.f32 %v735, %v740
        %s759 = scalar_lea.vmem [#allocation10], 1
        %v760 = vld [vmem:[%s759] ss:$2 sm:$0x3]
        %v762 = vperm.slane %v760, 0
        %v763 = vperm.slane %v760, 1
        %v766 = vadd.f32 %v743, %v762
        %v767 = vadd.f32 %v744, %v763
        %v768 = vadd.f32 %v745, %v762
        %v769 = vadd.f32 %v746, %v763
        %v770 = vadd.f32 %v747, %v762
        %v771 = vadd.f32 %v748, %v763
        %v772 = vadd.f32 %v749, %v762
        %v773 = vadd.f32 %v750, %v763
        %v774 = vadd.f32 %v751, %v762
        %v775 = vadd.f32 %v752, %v763
        %v776 = vadd.f32 %v753, %v762
        %v777 = vadd.f32 %v754, %v763
        %v778 = vadd.f32 %v755, %v762
        %v779 = vadd.f32 %v756, %v763
        %v780 = vadd.f32 %v757, %v762
        %v781 = vadd.f32 %v758, %v763
        %v782 = vmax.f32 %v766, 0.0
        %v783 = vmax.f32 %v767, 0.0
        %v784 = vmax.f32 %v768, 0.0
        %v785 = vmax.f32 %v769, 0.0
        %v786 = vmax.f32 %v770, 0.0
        %v787 = vmax.f32 %v771, 0.0
        %v788 = vmax.f32 %v772, 0.0
        %v789 = vmax.f32 %v773, 0.0
        %v790 = vmax.f32 %v774, 0.0
        %v791 = vmax.f32 %v775, 0.0
        %v792 = vmax.f32 %v776, 0.0
        %v793 = vmax.f32 %v777, 0.0
        %v794 = vmax.f32 %v778, 0.0
        %v795 = vmax.f32 %v779, 0.0
        %v796 = vmax.f32 %v780, 0.0
        %v797 = vmax.f32 %v781, 0.0
        %v798 = vmax.f32 %v782, %v786
        %v799 = vmax.f32 %v784, %v788
        %v800 = vmax.f32 %v798, %v790
        %v801 = vmax.f32 %v799, %v792
        %v802 = vmax.f32 %v800, %v794
        %v803 = vmax.f32 %v801, %v796
        %v804 = vmax.f32 %v802, %v803
        %v805 = vrot.slane %v804, 4
        %v806 = vmax.f32 %v804, %v805
        %v807 = vrot.slane %v806, 2
        %v808 = vmax.f32 %v806, %v807
        %v809 = vrot.slane %v808, 1
        %v810 = vmax.f32 %v808, %v809
        %v811 = vmax.f32 %v783, %v787
        %v812 = vmax.f32 %v785, %v789
        %v813 = vmax.f32 %v811, %v791
        %v814 = vmax.f32 %v812, %v793
        %v815 = vmax.f32 %v813, %v795
        %v816 = vmax.f32 %v814, %v797
        %v817 = vmax.f32 %v815, %v816
        %v818 = vrot.slane %v817, 4
        %v819 = vmax.f32 %v817, %v818
        %v820 = vrot.slane %v819, 2
        %v821 = vmax.f32 %v819, %v820
        %v822 = vrot.slane %v821, 1
        %v823 = vmax.f32 %v821, %v822
        %v826 = vrot.slane %v823, 7
        %vm827 = vcmask 1040384
        %v828 = vsel %vm827, %v810, %v826
        %v830 = vlaneseq
        %vm831 = vcmp.ge.s32.totalorder %v830, 0
        %vm832 = vcmp.lt.s32.totalorder %v830, 256
        %vm833 = vmand %vm831, %vm832
        %834 = vst.msk [vmem:[%s368] sm:$0x3] %vm833, %v828
        %p835 = scmp.lt.s32.totalorder %s22, 1
        %s836 = scalar_select %p835, %s22, 1
        %s837 = smul.addr %s836, 2
        %s838 = scalar_lea.vmem %s7, %s837
        // Predicated region
        $region73: #{pointnet_seg_forward.2} parent=47 // pred_check
          %p839 = pneg %p192
        $region74: #{pointnet_seg_forward.2} parent=47 // pred_check_branch
          %841 = sbr.rel (%p839) target = $region76
        $region75: #{pointnet_seg_forward.2} parent=47 // pred_region
          _
        $region76: #{pointnet_seg_forward.2} parent=47 // pred_fallthru
          _
      $region48: #{pointnet_seg_forward.2} parent=5 // pred_fallthru
        _
      %p842 = scmp.le.s32.totalorder 2, %s17
      // Predicated region
      $region77: #{pointnet_seg_forward.2} parent=5 // pred_check
        %p843 = pneg %p842
      $region78: #{pointnet_seg_forward.2} parent=5 // pred_check_branch
        %845 = sbr.rel (%p843) target = $region80
      $region79: #{pointnet_seg_forward.2} parent=5 // pred_region
        %s846 = ssub.s32 %s17, 2
        // Predicated region
        $region81: #{pointnet_seg_forward.2} parent=79 // pred_check
          %p847 = pneg %p198
        $region82: #{pointnet_seg_forward.2} parent=79 // pred_check_branch
          %849 = sbr.rel (%p847) target = $region84
        $region83: #{pointnet_seg_forward.2} parent=79 // pred_region
          %p850 = scmp.lt.s32.totalorder %s23, 1
          %s851 = scalar_select %p850, %s23, 1
          %s852 = smul.addr %s851, 2
          %s853 = scalar_lea.vmem %s7, %s852
        $region84: #{pointnet_seg_forward.2} parent=79 // pred_fallthru
          _
      $region80: #{pointnet_seg_forward.2} parent=5 // pred_fallthru
        _
    $region6: #{pointnet_seg_forward.2} parent=1 // loop_footer
      %s21 = sadd.s32 1, %s17
    $region7: #{pointnet_seg_forward.2} parent=1 // loop_footer_branch
      %16 = sbr.rel target = $region3
    $region8: #{pointnet_seg_forward.2} parent=1 // loop_exit
      _
    %854 = vsyncpa [#allocation3], 1
    %s855 = scalar_lea.sflag [#allocation3], 1
    %856 = vsyncpa %s855, 1
    %857 = vsyncpa [#allocation5], 1
    %858 = vsyncpa [#allocation8], 1
    %859 = vsyncpa [#allocation11], 1

// kernel: pointnet_seg_forward.3
$region0: #{pointnet_seg_forward.3}
  #allocation0 [shape = 'u32[]', space=smem, size = 0x4, offset = 0x4, fixed_abs, tag = 'smem constant byte address 0x4 - core index']
  #allocation1 [shape = 'u32[72,128]{1,0:T(1,128)}', space=vmem, size = 0x9000, scoped, tag = 'internal scratch']
  %s0 = inlined_call_operand.vmem [shape: bf16[2,64,8], index: 0, kind: input, shape index: {}]
  %s1 = inlined_call_operand.vmem [shape: bf16[2,8,64], index: 1, kind: input, shape index: {}]
  %s2 = inlined_call_operand.hbm [shape: f32[2,64], index: 2, kind: input, shape index: {}]
  %s3 = inlined_call_operand.hbm [shape: bf16[64,64], index: 3, kind: input, shape index: {}]
  %s4 = inlined_call_operand.hbm [shape: f32[2,64], index: 4, kind: input, shape index: {}]
  %s5 = inlined_call_operand.hbm [shape: bf16[64,128], index: 5, kind: input, shape index: {}]
  %s6 = inlined_call_operand.hbm [shape: f32[2,128], index: 6, kind: input, shape index: {}]
  %s7 = inlined_call_operand.hbm [shape: bf16[128,256], index: 7, kind: input, shape index: {}]
  %s8 = inlined_call_operand.hbm [shape: f32[2,256], index: 8, kind: input, shape index: {}]
  %s9 = inlined_call_operand.hbm [shape: bf16[256,128], index: 9, kind: input, shape index: {}]
  %s10 = inlined_call_operand.hbm [shape: f32[2,128], index: 10, kind: input, shape index: {}]
  %s11 = inlined_call_operand.vmem [shape: bf16[128,64], index: 11, kind: input, shape index: {}]
  %s12 = inlined_call_operand.hbm [shape: f32[2,64], index: 12, kind: input, shape index: {}]
  %s13 = inlined_call_operand.hbm [shape: bf16[64,4096], index: 13, kind: input, shape index: {}]
  %s14 = inlined_call_operand.hbm [shape: bf16[64,4096], index: 14, kind: input, shape index: {}]
  %s15 = inlined_call_operand.hbm [shape: bf16[4096,256], index: 15, kind: input, shape index: {}]
  %s16 = inlined_call_operand.hbm [shape: f32[64,256], index: 16, kind: input, shape index: {}]
  %s17 = inlined_call_operand.hbm [shape: f32[2,128], index: 17, kind: input, shape index: {}]
  %s18 = inlined_call_operand.vmem [shape: bf16[128,96], index: 18, kind: input, shape index: {}]
  %s19 = inlined_call_operand.hbm [shape: f32[2,96], index: 19, kind: input, shape index: {}]
  %s20 = inlined_call_operand.hbm [shape: bf16[96,128], index: 20, kind: input, shape index: {}]
  %s21 = inlined_call_operand.hbm [shape: f32[2,128], index: 21, kind: input, shape index: {}]
  %s22 = inlined_call_operand.hbm [shape: bf16[128,128], index: 22, kind: input, shape index: {}]
  %s23 = inlined_call_operand.hbm [shape: f32[2,128], index: 23, kind: input, shape index: {}]
  %s24 = inlined_call_operand.vmem [shape: bf16[128,64], index: 24, kind: input, shape index: {}]
  %s25 = inlined_call_operand.hbm [shape: f32[2,64], index: 25, kind: input, shape index: {}]
  %s26 = inlined_call_operand.vmem [shape: bf16[64,5], index: 26, kind: input, shape index: {}]
  %s27 = inlined_call_operand.hbm [shape: f32[1,5], index: 27, kind: input, shape index: {}]
  %s28 = inlined_call_operand.vmem [shape: f32[2,64,5], index: 28, kind: output, shape index: {}]
  %s29 = sld [smem:[#allocation0]]
  $region233: #{pointnet_seg_forward.3} parent=0
    _
  %s31 = ssub.s32 1, %s29
  %s32 = scalar_select 0, %s31, %s29
  $region1: #{pointnet_seg_forward.3} parent=0
    #allocation2 [shape = 'u8[1024]{0}', space=vmem, size = 0x400, scoped, tag = 'input window, operand 2, single buffered']
    #allocation3 [shape = 's32[2]{0}', space=sflag, size = 0x8, scoped, tag = 'scoped memory for pointnet_seg_forward.3']
    #allocation4 [shape = 'u8[16384]{0}', space=vmem, size = 0x4000, scoped, tag = 'input window, operand 3, single buffered']
    #allocation5 [shape = 's32[1]{0}', space=sflag, size = 0x4, scoped, tag = 'scoped memory for pointnet_seg_forward.3']
    #allocation6 [shape = 'u8[1024]{0}', space=vmem, size = 0x400, scoped, tag = 'input window, operand 4, single buffered']
    #allocation7 [shape = 'u8[16384]{0}', space=vmem, size = 0x4000, scoped, tag = 'input window, operand 5, single buffered']
    #allocation8 [shape = 's32[1]{0}', space=sflag, size = 0x4, scoped, tag = 'scoped memory for pointnet_seg_forward.3']
    #allocation9 [shape = 'u8[1024]{0}', space=vmem, size = 0x400, scoped, tag = 'input window, operand 6, single buffered']
    #allocation10 [shape = 'u8[65536]{0}', space=vmem, size = 0x10000, scoped, tag = 'input window, operand 7, single buffered']
    #allocation11 [shape = 's32[1]{0}', space=sflag, size = 0x4, scoped, tag = 'scoped memory for pointnet_seg_forward.3']
    #allocation12 [shape = 'u8[2048]{0}', space=vmem, size = 0x800, scoped, tag = 'input window, operand 8, single buffered']
    #allocation13 [shape = 'u8[65536]{0}', space=vmem, size = 0x10000, scoped, tag = 'input window, operand 9, single buffered']
    #allocation14 [shape = 's32[1]{0}', space=sflag, size = 0x4, scoped, tag = 'scoped memory for pointnet_seg_forward.3']
    #allocation15 [shape = 'u8[1024]{0}', space=vmem, size = 0x400, scoped, tag = 'input window, operand 10, single buffered']
    #allocation16 [shape = 'u8[1024]{0}', space=vmem, size = 0x400, scoped, tag = 'input window, operand 12, single buffered']
    #allocation17 [shape = 's32[1]{0}', space=sflag, size = 0x4, scoped, tag = 'scoped memory for pointnet_seg_forward.3']
    #allocation18 [shape = 'u8[524288]{0}', space=vmem, size = 0x80000, scoped, tag = 'input window, operand 13, single buffered']
    #allocation19 [shape = 'u8[524288]{0}', space=vmem, size = 0x80000, scoped, tag = 'input window, operand 14, single buffered']
    #allocation20 [shape = 's32[1]{0}', space=sflag, size = 0x4, scoped, tag = 'scoped memory for pointnet_seg_forward.3']
    #allocation21 [shape = 'u8[2097152]{0}', space=vmem, size = 0x200000, scoped, tag = 'input window, operand 15, single buffered']
    #allocation22 [shape = 'u8[65536]{0}', space=vmem, size = 0x10000, scoped, tag = 'input window, operand 16, single buffered']
    #allocation23 [shape = 's32[1]{0}', space=sflag, size = 0x4, scoped, tag = 'scoped memory for pointnet_seg_forward.3']
    #allocation24 [shape = 'u8[1024]{0}', space=vmem, size = 0x400, scoped, tag = 'input window, operand 17, single buffered']
    #allocation25 [shape = 'u8[1024]{0}', space=vmem, size = 0x400, scoped, tag = 'input window, operand 19, single buffered']
    #allocation26 [shape = 's32[1]{0}', space=sflag, size = 0x4, scoped, tag = 'scoped memory for pointnet_seg_forward.3']
    #allocation27 [shape = 'u8[24576]{0}', space=vmem, size = 0x6000, scoped, tag = 'input window, operand 20, single buffered']
    #allocation28 [shape = 'u8[1024]{0}', space=vmem, size = 0x400, scoped, tag = 'input window, operand 21, single buffered']
    #allocation29 [shape = 's32[1]{0}', space=sflag, size = 0x4, scoped, tag = 'scoped memory for pointnet_seg_forward.3']
    #allocation30 [shape = 'u8[32768]{0}', space=vmem, size = 0x8000, scoped, tag = 'input window, operand 22, single buffered']
    #allocation31 [shape = 'u8[1024]{0}', space=vmem, size = 0x400, scoped, tag = 'input window, operand 23, single buffered']
    #allocation32 [shape = 's32[1]{0}', space=sflag, size = 0x4, scoped, tag = 'scoped memory for pointnet_seg_forward.3']
    #allocation33 [shape = 'u8[1024]{0}', space=vmem, size = 0x400, scoped, tag = 'input window, operand 25, single buffered']
    #allocation34 [shape = 'u8[512]{0}', space=vmem, size = 0x400, scoped, tag = 'input window, operand 27, single buffered']
    #allocation35 [shape = 's32[1]{0}', space=sflag, size = 0x4, scoped, tag = 'scoped memory for pointnet_seg_forward.3']
    %33 = vsyncpa [#allocation3], 0
    %34 = vsyncpa [#allocation5], 0
    %35 = vsyncpa [#allocation8], 0
    %36 = vsyncpa [#allocation11], 0
    %37 = vsyncpa [#allocation14], 0
    %38 = vsyncpa [#allocation17], 0
    %39 = vsyncpa [#allocation20], 0
    %40 = vsyncpa [#allocation23], 0
    %41 = vsyncpa [#allocation26], 0
    %42 = vsyncpa [#allocation29], 0
    %43 = vsyncpa [#allocation32], 0
    %44 = vsyncpa [#allocation35], 0
    loop: start=0, step=1, limit=4
    $region2: #{pointnet_seg_forward.3} parent=1 // loop_pre_header
      _
    $region3: #{pointnet_seg_forward.3} parent=1 // loop_header
      %s46 = sphi 0, %s50
      %p47 = scmp.ge.s32.totalorder %s46, 4
      %s56 = sphi 0, %s58
      %s59 = sphi 0, %s56
      %s60 = sphi 0, %s59
      %s76 = sphi 0, %s60
      %s82 = sphi 0, %s84
      %s85 = sphi 0, %s82
      %s86 = sphi 0, %s85
      %s102 = sphi 0, %s86
      %s106 = sphi 0, %s106
      %s108 = sphi 0, %s106
      %s109 = sphi 0, %s108
      %s123 = sphi 0, %s109
      %s127 = sphi 0, %s127
      %s129 = sphi 0, %s127
      %s130 = sphi 0, %s129
      %s144 = sphi 0, %s130
      %s148 = sphi 0, %s148
      %s150 = sphi 0, %s148
      %s151 = sphi 0, %s150
      %s165 = sphi 0, %s151
      %s169 = sphi 0, %s169
      %s171 = sphi 0, %s169
      %s172 = sphi 0, %s171
      %s186 = sphi 0, %s172
      %s190 = sphi 0, %s190
      %s192 = sphi 0, %s190
      %s193 = sphi 0, %s192
      %s207 = sphi 0, %s193
      %s211 = sphi 0, %s211
      %s213 = sphi 0, %s211
      %s214 = sphi 0, %s213
      %s228 = sphi 0, %s214
      %s232 = sphi 0, %s232
      %s234 = sphi 0, %s232
      %s235 = sphi 0, %s234
      %s249 = sphi 0, %s235
      %s253 = sphi 0, %s253
      %s255 = sphi 0, %s253
      %s256 = sphi 0, %s255
      %s270 = sphi 0, %s256
      %s274 = sphi 0, %s274
      %s276 = sphi 0, %s274
      %s277 = sphi 0, %s276
      %s291 = sphi 0, %s277
      %s295 = sphi 0, %s295
      %s297 = sphi 0, %s295
      %s298 = sphi 0, %s297
      %s312 = sphi 0, %s298
      %s316 = sphi 0, %s316
      %s318 = sphi 0, %s316
      %s319 = sphi 0, %s318
      %s333 = sphi 0, %s319
      %s337 = sphi 0, %s337
      %s339 = sphi 0, %s337
      %s340 = sphi 0, %s339
      %s354 = sphi 0, %s340
      %s358 = sphi 0, %s358
      %s360 = sphi 0, %s358
      %s361 = sphi 0, %s360
      %s375 = sphi 0, %s361
      %s379 = sphi 0, %s379
      %s381 = sphi 0, %s379
      %s382 = sphi 0, %s381
      %s396 = sphi 0, %s382
      %s400 = sphi 0, %s400
      %s402 = sphi 0, %s400
      %s403 = sphi 0, %s402
      %s417 = sphi 0, %s403
      %s421 = sphi 0, %s421
      %s423 = sphi 0, %s421
      %s424 = sphi 0, %s423
      %s438 = sphi 0, %s424
      %s442 = sphi 0, %s442
      %s444 = sphi 0, %s442
      %s445 = sphi 0, %s444
      %s459 = sphi 0, %s445
      %s463 = sphi 0, %s463
      %s465 = sphi 0, %s463
      %s466 = sphi 0, %s465
      %s480 = sphi 0, %s466
      %s484 = sphi 0, %s484
      %s486 = sphi 0, %s484
      %s487 = sphi 0, %s486
      %s501 = sphi 0, %s487
      %s505 = sphi 0, %s505
      %s507 = sphi 0, %s505
      %s508 = sphi 0, %s507
      %s522 = sphi 0, %s508
      %s526 = sphi 0, %s526
      %s528 = sphi 0, %s526
      %s529 = sphi 0, %s528
      %s543 = sphi 0, %s529
      %s547 = sphi 0, %s547
      %s549 = sphi 0, %s547
      %s550 = sphi 0, %s549
      %s564 = sphi 0, %s550
      %s568 = sphi 0, %s568
      %s570 = sphi 0, %s568
      %s571 = sphi 0, %s570
      %s585 = sphi 0, %s571
      %s589 = sphi 0, %s589
      %s591 = sphi 0, %s589
      %s592 = sphi 0, %s591
      %s606 = sphi 0, %s592
      %s610 = sphi 0, %s610
      %s612 = sphi 0, %s610
      %s613 = sphi 0, %s612
      %s627 = sphi 0, %s613
      %s631 = sphi 0, %s631
      %s633 = sphi 0, %s631
      %s634 = sphi 0, %s633
      %s648 = sphi 0, %s634
      %s654 = sphi 0, %s656
      %s657 = sphi 0, %s654
      %s658 = sphi 0, %s657
      %s674 = sphi 0, %s658
    $region4: #{pointnet_seg_forward.3} parent=1 // loop_header_branch
      %49 = sbr.rel (%p47) target = $region8
    $region5: #{pointnet_seg_forward.3} parent=1 // loop_body
      %s51 = ssub.s32 %s46, 1
      %s52 = ssub.s32 %s46, 2
      %s53 = sadd.s32 %s46, 1
      %s54 = ssub.s32 %s46, %s53
      %p55 = scmp.eq.s32.totalorder %s54, 0
      %s57 = sadd.s32 %s56, 1
      %s58 = scalar_select %p55, %s56, %s57
      %p61 = pneg %p55
      %p62 = scmp.eq.s32.totalorder %s46, 1
      %p63 = por %p61, %p62
      %p64 = scmp.ne.s32.totalorder %s56, %s59
      %p65 = scmp.eq.s32.totalorder %s46, 0
      %p66 = por %p64, %p65
      %p67 = scmp.ne.s32.totalorder %s56, %s59
      %p68 = scmp.eq.s32.totalorder %s51, 1
      %p69 = por %p67, %p68
      %p70 = scmp.ne.s32.totalorder %s59, %s60
      %p71 = scmp.eq.s32.totalorder %s51, 0
      %p72 = por %p70, %p71
      %p73 = scmp.ne.s32.totalorder %s59, %s60
      %p74 = scmp.eq.s32.totalorder %s52, 1
      %p75 = por %p73, %p74
      %p77 = scmp.ne.s32.totalorder %s60, %s76
      %p78 = scmp.eq.s32.totalorder %s52, 0
      %p79 = por %p77, %p78
      %s80 = ssub.s32 %s46, %s53
      %p81 = scmp.eq.s32.totalorder %s80, 0
      %s83 = sadd.s32 %s82, 1
      %s84 = scalar_select %p81, %s82, %s83
      %p87 = pneg %p81
      %p88 = scmp.eq.s32.totalorder %s46, 1
      %p89 = por %p87, %p88
      %p90 = scmp.ne.s32.totalorder %s82, %s85
      %p91 = scmp.eq.s32.totalorder %s46, 0
      %p92 = por %p90, %p91
      %p93 = scmp.ne.s32.totalorder %s82, %s85
      %p94 = scmp.eq.s32.totalorder %s51, 1
      %p95 = por %p93, %p94
      %p96 = scmp.ne.s32.totalorder %s85, %s86
      %p97 = scmp.eq.s32.totalorder %s51, 0
      %p98 = por %p96, %p97
      %p99 = scmp.ne.s32.totalorder %s85, %s86
      %p100 = scmp.eq.s32.totalorder %s52, 1
      %p101 = por %p99, %p100
      %p103 = scmp.ne.s32.totalorder %s86, %s102
      %p104 = scmp.eq.s32.totalorder %s52, 0
      %p105 = por %p103, %p104
      %s107 = sadd.s32 %s106, 1
      %p110 = scmp.eq.s32.totalorder %s46, 1
      %p111 = scmp.ne.s32.totalorder %s106, %s108
      %p112 = scmp.eq.s32.totalorder %s46, 0
      %p113 = por %p111, %p112
      %p114 = scmp.ne.s32.totalorder %s106, %s108
      %p115 = scmp.eq.s32.totalorder %s51, 1
      %p116 = por %p114, %p115
      %p117 = scmp.ne.s32.totalorder %s108, %s109
      %p118 = scmp.eq.s32.totalorder %s51, 0
      %p119 = por %p117, %p118
      %p120 = scmp.ne.s32.totalorder %s108, %s109
      %p121 = scmp.eq.s32.totalorder %s52, 1
      %p122 = por %p120, %p121
      %p124 = scmp.ne.s32.totalorder %s109, %s123
      %p125 = scmp.eq.s32.totalorder %s52, 0
      %p126 = por %p124, %p125
      %s128 = sadd.s32 %s127, 1
      %p131 = scmp.eq.s32.totalorder %s46, 1
      %p132 = scmp.ne.s32.totalorder %s127, %s129
      %p133 = scmp.eq.s32.totalorder %s46, 0
      %p134 = por %p132, %p133
      %p135 = scmp.ne.s32.totalorder %s127, %s129
      %p136 = scmp.eq.s32.totalorder %s51, 1
      %p137 = por %p135, %p136
      %p138 = scmp.ne.s32.totalorder %s129, %s130
      %p139 = scmp.eq.s32.totalorder %s51, 0
      %p140 = por %p138, %p139
      %p141 = scmp.ne.s32.totalorder %s129, %s130
      %p142 = scmp.eq.s32.totalorder %s52, 1
      %p143 = por %p141, %p142
      %p145 = scmp.ne.s32.totalorder %s130, %s144
      %p146 = scmp.eq.s32.totalorder %s52, 0
      %p147 = por %p145, %p146
      %s149 = sadd.s32 %s148, 1
      %p152 = scmp.eq.s32.totalorder %s46, 1
      %p153 = scmp.ne.s32.totalorder %s148, %s150
      %p154 = scmp.eq.s32.totalorder %s46, 0
      %p155 = por %p153, %p154
      %p156 = scmp.ne.s32.totalorder %s148, %s150
      %p157 = scmp.eq.s32.totalorder %s51, 1
      %p158 = por %p156, %p157
      %p159 = scmp.ne.s32.totalorder %s150, %s151
      %p160 = scmp.eq.s32.totalorder %s51, 0
      %p161 = por %p159, %p160
      %p162 = scmp.ne.s32.totalorder %s150, %s151
      %p163 = scmp.eq.s32.totalorder %s52, 1
      %p164 = por %p162, %p163
      %p166 = scmp.ne.s32.totalorder %s151, %s165
      %p167 = scmp.eq.s32.totalorder %s52, 0
      %p168 = por %p166, %p167
      %s170 = sadd.s32 %s169, 1
      %p173 = scmp.eq.s32.totalorder %s46, 1
      %p174 = scmp.ne.s32.totalorder %s169, %s171
      %p175 = scmp.eq.s32.totalorder %s46, 0
      %p176 = por %p174, %p175
      %p177 = scmp.ne.s32.totalorder %s169, %s171
      %p178 = scmp.eq.s32.totalorder %s51, 1
      %p179 = por %p177, %p178
      %p180 = scmp.ne.s32.totalorder %s171, %s172
      %p181 = scmp.eq.s32.totalorder %s51, 0
      %p182 = por %p180, %p181
      %p183 = scmp.ne.s32.totalorder %s171, %s172
      %p184 = scmp.eq.s32.totalorder %s52, 1
      %p185 = por %p183, %p184
      %p187 = scmp.ne.s32.totalorder %s172, %s186
      %p188 = scmp.eq.s32.totalorder %s52, 0
      %p189 = por %p187, %p188
      %s191 = sadd.s32 %s190, 1
      %p194 = scmp.eq.s32.totalorder %s46, 1
      %p195 = scmp.ne.s32.totalorder %s190, %s192
      %p196 = scmp.eq.s32.totalorder %s46, 0
      %p197 = por %p195, %p196
      %p198 = scmp.ne.s32.totalorder %s190, %s192
      %p199 = scmp.eq.s32.totalorder %s51, 1
      %p200 = por %p198, %p199
      %p201 = scmp.ne.s32.totalorder %s192, %s193
      %p202 = scmp.eq.s32.totalorder %s51, 0
      %p203 = por %p201, %p202
      %p204 = scmp.ne.s32.totalorder %s192, %s193
      %p205 = scmp.eq.s32.totalorder %s52, 1
      %p206 = por %p204, %p205
      %p208 = scmp.ne.s32.totalorder %s193, %s207
      %p209 = scmp.eq.s32.totalorder %s52, 0
      %p210 = por %p208, %p209
      %s212 = sadd.s32 %s211, 1
      %p215 = scmp.eq.s32.totalorder %s46, 1
      %p216 = scmp.ne.s32.totalorder %s211, %s213
      %p217 = scmp.eq.s32.totalorder %s46, 0
      %p218 = por %p216, %p217
      %p219 = scmp.ne.s32.totalorder %s211, %s213
      %p220 = scmp.eq.s32.totalorder %s51, 1
      %p221 = por %p219, %p220
      %p222 = scmp.ne.s32.totalorder %s213, %s214
      %p223 = scmp.eq.s32.totalorder %s51, 0
      %p224 = por %p222, %p223
      %p225 = scmp.ne.s32.totalorder %s213, %s214
      %p226 = scmp.eq.s32.totalorder %s52, 1
      %p227 = por %p225, %p226
      %p229 = scmp.ne.s32.totalorder %s214, %s228
      %p230 = scmp.eq.s32.totalorder %s52, 0
      %p231 = por %p229, %p230
      %s233 = sadd.s32 %s232, 1
      %p236 = scmp.eq.s32.totalorder %s46, 1
      %p237 = scmp.ne.s32.totalorder %s232, %s234
      %p238 = scmp.eq.s32.totalorder %s46, 0
      %p239 = por %p237, %p238
      %p240 = scmp.ne.s32.totalorder %s232, %s234
      %p241 = scmp.eq.s32.totalorder %s51, 1
      %p242 = por %p240, %p241
      %p243 = scmp.ne.s32.totalorder %s234, %s235
      %p244 = scmp.eq.s32.totalorder %s51, 0
      %p245 = por %p243, %p244
      %p246 = scmp.ne.s32.totalorder %s234, %s235
      %p247 = scmp.eq.s32.totalorder %s52, 1
      %p248 = por %p246, %p247
      %p250 = scmp.ne.s32.totalorder %s235, %s249
      %p251 = scmp.eq.s32.totalorder %s52, 0
      %p252 = por %p250, %p251
      %s254 = sadd.s32 %s253, 1
      %p257 = scmp.eq.s32.totalorder %s46, 1
      %p258 = scmp.ne.s32.totalorder %s253, %s255
      %p259 = scmp.eq.s32.totalorder %s46, 0
      %p260 = por %p258, %p259
      %p261 = scmp.ne.s32.totalorder %s253, %s255
      %p262 = scmp.eq.s32.totalorder %s51, 1
      %p263 = por %p261, %p262
      %p264 = scmp.ne.s32.totalorder %s255, %s256
      %p265 = scmp.eq.s32.totalorder %s51, 0
      %p266 = por %p264, %p265
      %p267 = scmp.ne.s32.totalorder %s255, %s256
      %p268 = scmp.eq.s32.totalorder %s52, 1
      %p269 = por %p267, %p268
      %p271 = scmp.ne.s32.totalorder %s256, %s270
      %p272 = scmp.eq.s32.totalorder %s52, 0
      %p273 = por %p271, %p272
      %s275 = sadd.s32 %s274, 1
      %p278 = scmp.eq.s32.totalorder %s46, 1
      %p279 = scmp.ne.s32.totalorder %s274, %s276
      %p280 = scmp.eq.s32.totalorder %s46, 0
      %p281 = por %p279, %p280
      %p282 = scmp.ne.s32.totalorder %s274, %s276
      %p283 = scmp.eq.s32.totalorder %s51, 1
      %p284 = por %p282, %p283
      %p285 = scmp.ne.s32.totalorder %s276, %s277
      %p286 = scmp.eq.s32.totalorder %s51, 0
      %p287 = por %p285, %p286
      %p288 = scmp.ne.s32.totalorder %s276, %s277
      %p289 = scmp.eq.s32.totalorder %s52, 1
      %p290 = por %p288, %p289
      %p292 = scmp.ne.s32.totalorder %s277, %s291
      %p293 = scmp.eq.s32.totalorder %s52, 0
      %p294 = por %p292, %p293
      %s296 = sadd.s32 %s295, 1
      %p299 = scmp.eq.s32.totalorder %s46, 1
      %p300 = scmp.ne.s32.totalorder %s295, %s297
      %p301 = scmp.eq.s32.totalorder %s46, 0
      %p302 = por %p300, %p301
      %p303 = scmp.ne.s32.totalorder %s295, %s297
      %p304 = scmp.eq.s32.totalorder %s51, 1
      %p305 = por %p303, %p304
      %p306 = scmp.ne.s32.totalorder %s297, %s298
      %p307 = scmp.eq.s32.totalorder %s51, 0
      %p308 = por %p306, %p307
      %p309 = scmp.ne.s32.totalorder %s297, %s298
      %p310 = scmp.eq.s32.totalorder %s52, 1
      %p311 = por %p309, %p310
      %p313 = scmp.ne.s32.totalorder %s298, %s312
      %p314 = scmp.eq.s32.totalorder %s52, 0
      %p315 = por %p313, %p314
      %s317 = sadd.s32 %s316, 1
      %p320 = scmp.eq.s32.totalorder %s46, 1
      %p321 = scmp.ne.s32.totalorder %s316, %s318
      %p322 = scmp.eq.s32.totalorder %s46, 0
      %p323 = por %p321, %p322
      %p324 = scmp.ne.s32.totalorder %s316, %s318
      %p325 = scmp.eq.s32.totalorder %s51, 1
      %p326 = por %p324, %p325
      %p327 = scmp.ne.s32.totalorder %s318, %s319
      %p328 = scmp.eq.s32.totalorder %s51, 0
      %p329 = por %p327, %p328
      %p330 = scmp.ne.s32.totalorder %s318, %s319
      %p331 = scmp.eq.s32.totalorder %s52, 1
      %p332 = por %p330, %p331
      %p334 = scmp.ne.s32.totalorder %s319, %s333
      %p335 = scmp.eq.s32.totalorder %s52, 0
      %p336 = por %p334, %p335
      %s338 = sadd.s32 %s337, 1
      %p341 = scmp.eq.s32.totalorder %s46, 1
      %p342 = scmp.ne.s32.totalorder %s337, %s339
      %p343 = scmp.eq.s32.totalorder %s46, 0
      %p344 = por %p342, %p343
      %p345 = scmp.ne.s32.totalorder %s337, %s339
      %p346 = scmp.eq.s32.totalorder %s51, 1
      %p347 = por %p345, %p346
      %p348 = scmp.ne.s32.totalorder %s339, %s340
      %p349 = scmp.eq.s32.totalorder %s51, 0
      %p350 = por %p348, %p349
      %p351 = scmp.ne.s32.totalorder %s339, %s340
      %p352 = scmp.eq.s32.totalorder %s52, 1
      %p353 = por %p351, %p352
      %p355 = scmp.ne.s32.totalorder %s340, %s354
      %p356 = scmp.eq.s32.totalorder %s52, 0
      %p357 = por %p355, %p356
      %s359 = sadd.s32 %s358, 1
      %p362 = scmp.eq.s32.totalorder %s46, 1
      %p363 = scmp.ne.s32.totalorder %s358, %s360
      %p364 = scmp.eq.s32.totalorder %s46, 0
      %p365 = por %p363, %p364
      %p366 = scmp.ne.s32.totalorder %s358, %s360
      %p367 = scmp.eq.s32.totalorder %s51, 1
      %p368 = por %p366, %p367
      %p369 = scmp.ne.s32.totalorder %s360, %s361
      %p370 = scmp.eq.s32.totalorder %s51, 0
      %p371 = por %p369, %p370
      %p372 = scmp.ne.s32.totalorder %s360, %s361
      %p373 = scmp.eq.s32.totalorder %s52, 1
      %p374 = por %p372, %p373
      %p376 = scmp.ne.s32.totalorder %s361, %s375
      %p377 = scmp.eq.s32.totalorder %s52, 0
      %p378 = por %p376, %p377
      %s380 = sadd.s32 %s379, 1
      %p383 = scmp.eq.s32.totalorder %s46, 1
      %p384 = scmp.ne.s32.totalorder %s379, %s381
      %p385 = scmp.eq.s32.totalorder %s46, 0
      %p386 = por %p384, %p385
      %p387 = scmp.ne.s32.totalorder %s379, %s381
      %p388 = scmp.eq.s32.totalorder %s51, 1
      %p389 = por %p387, %p388
      %p390 = scmp.ne.s32.totalorder %s381, %s382
      %p391 = scmp.eq.s32.totalorder %s51, 0
      %p392 = por %p390, %p391
      %p393 = scmp.ne.s32.totalorder %s381, %s382
      %p394 = scmp.eq.s32.totalorder %s52, 1
      %p395 = por %p393, %p394
      %p397 = scmp.ne.s32.totalorder %s382, %s396
      %p398 = scmp.eq.s32.totalorder %s52, 0
      %p399 = por %p397, %p398
      %s401 = sadd.s32 %s400, 1
      %p404 = scmp.eq.s32.totalorder %s46, 1
      %p405 = scmp.ne.s32.totalorder %s400, %s402
      %p406 = scmp.eq.s32.totalorder %s46, 0
      %p407 = por %p405, %p406
      %p408 = scmp.ne.s32.totalorder %s400, %s402
      %p409 = scmp.eq.s32.totalorder %s51, 1
      %p410 = por %p408, %p409
      %p411 = scmp.ne.s32.totalorder %s402, %s403
      %p412 = scmp.eq.s32.totalorder %s51, 0
      %p413 = por %p411, %p412
      %p414 = scmp.ne.s32.totalorder %s402, %s403
      %p415 = scmp.eq.s32.totalorder %s52, 1
      %p416 = por %p414, %p415
      %p418 = scmp.ne.s32.totalorder %s403, %s417
      %p419 = scmp.eq.s32.totalorder %s52, 0
      %p420 = por %p418, %p419
      %s422 = sadd.s32 %s421, 1
      %p425 = scmp.eq.s32.totalorder %s46, 1
      %p426 = scmp.ne.s32.totalorder %s421, %s423
      %p427 = scmp.eq.s32.totalorder %s46, 0
      %p428 = por %p426, %p427
      %p429 = scmp.ne.s32.totalorder %s421, %s423
      %p430 = scmp.eq.s32.totalorder %s51, 1
      %p431 = por %p429, %p430
      %p432 = scmp.ne.s32.totalorder %s423, %s424
      %p433 = scmp.eq.s32.totalorder %s51, 0
      %p434 = por %p432, %p433
      %p435 = scmp.ne.s32.totalorder %s423, %s424
      %p436 = scmp.eq.s32.totalorder %s52, 1
      %p437 = por %p435, %p436
      %p439 = scmp.ne.s32.totalorder %s424, %s438
      %p440 = scmp.eq.s32.totalorder %s52, 0
      %p441 = por %p439, %p440
      %s443 = sadd.s32 %s442, 1
      %p446 = scmp.eq.s32.totalorder %s46, 1
      %p447 = scmp.ne.s32.totalorder %s442, %s444
      %p448 = scmp.eq.s32.totalorder %s46, 0
      %p449 = por %p447, %p448
      %p450 = scmp.ne.s32.totalorder %s442, %s444
      %p451 = scmp.eq.s32.totalorder %s51, 1
      %p452 = por %p450, %p451
      %p453 = scmp.ne.s32.totalorder %s444, %s445
      %p454 = scmp.eq.s32.totalorder %s51, 0
      %p455 = por %p453, %p454
      %p456 = scmp.ne.s32.totalorder %s444, %s445
      %p457 = scmp.eq.s32.totalorder %s52, 1
      %p458 = por %p456, %p457
      %p460 = scmp.ne.s32.totalorder %s445, %s459
      %p461 = scmp.eq.s32.totalorder %s52, 0
      %p462 = por %p460, %p461
      %s464 = sadd.s32 %s463, 1
      %p467 = scmp.eq.s32.totalorder %s46, 1
      %p468 = scmp.ne.s32.totalorder %s463, %s465
      %p469 = scmp.eq.s32.totalorder %s46, 0
      %p470 = por %p468, %p469
      %p471 = scmp.ne.s32.totalorder %s463, %s465
      %p472 = scmp.eq.s32.totalorder %s51, 1
      %p473 = por %p471, %p472
      %p474 = scmp.ne.s32.totalorder %s465, %s466
      %p475 = scmp.eq.s32.totalorder %s51, 0
      %p476 = por %p474, %p475
      %p477 = scmp.ne.s32.totalorder %s465, %s466
      %p478 = scmp.eq.s32.totalorder %s52, 1
      %p479 = por %p477, %p478
      %p481 = scmp.ne.s32.totalorder %s466, %s480
      %p482 = scmp.eq.s32.totalorder %s52, 0
      %p483 = por %p481, %p482
      %s485 = sadd.s32 %s484, 1
      %p488 = scmp.eq.s32.totalorder %s46, 1
      %p489 = scmp.ne.s32.totalorder %s484, %s486
      %p490 = scmp.eq.s32.totalorder %s46, 0
      %p491 = por %p489, %p490
      %p492 = scmp.ne.s32.totalorder %s484, %s486
      %p493 = scmp.eq.s32.totalorder %s51, 1
      %p494 = por %p492, %p493
      %p495 = scmp.ne.s32.totalorder %s486, %s487
      %p496 = scmp.eq.s32.totalorder %s51, 0
      %p497 = por %p495, %p496
      %p498 = scmp.ne.s32.totalorder %s486, %s487
      %p499 = scmp.eq.s32.totalorder %s52, 1
      %p500 = por %p498, %p499
      %p502 = scmp.ne.s32.totalorder %s487, %s501
      %p503 = scmp.eq.s32.totalorder %s52, 0
      %p504 = por %p502, %p503
      %s506 = sadd.s32 %s505, 1
      %p509 = scmp.eq.s32.totalorder %s46, 1
      %p510 = scmp.ne.s32.totalorder %s505, %s507
      %p511 = scmp.eq.s32.totalorder %s46, 0
      %p512 = por %p510, %p511
      %p513 = scmp.ne.s32.totalorder %s505, %s507
      %p514 = scmp.eq.s32.totalorder %s51, 1
      %p515 = por %p513, %p514
      %p516 = scmp.ne.s32.totalorder %s507, %s508
      %p517 = scmp.eq.s32.totalorder %s51, 0
      %p518 = por %p516, %p517
      %p519 = scmp.ne.s32.totalorder %s507, %s508
      %p520 = scmp.eq.s32.totalorder %s52, 1
      %p521 = por %p519, %p520
      %p523 = scmp.ne.s32.totalorder %s508, %s522
      %p524 = scmp.eq.s32.totalorder %s52, 0
      %p525 = por %p523, %p524
      %s527 = sadd.s32 %s526, 1
      %p530 = scmp.eq.s32.totalorder %s46, 1
      %p531 = scmp.ne.s32.totalorder %s526, %s528
      %p532 = scmp.eq.s32.totalorder %s46, 0
      %p533 = por %p531, %p532
      %p534 = scmp.ne.s32.totalorder %s526, %s528
      %p535 = scmp.eq.s32.totalorder %s51, 1
      %p536 = por %p534, %p535
      %p537 = scmp.ne.s32.totalorder %s528, %s529
      %p538 = scmp.eq.s32.totalorder %s51, 0
      %p539 = por %p537, %p538
      %p540 = scmp.ne.s32.totalorder %s528, %s529
      %p541 = scmp.eq.s32.totalorder %s52, 1
      %p542 = por %p540, %p541
      %p544 = scmp.ne.s32.totalorder %s529, %s543
      %p545 = scmp.eq.s32.totalorder %s52, 0
      %p546 = por %p544, %p545
      %s548 = sadd.s32 %s547, 1
      %p551 = scmp.eq.s32.totalorder %s46, 1
      %p552 = scmp.ne.s32.totalorder %s547, %s549
      %p553 = scmp.eq.s32.totalorder %s46, 0
      %p554 = por %p552, %p553
      %p555 = scmp.ne.s32.totalorder %s547, %s549
      %p556 = scmp.eq.s32.totalorder %s51, 1
      %p557 = por %p555, %p556
      %p558 = scmp.ne.s32.totalorder %s549, %s550
      %p559 = scmp.eq.s32.totalorder %s51, 0
      %p560 = por %p558, %p559
      %p561 = scmp.ne.s32.totalorder %s549, %s550
      %p562 = scmp.eq.s32.totalorder %s52, 1
      %p563 = por %p561, %p562
      %p565 = scmp.ne.s32.totalorder %s550, %s564
      %p566 = scmp.eq.s32.totalorder %s52, 0
      %p567 = por %p565, %p566
      %s569 = sadd.s32 %s568, 1
      %p572 = scmp.eq.s32.totalorder %s46, 1
      %p573 = scmp.ne.s32.totalorder %s568, %s570
      %p574 = scmp.eq.s32.totalorder %s46, 0
      %p575 = por %p573, %p574
      %p576 = scmp.ne.s32.totalorder %s568, %s570
      %p577 = scmp.eq.s32.totalorder %s51, 1
      %p578 = por %p576, %p577
      %p579 = scmp.ne.s32.totalorder %s570, %s571
      %p580 = scmp.eq.s32.totalorder %s51, 0
      %p581 = por %p579, %p580
      %p582 = scmp.ne.s32.totalorder %s570, %s571
      %p583 = scmp.eq.s32.totalorder %s52, 1
      %p584 = por %p582, %p583
      %p586 = scmp.ne.s32.totalorder %s571, %s585
      %p587 = scmp.eq.s32.totalorder %s52, 0
      %p588 = por %p586, %p587
      %s590 = sadd.s32 %s589, 1
      %p593 = scmp.eq.s32.totalorder %s46, 1
      %p594 = scmp.ne.s32.totalorder %s589, %s591
      %p595 = scmp.eq.s32.totalorder %s46, 0
      %p596 = por %p594, %p595
      %p597 = scmp.ne.s32.totalorder %s589, %s591
      %p598 = scmp.eq.s32.totalorder %s51, 1
      %p599 = por %p597, %p598
      %p600 = scmp.ne.s32.totalorder %s591, %s592
      %p601 = scmp.eq.s32.totalorder %s51, 0
      %p602 = por %p600, %p601
      %p603 = scmp.ne.s32.totalorder %s591, %s592
      %p604 = scmp.eq.s32.totalorder %s52, 1
      %p605 = por %p603, %p604
      %p607 = scmp.ne.s32.totalorder %s592, %s606
      %p608 = scmp.eq.s32.totalorder %s52, 0
      %p609 = por %p607, %p608
      %s611 = sadd.s32 %s610, 1
      %p614 = scmp.eq.s32.totalorder %s46, 1
      %p615 = scmp.ne.s32.totalorder %s610, %s612
      %p616 = scmp.eq.s32.totalorder %s46, 0
      %p617 = por %p615, %p616
      %p618 = scmp.ne.s32.totalorder %s610, %s612
      %p619 = scmp.eq.s32.totalorder %s51, 1
      %p620 = por %p618, %p619
      %p621 = scmp.ne.s32.totalorder %s612, %s613
      %p622 = scmp.eq.s32.totalorder %s51, 0
      %p623 = por %p621, %p622
      %p624 = scmp.ne.s32.totalorder %s612, %s613
      %p625 = scmp.eq.s32.totalorder %s52, 1
      %p626 = por %p624, %p625
      %p628 = scmp.ne.s32.totalorder %s613, %s627
      %p629 = scmp.eq.s32.totalorder %s52, 0
      %p630 = por %p628, %p629
      %s632 = sadd.s32 %s631, 1
      %p635 = scmp.eq.s32.totalorder %s46, 1
      %p636 = scmp.ne.s32.totalorder %s631, %s633
      %p637 = scmp.eq.s32.totalorder %s46, 0
      %p638 = por %p636, %p637
      %p639 = scmp.ne.s32.totalorder %s631, %s633
      %p640 = scmp.eq.s32.totalorder %s51, 1
      %p641 = por %p639, %p640
      %p642 = scmp.ne.s32.totalorder %s633, %s634
      %p643 = scmp.eq.s32.totalorder %s51, 0
      %p644 = por %p642, %p643
      %p645 = scmp.ne.s32.totalorder %s633, %s634
      %p646 = scmp.eq.s32.totalorder %s52, 1
      %p647 = por %p645, %p646
      %p649 = scmp.ne.s32.totalorder %s634, %s648
      %p650 = scmp.eq.s32.totalorder %s52, 0
      %p651 = por %p649, %p650
      %s652 = ssub.s32 %s46, %s53
      %p653 = scmp.eq.s32.totalorder %s652, 0
      %s655 = sadd.s32 %s654, 1
      %s656 = scalar_select %p653, %s654, %s655
      %p659 = pneg %p653
      %p660 = scmp.eq.s32.totalorder %s46, 1
      %p661 = por %p659, %p660
      %p662 = scmp.ne.s32.totalorder %s654, %s657
      %p663 = scmp.eq.s32.totalorder %s46, 0
      %p664 = por %p662, %p663
      %p665 = scmp.ne.s32.totalorder %s654, %s657
      %p666 = scmp.eq.s32.totalorder %s51, 1
      %p667 = por %p665, %p666
      %p668 = scmp.ne.s32.totalorder %s657, %s658
      %p669 = scmp.eq.s32.totalorder %s51, 0
      %p670 = por %p668, %p669
      %p671 = scmp.ne.s32.totalorder %s657, %s658
      %p672 = scmp.eq.s32.totalorder %s52, 1
      %p673 = por %p671, %p672
      %p675 = scmp.ne.s32.totalorder %s658, %s674
      %p676 = scmp.eq.s32.totalorder %s52, 0
      %p677 = por %p675, %p676
      %p678 = scmp.le.s32.totalorder 1, %s46
      %p679 = scmp.lt.s32.totalorder %s46, 3
      %p680 = pnand %p678, %p679
      %p681 = pneg %p680
      // Predicated region
      $region9: #{pointnet_seg_forward.3} parent=5 // pred_check
        _
      $region10: #{pointnet_seg_forward.3} parent=5 // pred_check_branch
        %683 = sbr.rel (%p680) target = $region12
      $region11: #{pointnet_seg_forward.3} parent=5 // pred_region
        %s684 = ssub.s32 %s46, 1
        // Predicated region
        $region13: #{pointnet_seg_forward.3} parent=11 // pred_check
          %p685 = pneg %p119
        $region14: #{pointnet_seg_forward.3} parent=11 // pred_check_branch
          %687 = sbr.rel (%p685) target = $region16
        $region15: #{pointnet_seg_forward.3} parent=11 // pred_region
          %689 = vsyncadd [#allocation3], 0
          %s691 = sshll.u32 %s2, 4
          %s692 = int_to_ptr.hbm [resolvable:$true] %s691
          %s693 = sshll.u32 [#allocation2], 4
          %s694 = int_to_ptr.vmem [resolvable:$true] %s693
          %696 = dma.hbm_to_vmem [thread:$0]  %s692, 32, %s694, [#allocation3]
        $region16: #{pointnet_seg_forward.3} parent=11 // pred_fallthru
          _
        // Predicated region
        $region17: #{pointnet_seg_forward.3} parent=11 // pred_check
          %p697 = pneg %p140
        $region18: #{pointnet_seg_forward.3} parent=11 // pred_check_branch
          %699 = sbr.rel (%p697) target = $region20
        $region19: #{pointnet_seg_forward.3} parent=11 // pred_region
          %701 = vsyncadd [#allocation5], 0
          %s702 = sshll.u32 %s3, 4
          %s703 = int_to_ptr.hbm [resolvable:$true] %s702
          %s704 = sshll.u32 [#allocation4], 4
          %s705 = int_to_ptr.vmem [resolvable:$true] %s704
          %710 = dma.hbm_to_vmem [thread:$0]  %s703, 512, %s705, [#allocation5], 64, 64, 4
        $region20: #{pointnet_seg_forward.3} parent=11 // pred_fallthru
          _
        // Predicated region
        $region21: #{pointnet_seg_forward.3} parent=11 // pred_check
          %p711 = pneg %p161
        $region22: #{pointnet_seg_forward.3} parent=11 // pred_check_branch
          %713 = sbr.rel (%p711) target = $region24
        $region23: #{pointnet_seg_forward.3} parent=11 // pred_region
          %715 = vsyncadd [#allocation5], 0
          %s717 = sshll.u32 %s4, 4
          %s718 = int_to_ptr.hbm [resolvable:$true] %s717
          %s719 = sshll.u32 [#allocation6], 4
          %s720 = int_to_ptr.vmem [resolvable:$true] %s719
          %722 = dma.hbm_to_vmem [thread:$0]  %s718, 32, %s720, [#allocation5]
        $region24: #{pointnet_seg_forward.3} parent=11 // pred_fallthru
          _
        // Predicated region
        $region25: #{pointnet_seg_forward.3} parent=11 // pred_check
          %p723 = pneg %p182
        $region26: #{pointnet_seg_forward.3} parent=11 // pred_check_branch
          %725 = sbr.rel (%p723) target = $region28
        $region27: #{pointnet_seg_forward.3} parent=11 // pred_region
          %727 = vsyncadd [#allocation8], 0
          %s728 = sshll.u32 %s5, 4
          %s729 = int_to_ptr.hbm [resolvable:$true] %s728
          %s730 = sshll.u32 [#allocation7], 4
          %s731 = int_to_ptr.vmem [resolvable:$true] %s730
          %736 = dma.hbm_to_vmem [thread:$0]  %s729, 512, %s731, [#allocation8], 64, 64, 4
        $region28: #{pointnet_seg_forward.3} parent=11 // pred_fallthru
          _
        // Predicated region
        $region29: #{pointnet_seg_forward.3} parent=11 // pred_check
          %p737 = pneg %p203
        $region30: #{pointnet_seg_forward.3} parent=11 // pred_check_branch
          %739 = sbr.rel (%p737) target = $region32
        $region31: #{pointnet_seg_forward.3} parent=11 // pred_region
          %741 = vsyncadd [#allocation8], 0
          %s743 = sshll.u32 %s6, 4
          %s744 = int_to_ptr.hbm [resolvable:$true] %s743
          %s745 = sshll.u32 [#allocation9], 4
          %s746 = int_to_ptr.vmem [resolvable:$true] %s745
          %748 = dma.hbm_to_vmem [thread:$0]  %s744, 32, %s746, [#allocation8]
        $region32: #{pointnet_seg_forward.3} parent=11 // pred_fallthru
          _
        // Predicated region
        $region33: #{pointnet_seg_forward.3} parent=11 // pred_check
          %p749 = pneg %p224
        $region34: #{pointnet_seg_forward.3} parent=11 // pred_check_branch
          %751 = sbr.rel (%p749) target = $region36
        $region35: #{pointnet_seg_forward.3} parent=11 // pred_region
          %753 = vsyncadd [#allocation11], 0
          %s754 = sshll.u32 %s7, 4
          %s755 = int_to_ptr.hbm [resolvable:$true] %s754
          %s756 = sshll.u32 [#allocation10], 4
          %s757 = int_to_ptr.vmem [resolvable:$true] %s756
          %762 = dma.hbm_to_vmem [thread:$0]  %s755, 2048, %s757, [#allocation11], 128, 128, 8
        $region36: #{pointnet_seg_forward.3} parent=11 // pred_fallthru
          _
        // Predicated region
        $region37: #{pointnet_seg_forward.3} parent=11 // pred_check
          %p763 = pneg %p245
        $region38: #{pointnet_seg_forward.3} parent=11 // pred_check_branch
          %765 = sbr.rel (%p763) target = $region40
        $region39: #{pointnet_seg_forward.3} parent=11 // pred_region
          %767 = vsyncadd [#allocation11], 0
          %s769 = sshll.u32 %s8, 4
          %s770 = int_to_ptr.hbm [resolvable:$true] %s769
          %s771 = sshll.u32 [#allocation12], 4
          %s772 = int_to_ptr.vmem [resolvable:$true] %s771
          %774 = dma.hbm_to_vmem [thread:$0]  %s770, 64, %s772, [#allocation11]
        $region40: #{pointnet_seg_forward.3} parent=11 // pred_fallthru
          _
        // Predicated region
        $region41: #{pointnet_seg_forward.3} parent=11 // pred_check
          %p775 = pneg %p266
        $region42: #{pointnet_seg_forward.3} parent=11 // pred_check_branch
          %777 = sbr.rel (%p775) target = $region44
        $region43: #{pointnet_seg_forward.3} parent=11 // pred_region
          %779 = vsyncadd [#allocation14], 0
          %s780 = sshll.u32 %s9, 4
          %s781 = int_to_ptr.hbm [resolvable:$true] %s780
          %s782 = sshll.u32 [#allocation13], 4
          %s783 = int_to_ptr.vmem [resolvable:$true] %s782
          %788 = dma.hbm_to_vmem [thread:$0]  %s781, 2048, %s783, [#allocation14], 64, 64, 4
        $region44: #{pointnet_seg_forward.3} parent=11 // pred_fallthru
          _
        // Predicated region
        $region45: #{pointnet_seg_forward.3} parent=11 // pred_check
          %p789 = pneg %p287
        $region46: #{pointnet_seg_forward.3} parent=11 // pred_check_branch
          %791 = sbr.rel (%p789) target = $region48
        $region47: #{pointnet_seg_forward.3} parent=11 // pred_region
          %793 = vsyncadd [#allocation14], 0
          %s795 = sshll.u32 %s10, 4
          %s796 = int_to_ptr.hbm [resolvable:$true] %s795
          %s797 = sshll.u32 [#allocation15], 4
          %s798 = int_to_ptr.vmem [resolvable:$true] %s797
          %800 = dma.hbm_to_vmem [thread:$0]  %s796, 32, %s798, [#allocation14]
        $region48: #{pointnet_seg_forward.3} parent=11 // pred_fallthru
          _
        // Predicated region
        $region49: #{pointnet_seg_forward.3} parent=11 // pred_check
          %p801 = pneg %p308
        $region50: #{pointnet_seg_forward.3} parent=11 // pred_check_branch
          %803 = sbr.rel (%p801) target = $region52
        $region51: #{pointnet_seg_forward.3} parent=11 // pred_region
          _
        $region52: #{pointnet_seg_forward.3} parent=11 // pred_fallthru
          _
        // Predicated region
        $region53: #{pointnet_seg_forward.3} parent=11 // pred_check
          %p804 = pneg %p329
        $region54: #{pointnet_seg_forward.3} parent=11 // pred_check_branch
          %806 = sbr.rel (%p804) target = $region56
        $region55: #{pointnet_seg_forward.3} parent=11 // pred_region
          %808 = vsyncadd [#allocation17], 0
          %s810 = sshll.u32 %s12, 4
          %s811 = int_to_ptr.hbm [resolvable:$true] %s810
          %s812 = sshll.u32 [#allocation16], 4
          %s813 = int_to_ptr.vmem [resolvable:$true] %s812
          %815 = dma.hbm_to_vmem [thread:$0]  %s811, 32, %s813, [#allocation17]
        $region56: #{pointnet_seg_forward.3} parent=11 // pred_fallthru
          _
        // Predicated region
        $region57: #{pointnet_seg_forward.3} parent=11 // pred_check
          %p816 = pneg %p350
        $region58: #{pointnet_seg_forward.3} parent=11 // pred_check_branch
          %818 = sbr.rel (%p816) target = $region60
        $region59: #{pointnet_seg_forward.3} parent=11 // pred_region
          %820 = vsyncadd [#allocation17], 0
          %s821 = sshll.u32 %s13, 4
          %s822 = int_to_ptr.hbm [resolvable:$true] %s821
          %s823 = sshll.u32 [#allocation18], 4
          %s824 = int_to_ptr.vmem [resolvable:$true] %s823
          %829 = dma.hbm_to_vmem [thread:$0]  %s822, 16384, %s824, [#allocation17], 2048, 2048, 128
        $region60: #{pointnet_seg_forward.3} parent=11 // pred_fallthru
          _
        // Predicated region
        $region61: #{pointnet_seg_forward.3} parent=11 // pred_check
          %p830 = pneg %p371
        $region62: #{pointnet_seg_forward.3} parent=11 // pred_check_branch
          %832 = sbr.rel (%p830) target = $region64
        $region63: #{pointnet_seg_forward.3} parent=11 // pred_region
          %834 = vsyncadd [#allocation20], 0
          %s835 = sshll.u32 %s14, 4
          %s836 = int_to_ptr.hbm [resolvable:$true] %s835
          %s837 = sshll.u32 [#allocation19], 4
          %s838 = int_to_ptr.vmem [resolvable:$true] %s837
          %843 = dma.hbm_to_vmem [thread:$0]  %s836, 16384, %s838, [#allocation20], 2048, 2048, 128
        $region64: #{pointnet_seg_forward.3} parent=11 // pred_fallthru
          _
        // Predicated region
        $region65: #{pointnet_seg_forward.3} parent=11 // pred_check
          %p844 = pneg %p392
        $region66: #{pointnet_seg_forward.3} parent=11 // pred_check_branch
          %846 = sbr.rel (%p844) target = $region68
        $region67: #{pointnet_seg_forward.3} parent=11 // pred_region
          %848 = vsyncadd [#allocation20], 0
          %s849 = sshll.u32 %s15, 4
          %s850 = int_to_ptr.hbm [resolvable:$true] %s849
          %s851 = sshll.u32 [#allocation21], 4
          %s852 = int_to_ptr.vmem [resolvable:$true] %s851
          %857 = dma.hbm_to_vmem [thread:$0]  %s850, 65536, %s852, [#allocation20], 128, 128, 8
        $region68: #{pointnet_seg_forward.3} parent=11 // pred_fallthru
          _
        // Predicated region
        $region69: #{pointnet_seg_forward.3} parent=11 // pred_check
          %p858 = pneg %p413
        $region70: #{pointnet_seg_forward.3} parent=11 // pred_check_branch
          %860 = sbr.rel (%p858) target = $region72
        $region71: #{pointnet_seg_forward.3} parent=11 // pred_region
          %862 = vsyncadd [#allocation23], 0
          %s863 = sshll.u32 %s16, 4
          %s864 = int_to_ptr.hbm [resolvable:$true] %s863
          %s865 = sshll.u32 [#allocation22], 4
          %s866 = int_to_ptr.vmem [resolvable:$true] %s865
          %871 = dma.hbm_to_vmem [thread:$0]  %s864, 2048, %s866, [#allocation23], 256, 256, 16
        $region72: #{pointnet_seg_forward.3} parent=11 // pred_fallthru
          _
        // Predicated region
        $region73: #{pointnet_seg_forward.3} parent=11 // pred_check
          %p872 = pneg %p434
        $region74: #{pointnet_seg_forward.3} parent=11 // pred_check_branch
          %874 = sbr.rel (%p872) target = $region76
        $region75: #{pointnet_seg_forward.3} parent=11 // pred_region
          %876 = vsyncadd [#allocation23], 0
          %s878 = sshll.u32 %s17, 4
          %s879 = int_to_ptr.hbm [resolvable:$true] %s878
          %s880 = sshll.u32 [#allocation24], 4
          %s881 = int_to_ptr.vmem [resolvable:$true] %s880
          %883 = dma.hbm_to_vmem [thread:$0]  %s879, 32, %s881, [#allocation23]
        $region76: #{pointnet_seg_forward.3} parent=11 // pred_fallthru
          _
        // Predicated region
        $region77: #{pointnet_seg_forward.3} parent=11 // pred_check
          %p884 = pneg %p455
        $region78: #{pointnet_seg_forward.3} parent=11 // pred_check_branch
          %886 = sbr.rel (%p884) target = $region80
        $region79: #{pointnet_seg_forward.3} parent=11 // pred_region
          _
        $region80: #{pointnet_seg_forward.3} parent=11 // pred_fallthru
          _
        // Predicated region
        $region81: #{pointnet_seg_forward.3} parent=11 // pred_check
          %p887 = pneg %p476
        $region82: #{pointnet_seg_forward.3} parent=11 // pred_check_branch
          %889 = sbr.rel (%p887) target = $region84
        $region83: #{pointnet_seg_forward.3} parent=11 // pred_region
          %891 = vsyncadd [#allocation26], 0
          %s893 = sshll.u32 %s19, 4
          %s894 = int_to_ptr.hbm [resolvable:$true] %s893
          %s895 = sshll.u32 [#allocation25], 4
          %s896 = int_to_ptr.vmem [resolvable:$true] %s895
          %898 = dma.hbm_to_vmem [thread:$0]  %s894, 32, %s896, [#allocation26]
        $region84: #{pointnet_seg_forward.3} parent=11 // pred_fallthru
          _
        // Predicated region
        $region85: #{pointnet_seg_forward.3} parent=11 // pred_check
          %p899 = pneg %p497
        $region86: #{pointnet_seg_forward.3} parent=11 // pred_check_branch
          %901 = sbr.rel (%p899) target = $region88
        $region87: #{pointnet_seg_forward.3} parent=11 // pred_region
          %903 = vsyncadd [#allocation26], 0
          %s904 = sshll.u32 %s20, 4
          %s905 = int_to_ptr.hbm [resolvable:$true] %s904
          %s906 = sshll.u32 [#allocation27], 4
          %s907 = int_to_ptr.vmem [resolvable:$true] %s906
          %912 = dma.hbm_to_vmem [thread:$0]  %s905, 768, %s907, [#allocation26], 64, 64, 4
        $region88: #{pointnet_seg_forward.3} parent=11 // pred_fallthru
          _
        // Predicated region
        $region89: #{pointnet_seg_forward.3} parent=11 // pred_check
          %p913 = pneg %p518
        $region90: #{pointnet_seg_forward.3} parent=11 // pred_check_branch
          %915 = sbr.rel (%p913) target = $region92
        $region91: #{pointnet_seg_forward.3} parent=11 // pred_region
          %917 = vsyncadd [#allocation29], 0
          %s919 = sshll.u32 %s21, 4
          %s920 = int_to_ptr.hbm [resolvable:$true] %s919
          %s921 = sshll.u32 [#allocation28], 4
          %s922 = int_to_ptr.vmem [resolvable:$true] %s921
          %924 = dma.hbm_to_vmem [thread:$0]  %s920, 32, %s922, [#allocation29]
        $region92: #{pointnet_seg_forward.3} parent=11 // pred_fallthru
          _
        // Predicated region
        $region93: #{pointnet_seg_forward.3} parent=11 // pred_check
          %p925 = pneg %p539
        $region94: #{pointnet_seg_forward.3} parent=11 // pred_check_branch
          %927 = sbr.rel (%p925) target = $region96
        $region95: #{pointnet_seg_forward.3} parent=11 // pred_region
          %929 = vsyncadd [#allocation29], 0
          %s930 = sshll.u32 %s22, 4
          %s931 = int_to_ptr.hbm [resolvable:$true] %s930
          %s932 = sshll.u32 [#allocation30], 4
          %s933 = int_to_ptr.vmem [resolvable:$true] %s932
          %938 = dma.hbm_to_vmem [thread:$0]  %s931, 1024, %s933, [#allocation29], 64, 64, 4
        $region96: #{pointnet_seg_forward.3} parent=11 // pred_fallthru
          _
        // Predicated region
        $region97: #{pointnet_seg_forward.3} parent=11 // pred_check
          %p939 = pneg %p560
        $region98: #{pointnet_seg_forward.3} parent=11 // pred_check_branch
          %941 = sbr.rel (%p939) target = $region100
        $region99: #{pointnet_seg_forward.3} parent=11 // pred_region
          %943 = vsyncadd [#allocation32], 0
          %s945 = sshll.u32 %s23, 4
          %s946 = int_to_ptr.hbm [resolvable:$true] %s945
          %s947 = sshll.u32 [#allocation31], 4
          %s948 = int_to_ptr.vmem [resolvable:$true] %s947
          %950 = dma.hbm_to_vmem [thread:$0]  %s946, 32, %s948, [#allocation32]
        $region100: #{pointnet_seg_forward.3} parent=11 // pred_fallthru
          _
        // Predicated region
        $region101: #{pointnet_seg_forward.3} parent=11 // pred_check
          %p951 = pneg %p581
        $region102: #{pointnet_seg_forward.3} parent=11 // pred_check_branch
          %953 = sbr.rel (%p951) target = $region104
        $region103: #{pointnet_seg_forward.3} parent=11 // pred_region
          _
        $region104: #{pointnet_seg_forward.3} parent=11 // pred_fallthru
          _
        // Predicated region
        $region105: #{pointnet_seg_forward.3} parent=11 // pred_check
          %p954 = pneg %p602
        $region106: #{pointnet_seg_forward.3} parent=11 // pred_check_branch
          %956 = sbr.rel (%p954) target = $region108
        $region107: #{pointnet_seg_forward.3} parent=11 // pred_region
          %958 = vsyncadd [#allocation32], 0
          %s960 = sshll.u32 %s25, 4
          %s961 = int_to_ptr.hbm [resolvable:$true] %s960
          %s962 = sshll.u32 [#allocation33], 4
          %s963 = int_to_ptr.vmem [resolvable:$true] %s962
          %965 = dma.hbm_to_vmem [thread:$0]  %s961, 32, %s963, [#allocation32]
        $region108: #{pointnet_seg_forward.3} parent=11 // pred_fallthru
          _
        // Predicated region
        $region109: #{pointnet_seg_forward.3} parent=11 // pred_check
          %p966 = pneg %p623
        $region110: #{pointnet_seg_forward.3} parent=11 // pred_check_branch
          %968 = sbr.rel (%p966) target = $region112
        $region111: #{pointnet_seg_forward.3} parent=11 // pred_region
          _
        $region112: #{pointnet_seg_forward.3} parent=11 // pred_fallthru
          _
        // Predicated region
        $region113: #{pointnet_seg_forward.3} parent=11 // pred_check
          %p969 = pneg %p644
        $region114: #{pointnet_seg_forward.3} parent=11 // pred_check_branch
          %971 = sbr.rel (%p969) target = $region116
        $region115: #{pointnet_seg_forward.3} parent=11 // pred_region
          %973 = vsyncadd [#allocation35], 0
          %s975 = sshll.u32 %s27, 4
          %s976 = int_to_ptr.hbm [resolvable:$true] %s975
          %s977 = sshll.u32 [#allocation34], 4
          %s978 = int_to_ptr.vmem [resolvable:$true] %s977
          %980 = dma.hbm_to_vmem [thread:$0]  %s976, 16, %s978, [#allocation35]
        $region116: #{pointnet_seg_forward.3} parent=11 // pred_fallthru
          _
      $region12: #{pointnet_seg_forward.3} parent=5 // pred_fallthru
        _
      %p981 = scmp.lt.s32.totalorder %s46, 2
      // Predicated region
      $region117: #{pointnet_seg_forward.3} parent=5 // pred_check
        %p982 = pneg %p981
      $region118: #{pointnet_seg_forward.3} parent=5 // pred_check_branch
        %984 = sbr.rel (%p982) target = $region120
      $region119: #{pointnet_seg_forward.3} parent=5 // pred_region
        // Predicated region
        $region121: #{pointnet_seg_forward.3} parent=119 // pred_check
          %p985 = pneg %p66
        $region122: #{pointnet_seg_forward.3} parent=119 // pred_check_branch
          %987 = sbr.rel (%p985) target = $region124
        $region123: #{pointnet_seg_forward.3} parent=119 // pred_region
          %p988 = scmp.lt.s32.totalorder %s46, 1
          %s989 = scalar_select %p988, %s46, 1
          %s990 = smul.addr %s989, 8
          %s991 = smul.addr %s990, 4
          %s992 = scalar_lea.vmem %s0, %s991
        $region124: #{pointnet_seg_forward.3} parent=119 // pred_fallthru
          _
        // Predicated region
        $region125: #{pointnet_seg_forward.3} parent=119 // pred_check
          %p993 = pneg %p92
        $region126: #{pointnet_seg_forward.3} parent=119 // pred_check_branch
          %995 = sbr.rel (%p993) target = $region128
        $region127: #{pointnet_seg_forward.3} parent=119 // pred_region
          %p996 = scmp.lt.s32.totalorder %s46, 1
          %s997 = scalar_select %p996, %s46, 1
          %s998 = smul.addr %s997, 4
          %s999 = scalar_lea.vmem %s1, %s998
        $region128: #{pointnet_seg_forward.3} parent=119 // pred_fallthru
          _
      $region120: #{pointnet_seg_forward.3} parent=5 // pred_fallthru
        _
      %p1000 = scmp.le.s32.totalorder 1, %s46
      %p1001 = scmp.lt.s32.totalorder %s46, 3
      %p1002 = pnand %p1000, %p1001
      %p1003 = pneg %p1002
      // Predicated region
      $region129: #{pointnet_seg_forward.3} parent=5 // pred_check
        _
      $region130: #{pointnet_seg_forward.3} parent=5 // pred_check_branch
        %1005 = sbr.rel (%p1002) target = $region132
      $region131: #{pointnet_seg_forward.3} parent=5 // pred_region
        %s1006 = ssub.s32 %s46, 1
        // Predicated region
        $region133: #{pointnet_seg_forward.3} parent=131 // pred_check
          %p1007 = pneg %p119
        $region134: #{pointnet_seg_forward.3} parent=131 // pred_check_branch
          %1009 = sbr.rel (%p1007) target = $region136
        $region135: #{pointnet_seg_forward.3} parent=131 // pred_region
          %1011 = dma.done [#allocation3], 32
        $region136: #{pointnet_seg_forward.3} parent=131 // pred_fallthru
          _
        // Predicated region
        $region137: #{pointnet_seg_forward.3} parent=131 // pred_check
          %p1012 = pneg %p140
        $region138: #{pointnet_seg_forward.3} parent=131 // pred_check_branch
          %1014 = sbr.rel (%p1012) target = $region140
        $region139: #{pointnet_seg_forward.3} parent=131 // pred_region
          %1016 = dma.done [#allocation5], 512
        $region140: #{pointnet_seg_forward.3} parent=131 // pred_fallthru
          _
        // Predicated region
        $region141: #{pointnet_seg_forward.3} parent=131 // pred_check
          %p1017 = pneg %p161
        $region142: #{pointnet_seg_forward.3} parent=131 // pred_check_branch
          %1019 = sbr.rel (%p1017) target = $region144
        $region143: #{pointnet_seg_forward.3} parent=131 // pred_region
          %1021 = dma.done [#allocation5], 32
        $region144: #{pointnet_seg_forward.3} parent=131 // pred_fallthru
          _
        // Predicated region
        $region145: #{pointnet_seg_forward.3} parent=131 // pred_check
          %p1022 = pneg %p182
        $region146: #{pointnet_seg_forward.3} parent=131 // pred_check_branch
          %1024 = sbr.rel (%p1022) target = $region148
        $region147: #{pointnet_seg_forward.3} parent=131 // pred_region
          %1026 = dma.done [#allocation8], 512
        $region148: #{pointnet_seg_forward.3} parent=131 // pred_fallthru
          _
        // Predicated region
        $region149: #{pointnet_seg_forward.3} parent=131 // pred_check
          %p1027 = pneg %p203
        $region150: #{pointnet_seg_forward.3} parent=131 // pred_check_branch
          %1029 = sbr.rel (%p1027) target = $region152
        $region151: #{pointnet_seg_forward.3} parent=131 // pred_region
          %1031 = dma.done [#allocation8], 32
        $region152: #{pointnet_seg_forward.3} parent=131 // pred_fallthru
          _
        // Predicated region
        $region153: #{pointnet_seg_forward.3} parent=131 // pred_check
          %p1032 = pneg %p224
        $region154: #{pointnet_seg_forward.3} parent=131 // pred_check_branch
          %1034 = sbr.rel (%p1032) target = $region156
        $region155: #{pointnet_seg_forward.3} parent=131 // pred_region
          %1036 = dma.done [#allocation11], 2048
        $region156: #{pointnet_seg_forward.3} parent=131 // pred_fallthru
          _
        // Predicated region
        $region157: #{pointnet_seg_forward.3} parent=131 // pred_check
          %p1037 = pneg %p245
        $region158: #{pointnet_seg_forward.3} parent=131 // pred_check_branch
          %1039 = sbr.rel (%p1037) target = $region160
        $region159: #{pointnet_seg_forward.3} parent=131 // pred_region
          %1041 = dma.done [#allocation11], 64
        $region160: #{pointnet_seg_forward.3} parent=131 // pred_fallthru
          _
        // Predicated region
        $region161: #{pointnet_seg_forward.3} parent=131 // pred_check
          %p1042 = pneg %p266
        $region162: #{pointnet_seg_forward.3} parent=131 // pred_check_branch
          %1044 = sbr.rel (%p1042) target = $region164
        $region163: #{pointnet_seg_forward.3} parent=131 // pred_region
          %1046 = dma.done [#allocation14], 2048
        $region164: #{pointnet_seg_forward.3} parent=131 // pred_fallthru
          _
        // Predicated region
        $region165: #{pointnet_seg_forward.3} parent=131 // pred_check
          %p1047 = pneg %p287
        $region166: #{pointnet_seg_forward.3} parent=131 // pred_check_branch
          %1049 = sbr.rel (%p1047) target = $region168
        $region167: #{pointnet_seg_forward.3} parent=131 // pred_region
          %1051 = dma.done [#allocation14], 32
        $region168: #{pointnet_seg_forward.3} parent=131 // pred_fallthru
          _
        // Predicated region
        $region169: #{pointnet_seg_forward.3} parent=131 // pred_check
          %p1052 = pneg %p329
        $region170: #{pointnet_seg_forward.3} parent=131 // pred_check_branch
          %1054 = sbr.rel (%p1052) target = $region172
        $region171: #{pointnet_seg_forward.3} parent=131 // pred_region
          %1056 = dma.done [#allocation17], 32
        $region172: #{pointnet_seg_forward.3} parent=131 // pred_fallthru
          _
        // Predicated region
        $region173: #{pointnet_seg_forward.3} parent=131 // pred_check
          %p1057 = pneg %p350
        $region174: #{pointnet_seg_forward.3} parent=131 // pred_check_branch
          %1059 = sbr.rel (%p1057) target = $region176
        $region175: #{pointnet_seg_forward.3} parent=131 // pred_region
          %1061 = dma.done [#allocation17], 16384
        $region176: #{pointnet_seg_forward.3} parent=131 // pred_fallthru
          _
        // Predicated region
        $region177: #{pointnet_seg_forward.3} parent=131 // pred_check
          %p1062 = pneg %p371
        $region178: #{pointnet_seg_forward.3} parent=131 // pred_check_branch
          %1064 = sbr.rel (%p1062) target = $region180
        $region179: #{pointnet_seg_forward.3} parent=131 // pred_region
          %1066 = dma.done [#allocation20], 16384
        $region180: #{pointnet_seg_forward.3} parent=131 // pred_fallthru
          _
        // Predicated region
        $region181: #{pointnet_seg_forward.3} parent=131 // pred_check
          %p1067 = pneg %p392
        $region182: #{pointnet_seg_forward.3} parent=131 // pred_check_branch
          %1069 = sbr.rel (%p1067) target = $region184
        $region183: #{pointnet_seg_forward.3} parent=131 // pred_region
          %1071 = dma.done [#allocation20], 65536
        $region184: #{pointnet_seg_forward.3} parent=131 // pred_fallthru
          _
        // Predicated region
        $region185: #{pointnet_seg_forward.3} parent=131 // pred_check
          %p1072 = pneg %p413
        $region186: #{pointnet_seg_forward.3} parent=131 // pred_check_branch
          %1074 = sbr.rel (%p1072) target = $region188
        $region187: #{pointnet_seg_forward.3} parent=131 // pred_region
          %1076 = dma.done [#allocation23], 2048
        $region188: #{pointnet_seg_forward.3} parent=131 // pred_fallthru
          _
        // Predicated region
        $region189: #{pointnet_seg_forward.3} parent=131 // pred_check
          %p1077 = pneg %p434
        $region190: #{pointnet_seg_forward.3} parent=131 // pred_check_branch
          %1079 = sbr.rel (%p1077) target = $region192
        $region191: #{pointnet_seg_forward.3} parent=131 // pred_region
          %1081 = dma.done [#allocation23], 32
        $region192: #{pointnet_seg_forward.3} parent=131 // pred_fallthru
          _
        // Predicated region
        $region193: #{pointnet_seg_forward.3} parent=131 // pred_check
          %p1082 = pneg %p476
        $region194: #{pointnet_seg_forward.3} parent=131 // pred_check_branch
          %1084 = sbr.rel (%p1082) target = $region196
        $region195: #{pointnet_seg_forward.3} parent=131 // pred_region
          %1086 = dma.done [#allocation26], 32
        $region196: #{pointnet_seg_forward.3} parent=131 // pred_fallthru
          _
        // Predicated region
        $region197: #{pointnet_seg_forward.3} parent=131 // pred_check
          %p1087 = pneg %p497
        $region198: #{pointnet_seg_forward.3} parent=131 // pred_check_branch
          %1089 = sbr.rel (%p1087) target = $region200
        $region199: #{pointnet_seg_forward.3} parent=131 // pred_region
          %1091 = dma.done [#allocation26], 768
        $region200: #{pointnet_seg_forward.3} parent=131 // pred_fallthru
          _
        // Predicated region
        $region201: #{pointnet_seg_forward.3} parent=131 // pred_check
          %p1092 = pneg %p518
        $region202: #{pointnet_seg_forward.3} parent=131 // pred_check_branch
          %1094 = sbr.rel (%p1092) target = $region204
        $region203: #{pointnet_seg_forward.3} parent=131 // pred_region
          %1096 = dma.done [#allocation29], 32
        $region204: #{pointnet_seg_forward.3} parent=131 // pred_fallthru
          _
        // Predicated region
        $region205: #{pointnet_seg_forward.3} parent=131 // pred_check
          %p1097 = pneg %p539
        $region206: #{pointnet_seg_forward.3} parent=131 // pred_check_branch
          %1099 = sbr.rel (%p1097) target = $region208
        $region207: #{pointnet_seg_forward.3} parent=131 // pred_region
          %1101 = dma.done [#allocation29], 1024
        $region208: #{pointnet_seg_forward.3} parent=131 // pred_fallthru
          _
        // Predicated region
        $region209: #{pointnet_seg_forward.3} parent=131 // pred_check
          %p1102 = pneg %p560
        $region210: #{pointnet_seg_forward.3} parent=131 // pred_check_branch
          %1104 = sbr.rel (%p1102) target = $region212
        $region211: #{pointnet_seg_forward.3} parent=131 // pred_region
          %1106 = dma.done [#allocation32], 32
        $region212: #{pointnet_seg_forward.3} parent=131 // pred_fallthru
          _
        // Predicated region
        $region213: #{pointnet_seg_forward.3} parent=131 // pred_check
          %p1107 = pneg %p602
        $region214: #{pointnet_seg_forward.3} parent=131 // pred_check_branch
          %1109 = sbr.rel (%p1107) target = $region216
        $region215: #{pointnet_seg_forward.3} parent=131 // pred_region
          %1111 = dma.done [#allocation32], 32
        $region216: #{pointnet_seg_forward.3} parent=131 // pred_fallthru
          _
        // Predicated region
        $region217: #{pointnet_seg_forward.3} parent=131 // pred_check
          %p1112 = pneg %p644
        $region218: #{pointnet_seg_forward.3} parent=131 // pred_check_branch
          %1114 = sbr.rel (%p1112) target = $region220
        $region219: #{pointnet_seg_forward.3} parent=131 // pred_region
          %1116 = dma.done [#allocation35], 16
        $region220: #{pointnet_seg_forward.3} parent=131 // pred_fallthru
          _
        %p1117 = scmp.lt.s32.totalorder %s51, 1
        %s1118 = scalar_select %p1117, %s51, 1
        %s1119 = smul.addr %s1118, 8
        %s1120 = smul.addr %s1119, 4
        %s1121 = scalar_lea.vmem %s0, %s1120
        %p1122 = pneg %p72
        %p1123 = pneg %p69
        %p1124 = scmp.lt.s32.totalorder %s51, 1
        %s1125 = scalar_select %p1124, %s51, 1
        %s1126 = smul.addr %s1125, 4
        %s1127 = scalar_lea.vmem %s1, %s1126
        %p1128 = pneg %p98
        %p1129 = pneg %p95
        %p1130 = pneg %p119
        %p1131 = pneg %p116
        %p1132 = pneg %p140
        %p1133 = pneg %p137
        %p1134 = pneg %p161
        %p1135 = pneg %p158
        %p1136 = pneg %p182
        %p1137 = pneg %p179
        %p1138 = pneg %p203
        %p1139 = pneg %p200
        %p1140 = pneg %p224
        %p1141 = pneg %p221
        %p1142 = pneg %p245
        %p1143 = pneg %p242
        %p1144 = pneg %p266
        %p1145 = pneg %p263
        %p1146 = pneg %p287
        %p1147 = pneg %p284
        %p1148 = pneg %p308
        %p1149 = pneg %p305
        %p1150 = pneg %p329
        %p1151 = pneg %p326
        %p1152 = pneg %p350
        %p1153 = pneg %p347
        %p1154 = pneg %p371
        %p1155 = pneg %p368
        %p1156 = pneg %p392
        %p1157 = pneg %p389
        %p1158 = pneg %p413
        %p1159 = pneg %p410
        %p1160 = pneg %p434
        %p1161 = pneg %p431
        %p1162 = pneg %p455
        %p1163 = pneg %p452
        %p1164 = pneg %p476
        %p1165 = pneg %p473
        %p1166 = pneg %p497
        %p1167 = pneg %p494
        %p1168 = pneg %p518
        %p1169 = pneg %p515
        %p1170 = pneg %p539
        %p1171 = pneg %p536
        %p1172 = pneg %p560
        %p1173 = pneg %p557
        %p1174 = pneg %p581
        %p1175 = pneg %p578
        %p1176 = pneg %p602
        %p1177 = pneg %p599
        %p1178 = pneg %p623
        %p1179 = pneg %p620
        %p1180 = pneg %p644
        %p1181 = pneg %p641
        %p1182 = pneg %p670
        %p1183 = pneg %p667
        %p1184 = scmp.lt.s32.totalorder %s51, 1
        %s1185 = scalar_select %p1184, %s51, 1
        %s1186 = smul.addr %s1185, 8
        %s1187 = smul.addr %s1186, 8
        %s1188 = scalar_lea.vmem %s28, %s1187
        %p1189 = scmp.lt.s32.totalorder %s51, 1
        %s1190 = scalar_select %p1189, %s51, 1
        %s1191 = smul.addr %s1190, 8
        %s1192 = smul.addr %s1191, 4
        %s1193 = scalar_lea.vmem %s0, %s1192
        %p1194 = scmp.lt.s32.totalorder %s51, 1
        %s1195 = scalar_select %p1194, %s51, 1
        %s1196 = smul.addr %s1195, 4
        %s1197 = scalar_lea.vmem %s1, %s1196
        %p1198 = scmp.lt.s32.totalorder %s51, 1
        %s1199 = scalar_select %p1198, %s51, 1
        %s1200 = smul.addr %s1199, 8
        %s1201 = smul.addr %s1200, 8
        %s1202 = scalar_lea.vmem %s28, %s1201
        %v1204 = vld [vmem:[%s1193] sm:$0xf]
        %v1205 = vld [vmem:[%s1193 + $0x4] sm:$0xf]
        %v1206 = vld [vmem:[%s1193 + $0x8] sm:$0xf]
        %v1207 = vld [vmem:[%s1193 + $0xc] sm:$0xf]
        %v1208 = vld [vmem:[%s1193 + $0x10] sm:$0xf]
        %v1209 = vld [vmem:[%s1193 + $0x14] sm:$0xf]
        %v1210 = vld [vmem:[%s1193 + $0x18] sm:$0xf]
        %v1211 = vld [vmem:[%s1193 + $0x1c] sm:$0xf]
        %v1212 = vld [vmem:[%s1197] sm:$0xf]
        %v1221 = vunpack.c.l.b16 %v1204
        %v1222 = vunpack.c.l.b16 %v1205
        %v1223 = vunpack.c.l.b16 %v1206
        %v1224 = vunpack.c.l.b16 %v1207
        %v1225 = vunpack.c.l.b16 %v1208
        %v1226 = vunpack.c.l.b16 %v1209
        %v1227 = vunpack.c.l.b16 %v1210
        %v1228 = vunpack.c.l.b16 %v1211
        %v1229 = vpack.c.b16 %v1222, %v1221
        %v1230 = vpack.c.b16 %v1224, %v1223
        %v1231 = vpack.c.b16 %v1226, %v1225
        %v1232 = vpack.c.b16 %v1228, %v1227
        %vm1233 = vcmask 64512
        %v1235 = vsel %vm1233, %v1229, 0
        %v1238 = vsel %vm1233, %v1230, 0
        %v1241 = vsel %vm1233, %v1231, 0
        %v1244 = vsel %vm1233, %v1232, 0
        %vm1246 = vcmask 1043456
        %v1248 = vsel %vm1246, %v1212, 0
        %1250 = vmatpush.bf16.msra.mxu0 0
        %1251 = vmatpush.bf16.msra.mxu0 0
        %1252 = vmatpush.bf16.msra.mxu0 0
        %1253 = vmatpush.bf16.msra.mxu0 0
        %1254 = vmatpush.bf16.msra.mxu0 0
        %1255 = vmatpush.bf16.msra.mxu0 0
        %1256 = vmatpush.bf16.msra.mxu0 0
        %1257 = vmatpush.bf16.msra.mxu0 %v1248
        %1258 = vmatmul.bf16.gmra.mxu0 %v1235
        %v1259 = vpop.f32.mrf.mxu0
        %v1260 = vadd.f32 0.0, %v1259
        %v1261 = vpop.f32.mrf.mxu0
        %v1262 = vadd.f32 0.0, %v1261
        %1263 = vmatmul.bf16.gmra.mxu0 %v1238
        %v1264 = vpop.f32.mrf.mxu0
        %v1265 = vadd.f32 0.0, %v1264
        %v1266 = vpop.f32.mrf.mxu0
        %v1267 = vadd.f32 0.0, %v1266
        %1268 = vmatmul.bf16.gmra.mxu0 %v1241
        %v1269 = vpop.f32.mrf.mxu0
        %v1270 = vadd.f32 0.0, %v1269
        %v1271 = vpop.f32.mrf.mxu0
        %v1272 = vadd.f32 0.0, %v1271
        %1273 = vmatmul.bf16.gmra.mxu0 %v1244
        %v1274 = vpop.f32.mrf.mxu0
        %v1275 = vadd.f32 0.0, %v1274
        %v1276 = vpop.f32.mrf.mxu0
        %v1277 = vadd.f32 0.0, %v1276
        %1278 = vdwg.mxu0
        %v1279 = vld [vmem:[#allocation2] sm:$0x1]
        %v1280 = vperm.slane %v1279, 0
        %v1281 = vmul.f32 %v1260, %v1280
        %v1282 = vmul.f32 %v1262, %v1280
        %v1283 = vmul.f32 %v1265, %v1280
        %v1284 = vmul.f32 %v1267, %v1280
        %v1285 = vmul.f32 %v1270, %v1280
        %v1286 = vmul.f32 %v1272, %v1280
        %v1287 = vmul.f32 %v1275, %v1280
        %v1288 = vmul.f32 %v1277, %v1280
        %v1289 = vld [vmem:[#allocation2 + $0x1] sm:$0x1]
        %v1290 = vperm.slane %v1289, 0
        %v1291 = vadd.f32 %v1281, %v1290
        %v1292 = vadd.f32 %v1282, %v1290
        %v1293 = vadd.f32 %v1283, %v1290
        %v1294 = vadd.f32 %v1284, %v1290
        %v1295 = vadd.f32 %v1285, %v1290
        %v1296 = vadd.f32 %v1286, %v1290
        %v1297 = vadd.f32 %v1287, %v1290
        %v1298 = vadd.f32 %v1288, %v1290
        %v1299 = vmax.f32 %v1291, 0.0
        %v1300 = vmax.f32 %v1292, 0.0
        %v1301 = vmax.f32 %v1293, 0.0
        %v1302 = vmax.f32 %v1294, 0.0
        %v1303 = vmax.f32 %v1295, 0.0
        %v1304 = vmax.f32 %v1296, 0.0
        %v1305 = vmax.f32 %v1297, 0.0
        %v1306 = vmax.f32 %v1298, 0.0
        %v1307 = vpack.c.bf16 %v1300, %v1299
        %v1308 = vpack.c.bf16 %v1302, %v1301
        %v1309 = vpack.c.bf16 %v1304, %v1303
        %v1310 = vpack.c.bf16 %v1306, %v1305
        %v1311 = vld [vmem:[#allocation4] sm:$0xf]
        %v1312 = vld [vmem:[#allocation4 + $0x4] sm:$0xf]
        %v1313 = vld [vmem:[#allocation4 + $0x8] sm:$0xf]
        %v1314 = vld [vmem:[#allocation4 + $0xc] sm:$0xf]
        %v1315 = vld [vmem:[#allocation4 + $0x10] sm:$0xf]
        %v1316 = vld [vmem:[#allocation4 + $0x14] sm:$0xf]
        %v1317 = vld [vmem:[#allocation4 + $0x18] sm:$0xf]
        %v1318 = vld [vmem:[#allocation4 + $0x1c] sm:$0xf]
        %v1327 = vunpack.c.l.b16 %v1311
        %v1328 = vunpack.c.l.b16 %v1312
        %v1329 = vunpack.c.l.b16 %v1313
        %v1330 = vunpack.c.l.b16 %v1314
        %v1331 = vunpack.c.l.b16 %v1315
        %v1332 = vunpack.c.l.b16 %v1316
        %v1333 = vunpack.c.l.b16 %v1317
        %v1334 = vunpack.c.l.b16 %v1318
        %v1335 = vpack.c.b16 %v1328, %v1327
        %v1336 = vpack.c.b16 %v1330, %v1329
        %v1337 = vpack.c.b16 %v1332, %v1331
        %v1338 = vpack.c.b16 %v1334, %v1333
        %vm1343 = vcmask 523264
        %v1345 = vsel %vm1343, %v1307, 0
        %v1348 = vsel %vm1343, %v1308, 0
        %v1351 = vsel %vm1343, %v1309, 0
        %v1354 = vsel %vm1343, %v1310, 0
        %1356 = vmatpush.bf16.msra.mxu0 0
        %1357 = vmatpush.bf16.msra.mxu0 0
        %1358 = vmatpush.bf16.msra.mxu0 0
        %1359 = vmatpush.bf16.msra.mxu0 0
        %1360 = vmatpush.bf16.msra.mxu0 %v1338
        %1361 = vmatpush.bf16.msra.mxu0 %v1337
        %1362 = vmatpush.bf16.msra.mxu0 %v1336
        %1363 = vmatpush.bf16.msra.mxu0 %v1335
        %1364 = vmatmul.bf16.gmra.mxu0 %v1345
        %v1365 = vpop.f32.mrf.mxu0
        %v1366 = vadd.f32 0.0, %v1365
        %v1367 = vpop.f32.mrf.mxu0
        %v1368 = vadd.f32 0.0, %v1367
        %1369 = vmatmul.bf16.gmra.mxu0 %v1348
        %v1370 = vpop.f32.mrf.mxu0
        %v1371 = vadd.f32 0.0, %v1370
        %v1372 = vpop.f32.mrf.mxu0
        %v1373 = vadd.f32 0.0, %v1372
        %1374 = vmatmul.bf16.gmra.mxu0 %v1351
        %v1375 = vpop.f32.mrf.mxu0
        %v1376 = vadd.f32 0.0, %v1375
        %v1377 = vpop.f32.mrf.mxu0
        %v1378 = vadd.f32 0.0, %v1377
        %1379 = vmatmul.bf16.gmra.mxu0 %v1354
        %v1380 = vpop.f32.mrf.mxu0
        %v1381 = vadd.f32 0.0, %v1380
        %v1382 = vpop.f32.mrf.mxu0
        %v1383 = vadd.f32 0.0, %v1382
        %1384 = vdwg.mxu0
        %v1385 = vld [vmem:[#allocation6] sm:$0x1]
        %v1386 = vperm.slane %v1385, 0
        %v1387 = vmul.f32 %v1366, %v1386
        %v1388 = vmul.f32 %v1368, %v1386
        %v1389 = vmul.f32 %v1371, %v1386
        %v1390 = vmul.f32 %v1373, %v1386
        %v1391 = vmul.f32 %v1376, %v1386
        %v1392 = vmul.f32 %v1378, %v1386
        %v1393 = vmul.f32 %v1381, %v1386
        %v1394 = vmul.f32 %v1383, %v1386
        %v1395 = vld [vmem:[#allocation6 + $0x1] sm:$0x1]
        %v1396 = vperm.slane %v1395, 0
        %v1397 = vadd.f32 %v1387, %v1396
        %v1398 = vadd.f32 %v1388, %v1396
        %v1399 = vadd.f32 %v1389, %v1396
        %v1400 = vadd.f32 %v1390, %v1396
        %v1401 = vadd.f32 %v1391, %v1396
        %v1402 = vadd.f32 %v1392, %v1396
        %v1403 = vadd.f32 %v1393, %v1396
        %v1404 = vadd.f32 %v1394, %v1396
        %v1405 = vmax.f32 %v1397, 0.0
        %v1406 = vmax.f32 %v1398, 0.0
        %v1407 = vmax.f32 %v1399, 0.0
        %v1408 = vmax.f32 %v1400, 0.0
        %v1409 = vmax.f32 %v1401, 0.0
        %v1410 = vmax.f32 %v1402, 0.0
        %v1411 = vmax.f32 %v1403, 0.0
        %v1412 = vmax.f32 %v1404, 0.0
        %v1413 = vpack.c.bf16 %v1406, %v1405
        %v1414 = vpack.c.bf16 %v1408, %v1407
        %v1415 = vpack.c.bf16 %v1410, %v1409
        %v1416 = vpack.c.bf16 %v1412, %v1411
        %v1417 = vld [vmem:[#allocation7] sm:$0xf]
        %v1418 = vld [vmem:[#allocation7 + $0x4] sm:$0xf]
        %v1419 = vld [vmem:[#allocation7 + $0x8] sm:$0xf]
        %v1420 = vld [vmem:[#allocation7 + $0xc] sm:$0xf]
        %v1421 = vld [vmem:[#allocation7 + $0x10] sm:$0xf]
        %v1422 = vld [vmem:[#allocation7 + $0x14] sm:$0xf]
        %v1423 = vld [vmem:[#allocation7 + $0x18] sm:$0xf]
        %v1424 = vld [vmem:[#allocation7 + $0x1c] sm:$0xf]
        %v1433 = vunpack.c.l.b16 %v1417
        %v1434 = vunpack.c.l.b16 %v1418
        %v1435 = vunpack.c.l.b16 %v1419
        %v1436 = vunpack.c.l.b16 %v1420
        %v1437 = vunpack.c.l.b16 %v1421
        %v1438 = vunpack.c.l.b16 %v1422
        %v1439 = vunpack.c.l.b16 %v1423
        %v1440 = vunpack.c.l.b16 %v1424
        %v1441 = vpack.c.b16 %v1434, %v1433
        %v1442 = vpack.c.b16 %v1436, %v1435
        %v1443 = vpack.c.b16 %v1438, %v1437
        %v1444 = vpack.c.b16 %v1440, %v1439
        %v1450 = vsel %vm1343, %v1413, 0
        %v1453 = vsel %vm1343, %v1414, 0
        %v1456 = vsel %vm1343, %v1415, 0
        %v1459 = vsel %vm1343, %v1416, 0
        %1461 = vmatpush.bf16.msra.mxu0 0
        %1462 = vmatpush.bf16.msra.mxu0 0
        %1463 = vmatpush.bf16.msra.mxu0 0
        %1464 = vmatpush.bf16.msra.mxu0 0
        %1465 = vmatpush.bf16.msra.mxu0 %v1444
        %1466 = vmatpush.bf16.msra.mxu0 %v1443
        %1467 = vmatpush.bf16.msra.mxu0 %v1442
        %1468 = vmatpush.bf16.msra.mxu0 %v1441
        %1469 = vmatmul.bf16.gmra.mxu0 %v1450
        %v1470 = vpop.f32.mrf.mxu0
        %v1471 = vadd.f32 0.0, %v1470
        %v1472 = vpop.f32.mrf.mxu0
        %v1473 = vadd.f32 0.0, %v1472
        %1474 = vmatmul.bf16.gmra.mxu0 %v1453
        %v1475 = vpop.f32.mrf.mxu0
        %v1476 = vadd.f32 0.0, %v1475
        %v1477 = vpop.f32.mrf.mxu0
        %v1478 = vadd.f32 0.0, %v1477
        %1479 = vmatmul.bf16.gmra.mxu0 %v1456
        %v1480 = vpop.f32.mrf.mxu0
        %v1481 = vadd.f32 0.0, %v1480
        %v1482 = vpop.f32.mrf.mxu0
        %v1483 = vadd.f32 0.0, %v1482
        %1484 = vmatmul.bf16.gmra.mxu0 %v1459
        %v1485 = vpop.f32.mrf.mxu0
        %v1486 = vadd.f32 0.0, %v1485
        %v1487 = vpop.f32.mrf.mxu0
        %v1488 = vadd.f32 0.0, %v1487
        %1489 = vdwg.mxu0
        %v1490 = vld [vmem:[#allocation9] sm:$0x1]
        %v1491 = vperm.slane %v1490, 0
        %v1492 = vmul.f32 %v1471, %v1491
        %v1493 = vmul.f32 %v1473, %v1491
        %v1494 = vmul.f32 %v1476, %v1491
        %v1495 = vmul.f32 %v1478, %v1491
        %v1496 = vmul.f32 %v1481, %v1491
        %v1497 = vmul.f32 %v1483, %v1491
        %v1498 = vmul.f32 %v1486, %v1491
        %v1499 = vmul.f32 %v1488, %v1491
        %v1500 = vld [vmem:[#allocation9 + $0x1] sm:$0x1]
        %v1501 = vperm.slane %v1500, 0
        %v1502 = vadd.f32 %v1492, %v1501
        %v1503 = vadd.f32 %v1493, %v1501
        %v1504 = vadd.f32 %v1494, %v1501
        %v1505 = vadd.f32 %v1495, %v1501
        %v1506 = vadd.f32 %v1496, %v1501
        %v1507 = vadd.f32 %v1497, %v1501
        %v1508 = vadd.f32 %v1498, %v1501
        %v1509 = vadd.f32 %v1499, %v1501
        %v1510 = vmax.f32 %v1502, 0.0
        %v1511 = vmax.f32 %v1503, 0.0
        %v1512 = vmax.f32 %v1504, 0.0
        %v1513 = vmax.f32 %v1505, 0.0
        %v1514 = vmax.f32 %v1506, 0.0
        %v1515 = vmax.f32 %v1507, 0.0
        %v1516 = vmax.f32 %v1508, 0.0
        %v1517 = vmax.f32 %v1509, 0.0
        %v1518 = vpack.c.bf16 %v1511, %v1510
        %v1519 = vpack.c.bf16 %v1513, %v1512
        %v1520 = vpack.c.bf16 %v1515, %v1514
        %v1521 = vpack.c.bf16 %v1517, %v1516
        %v1522 = vld [vmem:[#allocation10] sm:$0xff]
        %v1523 = vld [vmem:[#allocation10 + $0x8] sm:$0xff]
        %v1524 = vld [vmem:[#allocation10 + $0x10] sm:$0xff]
        %v1525 = vld [vmem:[#allocation10 + $0x18] sm:$0xff]
        %v1526 = vld [vmem:[#allocation10 + $0x20] sm:$0xff]
        %v1527 = vld [vmem:[#allocation10 + $0x28] sm:$0xff]
        %v1528 = vld [vmem:[#allocation10 + $0x30] sm:$0xff]
        %v1529 = vld [vmem:[#allocation10 + $0x38] sm:$0xff]
        %v1530 = vld [vmem:[#allocation10 + $0x40] sm:$0xff]
        %v1531 = vld [vmem:[#allocation10 + $0x48] sm:$0xff]
        %v1532 = vld [vmem:[#allocation10 + $0x50] sm:$0xff]
        %v1533 = vld [vmem:[#allocation10 + $0x58] sm:$0xff]
        %v1534 = vld [vmem:[#allocation10 + $0x60] sm:$0xff]
        %v1535 = vld [vmem:[#allocation10 + $0x68] sm:$0xff]
        %v1536 = vld [vmem:[#allocation10 + $0x70] sm:$0xff]
        %v1537 = vld [vmem:[#allocation10 + $0x78] sm:$0xff]
        %v1554 = vunpack.c.l.b16 %v1522
        %v1555 = vunpack.c.h.b16 %v1522
        %v1556 = vunpack.c.l.b16 %v1523
        %v1557 = vunpack.c.h.b16 %v1523
        %v1558 = vunpack.c.l.b16 %v1524
        %v1559 = vunpack.c.h.b16 %v1524
        %v1560 = vunpack.c.l.b16 %v1525
        %v1561 = vunpack.c.h.b16 %v1525
        %v1562 = vunpack.c.l.b16 %v1526
        %v1563 = vunpack.c.h.b16 %v1526
        %v1564 = vunpack.c.l.b16 %v1527
        %v1565 = vunpack.c.h.b16 %v1527
        %v1566 = vunpack.c.l.b16 %v1528
        %v1567 = vunpack.c.h.b16 %v1528
        %v1568 = vunpack.c.l.b16 %v1529
        %v1569 = vunpack.c.h.b16 %v1529
        %v1570 = vunpack.c.l.b16 %v1530
        %v1571 = vunpack.c.h.b16 %v1530
        %v1572 = vunpack.c.l.b16 %v1531
        %v1573 = vunpack.c.h.b16 %v1531
        %v1574 = vunpack.c.l.b16 %v1532
        %v1575 = vunpack.c.h.b16 %v1532
        %v1576 = vunpack.c.l.b16 %v1533
        %v1577 = vunpack.c.h.b16 %v1533
        %v1578 = vunpack.c.l.b16 %v1534
        %v1579 = vunpack.c.h.b16 %v1534
        %v1580 = vunpack.c.l.b16 %v1535
        %v1581 = vunpack.c.h.b16 %v1535
        %v1582 = vunpack.c.l.b16 %v1536
        %v1583 = vunpack.c.h.b16 %v1536
        %v1584 = vunpack.c.l.b16 %v1537
        %v1585 = vunpack.c.h.b16 %v1537
        %v1586 = vpack.c.b16 %v1556, %v1554
        %v1587 = vpack.c.b16 %v1557, %v1555
        %v1588 = vpack.c.b16 %v1560, %v1558
        %v1589 = vpack.c.b16 %v1561, %v1559
        %v1590 = vpack.c.b16 %v1564, %v1562
        %v1591 = vpack.c.b16 %v1565, %v1563
        %v1592 = vpack.c.b16 %v1568, %v1566
        %v1593 = vpack.c.b16 %v1569, %v1567
        %v1594 = vpack.c.b16 %v1572, %v1570
        %v1595 = vpack.c.b16 %v1573, %v1571
        %v1596 = vpack.c.b16 %v1576, %v1574
        %v1597 = vpack.c.b16 %v1577, %v1575
        %v1598 = vpack.c.b16 %v1580, %v1578
        %v1599 = vpack.c.b16 %v1581, %v1579
        %v1600 = vpack.c.b16 %v1584, %v1582
        %v1601 = vpack.c.b16 %v1585, %v1583
        %1618 = vmatpush.bf16.msra.mxu0 %v1600
        %1619 = vmatpush.bf16.msra.mxu0 %v1598
        %1620 = vmatpush.bf16.msra.mxu0 %v1596
        %1621 = vmatpush.bf16.msra.mxu0 %v1594
        %1622 = vmatpush.bf16.msra.mxu0 %v1592
        %1623 = vmatpush.bf16.msra.mxu0 %v1590
        %1624 = vmatpush.bf16.msra.mxu0 %v1588
        %1625 = vmatpush.bf16.msra.mxu0 %v1586
        %1626 = vmatmul.bf16.gmra.mxu0 %v1518
        %v1627 = vpop.f32.mrf.mxu0
        %v1628 = vadd.f32 0.0, %v1627
        %v1629 = vpop.f32.mrf.mxu0
        %v1630 = vadd.f32 0.0, %v1629
        %1631 = vmatmul.bf16.gmra.mxu0 %v1519
        %v1632 = vpop.f32.mrf.mxu0
        %v1633 = vadd.f32 0.0, %v1632
        %v1634 = vpop.f32.mrf.mxu0
        %v1635 = vadd.f32 0.0, %v1634
        %1636 = vmatmul.bf16.gmra.mxu0 %v1520
        %v1637 = vpop.f32.mrf.mxu0
        %v1638 = vadd.f32 0.0, %v1637
        %v1639 = vpop.f32.mrf.mxu0
        %v1640 = vadd.f32 0.0, %v1639
        %1641 = vmatmul.bf16.gmra.mxu0 %v1521
        %v1642 = vpop.f32.mrf.mxu0
        %v1643 = vadd.f32 0.0, %v1642
        %v1644 = vpop.f32.mrf.mxu0
        %v1645 = vadd.f32 0.0, %v1644
        %1646 = vdwg.mxu0
        %1647 = vmatpush.bf16.msra.mxu0 %v1601
        %1648 = vmatpush.bf16.msra.mxu0 %v1599
        %1649 = vmatpush.bf16.msra.mxu0 %v1597
        %1650 = vmatpush.bf16.msra.mxu0 %v1595
        %1651 = vmatpush.bf16.msra.mxu0 %v1593
        %1652 = vmatpush.bf16.msra.mxu0 %v1591
        %1653 = vmatpush.bf16.msra.mxu0 %v1589
        %1654 = vmatpush.bf16.msra.mxu0 %v1587
        %1655 = vmatmul.bf16.gmra.mxu0 %v1518
        %v1656 = vpop.f32.mrf.mxu0
        %v1657 = vadd.f32 0.0, %v1656
        %v1658 = vpop.f32.mrf.mxu0
        %v1659 = vadd.f32 0.0, %v1658
        %1660 = vmatmul.bf16.gmra.mxu0 %v1519
        %v1661 = vpop.f32.mrf.mxu0
        %v1662 = vadd.f32 0.0, %v1661
        %v1663 = vpop.f32.mrf.mxu0
        %v1664 = vadd.f32 0.0, %v1663
        %1665 = vmatmul.bf16.gmra.mxu0 %v1520
        %v1666 = vpop.f32.mrf.mxu0
        %v1667 = vadd.f32 0.0, %v1666
        %v1668 = vpop.f32.mrf.mxu0
        %v1669 = vadd.f32 0.0, %v1668
        %1670 = vmatmul.bf16.gmra.mxu0 %v1521
        %v1671 = vpop.f32.mrf.mxu0
        %v1672 = vadd.f32 0.0, %v1671
        %v1673 = vpop.f32.mrf.mxu0
        %v1674 = vadd.f32 0.0, %v1673
        %1675 = vdwg.mxu0
        %v1676 = vld [vmem:[#allocation12] ss:$2 sm:$0x3]
        %v1678 = vperm.slane %v1676, 0
        %v1679 = vperm.slane %v1676, 1
        %v1682 = vmul.f32 %v1628, %v1678
        %v1683 = vmul.f32 %v1657, %v1679
        %v1684 = vmul.f32 %v1630, %v1678
        %v1685 = vmul.f32 %v1659, %v1679
        %v1686 = vmul.f32 %v1633, %v1678
        %v1687 = vmul.f32 %v1662, %v1679
        %v1688 = vmul.f32 %v1635, %v1678
        %v1689 = vmul.f32 %v1664, %v1679
        %v1690 = vmul.f32 %v1638, %v1678
        %v1691 = vmul.f32 %v1667, %v1679
        %v1692 = vmul.f32 %v1640, %v1678
        %v1693 = vmul.f32 %v1669, %v1679
        %v1694 = vmul.f32 %v1643, %v1678
        %v1695 = vmul.f32 %v1672, %v1679
        %v1696 = vmul.f32 %v1645, %v1678
        %v1697 = vmul.f32 %v1674, %v1679
        %s1698 = scalar_lea.vmem [#allocation12], 1
        %v1699 = vld [vmem:[%s1698] ss:$2 sm:$0x3]
        %v1701 = vperm.slane %v1699, 0
        %v1702 = vperm.slane %v1699, 1
        %v1705 = vadd.f32 %v1682, %v1701
        %v1706 = vadd.f32 %v1683, %v1702
        %v1707 = vadd.f32 %v1684, %v1701
        %v1708 = vadd.f32 %v1685, %v1702
        %v1709 = vadd.f32 %v1686, %v1701
        %v1710 = vadd.f32 %v1687, %v1702
        %v1711 = vadd.f32 %v1688, %v1701
        %v1712 = vadd.f32 %v1689, %v1702
        %v1713 = vadd.f32 %v1690, %v1701
        %v1714 = vadd.f32 %v1691, %v1702
        %v1715 = vadd.f32 %v1692, %v1701
        %v1716 = vadd.f32 %v1693, %v1702
        %v1717 = vadd.f32 %v1694, %v1701
        %v1718 = vadd.f32 %v1695, %v1702
        %v1719 = vadd.f32 %v1696, %v1701
        %v1720 = vadd.f32 %v1697, %v1702
        %v1721 = vmax.f32 %v1705, 0.0
        %v1722 = vmax.f32 %v1706, 0.0
        %v1723 = vmax.f32 %v1707, 0.0
        %v1724 = vmax.f32 %v1708, 0.0
        %v1725 = vmax.f32 %v1709, 0.0
        %v1726 = vmax.f32 %v1710, 0.0
        %v1727 = vmax.f32 %v1711, 0.0
        %v1728 = vmax.f32 %v1712, 0.0
        %v1729 = vmax.f32 %v1713, 0.0
        %v1730 = vmax.f32 %v1714, 0.0
        %v1731 = vmax.f32 %v1715, 0.0
        %v1732 = vmax.f32 %v1716, 0.0
        %v1733 = vmax.f32 %v1717, 0.0
        %v1734 = vmax.f32 %v1718, 0.0
        %v1735 = vmax.f32 %v1719, 0.0
        %v1736 = vmax.f32 %v1720, 0.0
        %v1737 = vmax.f32 %v1721, %v1725
        %v1738 = vmax.f32 %v1723, %v1727
        %v1739 = vmax.f32 %v1737, %v1729
        %v1740 = vmax.f32 %v1738, %v1731
        %v1741 = vmax.f32 %v1739, %v1733
        %v1742 = vmax.f32 %v1740, %v1735
        %v1743 = vmax.f32 %v1741, %v1742
        %v1744 = vrot.slane %v1743, 4
        %v1745 = vmax.f32 %v1743, %v1744
        %v1746 = vrot.slane %v1745, 2
        %v1747 = vmax.f32 %v1745, %v1746
        %v1748 = vrot.slane %v1747, 1
        %v1749 = vmax.f32 %v1747, %v1748
        %v1750 = vmax.f32 %v1722, %v1726
        %v1751 = vmax.f32 %v1724, %v1728
        %v1752 = vmax.f32 %v1750, %v1730
        %v1753 = vmax.f32 %v1751, %v1732
        %v1754 = vmax.f32 %v1752, %v1734
        %v1755 = vmax.f32 %v1753, %v1736
        %v1756 = vmax.f32 %v1754, %v1755
        %v1757 = vrot.slane %v1756, 4
        %v1758 = vmax.f32 %v1756, %v1757
        %v1759 = vrot.slane %v1758, 2
        %v1760 = vmax.f32 %v1758, %v1759
        %v1761 = vrot.slane %v1760, 1
        %v1762 = vmax.f32 %v1760, %v1761
        %v1763 = vpack.c.bf16 %v1749, %v1749
        %v1764 = vpack.c.bf16 %v1762, %v1762
        %v1765 = vld [vmem:[#allocation13] sm:$0xf]
        %v1766 = vld [vmem:[#allocation13 + $0x4] sm:$0xf]
        %v1767 = vld [vmem:[#allocation13 + $0x8] sm:$0xf]
        %v1768 = vld [vmem:[#allocation13 + $0xc] sm:$0xf]
        %v1769 = vld [vmem:[#allocation13 + $0x10] sm:$0xf]
        %v1770 = vld [vmem:[#allocation13 + $0x14] sm:$0xf]
        %v1771 = vld [vmem:[#allocation13 + $0x18] sm:$0xf]
        %v1772 = vld [vmem:[#allocation13 + $0x1c] sm:$0xf]
        %v1773 = vld [vmem:[#allocation13 + $0x20] sm:$0xf]
        %v1774 = vld [vmem:[#allocation13 + $0x24] sm:$0xf]
        %v1775 = vld [vmem:[#allocation13 + $0x28] sm:$0xf]
        %v1776 = vld [vmem:[#allocation13 + $0x2c] sm:$0xf]
        %v1777 = vld [vmem:[#allocation13 + $0x30] sm:$0xf]
        %v1778 = vld [vmem:[#allocation13 + $0x34] sm:$0xf]
        %v1779 = vld [vmem:[#allocation13 + $0x38] sm:$0xf]
        %v1780 = vld [vmem:[#allocation13 + $0x3c] sm:$0xf]
        %v1781 = vld [vmem:[#allocation13 + $0x40] sm:$0xf]
        %v1782 = vld [vmem:[#allocation13 + $0x44] sm:$0xf]
        %v1783 = vld [vmem:[#allocation13 + $0x48] sm:$0xf]
        %v1784 = vld [vmem:[#allocation13 + $0x4c] sm:$0xf]
        %v1785 = vld [vmem:[#allocation13 + $0x50] sm:$0xf]
        %v1786 = vld [vmem:[#allocation13 + $0x54] sm:$0xf]
        %v1787 = vld [vmem:[#allocation13 + $0x58] sm:$0xf]
        %v1788 = vld [vmem:[#allocation13 + $0x5c] sm:$0xf]
        %v1789 = vld [vmem:[#allocation13 + $0x60] sm:$0xf]
        %v1790 = vld [vmem:[#allocation13 + $0x64] sm:$0xf]
        %v1791 = vld [vmem:[#allocation13 + $0x68] sm:$0xf]
        %v1792 = vld [vmem:[#allocation13 + $0x6c] sm:$0xf]
        %v1793 = vld [vmem:[#allocation13 + $0x70] sm:$0xf]
        %v1794 = vld [vmem:[#allocation13 + $0x74] sm:$0xf]
        %v1795 = vld [vmem:[#allocation13 + $0x78] sm:$0xf]
        %v1796 = vld [vmem:[#allocation13 + $0x7c] sm:$0xf]
        %v1829 = vunpack.c.l.b16 %v1765
        %v1830 = vunpack.c.l.b16 %v1766
        %v1831 = vunpack.c.l.b16 %v1767
        %v1832 = vunpack.c.l.b16 %v1768
        %v1833 = vunpack.c.l.b16 %v1769
        %v1834 = vunpack.c.l.b16 %v1770
        %v1835 = vunpack.c.l.b16 %v1771
        %v1836 = vunpack.c.l.b16 %v1772
        %v1837 = vunpack.c.l.b16 %v1773
        %v1838 = vunpack.c.l.b16 %v1774
        %v1839 = vunpack.c.l.b16 %v1775
        %v1840 = vunpack.c.l.b16 %v1776
        %v1841 = vunpack.c.l.b16 %v1777
        %v1842 = vunpack.c.l.b16 %v1778
        %v1843 = vunpack.c.l.b16 %v1779
        %v1844 = vunpack.c.l.b16 %v1780
        %v1845 = vunpack.c.l.b16 %v1781
        %v1846 = vunpack.c.l.b16 %v1782
        %v1847 = vunpack.c.l.b16 %v1783
        %v1848 = vunpack.c.l.b16 %v1784
        %v1849 = vunpack.c.l.b16 %v1785
        %v1850 = vunpack.c.l.b16 %v1786
        %v1851 = vunpack.c.l.b16 %v1787
        %v1852 = vunpack.c.l.b16 %v1788
        %v1853 = vunpack.c.l.b16 %v1789
        %v1854 = vunpack.c.l.b16 %v1790
        %v1855 = vunpack.c.l.b16 %v1791
        %v1856 = vunpack.c.l.b16 %v1792
        %v1857 = vunpack.c.l.b16 %v1793
        %v1858 = vunpack.c.l.b16 %v1794
        %v1859 = vunpack.c.l.b16 %v1795
        %v1860 = vunpack.c.l.b16 %v1796
        %v1861 = vpack.c.b16 %v1830, %v1829
        %v1862 = vpack.c.b16 %v1832, %v1831
        %v1863 = vpack.c.b16 %v1834, %v1833
        %v1864 = vpack.c.b16 %v1836, %v1835
        %v1865 = vpack.c.b16 %v1838, %v1837
        %v1866 = vpack.c.b16 %v1840, %v1839
        %v1867 = vpack.c.b16 %v1842, %v1841
        %v1868 = vpack.c.b16 %v1844, %v1843
        %v1869 = vpack.c.b16 %v1846, %v1845
        %v1870 = vpack.c.b16 %v1848, %v1847
        %v1871 = vpack.c.b16 %v1850, %v1849
        %v1872 = vpack.c.b16 %v1852, %v1851
        %v1873 = vpack.c.b16 %v1854, %v1853
        %v1874 = vpack.c.b16 %v1856, %v1855
        %v1875 = vpack.c.b16 %v1858, %v1857
        %v1876 = vpack.c.b16 %v1860, %v1859
        %1893 = vmatpush.bf16.msra.mxu0 %v1868
        %1894 = vmatpush.bf16.msra.mxu0 %v1867
        %1895 = vmatpush.bf16.msra.mxu0 %v1866
        %1896 = vmatpush.bf16.msra.mxu0 %v1865
        %1897 = vmatpush.bf16.msra.mxu0 %v1864
        %1898 = vmatpush.bf16.msra.mxu0 %v1863
        %1899 = vmatpush.bf16.msra.mxu0 %v1862
        %1900 = vmatpush.bf16.msra.mxu0 %v1861
        %1901 = vmatmul.bf16.gmra.mxu0 %v1763
        %v1902 = vpop.f32.mrf.mxu0
        %v1903 = vadd.f32 0.0, %v1902
        %v1904 = vpop.f32.mrf.mxu0
        %1905 = vdwg.mxu0
        %1906 = vmatpush.bf16.msra.mxu0 %v1876
        %1907 = vmatpush.bf16.msra.mxu0 %v1875
        %1908 = vmatpush.bf16.msra.mxu0 %v1874
        %1909 = vmatpush.bf16.msra.mxu0 %v1873
        %1910 = vmatpush.bf16.msra.mxu0 %v1872
        %1911 = vmatpush.bf16.msra.mxu0 %v1871
        %1912 = vmatpush.bf16.msra.mxu0 %v1870
        %1913 = vmatpush.bf16.msra.mxu0 %v1869
        %1914 = vmatmul.bf16.gmra.mxu0 %v1764
        %v1915 = vpop.f32.mrf.mxu0
        %v1916 = vadd.f32 %v1903, %v1915
        %v1917 = vpop.f32.mrf.mxu0
        %1918 = vdwg.mxu0
        %v1919 = vld [vmem:[#allocation15] sm:$0x1]
        %v1920 = vmul.f32 %v1916, %v1919
        %v1921 = vld [vmem:[#allocation15 + $0x1] sm:$0x1]
        %v1922 = vadd.f32 %v1920, %v1921
        %v1923 = vmax.f32 %v1922, 0.0
        %v1924 = vpack.c.bf16 %v1923, %v1923
        %v1925 = vld [vmem:[%s11] sm:$0xf]
        %v1926 = vld [vmem:[%s11 + $0x4] sm:$0xf]
        %v1927 = vld [vmem:[%s11 + $0x8] sm:$0xf]
        %v1928 = vld [vmem:[%s11 + $0xc] sm:$0xf]
        %v1929 = vld [vmem:[%s11 + $0x10] sm:$0xf]
        %v1930 = vld [vmem:[%s11 + $0x14] sm:$0xf]
        %v1931 = vld [vmem:[%s11 + $0x18] sm:$0xf]
        %v1932 = vld [vmem:[%s11 + $0x1c] sm:$0xf]
        %v1933 = vld [vmem:[%s11 + $0x20] sm:$0xf]
        %v1934 = vld [vmem:[%s11 + $0x24] sm:$0xf]
        %v1935 = vld [vmem:[%s11 + $0x28] sm:$0xf]
        %v1936 = vld [vmem:[%s11 + $0x2c] sm:$0xf]
        %v1937 = vld [vmem:[%s11 + $0x30] sm:$0xf]
        %v1938 = vld [vmem:[%s11 + $0x34] sm:$0xf]
        %v1939 = vld [vmem:[%s11 + $0x38] sm:$0xf]
        %v1940 = vld [vmem:[%s11 + $0x3c] sm:$0xf]
        %v1957 = vunpack.c.l.b16 %v1925
        %v1958 = vunpack.c.l.b16 %v1926
        %v1959 = vunpack.c.l.b16 %v1927
        %v1960 = vunpack.c.l.b16 %v1928
        %v1961 = vunpack.c.l.b16 %v1929
        %v1962 = vunpack.c.l.b16 %v1930
        %v1963 = vunpack.c.l.b16 %v1931
        %v1964 = vunpack.c.l.b16 %v1932
        %v1965 = vunpack.c.l.b16 %v1933
        %v1966 = vunpack.c.l.b16 %v1934
        %v1967 = vunpack.c.l.b16 %v1935
        %v1968 = vunpack.c.l.b16 %v1936
        %v1969 = vunpack.c.l.b16 %v1937
        %v1970 = vunpack.c.l.b16 %v1938
        %v1971 = vunpack.c.l.b16 %v1939
        %v1972 = vunpack.c.l.b16 %v1940
        %v1973 = vpack.c.b16 %v1958, %v1957
        %v1974 = vpack.c.b16 %v1960, %v1959
        %v1975 = vpack.c.b16 %v1962, %v1961
        %v1976 = vpack.c.b16 %v1964, %v1963
        %v1977 = vpack.c.b16 %v1966, %v1965
        %v1978 = vpack.c.b16 %v1968, %v1967
        %v1979 = vpack.c.b16 %v1970, %v1969
        %v1980 = vpack.c.b16 %v1972, %v1971
        %1989 = vmatpush.bf16.msra.mxu0 %v1980
        %1990 = vmatpush.bf16.msra.mxu0 %v1979
        %1991 = vmatpush.bf16.msra.mxu0 %v1978
        %1992 = vmatpush.bf16.msra.mxu0 %v1977
        %1993 = vmatpush.bf16.msra.mxu0 %v1976
        %1994 = vmatpush.bf16.msra.mxu0 %v1975
        %1995 = vmatpush.bf16.msra.mxu0 %v1974
        %1996 = vmatpush.bf16.msra.mxu0 %v1973
        %1997 = vmatmul.bf16.gmra.mxu0 %v1924
        %v1998 = vpop.f32.mrf.mxu0
        %v1999 = vadd.f32 0.0, %v1998
        %v2000 = vpop.f32.mrf.mxu0
        %2001 = vdwg.mxu0
        %v2002 = vld [vmem:[#allocation16] sm:$0x1]
        %v2003 = vmul.f32 %v1999, %v2002
        %v2004 = vld [vmem:[#allocation16 + $0x1] sm:$0x1]
        %v2005 = vadd.f32 %v2003, %v2004
        %v2006 = vmax.f32 %v2005, 0.0
        %v2007 = vpack.c.bf16 %v2006, %v2006
        %v2008 = vld [vmem:[#allocation18] sm:$0xff]
        %v2009 = vld [vmem:[#allocation18 + $0x8] sm:$0xff]
        %v2010 = vld [vmem:[#allocation18 + $0x10] sm:$0xff]
        %v2011 = vld [vmem:[#allocation18 + $0x18] sm:$0xff]
        %v2012 = vld [vmem:[#allocation18 + $0x20] sm:$0xff]
        %v2013 = vld [vmem:[#allocation18 + $0x28] sm:$0xff]
        %v2014 = vld [vmem:[#allocation18 + $0x30] sm:$0xff]
        %v2015 = vld [vmem:[#allocation18 + $0x38] sm:$0xff]
        %v2016 = vld [vmem:[#allocation18 + $0x40] sm:$0xff]
        %v2017 = vld [vmem:[#allocation18 + $0x48] sm:$0xff]
        %v2018 = vld [vmem:[#allocation18 + $0x50] sm:$0xff]
        %v2019 = vld [vmem:[#allocation18 + $0x58] sm:$0xff]
        %v2020 = vld [vmem:[#allocation18 + $0x60] sm:$0xff]
        %v2021 = vld [vmem:[#allocation18 + $0x68] sm:$0xff]
        %v2022 = vld [vmem:[#allocation18 + $0x70] sm:$0xff]
        %v2023 = vld [vmem:[#allocation18 + $0x78] sm:$0xff]
        %v2024 = vld [vmem:[#allocation18 + $0x80] sm:$0xff]
        %v2025 = vld [vmem:[#allocation18 + $0x88] sm:$0xff]
        %v2026 = vld [vmem:[#allocation18 + $0x90] sm:$0xff]
        %v2027 = vld [vmem:[#allocation18 + $0x98] sm:$0xff]
        %v2028 = vld [vmem:[#allocation18 + $0xa0] sm:$0xff]
        %v2029 = vld [vmem:[#allocation18 + $0xa8] sm:$0xff]
        %v2030 = vld [vmem:[#allocation18 + $0xb0] sm:$0xff]
        %v2031 = vld [vmem:[#allocation18 + $0xb8] sm:$0xff]
        %v2032 = vld [vmem:[#allocation18 + $0xc0] sm:$0xff]
        %v2033 = vld [vmem:[#allocation18 + $0xc8] sm:$0xff]
        %v2034 = vld [vmem:[#allocation18 + $0xd0] sm:$0xff]
        %v2035 = vld [vmem:[#allocation18 + $0xd8] sm:$0xff]
        %v2036 = vld [vmem:[#allocation18 + $0xe0] sm:$0xff]
        %v2037 = vld [vmem:[#allocation18 + $0xe8] sm:$0xff]
        %v2038 = vld [vmem:[#allocation18 + $0xf0] sm:$0xff]
        %v2039 = vld [vmem:[#allocation18 + $0xf8] sm:$0xff]
        %v2040 = vld [vmem:[#allocation18 + $0x100] sm:$0xff]
        %v2041 = vld [vmem:[#allocation18 + $0x108] sm:$0xff]
        %v2042 = vld [vmem:[#allocation18 + $0x110] sm:$0xff]
        %v2043 = vld [vmem:[#allocation18 + $0x118] sm:$0xff]
        %v2044 = vld [vmem:[#allocation18 + $0x120] sm:$0xff]
        %v2045 = vld [vmem:[#allocation18 + $0x128] sm:$0xff]
        %v2046 = vld [vmem:[#allocation18 + $0x130] sm:$0xff]
        %v2047 = vld [vmem:[#allocation18 + $0x138] sm:$0xff]
        %v2048 = vld [vmem:[#allocation18 + $0x140] sm:$0xff]
        %v2049 = vld [vmem:[#allocation18 + $0x148] sm:$0xff]
        %v2050 = vld [vmem:[#allocation18 + $0x150] sm:$0xff]
        %v2051 = vld [vmem:[#allocation18 + $0x158] sm:$0xff]
        %v2052 = vld [vmem:[#allocation18 + $0x160] sm:$0xff]
        %v2053 = vld [vmem:[#allocation18 + $0x168] sm:$0xff]
        %v2054 = vld [vmem:[#allocation18 + $0x170] sm:$0xff]
        %v2055 = vld [vmem:[#allocation18 + $0x178] sm:$0xff]
        %v2056 = vld [vmem:[#allocation18 + $0x180] sm:$0xff]
        %v2057 = vld [vmem:[#allocation18 + $0x188] sm:$0xff]
        %v2058 = vld [vmem:[#allocation18 + $0x190] sm:$0xff]
        %v2059 = vld [vmem:[#allocation18 + $0x198] sm:$0xff]
        %v2060 = vld [vmem:[#allocation18 + $0x1a0] sm:$0xff]
        %v2061 = vld [vmem:[#allocation18 + $0x1a8] sm:$0xff]
        %v2062 = vld [vmem:[#allocation18 + $0x1b0] sm:$0xff]
        %v2063 = vld [vmem:[#allocation18 + $0x1b8] sm:$0xff]
        %v2064 = vld [vmem:[#allocation18 + $0x1c0] sm:$0xff]
        %v2065 = vld [vmem:[#allocation18 + $0x1c8] sm:$0xff]
        %v2066 = vld [vmem:[#allocation18 + $0x1d0] sm:$0xff]
        %v2067 = vld [vmem:[#allocation18 + $0x1d8] sm:$0xff]
        %v2068 = vld [vmem:[#allocation18 + $0x1e0] sm:$0xff]
        %v2069 = vld [vmem:[#allocation18 + $0x1e8] sm:$0xff]
        %v2070 = vld [vmem:[#allocation18 + $0x1f0] sm:$0xff]
        %v2071 = vld [vmem:[#allocation18 + $0x1f8] sm:$0xff]
        %v2072 = vld [vmem:[#allocation18 + $0x200] sm:$0xff]
        %v2073 = vld [vmem:[#allocation18 + $0x208] sm:$0xff]
        %v2074 = vld [vmem:[#allocation18 + $0x210] sm:$0xff]
        %v2075 = vld [vmem:[#allocation18 + $0x218] sm:$0xff]
        %v2076 = vld [vmem:[#allocation18 + $0x220] sm:$0xff]
        %v2077 = vld [vmem:[#allocation18 + $0x228] sm:$0xff]
        %v2078 = vld [vmem:[#allocation18 + $0x230] sm:$0xff]
        %v2079 = vld [vmem:[#allocation18 + $0x238] sm:$0xff]
        %v2080 = vld [vmem:[#allocation18 + $0x240] sm:$0xff]
        %v2081 = vld [vmem:[#allocation18 + $0x248] sm:$0xff]
        %v2082 = vld [vmem:[#allocation18 + $0x250] sm:$0xff]
        %v2083 = vld [vmem:[#allocation18 + $0x258] sm:$0xff]
        %v2084 = vld [vmem:[#allocation18 + $0x260] sm:$0xff]
        %v2085 = vld [vmem:[#allocation18 + $0x268] sm:$0xff]
        %v2086 = vld [vmem:[#allocation18 + $0x270] sm:$0xff]
        %v2087 = vld [vmem:[#allocation18 + $0x278] sm:$0xff]
        %v2088 = vld [vmem:[#allocation18 + $0x280] sm:$0xff]
        %v2089 = vld [vmem:[#allocation18 + $0x288] sm:$0xff]
        %v2090 = vld [vmem:[#allocation18 + $0x290] sm:$0xff]
        %v2091 = vld [vmem:[#allocation18 + $0x298] sm:$0xff]
        %v2092 = vld [vmem:[#allocation18 + $0x2a0] sm:$0xff]
        %v2093 = vld [vmem:[#allocation18 + $0x2a8] sm:$0xff]
        %v2094 = vld [vmem:[#allocation18 + $0x2b0] sm:$0xff]
        %v2095 = vld [vmem:[#allocation18 + $0x2b8] sm:$0xff]
        %v2096 = vld [vmem:[#allocation18 + $0x2c0] sm:$0xff]
        %v2097 = vld [vmem:[#allocation18 + $0x2c8] sm:$0xff]
        %v2098 = vld [vmem:[#allocation18 + $0x2d0] sm:$0xff]
        %v2099 = vld [vmem:[#allocation18 + $0x2d8] sm:$0xff]
        %v2100 = vld [vmem:[#allocation18 + $0x2e0] sm:$0xff]
        %v2101 = vld [vmem:[#allocation18 + $0x2e8] sm:$0xff]
        %v2102 = vld [vmem:[#allocation18 + $0x2f0] sm:$0xff]
        %v2103 = vld [vmem:[#allocation18 + $0x2f8] sm:$0xff]
        %v2104 = vld [vmem:[#allocation18 + $0x300] sm:$0xff]
        %v2105 = vld [vmem:[#allocation18 + $0x308] sm:$0xff]
        %v2106 = vld [vmem:[#allocation18 + $0x310] sm:$0xff]
        %v2107 = vld [vmem:[#allocation18 + $0x318] sm:$0xff]
        %v2108 = vld [vmem:[#allocation18 + $0x320] sm:$0xff]
        %v2109 = vld [vmem:[#allocation18 + $0x328] sm:$0xff]
        %v2110 = vld [vmem:[#allocation18 + $0x330] sm:$0xff]
        %v2111 = vld [vmem:[#allocation18 + $0x338] sm:$0xff]
        %v2112 = vld [vmem:[#allocation18 + $0x340] sm:$0xff]
        %v2113 = vld [vmem:[#allocation18 + $0x348] sm:$0xff]
        %v2114 = vld [vmem:[#allocation18 + $0x350] sm:$0xff]
        %v2115 = vld [vmem:[#allocation18 + $0x358] sm:$0xff]
        %v2116 = vld [vmem:[#allocation18 + $0x360] sm:$0xff]
        %v2117 = vld [vmem:[#allocation18 + $0x368] sm:$0xff]
        %v2118 = vld [vmem:[#allocation18 + $0x370] sm:$0xff]
        %v2119 = vld [vmem:[#allocation18 + $0x378] sm:$0xff]
        %v2120 = vld [vmem:[#allocation18 + $0x380] sm:$0xff]
        %v2121 = vld [vmem:[#allocation18 + $0x388] sm:$0xff]
        %v2122 = vld [vmem:[#allocation18 + $0x390] sm:$0xff]
        %v2123 = vld [vmem:[#allocation18 + $0x398] sm:$0xff]
        %v2124 = vld [vmem:[#allocation18 + $0x3a0] sm:$0xff]
        %v2125 = vld [vmem:[#allocation18 + $0x3a8] sm:$0xff]
        %v2126 = vld [vmem:[#allocation18 + $0x3b0] sm:$0xff]
        %v2127 = vld [vmem:[#allocation18 + $0x3b8] sm:$0xff]
        %v2128 = vld [vmem:[#allocation18 + $0x3c0] sm:$0xff]
        %v2129 = vld [vmem:[#allocation18 + $0x3c8] sm:$0xff]
        %v2130 = vld [vmem:[#allocation18 + $0x3d0] sm:$0xff]
        %v2131 = vld [vmem:[#allocation18 + $0x3d8] sm:$0xff]
        %v2132 = vld [vmem:[#allocation18 + $0x3e0] sm:$0xff]
        %v2133 = vld [vmem:[#allocation18 + $0x3e8] sm:$0xff]
        %v2134 = vld [vmem:[#allocation18 + $0x3f0] sm:$0xff]
        %v2135 = vld [vmem:[#allocation18 + $0x3f8] sm:$0xff]
        %v2264 = vunpack.c.l.b16 %v2008
        %v2265 = vunpack.c.h.b16 %v2008
        %v2266 = vunpack.c.l.b16 %v2009
        %v2267 = vunpack.c.h.b16 %v2009
        %v2268 = vunpack.c.l.b16 %v2010
        %v2269 = vunpack.c.h.b16 %v2010
        %v2270 = vunpack.c.l.b16 %v2011
        %v2271 = vunpack.c.h.b16 %v2011
        %v2272 = vunpack.c.l.b16 %v2012
        %v2273 = vunpack.c.h.b16 %v2012
        %v2274 = vunpack.c.l.b16 %v2013
        %v2275 = vunpack.c.h.b16 %v2013
        %v2276 = vunpack.c.l.b16 %v2014
        %v2277 = vunpack.c.h.b16 %v2014
        %v2278 = vunpack.c.l.b16 %v2015
        %v2279 = vunpack.c.h.b16 %v2015
        %v2280 = vunpack.c.l.b16 %v2016
        %v2281 = vunpack.c.h.b16 %v2016
        %v2282 = vunpack.c.l.b16 %v2017
        %v2283 = vunpack.c.h.b16 %v2017
        %v2284 = vunpack.c.l.b16 %v2018
        %v2285 = vunpack.c.h.b16 %v2018
        %v2286 = vunpack.c.l.b16 %v2019
        %v2287 = vunpack.c.h.b16 %v2019
        %v2288 = vunpack.c.l.b16 %v2020
        %v2289 = vunpack.c.h.b16 %v2020
        %v2290 = vunpack.c.l.b16 %v2021
        %v2291 = vunpack.c.h.b16 %v2021
        %v2292 = vunpack.c.l.b16 %v2022
        %v2293 = vunpack.c.h.b16 %v2022
        %v2294 = vunpack.c.l.b16 %v2023
        %v2295 = vunpack.c.h.b16 %v2023
        %v2296 = vunpack.c.l.b16 %v2024
        %v2297 = vunpack.c.h.b16 %v2024
        %v2298 = vunpack.c.l.b16 %v2025
        %v2299 = vunpack.c.h.b16 %v2025
        %v2300 = vunpack.c.l.b16 %v2026
        %v2301 = vunpack.c.h.b16 %v2026
        %v2302 = vunpack.c.l.b16 %v2027
        %v2303 = vunpack.c.h.b16 %v2027
        %v2304 = vunpack.c.l.b16 %v2028
        %v2305 = vunpack.c.h.b16 %v2028
        %v2306 = vunpack.c.l.b16 %v2029
        %v2307 = vunpack.c.h.b16 %v2029
        %v2308 = vunpack.c.l.b16 %v2030
        %v2309 = vunpack.c.h.b16 %v2030
        %v2310 = vunpack.c.l.b16 %v2031
        %v2311 = vunpack.c.h.b16 %v2031
        %v2312 = vunpack.c.l.b16 %v2032
        %v2313 = vunpack.c.h.b16 %v2032
        %v2314 = vunpack.c.l.b16 %v2033
        %v2315 = vunpack.c.h.b16 %v2033
        %v2316 = vunpack.c.l.b16 %v2034
        %v2317 = vunpack.c.h.b16 %v2034
        %v2318 = vunpack.c.l.b16 %v2035
        %v2319 = vunpack.c.h.b16 %v2035
        %v2320 = vunpack.c.l.b16 %v2036
        %v2321 = vunpack.c.h.b16 %v2036
        %v2322 = vunpack.c.l.b16 %v2037
        %v2323 = vunpack.c.h.b16 %v2037
        %v2324 = vunpack.c.l.b16 %v2038
        %v2325 = vunpack.c.h.b16 %v2038
        %v2326 = vunpack.c.l.b16 %v2039
        %v2327 = vunpack.c.h.b16 %v2039
        %v2328 = vunpack.c.l.b16 %v2040
        %v2329 = vunpack.c.h.b16 %v2040
        %v2330 = vunpack.c.l.b16 %v2041
        %v2331 = vunpack.c.h.b16 %v2041
        %v2332 = vunpack.c.l.b16 %v2042
        %v2333 = vunpack.c.h.b16 %v2042
        %v2334 = vunpack.c.l.b16 %v2043
        %v2335 = vunpack.c.h.b16 %v2043
        %v2336 = vunpack.c.l.b16 %v2044
        %v2337 = vunpack.c.h.b16 %v2044
        %v2338 = vunpack.c.l.b16 %v2045
        %v2339 = vunpack.c.h.b16 %v2045
        %v2340 = vunpack.c.l.b16 %v2046
        %v2341 = vunpack.c.h.b16 %v2046
        %v2342 = vunpack.c.l.b16 %v2047
        %v2343 = vunpack.c.h.b16 %v2047
        %v2344 = vunpack.c.l.b16 %v2048
        %v2345 = vunpack.c.h.b16 %v2048
        %v2346 = vunpack.c.l.b16 %v2049
        %v2347 = vunpack.c.h.b16 %v2049
        %v2348 = vunpack.c.l.b16 %v2050
        %v2349 = vunpack.c.h.b16 %v2050
        %v2350 = vunpack.c.l.b16 %v2051
        %v2351 = vunpack.c.h.b16 %v2051
        %v2352 = vunpack.c.l.b16 %v2052
        %v2353 = vunpack.c.h.b16 %v2052
        %v2354 = vunpack.c.l.b16 %v2053
        %v2355 = vunpack.c.h.b16 %v2053
        %v2356 = vunpack.c.l.b16 %v2054
        %v2357 = vunpack.c.h.b16 %v2054
        %v2358 = vunpack.c.l.b16 %v2055
        %v2359 = vunpack.c.h.b16 %v2055
        %v2360 = vunpack.c.l.b16 %v2056
        %v2361 = vunpack.c.h.b16 %v2056
        %v2362 = vunpack.c.l.b16 %v2057
        %v2363 = vunpack.c.h.b16 %v2057
        %v2364 = vunpack.c.l.b16 %v2058
        %v2365 = vunpack.c.h.b16 %v2058
        %v2366 = vunpack.c.l.b16 %v2059
        %v2367 = vunpack.c.h.b16 %v2059
        %v2368 = vunpack.c.l.b16 %v2060
        %v2369 = vunpack.c.h.b16 %v2060
        %v2370 = vunpack.c.l.b16 %v2061
        %v2371 = vunpack.c.h.b16 %v2061
        %v2372 = vunpack.c.l.b16 %v2062
        %v2373 = vunpack.c.h.b16 %v2062
        %v2374 = vunpack.c.l.b16 %v2063
        %v2375 = vunpack.c.h.b16 %v2063
        %v2376 = vunpack.c.l.b16 %v2064
        %v2377 = vunpack.c.h.b16 %v2064
        %v2378 = vunpack.c.l.b16 %v2065
        %v2379 = vunpack.c.h.b16 %v2065
        %v2380 = vunpack.c.l.b16 %v2066
        %v2381 = vunpack.c.h.b16 %v2066
        %v2382 = vunpack.c.l.b16 %v2067
        %v2383 = vunpack.c.h.b16 %v2067
        %v2384 = vunpack.c.l.b16 %v2068
        %v2385 = vunpack.c.h.b16 %v2068
        %v2386 = vunpack.c.l.b16 %v2069
        %v2387 = vunpack.c.h.b16 %v2069
        %v2388 = vunpack.c.l.b16 %v2070
        %v2389 = vunpack.c.h.b16 %v2070
        %v2390 = vunpack.c.l.b16 %v2071
        %v2391 = vunpack.c.h.b16 %v2071
        %v2392 = vunpack.c.l.b16 %v2072
        %v2393 = vunpack.c.h.b16 %v2072
        %v2394 = vunpack.c.l.b16 %v2073
        %v2395 = vunpack.c.h.b16 %v2073
        %v2396 = vunpack.c.l.b16 %v2074
        %v2397 = vunpack.c.h.b16 %v2074
        %v2398 = vunpack.c.l.b16 %v2075
        %v2399 = vunpack.c.h.b16 %v2075
        %v2400 = vunpack.c.l.b16 %v2076
        %v2401 = vunpack.c.h.b16 %v2076
        %v2402 = vunpack.c.l.b16 %v2077
        %v2403 = vunpack.c.h.b16 %v2077
        %v2404 = vunpack.c.l.b16 %v2078
        %v2405 = vunpack.c.h.b16 %v2078
        %v2406 = vunpack.c.l.b16 %v2079
        %v2407 = vunpack.c.h.b16 %v2079
        %v2408 = vunpack.c.l.b16 %v2080
        %v2409 = vunpack.c.h.b16 %v2080
        %v2410 = vunpack.c.l.b16 %v2081
        %v2411 = vunpack.c.h.b16 %v2081
        %v2412 = vunpack.c.l.b16 %v2082
        %v2413 = vunpack.c.h.b16 %v2082
        %v2414 = vunpack.c.l.b16 %v2083
        %v2415 = vunpack.c.h.b16 %v2083
        %v2416 = vunpack.c.l.b16 %v2084
        %v2417 = vunpack.c.h.b16 %v2084
        %v2418 = vunpack.c.l.b16 %v2085
        %v2419 = vunpack.c.h.b16 %v2085
        %v2420 = vunpack.c.l.b16 %v2086
        %v2421 = vunpack.c.h.b16 %v2086
        %v2422 = vunpack.c.l.b16 %v2087
        %v2423 = vunpack.c.h.b16 %v2087
        %v2424 = vunpack.c.l.b16 %v2088
        %v2425 = vunpack.c.h.b16 %v2088
        %v2426 = vunpack.c.l.b16 %v2089
        %v2427 = vunpack.c.h.b16 %v2089
        %v2428 = vunpack.c.l.b16 %v2090
        %v2429 = vunpack.c.h.b16 %v2090
        %v2430 = vunpack.c.l.b16 %v2091
        %v2431 = vunpack.c.h.b16 %v2091
        %v2432 = vunpack.c.l.b16 %v2092
        %v2433 = vunpack.c.h.b16 %v2092
        %v2434 = vunpack.c.l.b16 %v2093
        %v2435 = vunpack.c.h.b16 %v2093
        %v2436 = vunpack.c.l.b16 %v2094
        %v2437 = vunpack.c.h.b16 %v2094
        %v2438 = vunpack.c.l.b16 %v2095
        %v2439 = vunpack.c.h.b16 %v2095
        %v2440 = vunpack.c.l.b16 %v2096
        %v2441 = vunpack.c.h.b16 %v2096
        %v2442 = vunpack.c.l.b16 %v2097
        %v2443 = vunpack.c.h.b16 %v2097
        %v2444 = vunpack.c.l.b16 %v2098
        %v2445 = vunpack.c.h.b16 %v2098
        %v2446 = vunpack.c.l.b16 %v2099
        %v2447 = vunpack.c.h.b16 %v2099
        %v2448 = vunpack.c.l.b16 %v2100
        %v2449 = vunpack.c.h.b16 %v2100
        %v2450 = vunpack.c.l.b16 %v2101
        %v2451 = vunpack.c.h.b16 %v2101
        %v2452 = vunpack.c.l.b16 %v2102
        %v2453 = vunpack.c.h.b16 %v2102
        %v2454 = vunpack.c.l.b16 %v2103
        %v2455 = vunpack.c.h.b16 %v2103
        %v2456 = vunpack.c.l.b16 %v2104
        %v2457 = vunpack.c.h.b16 %v2104
        %v2458 = vunpack.c.l.b16 %v2105
        %v2459 = vunpack.c.h.b16 %v2105
        %v2460 = vunpack.c.l.b16 %v2106
        %v2461 = vunpack.c.h.b16 %v2106
        %v2462 = vunpack.c.l.b16 %v2107
        %v2463 = vunpack.c.h.b16 %v2107
        %v2464 = vunpack.c.l.b16 %v2108
        %v2465 = vunpack.c.h.b16 %v2108
        %v2466 = vunpack.c.l.b16 %v2109
        %v2467 = vunpack.c.h.b16 %v2109
        %v2468 = vunpack.c.l.b16 %v2110
        %v2469 = vunpack.c.h.b16 %v2110
        %v2470 = vunpack.c.l.b16 %v2111
        %v2471 = vunpack.c.h.b16 %v2111
        %v2472 = vunpack.c.l.b16 %v2112
        %v2473 = vunpack.c.h.b16 %v2112
        %v2474 = vunpack.c.l.b16 %v2113
        %v2475 = vunpack.c.h.b16 %v2113
        %v2476 = vunpack.c.l.b16 %v2114
        %v2477 = vunpack.c.h.b16 %v2114
        %v2478 = vunpack.c.l.b16 %v2115
        %v2479 = vunpack.c.h.b16 %v2115
        %v2480 = vunpack.c.l.b16 %v2116
        %v2481 = vunpack.c.h.b16 %v2116
        %v2482 = vunpack.c.l.b16 %v2117
        %v2483 = vunpack.c.h.b16 %v2117
        %v2484 = vunpack.c.l.b16 %v2118
        %v2485 = vunpack.c.h.b16 %v2118
        %v2486 = vunpack.c.l.b16 %v2119
        %v2487 = vunpack.c.h.b16 %v2119
        %v2488 = vunpack.c.l.b16 %v2120
        %v2489 = vunpack.c.h.b16 %v2120
        %v2490 = vunpack.c.l.b16 %v2121
        %v2491 = vunpack.c.h.b16 %v2121
        %v2492 = vunpack.c.l.b16 %v2122
        %v2493 = vunpack.c.h.b16 %v2122
        %v2494 = vunpack.c.l.b16 %v2123
        %v2495 = vunpack.c.h.b16 %v2123
        %v2496 = vunpack.c.l.b16 %v2124
        %v2497 = vunpack.c.h.b16 %v2124
        %v2498 = vunpack.c.l.b16 %v2125
        %v2499 = vunpack.c.h.b16 %v2125
        %v2500 = vunpack.c.l.b16 %v2126
        %v2501 = vunpack.c.h.b16 %v2126
        %v2502 = vunpack.c.l.b16 %v2127
        %v2503 = vunpack.c.h.b16 %v2127
        %v2504 = vunpack.c.l.b16 %v2128
        %v2505 = vunpack.c.h.b16 %v2128
        %v2506 = vunpack.c.l.b16 %v2129
        %v2507 = vunpack.c.h.b16 %v2129
        %v2508 = vunpack.c.l.b16 %v2130
        %v2509 = vunpack.c.h.b16 %v2130
        %v2510 = vunpack.c.l.b16 %v2131
        %v2511 = vunpack.c.h.b16 %v2131
        %v2512 = vunpack.c.l.b16 %v2132
        %v2513 = vunpack.c.h.b16 %v2132
        %v2514 = vunpack.c.l.b16 %v2133
        %v2515 = vunpack.c.h.b16 %v2133
        %v2516 = vunpack.c.l.b16 %v2134
        %v2517 = vunpack.c.h.b16 %v2134
        %v2518 = vunpack.c.l.b16 %v2135
        %v2519 = vunpack.c.h.b16 %v2135
        %v2520 = vpack.c.b16 %v2296, %v2264
        %v2521 = vpack.c.b16 %v2297, %v2265
        %v2522 = vpack.c.b16 %v2298, %v2266
        %v2523 = vpack.c.b16 %v2299, %v2267
        %v2524 = vpack.c.b16 %v2300, %v2268
        %v2525 = vpack.c.b16 %v2301, %v2269
        %v2526 = vpack.c.b16 %v2302, %v2270
        %v2527 = vpack.c.b16 %v2303, %v2271
        %v2528 = vpack.c.b16 %v2304, %v2272
        %v2529 = vpack.c.b16 %v2305, %v2273
        %v2530 = vpack.c.b16 %v2306, %v2274
        %v2531 = vpack.c.b16 %v2307, %v2275
        %v2532 = vpack.c.b16 %v2308, %v2276
        %v2533 = vpack.c.b16 %v2309, %v2277
        %v2534 = vpack.c.b16 %v2310, %v2278
        %v2535 = vpack.c.b16 %v2311, %v2279
        %v2536 = vpack.c.b16 %v2312, %v2280
        %v2537 = vpack.c.b16 %v2313, %v2281
        %v2538 = vpack.c.b16 %v2314, %v2282
        %v2539 = vpack.c.b16 %v2315, %v2283
        %v2540 = vpack.c.b16 %v2316, %v2284
        %v2541 = vpack.c.b16 %v2317, %v2285
        %v2542 = vpack.c.b16 %v2318, %v2286
        %v2543 = vpack.c.b16 %v2319, %v2287
        %v2544 = vpack.c.b16 %v2320, %v2288
        %v2545 = vpack.c.b16 %v2321, %v2289
        %v2546 = vpack.c.b16 %v2322, %v2290
        %v2547 = vpack.c.b16 %v2323, %v2291
        %v2548 = vpack.c.b16 %v2324, %v2292
        %v2549 = vpack.c.b16 %v2325, %v2293
        %v2550 = vpack.c.b16 %v2326, %v2294
        %v2551 = vpack.c.b16 %v2327, %v2295
        %v2552 = vpack.c.b16 %v2360, %v2328
        %v2553 = vpack.c.b16 %v2361, %v2329
        %v2554 = vpack.c.b16 %v2362, %v2330
        %v2555 = vpack.c.b16 %v2363, %v2331
        %v2556 = vpack.c.b16 %v2364, %v2332
        %v2557 = vpack.c.b16 %v2365, %v2333
        %v2558 = vpack.c.b16 %v2366, %v2334
        %v2559 = vpack.c.b16 %v2367, %v2335
        %v2560 = vpack.c.b16 %v2368, %v2336
        %v2561 = vpack.c.b16 %v2369, %v2337
        %v2562 = vpack.c.b16 %v2370, %v2338
        %v2563 = vpack.c.b16 %v2371, %v2339
        %v2564 = vpack.c.b16 %v2372, %v2340
        %v2565 = vpack.c.b16 %v2373, %v2341
        %v2566 = vpack.c.b16 %v2374, %v2342
        %v2567 = vpack.c.b16 %v2375, %v2343
        %v2568 = vpack.c.b16 %v2376, %v2344
        %v2569 = vpack.c.b16 %v2377, %v2345
        %v2570 = vpack.c.b16 %v2378, %v2346
        %v2571 = vpack.c.b16 %v2379, %v2347
        %v2572 = vpack.c.b16 %v2380, %v2348
        %v2573 = vpack.c.b16 %v2381, %v2349
        %v2574 = vpack.c.b16 %v2382, %v2350
        %v2575 = vpack.c.b16 %v2383, %v2351
        %v2576 = vpack.c.b16 %v2384, %v2352
        %v2577 = vpack.c.b16 %v2385, %v2353
        %v2578 = vpack.c.b16 %v2386, %v2354
        %v2579 = vpack.c.b16 %v2387, %v2355
        %v2580 = vpack.c.b16 %v2388, %v2356
        %v2581 = vpack.c.b16 %v2389, %v2357
        %v2582 = vpack.c.b16 %v2390, %v2358
        %v2583 = vpack.c.b16 %v2391, %v2359
        %v2584 = vpack.c.b16 %v2424, %v2392
        %v2585 = vpack.c.b16 %v2425, %v2393
        %v2586 = vpack.c.b16 %v2426, %v2394
        %v2587 = vpack.c.b16 %v2427, %v2395
        %v2588 = vpack.c.b16 %v2428, %v2396
        %v2589 = vpack.c.b16 %v2429, %v2397
        %v2590 = vpack.c.b16 %v2430, %v2398
        %v2591 = vpack.c.b16 %v2431, %v2399
        %v2592 = vpack.c.b16 %v2432, %v2400
        %v2593 = vpack.c.b16 %v2433, %v2401
        %v2594 = vpack.c.b16 %v2434, %v2402
        %v2595 = vpack.c.b16 %v2435, %v2403
        %v2596 = vpack.c.b16 %v2436, %v2404
        %v2597 = vpack.c.b16 %v2437, %v2405
        %v2598 = vpack.c.b16 %v2438, %v2406
        %v2599 = vpack.c.b16 %v2439, %v2407
        %v2600 = vpack.c.b16 %v2440, %v2408
        %v2601 = vpack.c.b16 %v2441, %v2409
        %v2602 = vpack.c.b16 %v2442, %v2410
        %v2603 = vpack.c.b16 %v2443, %v2411
        %v2604 = vpack.c.b16 %v2444, %v2412
        %v2605 = vpack.c.b16 %v2445, %v2413
        %v2606 = vpack.c.b16 %v2446, %v2414
        %v2607 = vpack.c.b16 %v2447, %v2415
        %v2608 = vpack.c.b16 %v2448, %v2416
        %v2609 = vpack.c.b16 %v2449, %v2417
        %v2610 = vpack.c.b16 %v2450, %v2418
        %v2611 = vpack.c.b16 %v2451, %v2419
        %v2612 = vpack.c.b16 %v2452, %v2420
        %v2613 = vpack.c.b16 %v2453, %v2421
        %v2614 = vpack.c.b16 %v2454, %v2422
        %v2615 = vpack.c.b16 %v2455, %v2423
        %v2616 = vpack.c.b16 %v2488, %v2456
        %v2617 = vpack.c.b16 %v2489, %v2457
        %v2618 = vpack.c.b16 %v2490, %v2458
        %v2619 = vpack.c.b16 %v2491, %v2459
        %v2620 = vpack.c.b16 %v2492, %v2460
        %v2621 = vpack.c.b16 %v2493, %v2461
        %v2622 = vpack.c.b16 %v2494, %v2462
        %v2623 = vpack.c.b16 %v2495, %v2463
        %v2624 = vpack.c.b16 %v2496, %v2464
        %v2625 = vpack.c.b16 %v2497, %v2465
        %v2626 = vpack.c.b16 %v2498, %v2466
        %v2627 = vpack.c.b16 %v2499, %v2467
        %v2628 = vpack.c.b16 %v2500, %v2468
        %v2629 = vpack.c.b16 %v2501, %v2469
        %v2630 = vpack.c.b16 %v2502, %v2470
        %v2631 = vpack.c.b16 %v2503, %v2471
        %v2632 = vpack.c.b16 %v2504, %v2472
        %v2633 = vpack.c.b16 %v2505, %v2473
        %v2634 = vpack.c.b16 %v2506, %v2474
        %v2635 = vpack.c.b16 %v2507, %v2475
        %v2636 = vpack.c.b16 %v2508, %v2476
        %v2637 = vpack.c.b16 %v2509, %v2477
        %v2638 = vpack.c.b16 %v2510, %v2478
        %v2639 = vpack.c.b16 %v2511, %v2479
        %v2640 = vpack.c.b16 %v2512, %v2480
        %v2641 = vpack.c.b16 %v2513, %v2481
        %v2642 = vpack.c.b16 %v2514, %v2482
        %v2643 = vpack.c.b16 %v2515, %v2483
        %v2644 = vpack.c.b16 %v2516, %v2484
        %v2645 = vpack.c.b16 %v2517, %v2485
        %v2646 = vpack.c.b16 %v2518, %v2486
        %v2647 = vpack.c.b16 %v2519, %v2487
        %v2777 = vsel %vm1343, %v2007, 0
        %2779 = vmatpush.bf16.msra.mxu0 0
        %2780 = vmatpush.bf16.msra.mxu0 0
        %2781 = vmatpush.bf16.msra.mxu0 0
        %2782 = vmatpush.bf16.msra.mxu0 0
        %2783 = vmatpush.bf16.msra.mxu0 %v2616
        %2784 = vmatpush.bf16.msra.mxu0 %v2584
        %2785 = vmatpush.bf16.msra.mxu0 %v2552
        %2786 = vmatpush.bf16.msra.mxu0 %v2520
        %2787 = vmatmul.bf16.gmra.mxu0 %v2777
        %v2788 = vpop.f32.mrf.mxu0
        %v2789 = vadd.f32 0.0, %v2788
        %v2790 = vpop.f32.mrf.mxu0
        %2791 = vdwg.mxu0
        %2792 = vmatpush.bf16.msra.mxu0 0
        %2793 = vmatpush.bf16.msra.mxu0 0
        %2794 = vmatpush.bf16.msra.mxu0 0
        %2795 = vmatpush.bf16.msra.mxu0 0
        %2796 = vmatpush.bf16.msra.mxu0 %v2617
        %2797 = vmatpush.bf16.msra.mxu0 %v2585
        %2798 = vmatpush.bf16.msra.mxu0 %v2553
        %2799 = vmatpush.bf16.msra.mxu0 %v2521
        %2800 = vmatmul.bf16.gmra.mxu0 %v2777
        %v2801 = vpop.f32.mrf.mxu0
        %v2802 = vadd.f32 0.0, %v2801
        %v2803 = vpop.f32.mrf.mxu0
        %2804 = vdwg.mxu0
        %2805 = vmatpush.bf16.msra.mxu0 0
        %2806 = vmatpush.bf16.msra.mxu0 0
        %2807 = vmatpush.bf16.msra.mxu0 0
        %2808 = vmatpush.bf16.msra.mxu0 0
        %2809 = vmatpush.bf16.msra.mxu0 %v2618
        %2810 = vmatpush.bf16.msra.mxu0 %v2586
        %2811 = vmatpush.bf16.msra.mxu0 %v2554
        %2812 = vmatpush.bf16.msra.mxu0 %v2522
        %2813 = vmatmul.bf16.gmra.mxu0 %v2777
        %v2814 = vpop.f32.mrf.mxu0
        %v2815 = vadd.f32 0.0, %v2814
        %v2816 = vpop.f32.mrf.mxu0
        %2817 = vdwg.mxu0
        %2818 = vmatpush.bf16.msra.mxu0 0
        %2819 = vmatpush.bf16.msra.mxu0 0
        %2820 = vmatpush.bf16.msra.mxu0 0
        %2821 = vmatpush.bf16.msra.mxu0 0
        %2822 = vmatpush.bf16.msra.mxu0 %v2619
        %2823 = vmatpush.bf16.msra.mxu0 %v2587
        %2824 = vmatpush.bf16.msra.mxu0 %v2555
        %2825 = vmatpush.bf16.msra.mxu0 %v2523
        %2826 = vmatmul.bf16.gmra.mxu0 %v2777
        %v2827 = vpop.f32.mrf.mxu0
        %v2828 = vadd.f32 0.0, %v2827
        %v2829 = vpop.f32.mrf.mxu0
        %2830 = vdwg.mxu0
        %2831 = vmatpush.bf16.msra.mxu0 0
        %2832 = vmatpush.bf16.msra.mxu0 0
        %2833 = vmatpush.bf16.msra.mxu0 0
        %2834 = vmatpush.bf16.msra.mxu0 0
        %2835 = vmatpush.bf16.msra.mxu0 %v2620
        %2836 = vmatpush.bf16.msra.mxu0 %v2588
        %2837 = vmatpush.bf16.msra.mxu0 %v2556
        %2838 = vmatpush.bf16.msra.mxu0 %v2524
        %2839 = vmatmul.bf16.gmra.mxu0 %v2777
        %v2840 = vpop.f32.mrf.mxu0
        %v2841 = vadd.f32 0.0, %v2840
        %v2842 = vpop.f32.mrf.mxu0
        %2843 = vdwg.mxu0
        %2844 = vmatpush.bf16.msra.mxu0 0
        %2845 = vmatpush.bf16.msra.mxu0 0
        %2846 = vmatpush.bf16.msra.mxu0 0
        %2847 = vmatpush.bf16.msra.mxu0 0
        %2848 = vmatpush.bf16.msra.mxu0 %v2621
        %2849 = vmatpush.bf16.msra.mxu0 %v2589
        %2850 = vmatpush.bf16.msra.mxu0 %v2557
        %2851 = vmatpush.bf16.msra.mxu0 %v2525
        %2852 = vmatmul.bf16.gmra.mxu0 %v2777
        %v2853 = vpop.f32.mrf.mxu0
        %v2854 = vadd.f32 0.0, %v2853
        %v2855 = vpop.f32.mrf.mxu0
        %2856 = vdwg.mxu0
        %2857 = vmatpush.bf16.msra.mxu0 0
        %2858 = vmatpush.bf16.msra.mxu0 0
        %2859 = vmatpush.bf16.msra.mxu0 0
        %2860 = vmatpush.bf16.msra.mxu0 0
        %2861 = vmatpush.bf16.msra.mxu0 %v2622
        %2862 = vmatpush.bf16.msra.mxu0 %v2590
        %2863 = vmatpush.bf16.msra.mxu0 %v2558
        %2864 = vmatpush.bf16.msra.mxu0 %v2526
        %2865 = vmatmul.bf16.gmra.mxu0 %v2777
        %v2866 = vpop.f32.mrf.mxu0
        %v2867 = vadd.f32 0.0, %v2866
        %v2868 = vpop.f32.mrf.mxu0
        %2869 = vdwg.mxu0
        %2870 = vmatpush.bf16.msra.mxu0 0
        %2871 = vmatpush.bf16.msra.mxu0 0
        %2872 = vmatpush.bf16.msra.mxu0 0
        %2873 = vmatpush.bf16.msra.mxu0 0
        %2874 = vmatpush.bf16.msra.mxu0 %v2623
        %2875 = vmatpush.bf16.msra.mxu0 %v2591
        %2876 = vmatpush.bf16.msra.mxu0 %v2559
        %2877 = vmatpush.bf16.msra.mxu0 %v2527
        %2878 = vmatmul.bf16.gmra.mxu0 %v2777
        %v2879 = vpop.f32.mrf.mxu0
        %v2880 = vadd.f32 0.0, %v2879
        %v2881 = vpop.f32.mrf.mxu0
        %2882 = vdwg.mxu0
        %2883 = vmatpush.bf16.msra.mxu0 0
        %2884 = vmatpush.bf16.msra.mxu0 0
        %2885 = vmatpush.bf16.msra.mxu0 0
        %2886 = vmatpush.bf16.msra.mxu0 0
        %2887 = vmatpush.bf16.msra.mxu0 %v2624
        %2888 = vmatpush.bf16.msra.mxu0 %v2592
        %2889 = vmatpush.bf16.msra.mxu0 %v2560
        %2890 = vmatpush.bf16.msra.mxu0 %v2528
        %2891 = vmatmul.bf16.gmra.mxu0 %v2777
        %v2892 = vpop.f32.mrf.mxu0
        %v2893 = vadd.f32 0.0, %v2892
        %v2894 = vpop.f32.mrf.mxu0
        %2895 = vdwg.mxu0
        %2896 = vmatpush.bf16.msra.mxu0 0
        %2897 = vmatpush.bf16.msra.mxu0 0
        %2898 = vmatpush.bf16.msra.mxu0 0
        %2899 = vmatpush.bf16.msra.mxu0 0
        %2900 = vmatpush.bf16.msra.mxu0 %v2625
        %2901 = vmatpush.bf16.msra.mxu0 %v2593
        %2902 = vmatpush.bf16.msra.mxu0 %v2561
        %2903 = vmatpush.bf16.msra.mxu0 %v2529
        %2904 = vmatmul.bf16.gmra.mxu0 %v2777
        %v2905 = vpop.f32.mrf.mxu0
        %v2906 = vadd.f32 0.0, %v2905
        %v2907 = vpop.f32.mrf.mxu0
        %2908 = vdwg.mxu0
        %2909 = vmatpush.bf16.msra.mxu0 0
        %2910 = vmatpush.bf16.msra.mxu0 0
        %2911 = vmatpush.bf16.msra.mxu0 0
        %2912 = vmatpush.bf16.msra.mxu0 0
        %2913 = vmatpush.bf16.msra.mxu0 %v2626
        %2914 = vmatpush.bf16.msra.mxu0 %v2594
        %2915 = vmatpush.bf16.msra.mxu0 %v2562
        %2916 = vmatpush.bf16.msra.mxu0 %v2530
        %2917 = vmatmul.bf16.gmra.mxu0 %v2777
        %v2918 = vpop.f32.mrf.mxu0
        %v2919 = vadd.f32 0.0, %v2918
        %v2920 = vpop.f32.mrf.mxu0
        %2921 = vdwg.mxu0
        %2922 = vmatpush.bf16.msra.mxu0 0
        %2923 = vmatpush.bf16.msra.mxu0 0
        %2924 = vmatpush.bf16.msra.mxu0 0
        %2925 = vmatpush.bf16.msra.mxu0 0
        %2926 = vmatpush.bf16.msra.mxu0 %v2627
        %2927 = vmatpush.bf16.msra.mxu0 %v2595
        %2928 = vmatpush.bf16.msra.mxu0 %v2563
        %2929 = vmatpush.bf16.msra.mxu0 %v2531
        %2930 = vmatmul.bf16.gmra.mxu0 %v2777
        %v2931 = vpop.f32.mrf.mxu0
        %v2932 = vadd.f32 0.0, %v2931
        %v2933 = vpop.f32.mrf.mxu0
        %2934 = vdwg.mxu0
        %2935 = vmatpush.bf16.msra.mxu0 0
        %2936 = vmatpush.bf16.msra.mxu0 0
        %2937 = vmatpush.bf16.msra.mxu0 0
        %2938 = vmatpush.bf16.msra.mxu0 0
        %2939 = vmatpush.bf16.msra.mxu0 %v2628
        %2940 = vmatpush.bf16.msra.mxu0 %v2596
        %2941 = vmatpush.bf16.msra.mxu0 %v2564
        %2942 = vmatpush.bf16.msra.mxu0 %v2532
        %2943 = vmatmul.bf16.gmra.mxu0 %v2777
        %v2944 = vpop.f32.mrf.mxu0
        %v2945 = vadd.f32 0.0, %v2944
        %v2946 = vpop.f32.mrf.mxu0
        %2947 = vdwg.mxu0
        %2948 = vmatpush.bf16.msra.mxu0 0
        %2949 = vmatpush.bf16.msra.mxu0 0
        %2950 = vmatpush.bf16.msra.mxu0 0
        %2951 = vmatpush.bf16.msra.mxu0 0
        %2952 = vmatpush.bf16.msra.mxu0 %v2629
        %2953 = vmatpush.bf16.msra.mxu0 %v2597
        %2954 = vmatpush.bf16.msra.mxu0 %v2565
        %2955 = vmatpush.bf16.msra.mxu0 %v2533
        %2956 = vmatmul.bf16.gmra.mxu0 %v2777
        %v2957 = vpop.f32.mrf.mxu0
        %v2958 = vadd.f32 0.0, %v2957
        %v2959 = vpop.f32.mrf.mxu0
        %2960 = vdwg.mxu0
        %2961 = vmatpush.bf16.msra.mxu0 0
        %2962 = vmatpush.bf16.msra.mxu0 0
        %2963 = vmatpush.bf16.msra.mxu0 0
        %2964 = vmatpush.bf16.msra.mxu0 0
        %2965 = vmatpush.bf16.msra.mxu0 %v2630
        %2966 = vmatpush.bf16.msra.mxu0 %v2598
        %2967 = vmatpush.bf16.msra.mxu0 %v2566
        %2968 = vmatpush.bf16.msra.mxu0 %v2534
        %2969 = vmatmul.bf16.gmra.mxu0 %v2777
        %v2970 = vpop.f32.mrf.mxu0
        %v2971 = vadd.f32 0.0, %v2970
        %v2972 = vpop.f32.mrf.mxu0
        %2973 = vdwg.mxu0
        %2974 = vmatpush.bf16.msra.mxu0 0
        %2975 = vmatpush.bf16.msra.mxu0 0
        %2976 = vmatpush.bf16.msra.mxu0 0
        %2977 = vmatpush.bf16.msra.mxu0 0
        %2978 = vmatpush.bf16.msra.mxu0 %v2631
        %2979 = vmatpush.bf16.msra.mxu0 %v2599
        %2980 = vmatpush.bf16.msra.mxu0 %v2567
        %2981 = vmatpush.bf16.msra.mxu0 %v2535
        %2982 = vmatmul.bf16.gmra.mxu0 %v2777
        %v2983 = vpop.f32.mrf.mxu0
        %v2984 = vadd.f32 0.0, %v2983
        %v2985 = vpop.f32.mrf.mxu0
        %2986 = vdwg.mxu0
        %2987 = vmatpush.bf16.msra.mxu0 0
        %2988 = vmatpush.bf16.msra.mxu0 0
        %2989 = vmatpush.bf16.msra.mxu0 0
        %2990 = vmatpush.bf16.msra.mxu0 0
        %2991 = vmatpush.bf16.msra.mxu0 %v2632
        %2992 = vmatpush.bf16.msra.mxu0 %v2600
        %2993 = vmatpush.bf16.msra.mxu0 %v2568
        %2994 = vmatpush.bf16.msra.mxu0 %v2536
        %2995 = vmatmul.bf16.gmra.mxu0 %v2777
        %v2996 = vpop.f32.mrf.mxu0
        %v2997 = vadd.f32 0.0, %v2996
        %v2998 = vpop.f32.mrf.mxu0
        %2999 = vdwg.mxu0
        %3000 = vmatpush.bf16.msra.mxu0 0
        %3001 = vmatpush.bf16.msra.mxu0 0
        %3002 = vmatpush.bf16.msra.mxu0 0
        %3003 = vmatpush.bf16.msra.mxu0 0
        %3004 = vmatpush.bf16.msra.mxu0 %v2633
        %3005 = vmatpush.bf16.msra.mxu0 %v2601
        %3006 = vmatpush.bf16.msra.mxu0 %v2569
        %3007 = vmatpush.bf16.msra.mxu0 %v2537
        %3008 = vmatmul.bf16.gmra.mxu0 %v2777
        %v3009 = vpop.f32.mrf.mxu0
        %v3010 = vadd.f32 0.0, %v3009
        %v3011 = vpop.f32.mrf.mxu0
        %3012 = vdwg.mxu0
        %3013 = vmatpush.bf16.msra.mxu0 0
        %3014 = vmatpush.bf16.msra.mxu0 0
        %3015 = vmatpush.bf16.msra.mxu0 0
        %3016 = vmatpush.bf16.msra.mxu0 0
        %3017 = vmatpush.bf16.msra.mxu0 %v2634
        %3018 = vmatpush.bf16.msra.mxu0 %v2602
        %3019 = vmatpush.bf16.msra.mxu0 %v2570
        %3020 = vmatpush.bf16.msra.mxu0 %v2538
        %3021 = vmatmul.bf16.gmra.mxu0 %v2777
        %v3022 = vpop.f32.mrf.mxu0
        %v3023 = vadd.f32 0.0, %v3022
        %v3024 = vpop.f32.mrf.mxu0
        %3025 = vdwg.mxu0
        %3026 = vmatpush.bf16.msra.mxu0 0
        %3027 = vmatpush.bf16.msra.mxu0 0
        %3028 = vmatpush.bf16.msra.mxu0 0
        %3029 = vmatpush.bf16.msra.mxu0 0
        %3030 = vmatpush.bf16.msra.mxu0 %v2635
        %3031 = vmatpush.bf16.msra.mxu0 %v2603
        %3032 = vmatpush.bf16.msra.mxu0 %v2571
        %3033 = vmatpush.bf16.msra.mxu0 %v2539
        %3034 = vmatmul.bf16.gmra.mxu0 %v2777
        %v3035 = vpop.f32.mrf.mxu0
        %v3036 = vadd.f32 0.0, %v3035
        %v3037 = vpop.f32.mrf.mxu0
        %3038 = vdwg.mxu0
        %3039 = vmatpush.bf16.msra.mxu0 0
        %3040 = vmatpush.bf16.msra.mxu0 0
        %3041 = vmatpush.bf16.msra.mxu0 0
        %3042 = vmatpush.bf16.msra.mxu0 0
        %3043 = vmatpush.bf16.msra.mxu0 %v2636
        %3044 = vmatpush.bf16.msra.mxu0 %v2604
        %3045 = vmatpush.bf16.msra.mxu0 %v2572
        %3046 = vmatpush.bf16.msra.mxu0 %v2540
        %3047 = vmatmul.bf16.gmra.mxu0 %v2777
        %v3048 = vpop.f32.mrf.mxu0
        %v3049 = vadd.f32 0.0, %v3048
        %v3050 = vpop.f32.mrf.mxu0
        %3051 = vdwg.mxu0
        %3052 = vmatpush.bf16.msra.mxu0 0
        %3053 = vmatpush.bf16.msra.mxu0 0
        %3054 = vmatpush.bf16.msra.mxu0 0
        %3055 = vmatpush.bf16.msra.mxu0 0
        %3056 = vmatpush.bf16.msra.mxu0 %v2637
        %3057 = vmatpush.bf16.msra.mxu0 %v2605
        %3058 = vmatpush.bf16.msra.mxu0 %v2573
        %3059 = vmatpush.bf16.msra.mxu0 %v2541
        %3060 = vmatmul.bf16.gmra.mxu0 %v2777
        %v3061 = vpop.f32.mrf.mxu0
        %v3062 = vadd.f32 0.0, %v3061
        %v3063 = vpop.f32.mrf.mxu0
        %3064 = vdwg.mxu0
        %3065 = vmatpush.bf16.msra.mxu0 0
        %3066 = vmatpush.bf16.msra.mxu0 0
        %3067 = vmatpush.bf16.msra.mxu0 0
        %3068 = vmatpush.bf16.msra.mxu0 0
        %3069 = vmatpush.bf16.msra.mxu0 %v2638
        %3070 = vmatpush.bf16.msra.mxu0 %v2606
        %3071 = vmatpush.bf16.msra.mxu0 %v2574
        %3072 = vmatpush.bf16.msra.mxu0 %v2542
        %3073 = vmatmul.bf16.gmra.mxu0 %v2777
        %v3074 = vpop.f32.mrf.mxu0
        %v3075 = vadd.f32 0.0, %v3074
        %v3076 = vpop.f32.mrf.mxu0
        %3077 = vdwg.mxu0
        %3078 = vmatpush.bf16.msra.mxu0 0
        %3079 = vmatpush.bf16.msra.mxu0 0
        %3080 = vmatpush.bf16.msra.mxu0 0
        %3081 = vmatpush.bf16.msra.mxu0 0
        %3082 = vmatpush.bf16.msra.mxu0 %v2639
        %3083 = vmatpush.bf16.msra.mxu0 %v2607
        %3084 = vmatpush.bf16.msra.mxu0 %v2575
        %3085 = vmatpush.bf16.msra.mxu0 %v2543
        %3086 = vmatmul.bf16.gmra.mxu0 %v2777
        %v3087 = vpop.f32.mrf.mxu0
        %v3088 = vadd.f32 0.0, %v3087
        %v3089 = vpop.f32.mrf.mxu0
        %3090 = vdwg.mxu0
        %3091 = vmatpush.bf16.msra.mxu0 0
        %3092 = vmatpush.bf16.msra.mxu0 0
        %3093 = vmatpush.bf16.msra.mxu0 0
        %3094 = vmatpush.bf16.msra.mxu0 0
        %3095 = vmatpush.bf16.msra.mxu0 %v2640
        %3096 = vmatpush.bf16.msra.mxu0 %v2608
        %3097 = vmatpush.bf16.msra.mxu0 %v2576
        %3098 = vmatpush.bf16.msra.mxu0 %v2544
        %3099 = vmatmul.bf16.gmra.mxu0 %v2777
        %v3100 = vpop.f32.mrf.mxu0
        %v3101 = vadd.f32 0.0, %v3100
        %v3102 = vpop.f32.mrf.mxu0
        %3103 = vdwg.mxu0
        %3104 = vmatpush.bf16.msra.mxu0 0
        %3105 = vmatpush.bf16.msra.mxu0 0
        %3106 = vmatpush.bf16.msra.mxu0 0
        %3107 = vmatpush.bf16.msra.mxu0 0
        %3108 = vmatpush.bf16.msra.mxu0 %v2641
        %3109 = vmatpush.bf16.msra.mxu0 %v2609
        %3110 = vmatpush.bf16.msra.mxu0 %v2577
        %3111 = vmatpush.bf16.msra.mxu0 %v2545
        %3112 = vmatmul.bf16.gmra.mxu0 %v2777
        %v3113 = vpop.f32.mrf.mxu0
        %v3114 = vadd.f32 0.0, %v3113
        %v3115 = vpop.f32.mrf.mxu0
        %3116 = vdwg.mxu0
        %3117 = vmatpush.bf16.msra.mxu0 0
        %3118 = vmatpush.bf16.msra.mxu0 0
        %3119 = vmatpush.bf16.msra.mxu0 0
        %3120 = vmatpush.bf16.msra.mxu0 0
        %3121 = vmatpush.bf16.msra.mxu0 %v2642
        %3122 = vmatpush.bf16.msra.mxu0 %v2610
        %3123 = vmatpush.bf16.msra.mxu0 %v2578
        %3124 = vmatpush.bf16.msra.mxu0 %v2546
        %3125 = vmatmul.bf16.gmra.mxu0 %v2777
        %v3126 = vpop.f32.mrf.mxu0
        %v3127 = vadd.f32 0.0, %v3126
        %v3128 = vpop.f32.mrf.mxu0
        %3129 = vdwg.mxu0
        %3130 = vmatpush.bf16.msra.mxu0 0
        %3131 = vmatpush.bf16.msra.mxu0 0
        %3132 = vmatpush.bf16.msra.mxu0 0
        %3133 = vmatpush.bf16.msra.mxu0 0
        %3134 = vmatpush.bf16.msra.mxu0 %v2643
        %3135 = vmatpush.bf16.msra.mxu0 %v2611
        %3136 = vmatpush.bf16.msra.mxu0 %v2579
        %3137 = vmatpush.bf16.msra.mxu0 %v2547
        %3138 = vmatmul.bf16.gmra.mxu0 %v2777
        %v3139 = vpop.f32.mrf.mxu0
        %v3140 = vadd.f32 0.0, %v3139
        %v3141 = vpop.f32.mrf.mxu0
        %3142 = vdwg.mxu0
        %3143 = vmatpush.bf16.msra.mxu0 0
        %3144 = vmatpush.bf16.msra.mxu0 0
        %3145 = vmatpush.bf16.msra.mxu0 0
        %3146 = vmatpush.bf16.msra.mxu0 0
        %3147 = vmatpush.bf16.msra.mxu0 %v2644
        %3148 = vmatpush.bf16.msra.mxu0 %v2612
        %3149 = vmatpush.bf16.msra.mxu0 %v2580
        %3150 = vmatpush.bf16.msra.mxu0 %v2548
        %3151 = vmatmul.bf16.gmra.mxu0 %v2777
        %v3152 = vpop.f32.mrf.mxu0
        %v3153 = vadd.f32 0.0, %v3152
        %v3154 = vpop.f32.mrf.mxu0
        %3155 = vdwg.mxu0
        %3156 = vmatpush.bf16.msra.mxu0 0
        %3157 = vmatpush.bf16.msra.mxu0 0
        %3158 = vmatpush.bf16.msra.mxu0 0
        %3159 = vmatpush.bf16.msra.mxu0 0
        %3160 = vmatpush.bf16.msra.mxu0 %v2645
        %3161 = vmatpush.bf16.msra.mxu0 %v2613
        %3162 = vmatpush.bf16.msra.mxu0 %v2581
        %3163 = vmatpush.bf16.msra.mxu0 %v2549
        %3164 = vmatmul.bf16.gmra.mxu0 %v2777
        %v3165 = vpop.f32.mrf.mxu0
        %v3166 = vadd.f32 0.0, %v3165
        %v3167 = vpop.f32.mrf.mxu0
        %3168 = vdwg.mxu0
        %3169 = vmatpush.bf16.msra.mxu0 0
        %3170 = vmatpush.bf16.msra.mxu0 0
        %3171 = vmatpush.bf16.msra.mxu0 0
        %3172 = vmatpush.bf16.msra.mxu0 0
        %3173 = vmatpush.bf16.msra.mxu0 %v2646
        %3174 = vmatpush.bf16.msra.mxu0 %v2614
        %3175 = vmatpush.bf16.msra.mxu0 %v2582
        %3176 = vmatpush.bf16.msra.mxu0 %v2550
        %3177 = vmatmul.bf16.gmra.mxu0 %v2777
        %v3178 = vpop.f32.mrf.mxu0
        %v3179 = vadd.f32 0.0, %v3178
        %v3180 = vpop.f32.mrf.mxu0
        %3181 = vdwg.mxu0
        %3182 = vmatpush.bf16.msra.mxu0 0
        %3183 = vmatpush.bf16.msra.mxu0 0
        %3184 = vmatpush.bf16.msra.mxu0 0
        %3185 = vmatpush.bf16.msra.mxu0 0
        %3186 = vmatpush.bf16.msra.mxu0 %v2647
        %3187 = vmatpush.bf16.msra.mxu0 %v2615
        %3188 = vmatpush.bf16.msra.mxu0 %v2583
        %3189 = vmatpush.bf16.msra.mxu0 %v2551
        %3190 = vmatmul.bf16.gmra.mxu0 %v2777
        %v3191 = vpop.f32.mrf.mxu0
        %v3192 = vadd.f32 0.0, %v3191
        %v3193 = vpop.f32.mrf.mxu0
        %3194 = vdwg.mxu0
        %v3195 = vpack.c.bf16 %v2802, %v2789
        %v3196 = vpack.c.bf16 %v2828, %v2815
        %v3197 = vpack.c.bf16 %v2854, %v2841
        %v3198 = vpack.c.bf16 %v2880, %v2867
        %v3199 = vpack.c.bf16 %v2906, %v2893
        %v3200 = vpack.c.bf16 %v2932, %v2919
        %v3201 = vpack.c.bf16 %v2958, %v2945
        %v3202 = vpack.c.bf16 %v2984, %v2971
        %v3203 = vpack.c.bf16 %v3010, %v2997
        %v3204 = vpack.c.bf16 %v3036, %v3023
        %v3205 = vpack.c.bf16 %v3062, %v3049
        %v3206 = vpack.c.bf16 %v3088, %v3075
        %v3207 = vpack.c.bf16 %v3114, %v3101
        %v3208 = vpack.c.bf16 %v3140, %v3127
        %v3209 = vpack.c.bf16 %v3166, %v3153
        %v3210 = vpack.c.bf16 %v3192, %v3179
        %v3227 = vunpack.c.l.b16 %v3195
        %v3228 = vunpack.c.h.b16 %v3195
        %v3229 = vunpack.c.l.b16 %v3196
        %v3230 = vunpack.c.h.b16 %v3196
        %v3231 = vunpack.c.l.b16 %v3197
        %v3232 = vunpack.c.h.b16 %v3197
        %v3233 = vunpack.c.l.b16 %v3198
        %v3234 = vunpack.c.h.b16 %v3198
        %v3235 = vunpack.c.l.b16 %v3199
        %v3236 = vunpack.c.h.b16 %v3199
        %v3237 = vunpack.c.l.b16 %v3200
        %v3238 = vunpack.c.h.b16 %v3200
        %v3239 = vunpack.c.l.b16 %v3201
        %v3240 = vunpack.c.h.b16 %v3201
        %v3241 = vunpack.c.l.b16 %v3202
        %v3242 = vunpack.c.h.b16 %v3202
        %v3243 = vunpack.c.l.b16 %v3203
        %v3244 = vunpack.c.h.b16 %v3203
        %v3245 = vunpack.c.l.b16 %v3204
        %v3246 = vunpack.c.h.b16 %v3204
        %v3247 = vunpack.c.l.b16 %v3205
        %v3248 = vunpack.c.h.b16 %v3205
        %v3249 = vunpack.c.l.b16 %v3206
        %v3250 = vunpack.c.h.b16 %v3206
        %v3251 = vunpack.c.l.b16 %v3207
        %v3252 = vunpack.c.h.b16 %v3207
        %v3253 = vunpack.c.l.b16 %v3208
        %v3254 = vunpack.c.h.b16 %v3208
        %v3255 = vunpack.c.l.b16 %v3209
        %v3256 = vunpack.c.h.b16 %v3209
        %v3257 = vunpack.c.l.b16 %v3210
        %v3258 = vunpack.c.h.b16 %v3210
        %v3259 = vpack.c.b16 %v3227, %v3227
        %v3260 = vpack.c.b16 %v3228, %v3228
        %v3261 = vpack.c.b16 %v3229, %v3229
        %v3262 = vpack.c.b16 %v3230, %v3230
        %v3263 = vpack.c.b16 %v3231, %v3231
        %v3264 = vpack.c.b16 %v3232, %v3232
        %v3265 = vpack.c.b16 %v3233, %v3233
        %v3266 = vpack.c.b16 %v3234, %v3234
        %v3267 = vpack.c.b16 %v3235, %v3235
        %v3268 = vpack.c.b16 %v3236, %v3236
        %v3269 = vpack.c.b16 %v3237, %v3237
        %v3270 = vpack.c.b16 %v3238, %v3238
        %v3271 = vpack.c.b16 %v3239, %v3239
        %v3272 = vpack.c.b16 %v3240, %v3240
        %v3273 = vpack.c.b16 %v3241, %v3241
        %v3274 = vpack.c.b16 %v3242, %v3242
        %v3275 = vpack.c.b16 %v3243, %v3243
        %v3276 = vpack.c.b16 %v3244, %v3244
        %v3277 = vpack.c.b16 %v3245, %v3245
        %v3278 = vpack.c.b16 %v3246, %v3246
        %v3279 = vpack.c.b16 %v3247, %v3247
        %v3280 = vpack.c.b16 %v3248, %v3248
        %v3281 = vpack.c.b16 %v3249, %v3249
        %v3282 = vpack.c.b16 %v3250, %v3250
        %v3283 = vpack.c.b16 %v3251, %v3251
        %v3284 = vpack.c.b16 %v3252, %v3252
        %v3285 = vpack.c.b16 %v3253, %v3253
        %v3286 = vpack.c.b16 %v3254, %v3254
        %v3287 = vpack.c.b16 %v3255, %v3255
        %v3288 = vpack.c.b16 %v3256, %v3256
        %v3289 = vpack.c.b16 %v3257, %v3257
        %v3290 = vpack.c.b16 %v3258, %v3258
        %v3292 = vpack.i.b16 %v3259, %v3259
        %v3294 = vperm.slane %v3292, 0
        %v3296 = vpack.i.b16 %v3260, %v3260
        %v3298 = vperm.slane %v3296, 0
        %v3300 = vpack.i.b16 %v3261, %v3261
        %v3302 = vperm.slane %v3300, 0
        %v3304 = vpack.i.b16 %v3262, %v3262
        %v3306 = vperm.slane %v3304, 0
        %v3308 = vpack.i.b16 %v3263, %v3263
        %v3310 = vperm.slane %v3308, 0
        %v3312 = vpack.i.b16 %v3264, %v3264
        %v3314 = vperm.slane %v3312, 0
        %v3316 = vpack.i.b16 %v3265, %v3265
        %v3318 = vperm.slane %v3316, 0
        %v3320 = vpack.i.b16 %v3266, %v3266
        %v3322 = vperm.slane %v3320, 0
        %v3324 = vpack.i.b16 %v3267, %v3267
        %v3326 = vperm.slane %v3324, 0
        %v3328 = vpack.i.b16 %v3268, %v3268
        %v3330 = vperm.slane %v3328, 0
        %v3332 = vpack.i.b16 %v3269, %v3269
        %v3334 = vperm.slane %v3332, 0
        %v3336 = vpack.i.b16 %v3270, %v3270
        %v3338 = vperm.slane %v3336, 0
        %v3340 = vpack.i.b16 %v3271, %v3271
        %v3342 = vperm.slane %v3340, 0
        %v3344 = vpack.i.b16 %v3272, %v3272
        %v3346 = vperm.slane %v3344, 0
        %v3348 = vpack.i.b16 %v3273, %v3273
        %v3350 = vperm.slane %v3348, 0
        %v3352 = vpack.i.b16 %v3274, %v3274
        %v3354 = vperm.slane %v3352, 0
        %v3356 = vpack.i.b16 %v3275, %v3275
        %v3358 = vperm.slane %v3356, 0
        %v3360 = vpack.i.b16 %v3276, %v3276
        %v3362 = vperm.slane %v3360, 0
        %v3364 = vpack.i.b16 %v3277, %v3277
        %v3366 = vperm.slane %v3364, 0
        %v3368 = vpack.i.b16 %v3278, %v3278
        %v3370 = vperm.slane %v3368, 0
        %v3372 = vpack.i.b16 %v3279, %v3279
        %v3374 = vperm.slane %v3372, 0
        %v3376 = vpack.i.b16 %v3280, %v3280
        %v3378 = vperm.slane %v3376, 0
        %v3380 = vpack.i.b16 %v3281, %v3281
        %v3382 = vperm.slane %v3380, 0
        %v3384 = vpack.i.b16 %v3282, %v3282
        %v3386 = vperm.slane %v3384, 0
        %v3388 = vpack.i.b16 %v3283, %v3283
        %v3390 = vperm.slane %v3388, 0
        %v3392 = vpack.i.b16 %v3284, %v3284
        %v3394 = vperm.slane %v3392, 0
        %v3396 = vpack.i.b16 %v3285, %v3285
        %v3398 = vperm.slane %v3396, 0
        %v3400 = vpack.i.b16 %v3286, %v3286
        %v3402 = vperm.slane %v3400, 0
        %v3404 = vpack.i.b16 %v3287, %v3287
        %v3406 = vperm.slane %v3404, 0
        %v3408 = vpack.i.b16 %v3288, %v3288
        %v3410 = vperm.slane %v3408, 0
        %v3412 = vpack.i.b16 %v3289, %v3289
        %v3414 = vperm.slane %v3412, 0
        %v3416 = vpack.i.b16 %v3290, %v3290
        %v3418 = vperm.slane %v3416, 0
        %v3419 = vld [vmem:[#allocation19] sm:$0xff]
        %v3420 = vld [vmem:[#allocation19 + $0x8] sm:$0xff]
        %v3421 = vld [vmem:[#allocation19 + $0x10] sm:$0xff]
        %v3422 = vld [vmem:[#allocation19 + $0x18] sm:$0xff]
        %v3423 = vld [vmem:[#allocation19 + $0x20] sm:$0xff]
        %v3424 = vld [vmem:[#allocation19 + $0x28] sm:$0xff]
        %v3425 = vld [vmem:[#allocation19 + $0x30] sm:$0xff]
        %v3426 = vld [vmem:[#allocation19 + $0x38] sm:$0xff]
        %v3427 = vld [vmem:[#allocation19 + $0x40] sm:$0xff]
        %v3428 = vld [vmem:[#allocation19 + $0x48] sm:$0xff]
        %v3429 = vld [vmem:[#allocation19 + $0x50] sm:$0xff]
        %v3430 = vld [vmem:[#allocation19 + $0x58] sm:$0xff]
        %v3431 = vld [vmem:[#allocation19 + $0x60] sm:$0xff]
        %v3432 = vld [vmem:[#allocation19 + $0x68] sm:$0xff]
        %v3433 = vld [vmem:[#allocation19 + $0x70] sm:$0xff]
        %v3434 = vld [vmem:[#allocation19 + $0x78] sm:$0xff]
        %v3435 = vld [vmem:[#allocation19 + $0x80] sm:$0xff]
        %v3436 = vld [vmem:[#allocation19 + $0x88] sm:$0xff]
        %v3437 = vld [vmem:[#allocation19 + $0x90] sm:$0xff]
        %v3438 = vld [vmem:[#allocation19 + $0x98] sm:$0xff]
        %v3439 = vld [vmem:[#allocation19 + $0xa0] sm:$0xff]
        %v3440 = vld [vmem:[#allocation19 + $0xa8] sm:$0xff]
        %v3441 = vld [vmem:[#allocation19 + $0xb0] sm:$0xff]
        %v3442 = vld [vmem:[#allocation19 + $0xb8] sm:$0xff]
        %v3443 = vld [vmem:[#allocation19 + $0xc0] sm:$0xff]
        %v3444 = vld [vmem:[#allocation19 + $0xc8] sm:$0xff]
        %v3445 = vld [vmem:[#allocation19 + $0xd0] sm:$0xff]
        %v3446 = vld [vmem:[#allocation19 + $0xd8] sm:$0xff]
        %v3447 = vld [vmem:[#allocation19 + $0xe0] sm:$0xff]
        %v3448 = vld [vmem:[#allocation19 + $0xe8] sm:$0xff]
        %v3449 = vld [vmem:[#allocation19 + $0xf0] sm:$0xff]
        %v3450 = vld [vmem:[#allocation19 + $0xf8] sm:$0xff]
        %v3451 = vld [vmem:[#allocation19 + $0x100] sm:$0xff]
        %v3452 = vld [vmem:[#allocation19 + $0x108] sm:$0xff]
        %v3453 = vld [vmem:[#allocation19 + $0x110] sm:$0xff]
        %v3454 = vld [vmem:[#allocation19 + $0x118] sm:$0xff]
        %v3455 = vld [vmem:[#allocation19 + $0x120] sm:$0xff]
        %v3456 = vld [vmem:[#allocation19 + $0x128] sm:$0xff]
        %v3457 = vld [vmem:[#allocation19 + $0x130] sm:$0xff]
        %v3458 = vld [vmem:[#allocation19 + $0x138] sm:$0xff]
        %v3459 = vld [vmem:[#allocation19 + $0x140] sm:$0xff]
        %v3460 = vld [vmem:[#allocation19 + $0x148] sm:$0xff]
        %v3461 = vld [vmem:[#allocation19 + $0x150] sm:$0xff]
        %v3462 = vld [vmem:[#allocation19 + $0x158] sm:$0xff]
        %v3463 = vld [vmem:[#allocation19 + $0x160] sm:$0xff]
        %v3464 = vld [vmem:[#allocation19 + $0x168] sm:$0xff]
        %v3465 = vld [vmem:[#allocation19 + $0x170] sm:$0xff]
        %v3466 = vld [vmem:[#allocation19 + $0x178] sm:$0xff]
        %v3467 = vld [vmem:[#allocation19 + $0x180] sm:$0xff]
        %v3468 = vld [vmem:[#allocation19 + $0x188] sm:$0xff]
        %v3469 = vld [vmem:[#allocation19 + $0x190] sm:$0xff]
        %v3470 = vld [vmem:[#allocation19 + $0x198] sm:$0xff]
        %v3471 = vld [vmem:[#allocation19 + $0x1a0] sm:$0xff]
        %v3472 = vld [vmem:[#allocation19 + $0x1a8] sm:$0xff]
        %v3473 = vld [vmem:[#allocation19 + $0x1b0] sm:$0xff]
        %v3474 = vld [vmem:[#allocation19 + $0x1b8] sm:$0xff]
        %v3475 = vld [vmem:[#allocation19 + $0x1c0] sm:$0xff]
        %v3476 = vld [vmem:[#allocation19 + $0x1c8] sm:$0xff]
        %v3477 = vld [vmem:[#allocation19 + $0x1d0] sm:$0xff]
        %v3478 = vld [vmem:[#allocation19 + $0x1d8] sm:$0xff]
        %v3479 = vld [vmem:[#allocation19 + $0x1e0] sm:$0xff]
        %v3480 = vld [vmem:[#allocation19 + $0x1e8] sm:$0xff]
        %v3481 = vld [vmem:[#allocation19 + $0x1f0] sm:$0xff]
        %v3482 = vld [vmem:[#allocation19 + $0x1f8] sm:$0xff]
        %v3483 = vld [vmem:[#allocation19 + $0x200] sm:$0xff]
        %v3484 = vld [vmem:[#allocation19 + $0x208] sm:$0xff]
        %v3485 = vld [vmem:[#allocation19 + $0x210] sm:$0xff]
        %v3486 = vld [vmem:[#allocation19 + $0x218] sm:$0xff]
        %v3487 = vld [vmem:[#allocation19 + $0x220] sm:$0xff]
        %v3488 = vld [vmem:[#allocation19 + $0x228] sm:$0xff]
        %v3489 = vld [vmem:[#allocation19 + $0x230] sm:$0xff]
        %v3490 = vld [vmem:[#allocation19 + $0x238] sm:$0xff]
        %v3491 = vld [vmem:[#allocation19 + $0x240] sm:$0xff]
        %v3492 = vld [vmem:[#allocation19 + $0x248] sm:$0xff]
        %v3493 = vld [vmem:[#allocation19 + $0x250] sm:$0xff]
        %v3494 = vld [vmem:[#allocation19 + $0x258] sm:$0xff]
        %v3495 = vld [vmem:[#allocation19 + $0x260] sm:$0xff]
        %v3496 = vld [vmem:[#allocation19 + $0x268] sm:$0xff]
        %v3497 = vld [vmem:[#allocation19 + $0x270] sm:$0xff]
        %v3498 = vld [vmem:[#allocation19 + $0x278] sm:$0xff]
        %v3499 = vld [vmem:[#allocation19 + $0x280] sm:$0xff]
        %v3500 = vld [vmem:[#allocation19 + $0x288] sm:$0xff]
        %v3501 = vld [vmem:[#allocation19 + $0x290] sm:$0xff]
        %v3502 = vld [vmem:[#allocation19 + $0x298] sm:$0xff]
        %v3503 = vld [vmem:[#allocation19 + $0x2a0] sm:$0xff]
        %v3504 = vld [vmem:[#allocation19 + $0x2a8] sm:$0xff]
        %v3505 = vld [vmem:[#allocation19 + $0x2b0] sm:$0xff]
        %v3506 = vld [vmem:[#allocation19 + $0x2b8] sm:$0xff]
        %v3507 = vld [vmem:[#allocation19 + $0x2c0] sm:$0xff]
        %v3508 = vld [vmem:[#allocation19 + $0x2c8] sm:$0xff]
        %v3509 = vld [vmem:[#allocation19 + $0x2d0] sm:$0xff]
        %v3510 = vld [vmem:[#allocation19 + $0x2d8] sm:$0xff]
        %v3511 = vld [vmem:[#allocation19 + $0x2e0] sm:$0xff]
        %v3512 = vld [vmem:[#allocation19 + $0x2e8] sm:$0xff]
        %v3513 = vld [vmem:[#allocation19 + $0x2f0] sm:$0xff]
        %v3514 = vld [vmem:[#allocation19 + $0x2f8] sm:$0xff]
        %v3515 = vld [vmem:[#allocation19 + $0x300] sm:$0xff]
        %v3516 = vld [vmem:[#allocation19 + $0x308] sm:$0xff]
        %v3517 = vld [vmem:[#allocation19 + $0x310] sm:$0xff]
        %v3518 = vld [vmem:[#allocation19 + $0x318] sm:$0xff]
        %v3519 = vld [vmem:[#allocation19 + $0x320] sm:$0xff]
        %v3520 = vld [vmem:[#allocation19 + $0x328] sm:$0xff]
        %v3521 = vld [vmem:[#allocation19 + $0x330] sm:$0xff]
        %v3522 = vld [vmem:[#allocation19 + $0x338] sm:$0xff]
        %v3523 = vld [vmem:[#allocation19 + $0x340] sm:$0xff]
        %v3524 = vld [vmem:[#allocation19 + $0x348] sm:$0xff]
        %v3525 = vld [vmem:[#allocation19 + $0x350] sm:$0xff]
        %v3526 = vld [vmem:[#allocation19 + $0x358] sm:$0xff]
        %v3527 = vld [vmem:[#allocation19 + $0x360] sm:$0xff]
        %v3528 = vld [vmem:[#allocation19 + $0x368] sm:$0xff]
        %v3529 = vld [vmem:[#allocation19 + $0x370] sm:$0xff]
        %v3530 = vld [vmem:[#allocation19 + $0x378] sm:$0xff]
        %v3531 = vld [vmem:[#allocation19 + $0x380] sm:$0xff]
        %v3532 = vld [vmem:[#allocation19 + $0x388] sm:$0xff]
        %v3533 = vld [vmem:[#allocation19 + $0x390] sm:$0xff]
        %v3534 = vld [vmem:[#allocation19 + $0x398] sm:$0xff]
        %v3535 = vld [vmem:[#allocation19 + $0x3a0] sm:$0xff]
        %v3536 = vld [vmem:[#allocation19 + $0x3a8] sm:$0xff]
        %v3537 = vld [vmem:[#allocation19 + $0x3b0] sm:$0xff]
        %v3538 = vld [vmem:[#allocation19 + $0x3b8] sm:$0xff]
        %v3539 = vld [vmem:[#allocation19 + $0x3c0] sm:$0xff]
        %v3540 = vld [vmem:[#allocation19 + $0x3c8] sm:$0xff]
        %v3541 = vld [vmem:[#allocation19 + $0x3d0] sm:$0xff]
        %v3542 = vld [vmem:[#allocation19 + $0x3d8] sm:$0xff]
        %v3543 = vld [vmem:[#allocation19 + $0x3e0] sm:$0xff]
        %v3544 = vld [vmem:[#allocation19 + $0x3e8] sm:$0xff]
        %v3545 = vld [vmem:[#allocation19 + $0x3f0] sm:$0xff]
        %v3546 = vld [vmem:[#allocation19 + $0x3f8] sm:$0xff]
        %v3547 = vunpack.c.l.bf16 %v3294
        %v3548 = vunpack.c.l.bf16 %v3298
        %v3549 = vunpack.c.l.bf16 %v3302
        %v3550 = vunpack.c.l.bf16 %v3306
        %v3551 = vunpack.c.l.bf16 %v3310
        %v3552 = vunpack.c.l.bf16 %v3314
        %v3553 = vunpack.c.l.bf16 %v3318
        %v3554 = vunpack.c.l.bf16 %v3322
        %v3555 = vunpack.c.l.bf16 %v3326
        %v3556 = vunpack.c.l.bf16 %v3330
        %v3557 = vunpack.c.l.bf16 %v3334
        %v3558 = vunpack.c.l.bf16 %v3338
        %v3559 = vunpack.c.l.bf16 %v3342
        %v3560 = vunpack.c.l.bf16 %v3346
        %v3561 = vunpack.c.l.bf16 %v3350
        %v3562 = vunpack.c.l.bf16 %v3354
        %v3563 = vunpack.c.l.bf16 %v3358
        %v3564 = vunpack.c.l.bf16 %v3362
        %v3565 = vunpack.c.l.bf16 %v3366
        %v3566 = vunpack.c.l.bf16 %v3370
        %v3567 = vunpack.c.l.bf16 %v3374
        %v3568 = vunpack.c.l.bf16 %v3378
        %v3569 = vunpack.c.l.bf16 %v3382
        %v3570 = vunpack.c.l.bf16 %v3386
        %v3571 = vunpack.c.l.bf16 %v3390
        %v3572 = vunpack.c.l.bf16 %v3394
        %v3573 = vunpack.c.l.bf16 %v3398
        %v3574 = vunpack.c.l.bf16 %v3402
        %v3575 = vunpack.c.l.bf16 %v3406
        %v3576 = vunpack.c.l.bf16 %v3410
        %v3577 = vunpack.c.l.bf16 %v3414
        %v3578 = vunpack.c.l.bf16 %v3418
        %v3579 = vunpack.c.l.bf16 %v3419
        %v3580 = vunpack.c.h.bf16 %v3419
        %v3581 = vunpack.c.l.bf16 %v3420
        %v3582 = vunpack.c.h.bf16 %v3420
        %v3583 = vunpack.c.l.bf16 %v3421
        %v3584 = vunpack.c.h.bf16 %v3421
        %v3585 = vunpack.c.l.bf16 %v3422
        %v3586 = vunpack.c.h.bf16 %v3422
        %v3587 = vunpack.c.l.bf16 %v3423
        %v3588 = vunpack.c.h.bf16 %v3423
        %v3589 = vunpack.c.l.bf16 %v3424
        %v3590 = vunpack.c.h.bf16 %v3424
        %v3591 = vunpack.c.l.bf16 %v3425
        %v3592 = vunpack.c.h.bf16 %v3425
        %v3593 = vunpack.c.l.bf16 %v3426
        %v3594 = vunpack.c.h.bf16 %v3426
        %v3595 = vunpack.c.l.bf16 %v3427
        %v3596 = vunpack.c.h.bf16 %v3427
        %v3597 = vunpack.c.l.bf16 %v3428
        %v3598 = vunpack.c.h.bf16 %v3428
        %v3599 = vunpack.c.l.bf16 %v3429
        %v3600 = vunpack.c.h.bf16 %v3429
        %v3601 = vunpack.c.l.bf16 %v3430
        %v3602 = vunpack.c.h.bf16 %v3430
        %v3603 = vunpack.c.l.bf16 %v3431
        %v3604 = vunpack.c.h.bf16 %v3431
        %v3605 = vunpack.c.l.bf16 %v3432
        %v3606 = vunpack.c.h.bf16 %v3432
        %v3607 = vunpack.c.l.bf16 %v3433
        %v3608 = vunpack.c.h.bf16 %v3433
        %v3609 = vunpack.c.l.bf16 %v3434
        %v3610 = vunpack.c.h.bf16 %v3434
        %v3611 = vunpack.c.l.bf16 %v3435
        %v3612 = vunpack.c.h.bf16 %v3435
        %v3613 = vunpack.c.l.bf16 %v3436
        %v3614 = vunpack.c.h.bf16 %v3436
        %v3615 = vunpack.c.l.bf16 %v3437
        %v3616 = vunpack.c.h.bf16 %v3437
        %v3617 = vunpack.c.l.bf16 %v3438
        %v3618 = vunpack.c.h.bf16 %v3438
        %v3619 = vunpack.c.l.bf16 %v3439
        %v3620 = vunpack.c.h.bf16 %v3439
        %v3621 = vunpack.c.l.bf16 %v3440
        %v3622 = vunpack.c.h.bf16 %v3440
        %v3623 = vunpack.c.l.bf16 %v3441
        %v3624 = vunpack.c.h.bf16 %v3441
        %v3625 = vunpack.c.l.bf16 %v3442
        %v3626 = vunpack.c.h.bf16 %v3442
        %v3627 = vunpack.c.l.bf16 %v3443
        %v3628 = vunpack.c.h.bf16 %v3443
        %v3629 = vunpack.c.l.bf16 %v3444
        %v3630 = vunpack.c.h.bf16 %v3444
        %v3631 = vunpack.c.l.bf16 %v3445
        %v3632 = vunpack.c.h.bf16 %v3445
        %v3633 = vunpack.c.l.bf16 %v3446
        %v3634 = vunpack.c.h.bf16 %v3446
        %v3635 = vunpack.c.l.bf16 %v3447
        %v3636 = vunpack.c.h.bf16 %v3447
        %v3637 = vunpack.c.l.bf16 %v3448
        %v3638 = vunpack.c.h.bf16 %v3448
        %v3639 = vunpack.c.l.bf16 %v3449
        %v3640 = vunpack.c.h.bf16 %v3449
        %v3641 = vunpack.c.l.bf16 %v3450
        %v3642 = vunpack.c.h.bf16 %v3450
        %v3643 = vunpack.c.l.bf16 %v3451
        %v3644 = vunpack.c.h.bf16 %v3451
        %v3645 = vunpack.c.l.bf16 %v3452
        %v3646 = vunpack.c.h.bf16 %v3452
        %v3647 = vunpack.c.l.bf16 %v3453
        %v3648 = vunpack.c.h.bf16 %v3453
        %v3649 = vunpack.c.l.bf16 %v3454
        %v3650 = vunpack.c.h.bf16 %v3454
        %v3651 = vunpack.c.l.bf16 %v3455
        %v3652 = vunpack.c.h.bf16 %v3455
        %v3653 = vunpack.c.l.bf16 %v3456
        %v3654 = vunpack.c.h.bf16 %v3456
        %v3655 = vunpack.c.l.bf16 %v3457
        %v3656 = vunpack.c.h.bf16 %v3457
        %v3657 = vunpack.c.l.bf16 %v3458
        %v3658 = vunpack.c.h.bf16 %v3458
        %v3659 = vunpack.c.l.bf16 %v3459
        %v3660 = vunpack.c.h.bf16 %v3459
        %v3661 = vunpack.c.l.bf16 %v3460
        %v3662 = vunpack.c.h.bf16 %v3460
        %v3663 = vunpack.c.l.bf16 %v3461
        %v3664 = vunpack.c.h.bf16 %v3461
        %v3665 = vunpack.c.l.bf16 %v3462
        %v3666 = vunpack.c.h.bf16 %v3462
        %v3667 = vunpack.c.l.bf16 %v3463
        %v3668 = vunpack.c.h.bf16 %v3463
        %v3669 = vunpack.c.l.bf16 %v3464
        %v3670 = vunpack.c.h.bf16 %v3464
        %v3671 = vunpack.c.l.bf16 %v3465
        %v3672 = vunpack.c.h.bf16 %v3465
        %v3673 = vunpack.c.l.bf16 %v3466
        %v3674 = vunpack.c.h.bf16 %v3466
        %v3675 = vunpack.c.l.bf16 %v3467
        %v3676 = vunpack.c.h.bf16 %v3467
        %v3677 = vunpack.c.l.bf16 %v3468
        %v3678 = vunpack.c.h.bf16 %v3468
        %v3679 = vunpack.c.l.bf16 %v3469
        %v3680 = vunpack.c.h.bf16 %v3469
        %v3681 = vunpack.c.l.bf16 %v3470
        %v3682 = vunpack.c.h.bf16 %v3470
        %v3683 = vunpack.c.l.bf16 %v3471
        %v3684 = vunpack.c.h.bf16 %v3471
        %v3685 = vunpack.c.l.bf16 %v3472
        %v3686 = vunpack.c.h.bf16 %v3472
        %v3687 = vunpack.c.l.bf16 %v3473
        %v3688 = vunpack.c.h.bf16 %v3473
        %v3689 = vunpack.c.l.bf16 %v3474
        %v3690 = vunpack.c.h.bf16 %v3474
        %v3691 = vunpack.c.l.bf16 %v3475
        %v3692 = vunpack.c.h.bf16 %v3475
        %v3693 = vunpack.c.l.bf16 %v3476
        %v3694 = vunpack.c.h.bf16 %v3476
        %v3695 = vunpack.c.l.bf16 %v3477
        %v3696 = vunpack.c.h.bf16 %v3477
        %v3697 = vunpack.c.l.bf16 %v3478
        %v3698 = vunpack.c.h.bf16 %v3478
        %v3699 = vunpack.c.l.bf16 %v3479
        %v3700 = vunpack.c.h.bf16 %v3479
        %v3701 = vunpack.c.l.bf16 %v3480
        %v3702 = vunpack.c.h.bf16 %v3480
        %v3703 = vunpack.c.l.bf16 %v3481
        %v3704 = vunpack.c.h.bf16 %v3481
        %v3705 = vunpack.c.l.bf16 %v3482
        %v3706 = vunpack.c.h.bf16 %v3482
        %v3707 = vunpack.c.l.bf16 %v3483
        %v3708 = vunpack.c.h.bf16 %v3483
        %v3709 = vunpack.c.l.bf16 %v3484
        %v3710 = vunpack.c.h.bf16 %v3484
        %v3711 = vunpack.c.l.bf16 %v3485
        %v3712 = vunpack.c.h.bf16 %v3485
        %v3713 = vunpack.c.l.bf16 %v3486
        %v3714 = vunpack.c.h.bf16 %v3486
        %v3715 = vunpack.c.l.bf16 %v3487
        %v3716 = vunpack.c.h.bf16 %v3487
        %v3717 = vunpack.c.l.bf16 %v3488
        %v3718 = vunpack.c.h.bf16 %v3488
        %v3719 = vunpack.c.l.bf16 %v3489
        %v3720 = vunpack.c.h.bf16 %v3489
        %v3721 = vunpack.c.l.bf16 %v3490
        %v3722 = vunpack.c.h.bf16 %v3490
        %v3723 = vunpack.c.l.bf16 %v3491
        %v3724 = vunpack.c.h.bf16 %v3491
        %v3725 = vunpack.c.l.bf16 %v3492
        %v3726 = vunpack.c.h.bf16 %v3492
        %v3727 = vunpack.c.l.bf16 %v3493
        %v3728 = vunpack.c.h.bf16 %v3493
        %v3729 = vunpack.c.l.bf16 %v3494
        %v3730 = vunpack.c.h.bf16 %v3494
        %v3731 = vunpack.c.l.bf16 %v3495
        %v3732 = vunpack.c.h.bf16 %v3495
        %v3733 = vunpack.c.l.bf16 %v3496
        %v3734 = vunpack.c.h.bf16 %v3496
        %v3735 = vunpack.c.l.bf16 %v3497
        %v3736 = vunpack.c.h.bf16 %v3497
        %v3737 = vunpack.c.l.bf16 %v3498
        %v3738 = vunpack.c.h.bf16 %v3498
        %v3739 = vunpack.c.l.bf16 %v3499
        %v3740 = vunpack.c.h.bf16 %v3499
        %v3741 = vunpack.c.l.bf16 %v3500
        %v3742 = vunpack.c.h.bf16 %v3500
        %v3743 = vunpack.c.l.bf16 %v3501
        %v3744 = vunpack.c.h.bf16 %v3501
        %v3745 = vunpack.c.l.bf16 %v3502
        %v3746 = vunpack.c.h.bf16 %v3502
        %v3747 = vunpack.c.l.bf16 %v3503
        %v3748 = vunpack.c.h.bf16 %v3503
        %v3749 = vunpack.c.l.bf16 %v3504
        %v3750 = vunpack.c.h.bf16 %v3504
        %v3751 = vunpack.c.l.bf16 %v3505
        %v3752 = vunpack.c.h.bf16 %v3505
        %v3753 = vunpack.c.l.bf16 %v3506
        %v3754 = vunpack.c.h.bf16 %v3506
        %v3755 = vunpack.c.l.bf16 %v3507
        %v3756 = vunpack.c.h.bf16 %v3507
        %v3757 = vunpack.c.l.bf16 %v3508
        %v3758 = vunpack.c.h.bf16 %v3508
        %v3759 = vunpack.c.l.bf16 %v3509
        %v3760 = vunpack.c.h.bf16 %v3509
        %v3761 = vunpack.c.l.bf16 %v3510
        %v3762 = vunpack.c.h.bf16 %v3510
        %v3763 = vunpack.c.l.bf16 %v3511
        %v3764 = vunpack.c.h.bf16 %v3511
        %v3765 = vunpack.c.l.bf16 %v3512
        %v3766 = vunpack.c.h.bf16 %v3512
        %v3767 = vunpack.c.l.bf16 %v3513
        %v3768 = vunpack.c.h.bf16 %v3513
        %v3769 = vunpack.c.l.bf16 %v3514
        %v3770 = vunpack.c.h.bf16 %v3514
        %v3771 = vunpack.c.l.bf16 %v3515
        %v3772 = vunpack.c.h.bf16 %v3515
        %v3773 = vunpack.c.l.bf16 %v3516
        %v3774 = vunpack.c.h.bf16 %v3516
        %v3775 = vunpack.c.l.bf16 %v3517
        %v3776 = vunpack.c.h.bf16 %v3517
        %v3777 = vunpack.c.l.bf16 %v3518
        %v3778 = vunpack.c.h.bf16 %v3518
        %v3779 = vunpack.c.l.bf16 %v3519
        %v3780 = vunpack.c.h.bf16 %v3519
        %v3781 = vunpack.c.l.bf16 %v3520
        %v3782 = vunpack.c.h.bf16 %v3520
        %v3783 = vunpack.c.l.bf16 %v3521
        %v3784 = vunpack.c.h.bf16 %v3521
        %v3785 = vunpack.c.l.bf16 %v3522
        %v3786 = vunpack.c.h.bf16 %v3522
        %v3787 = vunpack.c.l.bf16 %v3523
        %v3788 = vunpack.c.h.bf16 %v3523
        %v3789 = vunpack.c.l.bf16 %v3524
        %v3790 = vunpack.c.h.bf16 %v3524
        %v3791 = vunpack.c.l.bf16 %v3525
        %v3792 = vunpack.c.h.bf16 %v3525
        %v3793 = vunpack.c.l.bf16 %v3526
        %v3794 = vunpack.c.h.bf16 %v3526
        %v3795 = vunpack.c.l.bf16 %v3527
        %v3796 = vunpack.c.h.bf16 %v3527
        %v3797 = vunpack.c.l.bf16 %v3528
        %v3798 = vunpack.c.h.bf16 %v3528
        %v3799 = vunpack.c.l.bf16 %v3529
        %v3800 = vunpack.c.h.bf16 %v3529
        %v3801 = vunpack.c.l.bf16 %v3530
        %v3802 = vunpack.c.h.bf16 %v3530
        %v3803 = vunpack.c.l.bf16 %v3531
        %v3804 = vunpack.c.h.bf16 %v3531
        %v3805 = vunpack.c.l.bf16 %v3532
        %v3806 = vunpack.c.h.bf16 %v3532
        %v3807 = vunpack.c.l.bf16 %v3533
        %v3808 = vunpack.c.h.bf16 %v3533
        %v3809 = vunpack.c.l.bf16 %v3534
        %v3810 = vunpack.c.h.bf16 %v3534
        %v3811 = vunpack.c.l.bf16 %v3535
        %v3812 = vunpack.c.h.bf16 %v3535
        %v3813 = vunpack.c.l.bf16 %v3536
        %v3814 = vunpack.c.h.bf16 %v3536
        %v3815 = vunpack.c.l.bf16 %v3537
        %v3816 = vunpack.c.h.bf16 %v3537
        %v3817 = vunpack.c.l.bf16 %v3538
        %v3818 = vunpack.c.h.bf16 %v3538
        %v3819 = vunpack.c.l.bf16 %v3539
        %v3820 = vunpack.c.h.bf16 %v3539
        %v3821 = vunpack.c.l.bf16 %v3540
        %v3822 = vunpack.c.h.bf16 %v3540
        %v3823 = vunpack.c.l.bf16 %v3541
        %v3824 = vunpack.c.h.bf16 %v3541
        %v3825 = vunpack.c.l.bf16 %v3542
        %v3826 = vunpack.c.h.bf16 %v3542
        %v3827 = vunpack.c.l.bf16 %v3543
        %v3828 = vunpack.c.h.bf16 %v3543
        %v3829 = vunpack.c.l.bf16 %v3544
        %v3830 = vunpack.c.h.bf16 %v3544
        %v3831 = vunpack.c.l.bf16 %v3545
        %v3832 = vunpack.c.h.bf16 %v3545
        %v3833 = vunpack.c.l.bf16 %v3546
        %v3834 = vunpack.c.h.bf16 %v3546
        %v3835 = vmul.f32 %v3547, %v3579
        %v3836 = vmul.f32 %v3548, %v3580
        %v3837 = vmul.f32 %v3549, %v3581
        %v3838 = vmul.f32 %v3550, %v3582
        %v3839 = vmul.f32 %v3551, %v3583
        %v3840 = vmul.f32 %v3552, %v3584
        %v3841 = vmul.f32 %v3553, %v3585
        %v3842 = vmul.f32 %v3554, %v3586
        %v3843 = vmul.f32 %v3555, %v3587
        %v3844 = vmul.f32 %v3556, %v3588
        %v3845 = vmul.f32 %v3557, %v3589
        %v3846 = vmul.f32 %v3558, %v3590
        %v3847 = vmul.f32 %v3559, %v3591
        %v3848 = vmul.f32 %v3560, %v3592
        %v3849 = vmul.f32 %v3561, %v3593
        %v3850 = vmul.f32 %v3562, %v3594
        %v3851 = vmul.f32 %v3563, %v3595
        %v3852 = vmul.f32 %v3564, %v3596
        %v3853 = vmul.f32 %v3565, %v3597
        %v3854 = vmul.f32 %v3566, %v3598
        %v3855 = vmul.f32 %v3567, %v3599
        %v3856 = vmul.f32 %v3568, %v3600
        %v3857 = vmul.f32 %v3569, %v3601
        %v3858 = vmul.f32 %v3570, %v3602
        %v3859 = vmul.f32 %v3571, %v3603
        %v3860 = vmul.f32 %v3572, %v3604
        %v3861 = vmul.f32 %v3573, %v3605
        %v3862 = vmul.f32 %v3574, %v3606
        %v3863 = vmul.f32 %v3575, %v3607
        %v3864 = vmul.f32 %v3576, %v3608
        %v3865 = vmul.f32 %v3577, %v3609
        %v3866 = vmul.f32 %v3578, %v3610
        %v3867 = vmul.f32 %v3547, %v3611
        %v3868 = vmul.f32 %v3548, %v3612
        %v3869 = vmul.f32 %v3549, %v3613
        %v3870 = vmul.f32 %v3550, %v3614
        %v3871 = vmul.f32 %v3551, %v3615
        %v3872 = vmul.f32 %v3552, %v3616
        %v3873 = vmul.f32 %v3553, %v3617
        %v3874 = vmul.f32 %v3554, %v3618
        %v3875 = vmul.f32 %v3555, %v3619
        %v3876 = vmul.f32 %v3556, %v3620
        %v3877 = vmul.f32 %v3557, %v3621
        %v3878 = vmul.f32 %v3558, %v3622
        %v3879 = vmul.f32 %v3559, %v3623
        %v3880 = vmul.f32 %v3560, %v3624
        %v3881 = vmul.f32 %v3561, %v3625
        %v3882 = vmul.f32 %v3562, %v3626
        %v3883 = vmul.f32 %v3563, %v3627
        %v3884 = vmul.f32 %v3564, %v3628
        %v3885 = vmul.f32 %v3565, %v3629
        %v3886 = vmul.f32 %v3566, %v3630
        %v3887 = vmul.f32 %v3567, %v3631
        %v3888 = vmul.f32 %v3568, %v3632
        %v3889 = vmul.f32 %v3569, %v3633
        %v3890 = vmul.f32 %v3570, %v3634
        %v3891 = vmul.f32 %v3571, %v3635
        %v3892 = vmul.f32 %v3572, %v3636
        %v3893 = vmul.f32 %v3573, %v3637
        %v3894 = vmul.f32 %v3574, %v3638
        %v3895 = vmul.f32 %v3575, %v3639
        %v3896 = vmul.f32 %v3576, %v3640
        %v3897 = vmul.f32 %v3577, %v3641
        %v3898 = vmul.f32 %v3578, %v3642
        %v3899 = vmul.f32 %v3547, %v3643
        %v3900 = vmul.f32 %v3548, %v3644
        %v3901 = vmul.f32 %v3549, %v3645
        %v3902 = vmul.f32 %v3550, %v3646
        %v3903 = vmul.f32 %v3551, %v3647
        %v3904 = vmul.f32 %v3552, %v3648
        %v3905 = vmul.f32 %v3553, %v3649
        %v3906 = vmul.f32 %v3554, %v3650
        %v3907 = vmul.f32 %v3555, %v3651
        %v3908 = vmul.f32 %v3556, %v3652
        %v3909 = vmul.f32 %v3557, %v3653
        %v3910 = vmul.f32 %v3558, %v3654
        %v3911 = vmul.f32 %v3559, %v3655
        %v3912 = vmul.f32 %v3560, %v3656
        %v3913 = vmul.f32 %v3561, %v3657
        %v3914 = vmul.f32 %v3562, %v3658
        %v3915 = vmul.f32 %v3563, %v3659
        %v3916 = vmul.f32 %v3564, %v3660
        %v3917 = vmul.f32 %v3565, %v3661
        %v3918 = vmul.f32 %v3566, %v3662
        %v3919 = vmul.f32 %v3567, %v3663
        %v3920 = vmul.f32 %v3568, %v3664
        %v3921 = vmul.f32 %v3569, %v3665
        %v3922 = vmul.f32 %v3570, %v3666
        %v3923 = vmul.f32 %v3571, %v3667
        %v3924 = vmul.f32 %v3572, %v3668
        %v3925 = vmul.f32 %v3573, %v3669
        %v3926 = vmul.f32 %v3574, %v3670
        %v3927 = vmul.f32 %v3575, %v3671
        %v3928 = vmul.f32 %v3576, %v3672
        %v3929 = vmul.f32 %v3577, %v3673
        %v3930 = vmul.f32 %v3578, %v3674
        %v3931 = vmul.f32 %v3547, %v3675
        %v3932 = vmul.f32 %v3548, %v3676
        %v3933 = vmul.f32 %v3549, %v3677
        %v3934 = vmul.f32 %v3550, %v3678
        %v3935 = vmul.f32 %v3551, %v3679
        %v3936 = vmul.f32 %v3552, %v3680
        %v3937 = vmul.f32 %v3553, %v3681
        %v3938 = vmul.f32 %v3554, %v3682
        %v3939 = vmul.f32 %v3555, %v3683
        %v3940 = vmul.f32 %v3556, %v3684
        %v3941 = vmul.f32 %v3557, %v3685
        %v3942 = vmul.f32 %v3558, %v3686
        %v3943 = vmul.f32 %v3559, %v3687
        %v3944 = vmul.f32 %v3560, %v3688
        %v3945 = vmul.f32 %v3561, %v3689
        %v3946 = vmul.f32 %v3562, %v3690
        %v3947 = vmul.f32 %v3563, %v3691
        %v3948 = vmul.f32 %v3564, %v3692
        %v3949 = vmul.f32 %v3565, %v3693
        %v3950 = vmul.f32 %v3566, %v3694
        %v3951 = vmul.f32 %v3567, %v3695
        %v3952 = vmul.f32 %v3568, %v3696
        %v3953 = vmul.f32 %v3569, %v3697
        %v3954 = vmul.f32 %v3570, %v3698
        %v3955 = vmul.f32 %v3571, %v3699
        %v3956 = vmul.f32 %v3572, %v3700
        %v3957 = vmul.f32 %v3573, %v3701
        %v3958 = vmul.f32 %v3574, %v3702
        %v3959 = vmul.f32 %v3575, %v3703
        %v3960 = vmul.f32 %v3576, %v3704
        %v3961 = vmul.f32 %v3577, %v3705
        %v3962 = vmul.f32 %v3578, %v3706
        %v3963 = vmul.f32 %v3547, %v3707
        %v3964 = vmul.f32 %v3548, %v3708
        %v3965 = vmul.f32 %v3549, %v3709
        %v3966 = vmul.f32 %v3550, %v3710
        %v3967 = vmul.f32 %v3551, %v3711
        %v3968 = vmul.f32 %v3552, %v3712
        %v3969 = vmul.f32 %v3553, %v3713
        %v3970 = vmul.f32 %v3554, %v3714
        %v3971 = vmul.f32 %v3555, %v3715
        %v3972 = vmul.f32 %v3556, %v3716
        %v3973 = vmul.f32 %v3557, %v3717
        %v3974 = vmul.f32 %v3558, %v3718
        %v3975 = vmul.f32 %v3559, %v3719
        %v3976 = vmul.f32 %v3560, %v3720
        %v3977 = vmul.f32 %v3561, %v3721
        %v3978 = vmul.f32 %v3562, %v3722
        %v3979 = vmul.f32 %v3563, %v3723
        %v3980 = vmul.f32 %v3564, %v3724
        %v3981 = vmul.f32 %v3565, %v3725
        %v3982 = vmul.f32 %v3566, %v3726
        %v3983 = vmul.f32 %v3567, %v3727
        %v3984 = vmul.f32 %v3568, %v3728
        %v3985 = vmul.f32 %v3569, %v3729
        %v3986 = vmul.f32 %v3570, %v3730
        %v3987 = vmul.f32 %v3571, %v3731
        %v3988 = vmul.f32 %v3572, %v3732
        %v3989 = vmul.f32 %v3573, %v3733
        %v3990 = vmul.f32 %v3574, %v3734
        %v3991 = vmul.f32 %v3575, %v3735
        %v3992 = vmul.f32 %v3576, %v3736
        %v3993 = vmul.f32 %v3577, %v3737
        %v3994 = vmul.f32 %v3578, %v3738
        %v3995 = vmul.f32 %v3547, %v3739
        %v3996 = vmul.f32 %v3548, %v3740
        %v3997 = vmul.f32 %v3549, %v3741
        %v3998 = vmul.f32 %v3550, %v3742
        %v3999 = vmul.f32 %v3551, %v3743
        %v4000 = vmul.f32 %v3552, %v3744
        %v4001 = vmul.f32 %v3553, %v3745
        %v4002 = vmul.f32 %v3554, %v3746
        %v4003 = vmul.f32 %v3555, %v3747
        %v4004 = vmul.f32 %v3556, %v3748
        %v4005 = vmul.f32 %v3557, %v3749
        %v4006 = vmul.f32 %v3558, %v3750
        %v4007 = vmul.f32 %v3559, %v3751
        %v4008 = vmul.f32 %v3560, %v3752
        %v4009 = vmul.f32 %v3561, %v3753
        %v4010 = vmul.f32 %v3562, %v3754
        %v4011 = vmul.f32 %v3563, %v3755
        %v4012 = vmul.f32 %v3564, %v3756
        %v4013 = vmul.f32 %v3565, %v3757
        %v4014 = vmul.f32 %v3566, %v3758
        %v4015 = vmul.f32 %v3567, %v3759
        %v4016 = vmul.f32 %v3568, %v3760
        %v4017 = vmul.f32 %v3569, %v3761
        %v4018 = vmul.f32 %v3570, %v3762
        %v4019 = vmul.f32 %v3571, %v3763
        %v4020 = vmul.f32 %v3572, %v3764
        %v4021 = vmul.f32 %v3573, %v3765
        %v4022 = vmul.f32 %v3574, %v3766
        %v4023 = vmul.f32 %v3575, %v3767
        %v4024 = vmul.f32 %v3576, %v3768
        %v4025 = vmul.f32 %v3577, %v3769
        %v4026 = vmul.f32 %v3578, %v3770
        %v4027 = vmul.f32 %v3547, %v3771
        %v4028 = vmul.f32 %v3548, %v3772
        %v4029 = vmul.f32 %v3549, %v3773
        %v4030 = vmul.f32 %v3550, %v3774
        %v4031 = vmul.f32 %v3551, %v3775
        %v4032 = vmul.f32 %v3552, %v3776
        %v4033 = vmul.f32 %v3553, %v3777
        %v4034 = vmul.f32 %v3554, %v3778
        %v4035 = vmul.f32 %v3555, %v3779
        %v4036 = vmul.f32 %v3556, %v3780
        %v4037 = vmul.f32 %v3557, %v3781
        %v4038 = vmul.f32 %v3558, %v3782
        %v4039 = vmul.f32 %v3559, %v3783
        %v4040 = vmul.f32 %v3560, %v3784
        %v4041 = vmul.f32 %v3561, %v3785
        %v4042 = vmul.f32 %v3562, %v3786
        %v4043 = vmul.f32 %v3563, %v3787
        %v4044 = vmul.f32 %v3564, %v3788
        %v4045 = vmul.f32 %v3565, %v3789
        %v4046 = vmul.f32 %v3566, %v3790
        %v4047 = vmul.f32 %v3567, %v3791
        %v4048 = vmul.f32 %v3568, %v3792
        %v4049 = vmul.f32 %v3569, %v3793
        %v4050 = vmul.f32 %v3570, %v3794
        %v4051 = vmul.f32 %v3571, %v3795
        %v4052 = vmul.f32 %v3572, %v3796
        %v4053 = vmul.f32 %v3573, %v3797
        %v4054 = vmul.f32 %v3574, %v3798
        %v4055 = vmul.f32 %v3575, %v3799
        %v4056 = vmul.f32 %v3576, %v3800
        %v4057 = vmul.f32 %v3577, %v3801
        %v4058 = vmul.f32 %v3578, %v3802
        %v4059 = vmul.f32 %v3547, %v3803
        %v4060 = vmul.f32 %v3548, %v3804
        %v4061 = vmul.f32 %v3549, %v3805
        %v4062 = vmul.f32 %v3550, %v3806
        %v4063 = vmul.f32 %v3551, %v3807
        %v4064 = vmul.f32 %v3552, %v3808
        %v4065 = vmul.f32 %v3553, %v3809
        %v4066 = vmul.f32 %v3554, %v3810
        %v4067 = vmul.f32 %v3555, %v3811
        %v4068 = vmul.f32 %v3556, %v3812
        %v4069 = vmul.f32 %v3557, %v3813
        %v4070 = vmul.f32 %v3558, %v3814
        %v4071 = vmul.f32 %v3559, %v3815
        %v4072 = vmul.f32 %v3560, %v3816
        %v4073 = vmul.f32 %v3561, %v3817
        %v4074 = vmul.f32 %v3562, %v3818
        %v4075 = vmul.f32 %v3563, %v3819
        %v4076 = vmul.f32 %v3564, %v3820
        %v4077 = vmul.f32 %v3565, %v3821
        %v4078 = vmul.f32 %v3566, %v3822
        %v4079 = vmul.f32 %v3567, %v3823
        %v4080 = vmul.f32 %v3568, %v3824
        %v4081 = vmul.f32 %v3569, %v3825
        %v4082 = vmul.f32 %v3570, %v3826
        %v4083 = vmul.f32 %v3571, %v3827
        %v4084 = vmul.f32 %v3572, %v3828
        %v4085 = vmul.f32 %v3573, %v3829
        %v4086 = vmul.f32 %v3574, %v3830
        %v4087 = vmul.f32 %v3575, %v3831
        %v4088 = vmul.f32 %v3576, %v3832
        %v4089 = vmul.f32 %v3577, %v3833
        %v4090 = vmul.f32 %v3578, %v3834
        %v4091 = vpack.c.bf16 %v3867, %v3835
        %v4092 = vpack.c.bf16 %v3868, %v3836
        %v4093 = vpack.c.bf16 %v3869, %v3837
        %v4094 = vpack.c.bf16 %v3870, %v3838
        %v4095 = vpack.c.bf16 %v3871, %v3839
        %v4096 = vpack.c.bf16 %v3872, %v3840
        %v4097 = vpack.c.bf16 %v3873, %v3841
        %v4098 = vpack.c.bf16 %v3874, %v3842
        %v4099 = vpack.c.bf16 %v3875, %v3843
        %v4100 = vpack.c.bf16 %v3876, %v3844
        %v4101 = vpack.c.bf16 %v3877, %v3845
        %v4102 = vpack.c.bf16 %v3878, %v3846
        %v4103 = vpack.c.bf16 %v3879, %v3847
        %v4104 = vpack.c.bf16 %v3880, %v3848
        %v4105 = vpack.c.bf16 %v3881, %v3849
        %v4106 = vpack.c.bf16 %v3882, %v3850
        %v4107 = vpack.c.bf16 %v3883, %v3851
        %v4108 = vpack.c.bf16 %v3884, %v3852
        %v4109 = vpack.c.bf16 %v3885, %v3853
        %v4110 = vpack.c.bf16 %v3886, %v3854
        %v4111 = vpack.c.bf16 %v3887, %v3855
        %v4112 = vpack.c.bf16 %v3888, %v3856
        %v4113 = vpack.c.bf16 %v3889, %v3857
        %v4114 = vpack.c.bf16 %v3890, %v3858
        %v4115 = vpack.c.bf16 %v3891, %v3859
        %v4116 = vpack.c.bf16 %v3892, %v3860
        %v4117 = vpack.c.bf16 %v3893, %v3861
        %v4118 = vpack.c.bf16 %v3894, %v3862
        %v4119 = vpack.c.bf16 %v3895, %v3863
        %v4120 = vpack.c.bf16 %v3896, %v3864
        %v4121 = vpack.c.bf16 %v3897, %v3865
        %v4122 = vpack.c.bf16 %v3898, %v3866
        %v4123 = vpack.c.bf16 %v3931, %v3899
        %v4124 = vpack.c.bf16 %v3932, %v3900
        %v4125 = vpack.c.bf16 %v3933, %v3901
        %v4126 = vpack.c.bf16 %v3934, %v3902
        %v4127 = vpack.c.bf16 %v3935, %v3903
        %v4128 = vpack.c.bf16 %v3936, %v3904
        %v4129 = vpack.c.bf16 %v3937, %v3905
        %v4130 = vpack.c.bf16 %v3938, %v3906
        %v4131 = vpack.c.bf16 %v3939, %v3907
        %v4132 = vpack.c.bf16 %v3940, %v3908
        %v4133 = vpack.c.bf16 %v3941, %v3909
        %v4134 = vpack.c.bf16 %v3942, %v3910
        %v4135 = vpack.c.bf16 %v3943, %v3911
        %v4136 = vpack.c.bf16 %v3944, %v3912
        %v4137 = vpack.c.bf16 %v3945, %v3913
        %v4138 = vpack.c.bf16 %v3946, %v3914
        %v4139 = vpack.c.bf16 %v3947, %v3915
        %v4140 = vpack.c.bf16 %v3948, %v3916
        %v4141 = vpack.c.bf16 %v3949, %v3917
        %v4142 = vpack.c.bf16 %v3950, %v3918
        %v4143 = vpack.c.bf16 %v3951, %v3919
        %v4144 = vpack.c.bf16 %v3952, %v3920
        %v4145 = vpack.c.bf16 %v3953, %v3921
        %v4146 = vpack.c.bf16 %v3954, %v3922
        %v4147 = vpack.c.bf16 %v3955, %v3923
        %v4148 = vpack.c.bf16 %v3956, %v3924
        %v4149 = vpack.c.bf16 %v3957, %v3925
        %v4150 = vpack.c.bf16 %v3958, %v3926
        %v4151 = vpack.c.bf16 %v3959, %v3927
        %v4152 = vpack.c.bf16 %v3960, %v3928
        %v4153 = vpack.c.bf16 %v3961, %v3929
        %v4154 = vpack.c.bf16 %v3962, %v3930
        %v4155 = vpack.c.bf16 %v3995, %v3963
        %v4156 = vpack.c.bf16 %v3996, %v3964
        %v4157 = vpack.c.bf16 %v3997, %v3965
        %v4158 = vpack.c.bf16 %v3998, %v3966
        %v4159 = vpack.c.bf16 %v3999, %v3967
        %v4160 = vpack.c.bf16 %v4000, %v3968
        %v4161 = vpack.c.bf16 %v4001, %v3969
        %v4162 = vpack.c.bf16 %v4002, %v3970
        %v4163 = vpack.c.bf16 %v4003, %v3971
        %v4164 = vpack.c.bf16 %v4004, %v3972
        %v4165 = vpack.c.bf16 %v4005, %v3973
        %v4166 = vpack.c.bf16 %v4006, %v3974
        %v4167 = vpack.c.bf16 %v4007, %v3975
        %v4168 = vpack.c.bf16 %v4008, %v3976
        %v4169 = vpack.c.bf16 %v4009, %v3977
        %v4170 = vpack.c.bf16 %v4010, %v3978
        %v4171 = vpack.c.bf16 %v4011, %v3979
        %v4172 = vpack.c.bf16 %v4012, %v3980
        %v4173 = vpack.c.bf16 %v4013, %v3981
        %v4174 = vpack.c.bf16 %v4014, %v3982
        %v4175 = vpack.c.bf16 %v4015, %v3983
        %v4176 = vpack.c.bf16 %v4016, %v3984
        %v4177 = vpack.c.bf16 %v4017, %v3985
        %v4178 = vpack.c.bf16 %v4018, %v3986
        %v4179 = vpack.c.bf16 %v4019, %v3987
        %v4180 = vpack.c.bf16 %v4020, %v3988
        %v4181 = vpack.c.bf16 %v4021, %v3989
        %v4182 = vpack.c.bf16 %v4022, %v3990
        %v4183 = vpack.c.bf16 %v4023, %v3991
        %v4184 = vpack.c.bf16 %v4024, %v3992
        %v4185 = vpack.c.bf16 %v4025, %v3993
        %v4186 = vpack.c.bf16 %v4026, %v3994
        %v4187 = vpack.c.bf16 %v4059, %v4027
        %v4188 = vpack.c.bf16 %v4060, %v4028
        %v4189 = vpack.c.bf16 %v4061, %v4029
        %v4190 = vpack.c.bf16 %v4062, %v4030
        %v4191 = vpack.c.bf16 %v4063, %v4031
        %v4192 = vpack.c.bf16 %v4064, %v4032
        %v4193 = vpack.c.bf16 %v4065, %v4033
        %v4194 = vpack.c.bf16 %v4066, %v4034
        %v4195 = vpack.c.bf16 %v4067, %v4035
        %v4196 = vpack.c.bf16 %v4068, %v4036
        %v4197 = vpack.c.bf16 %v4069, %v4037
        %v4198 = vpack.c.bf16 %v4070, %v4038
        %v4199 = vpack.c.bf16 %v4071, %v4039
        %v4200 = vpack.c.bf16 %v4072, %v4040
        %v4201 = vpack.c.bf16 %v4073, %v4041
        %v4202 = vpack.c.bf16 %v4074, %v4042
        %v4203 = vpack.c.bf16 %v4075, %v4043
        %v4204 = vpack.c.bf16 %v4076, %v4044
        %v4205 = vpack.c.bf16 %v4077, %v4045
        %v4206 = vpack.c.bf16 %v4078, %v4046
        %v4207 = vpack.c.bf16 %v4079, %v4047
        %v4208 = vpack.c.bf16 %v4080, %v4048
        %v4209 = vpack.c.bf16 %v4081, %v4049
        %v4210 = vpack.c.bf16 %v4082, %v4050
        %v4211 = vpack.c.bf16 %v4083, %v4051
        %v4212 = vpack.c.bf16 %v4084, %v4052
        %v4213 = vpack.c.bf16 %v4085, %v4053
        %v4214 = vpack.c.bf16 %v4086, %v4054
        %v4215 = vpack.c.bf16 %v4087, %v4055
        %v4216 = vpack.c.bf16 %v4088, %v4056
        %v4217 = vpack.c.bf16 %v4089, %v4057
        %v4218 = vpack.c.bf16 %v4090, %v4058
        %v4219 = vld [vmem:[#allocation21] sm:$0xff]
        %v4220 = vld [vmem:[#allocation21 + $0x8] sm:$0xff]
        %v4221 = vld [vmem:[#allocation21 + $0x10] sm:$0xff]
        %v4222 = vld [vmem:[#allocation21 + $0x18] sm:$0xff]
        %v4223 = vld [vmem:[#allocation21 + $0x20] sm:$0xff]
        %v4224 = vld [vmem:[#allocation21 + $0x28] sm:$0xff]
        %v4225 = vld [vmem:[#allocation21 + $0x30] sm:$0xff]
        %v4226 = vld [vmem:[#allocation21 + $0x38] sm:$0xff]
        %v4227 = vld [vmem:[#allocation21 + $0x40] sm:$0xff]
        %v4228 = vld [vmem:[#allocation21 + $0x48] sm:$0xff]
        %v4229 = vld [vmem:[#allocation21 + $0x50] sm:$0xff]
        %v4230 = vld [vmem:[#allocation21 + $0x58] sm:$0xff]
        %v4231 = vld [vmem:[#allocation21 + $0x60] sm:$0xff]
        %v4232 = vld [vmem:[#allocation21 + $0x68] sm:$0xff]
        %v4233 = vld [vmem:[#allocation21 + $0x70] sm:$0xff]
        %v4234 = vld [vmem:[#allocation21 + $0x78] sm:$0xff]
        %v4235 = vld [vmem:[#allocation21 + $0x80] sm:$0xff]
        %v4236 = vld [vmem:[#allocation21 + $0x88] sm:$0xff]
        %v4237 = vld [vmem:[#allocation21 + $0x90] sm:$0xff]
        %v4238 = vld [vmem:[#allocation21 + $0x98] sm:$0xff]
        %v4239 = vld [vmem:[#allocation21 + $0xa0] sm:$0xff]
        %v4240 = vld [vmem:[#allocation21 + $0xa8] sm:$0xff]
        %v4241 = vld [vmem:[#allocation21 + $0xb0] sm:$0xff]
        %v4242 = vld [vmem:[#allocation21 + $0xb8] sm:$0xff]
        %v4243 = vld [vmem:[#allocation21 + $0xc0] sm:$0xff]
        %v4244 = vld [vmem:[#allocation21 + $0xc8] sm:$0xff]
        %v4245 = vld [vmem:[#allocation21 + $0xd0] sm:$0xff]
        %v4246 = vld [vmem:[#allocation21 + $0xd8] sm:$0xff]
        %v4247 = vld [vmem:[#allocation21 + $0xe0] sm:$0xff]
        %v4248 = vld [vmem:[#allocation21 + $0xe8] sm:$0xff]
        %v4249 = vld [vmem:[#allocation21 + $0xf0] sm:$0xff]
        %v4250 = vld [vmem:[#allocation21 + $0xf8] sm:$0xff]
        %v4251 = vld [vmem:[#allocation21 + $0x100] sm:$0xff]
        %v4252 = vld [vmem:[#allocation21 + $0x108] sm:$0xff]
        %v4253 = vld [vmem:[#allocation21 + $0x110] sm:$0xff]
        %v4254 = vld [vmem:[#allocation21 + $0x118] sm:$0xff]
        %v4255 = vld [vmem:[#allocation21 + $0x120] sm:$0xff]
        %v4256 = vld [vmem:[#allocation21 + $0x128] sm:$0xff]
        %v4257 = vld [vmem:[#allocation21 + $0x130] sm:$0xff]
        %v4258 = vld [vmem:[#allocation21 + $0x138] sm:$0xff]
        %v4259 = vld [vmem:[#allocation21 + $0x140] sm:$0xff]
        %v4260 = vld [vmem:[#allocation21 + $0x148] sm:$0xff]
        %v4261 = vld [vmem:[#allocation21 + $0x150] sm:$0xff]
        %v4262 = vld [vmem:[#allocation21 + $0x158] sm:$0xff]
        %v4263 = vld [vmem:[#allocation21 + $0x160] sm:$0xff]
        %v4264 = vld [vmem:[#allocation21 + $0x168] sm:$0xff]
        %v4265 = vld [vmem:[#allocation21 + $0x170] sm:$0xff]
        %v4266 = vld [vmem:[#allocation21 + $0x178] sm:$0xff]
        %v4267 = vld [vmem:[#allocation21 + $0x180] sm:$0xff]
        %v4268 = vld [vmem:[#allocation21 + $0x188] sm:$0xff]
        %v4269 = vld [vmem:[#allocation21 + $0x190] sm:$0xff]
        %v4270 = vld [vmem:[#allocation21 + $0x198] sm:$0xff]
        %v4271 = vld [vmem:[#allocation21 + $0x1a0] sm:$0xff]
        %v4272 = vld [vmem:[#allocation21 + $0x1a8] sm:$0xff]
        %v4273 = vld [vmem:[#allocation21 + $0x1b0] sm:$0xff]
        %v4274 = vld [vmem:[#allocation21 + $0x1b8] sm:$0xff]
        %v4275 = vld [vmem:[#allocation21 + $0x1c0] sm:$0xff]
        %v4276 = vld [vmem:[#allocation21 + $0x1c8] sm:$0xff]
        %v4277 = vld [vmem:[#allocation21 + $0x1d0] sm:$0xff]
        %v4278 = vld [vmem:[#allocation21 + $0x1d8] sm:$0xff]
        %v4279 = vld [vmem:[#allocation21 + $0x1e0] sm:$0xff]
        %v4280 = vld [vmem:[#allocation21 + $0x1e8] sm:$0xff]
        %v4281 = vld [vmem:[#allocation21 + $0x1f0] sm:$0xff]
        %v4282 = vld [vmem:[#allocation21 + $0x1f8] sm:$0xff]
        %v4283 = vld [vmem:[#allocation21 + $0x200] sm:$0xff]
        %v4284 = vld [vmem:[#allocation21 + $0x208] sm:$0xff]
        %v4285 = vld [vmem:[#allocation21 + $0x210] sm:$0xff]
        %v4286 = vld [vmem:[#allocation21 + $0x218] sm:$0xff]
        %v4287 = vld [vmem:[#allocation21 + $0x220] sm:$0xff]
        %v4288 = vld [vmem:[#allocation21 + $0x228] sm:$0xff]
        %v4289 = vld [vmem:[#allocation21 + $0x230] sm:$0xff]
        %v4290 = vld [vmem:[#allocation21 + $0x238] sm:$0xff]
        %v4291 = vld [vmem:[#allocation21 + $0x240] sm:$0xff]
        %v4292 = vld [vmem:[#allocation21 + $0x248] sm:$0xff]
        %v4293 = vld [vmem:[#allocation21 + $0x250] sm:$0xff]
        %v4294 = vld [vmem:[#allocation21 + $0x258] sm:$0xff]
        %v4295 = vld [vmem:[#allocation21 + $0x260] sm:$0xff]
        %v4296 = vld [vmem:[#allocation21 + $0x268] sm:$0xff]
        %v4297 = vld [vmem:[#allocation21 + $0x270] sm:$0xff]
        %v4298 = vld [vmem:[#allocation21 + $0x278] sm:$0xff]
        %v4299 = vld [vmem:[#allocation21 + $0x280] sm:$0xff]
        %v4300 = vld [vmem:[#allocation21 + $0x288] sm:$0xff]
        %v4301 = vld [vmem:[#allocation21 + $0x290] sm:$0xff]
        %v4302 = vld [vmem:[#allocation21 + $0x298] sm:$0xff]
        %v4303 = vld [vmem:[#allocation21 + $0x2a0] sm:$0xff]
        %v4304 = vld [vmem:[#allocation21 + $0x2a8] sm:$0xff]
        %v4305 = vld [vmem:[#allocation21 + $0x2b0] sm:$0xff]
        %v4306 = vld [vmem:[#allocation21 + $0x2b8] sm:$0xff]
        %v4307 = vld [vmem:[#allocation21 + $0x2c0] sm:$0xff]
        %v4308 = vld [vmem:[#allocation21 + $0x2c8] sm:$0xff]
        %v4309 = vld [vmem:[#allocation21 + $0x2d0] sm:$0xff]
        %v4310 = vld [vmem:[#allocation21 + $0x2d8] sm:$0xff]
        %v4311 = vld [vmem:[#allocation21 + $0x2e0] sm:$0xff]
        %v4312 = vld [vmem:[#allocation21 + $0x2e8] sm:$0xff]
        %v4313 = vld [vmem:[#allocation21 + $0x2f0] sm:$0xff]
        %v4314 = vld [vmem:[#allocation21 + $0x2f8] sm:$0xff]
        %v4315 = vld [vmem:[#allocation21 + $0x300] sm:$0xff]
        %v4316 = vld [vmem:[#allocation21 + $0x308] sm:$0xff]
        %v4317 = vld [vmem:[#allocation21 + $0x310] sm:$0xff]
        %v4318 = vld [vmem:[#allocation21 + $0x318] sm:$0xff]
        %v4319 = vld [vmem:[#allocation21 + $0x320] sm:$0xff]
        %v4320 = vld [vmem:[#allocation21 + $0x328] sm:$0xff]
        %v4321 = vld [vmem:[#allocation21 + $0x330] sm:$0xff]
        %v4322 = vld [vmem:[#allocation21 + $0x338] sm:$0xff]
        %v4323 = vld [vmem:[#allocation21 + $0x340] sm:$0xff]
        %v4324 = vld [vmem:[#allocation21 + $0x348] sm:$0xff]
        %v4325 = vld [vmem:[#allocation21 + $0x350] sm:$0xff]
        %v4326 = vld [vmem:[#allocation21 + $0x358] sm:$0xff]
        %v4327 = vld [vmem:[#allocation21 + $0x360] sm:$0xff]
        %v4328 = vld [vmem:[#allocation21 + $0x368] sm:$0xff]
        %v4329 = vld [vmem:[#allocation21 + $0x370] sm:$0xff]
        %v4330 = vld [vmem:[#allocation21 + $0x378] sm:$0xff]
        %v4331 = vld [vmem:[#allocation21 + $0x380] sm:$0xff]
        %v4332 = vld [vmem:[#allocation21 + $0x388] sm:$0xff]
        %v4333 = vld [vmem:[#allocation21 + $0x390] sm:$0xff]
        %v4334 = vld [vmem:[#allocation21 + $0x398] sm:$0xff]
        %v4335 = vld [vmem:[#allocation21 + $0x3a0] sm:$0xff]
        %v4336 = vld [vmem:[#allocation21 + $0x3a8] sm:$0xff]
        %v4337 = vld [vmem:[#allocation21 + $0x3b0] sm:$0xff]
        %v4338 = vld [vmem:[#allocation21 + $0x3b8] sm:$0xff]
        %v4339 = vld [vmem:[#allocation21 + $0x3c0] sm:$0xff]
        %v4340 = vld [vmem:[#allocation21 + $0x3c8] sm:$0xff]
        %v4341 = vld [vmem:[#allocation21 + $0x3d0] sm:$0xff]
        %v4342 = vld [vmem:[#allocation21 + $0x3d8] sm:$0xff]
        %v4343 = vld [vmem:[#allocation21 + $0x3e0] sm:$0xff]
        %v4344 = vld [vmem:[#allocation21 + $0x3e8] sm:$0xff]
        %v4345 = vld [vmem:[#allocation21 + $0x3f0] sm:$0xff]
        %v4346 = vld [vmem:[#allocation21 + $0x3f8] sm:$0xff]
        %v4347 = vld [vmem:[#allocation21 + $0x400] sm:$0xff]
        %v4348 = vld [vmem:[#allocation21 + $0x408] sm:$0xff]
        %v4349 = vld [vmem:[#allocation21 + $0x410] sm:$0xff]
        %v4350 = vld [vmem:[#allocation21 + $0x418] sm:$0xff]
        %v4351 = vld [vmem:[#allocation21 + $0x420] sm:$0xff]
        %v4352 = vld [vmem:[#allocation21 + $0x428] sm:$0xff]
        %v4353 = vld [vmem:[#allocation21 + $0x430] sm:$0xff]
        %v4354 = vld [vmem:[#allocation21 + $0x438] sm:$0xff]
        %v4355 = vld [vmem:[#allocation21 + $0x440] sm:$0xff]
        %v4356 = vld [vmem:[#allocation21 + $0x448] sm:$0xff]
        %v4357 = vld [vmem:[#allocation21 + $0x450] sm:$0xff]
        %v4358 = vld [vmem:[#allocation21 + $0x458] sm:$0xff]
        %v4359 = vld [vmem:[#allocation21 + $0x460] sm:$0xff]
        %v4360 = vld [vmem:[#allocation21 + $0x468] sm:$0xff]
        %v4361 = vld [vmem:[#allocation21 + $0x470] sm:$0xff]
        %v4362 = vld [vmem:[#allocation21 + $0x478] sm:$0xff]
        %v4363 = vld [vmem:[#allocation21 + $0x480] sm:$0xff]
        %v4364 = vld [vmem:[#allocation21 + $0x488] sm:$0xff]
        %v4365 = vld [vmem:[#allocation21 + $0x490] sm:$0xff]
        %v4366 = vld [vmem:[#allocation21 + $0x498] sm:$0xff]
        %v4367 = vld [vmem:[#allocation21 + $0x4a0] sm:$0xff]
        %v4368 = vld [vmem:[#allocation21 + $0x4a8] sm:$0xff]
        %v4369 = vld [vmem:[#allocation21 + $0x4b0] sm:$0xff]
        %v4370 = vld [vmem:[#allocation21 + $0x4b8] sm:$0xff]
        %v4371 = vld [vmem:[#allocation21 + $0x4c0] sm:$0xff]
        %v4372 = vld [vmem:[#allocation21 + $0x4c8] sm:$0xff]
        %v4373 = vld [vmem:[#allocation21 + $0x4d0] sm:$0xff]
        %v4374 = vld [vmem:[#allocation21 + $0x4d8] sm:$0xff]
        %v4375 = vld [vmem:[#allocation21 + $0x4e0] sm:$0xff]
        %v4376 = vld [vmem:[#allocation21 + $0x4e8] sm:$0xff]
        %v4377 = vld [vmem:[#allocation21 + $0x4f0] sm:$0xff]
        %v4378 = vld [vmem:[#allocation21 + $0x4f8] sm:$0xff]
        %v4379 = vld [vmem:[#allocation21 + $0x500] sm:$0xff]
        %v4380 = vld [vmem:[#allocation21 + $0x508] sm:$0xff]
        %v4381 = vld [vmem:[#allocation21 + $0x510] sm:$0xff]
        %v4382 = vld [vmem:[#allocation21 + $0x518] sm:$0xff]
        %v4383 = vld [vmem:[#allocation21 + $0x520] sm:$0xff]
        %v4384 = vld [vmem:[#allocation21 + $0x528] sm:$0xff]
        %v4385 = vld [vmem:[#allocation21 + $0x530] sm:$0xff]
        %v4386 = vld [vmem:[#allocation21 + $0x538] sm:$0xff]
        %v4387 = vld [vmem:[#allocation21 + $0x540] sm:$0xff]
        %v4388 = vld [vmem:[#allocation21 + $0x548] sm:$0xff]
        %v4389 = vld [vmem:[#allocation21 + $0x550] sm:$0xff]
        %v4390 = vld [vmem:[#allocation21 + $0x558] sm:$0xff]
        %v4391 = vld [vmem:[#allocation21 + $0x560] sm:$0xff]
        %v4392 = vld [vmem:[#allocation21 + $0x568] sm:$0xff]
        %v4393 = vld [vmem:[#allocation21 + $0x570] sm:$0xff]
        %v4394 = vld [vmem:[#allocation21 + $0x578] sm:$0xff]
        %v4395 = vld [vmem:[#allocation21 + $0x580] sm:$0xff]
        %v4396 = vld [vmem:[#allocation21 + $0x588] sm:$0xff]
        %v4397 = vld [vmem:[#allocation21 + $0x590] sm:$0xff]
        %v4398 = vld [vmem:[#allocation21 + $0x598] sm:$0xff]
        %v4399 = vld [vmem:[#allocation21 + $0x5a0] sm:$0xff]
        %v4400 = vld [vmem:[#allocation21 + $0x5a8] sm:$0xff]
        %v4401 = vld [vmem:[#allocation21 + $0x5b0] sm:$0xff]
        %v4402 = vld [vmem:[#allocation21 + $0x5b8] sm:$0xff]
        %v4403 = vld [vmem:[#allocation21 + $0x5c0] sm:$0xff]
        %v4404 = vld [vmem:[#allocation21 + $0x5c8] sm:$0xff]
        %v4405 = vld [vmem:[#allocation21 + $0x5d0] sm:$0xff]
        %v4406 = vld [vmem:[#allocation21 + $0x5d8] sm:$0xff]
        %v4407 = vld [vmem:[#allocation21 + $0x5e0] sm:$0xff]
        %v4408 = vld [vmem:[#allocation21 + $0x5e8] sm:$0xff]
        %v4409 = vld [vmem:[#allocation21 + $0x5f0] sm:$0xff]
        %v4410 = vld [vmem:[#allocation21 + $0x5f8] sm:$0xff]
        %v4411 = vld [vmem:[#allocation21 + $0x600] sm:$0xff]
        %v4412 = vld [vmem:[#allocation21 + $0x608] sm:$0xff]
        %v4413 = vld [vmem:[#allocation21 + $0x610] sm:$0xff]
        %v4414 = vld [vmem:[#allocation21 + $0x618] sm:$0xff]
        %v4415 = vld [vmem:[#allocation21 + $0x620] sm:$0xff]
        %v4416 = vld [vmem:[#allocation21 + $0x628] sm:$0xff]
        %v4417 = vld [vmem:[#allocation21 + $0x630] sm:$0xff]
        %v4418 = vld [vmem:[#allocation21 + $0x638] sm:$0xff]
        %v4419 = vld [vmem:[#allocation21 + $0x640] sm:$0xff]
        %v4420 = vld [vmem:[#allocation21 + $0x648] sm:$0xff]
        %v4421 = vld [vmem:[#allocation21 + $0x650] sm:$0xff]
        %v4422 = vld [vmem:[#allocation21 + $0x658] sm:$0xff]
        %v4423 = vld [vmem:[#allocation21 + $0x660] sm:$0xff]
        %v4424 = vld [vmem:[#allocation21 + $0x668] sm:$0xff]
        %v4425 = vld [vmem:[#allocation21 + $0x670] sm:$0xff]
        %v4426 = vld [vmem:[#allocation21 + $0x678] sm:$0xff]
        %v4427 = vld [vmem:[#allocation21 + $0x680] sm:$0xff]
        %v4428 = vld [vmem:[#allocation21 + $0x688] sm:$0xff]
        %v4429 = vld [vmem:[#allocation21 + $0x690] sm:$0xff]
        %v4430 = vld [vmem:[#allocation21 + $0x698] sm:$0xff]
        %v4431 = vld [vmem:[#allocation21 + $0x6a0] sm:$0xff]
        %v4432 = vld [vmem:[#allocation21 + $0x6a8] sm:$0xff]
        %v4433 = vld [vmem:[#allocation21 + $0x6b0] sm:$0xff]
        %v4434 = vld [vmem:[#allocation21 + $0x6b8] sm:$0xff]
        %v4435 = vld [vmem:[#allocation21 + $0x6c0] sm:$0xff]
        %v4436 = vld [vmem:[#allocation21 + $0x6c8] sm:$0xff]
        %v4437 = vld [vmem:[#allocation21 + $0x6d0] sm:$0xff]
        %v4438 = vld [vmem:[#allocation21 + $0x6d8] sm:$0xff]
        %v4439 = vld [vmem:[#allocation21 + $0x6e0] sm:$0xff]
        %v4440 = vld [vmem:[#allocation21 + $0x6e8] sm:$0xff]
        %v4441 = vld [vmem:[#allocation21 + $0x6f0] sm:$0xff]
        %v4442 = vld [vmem:[#allocation21 + $0x6f8] sm:$0xff]
        %v4443 = vld [vmem:[#allocation21 + $0x700] sm:$0xff]
        %v4444 = vld [vmem:[#allocation21 + $0x708] sm:$0xff]
        %v4445 = vld [vmem:[#allocation21 + $0x710] sm:$0xff]
        %v4446 = vld [vmem:[#allocation21 + $0x718] sm:$0xff]
        %v4447 = vld [vmem:[#allocation21 + $0x720] sm:$0xff]
        %v4448 = vld [vmem:[#allocation21 + $0x728] sm:$0xff]
        %v4449 = vld [vmem:[#allocation21 + $0x730] sm:$0xff]
        %v4450 = vld [vmem:[#allocation21 + $0x738] sm:$0xff]
        %v4451 = vld [vmem:[#allocation21 + $0x740] sm:$0xff]
        %v4452 = vld [vmem:[#allocation21 + $0x748] sm:$0xff]
        %v4453 = vld [vmem:[#allocation21 + $0x750] sm:$0xff]
        %v4454 = vld [vmem:[#allocation21 + $0x758] sm:$0xff]
        %v4455 = vld [vmem:[#allocation21 + $0x760] sm:$0xff]
        %v4456 = vld [vmem:[#allocation21 + $0x768] sm:$0xff]
        %v4457 = vld [vmem:[#allocation21 + $0x770] sm:$0xff]
        %v4458 = vld [vmem:[#allocation21 + $0x778] sm:$0xff]
        %v4459 = vld [vmem:[#allocation21 + $0x780] sm:$0xff]
        %v4460 = vld [vmem:[#allocation21 + $0x788] sm:$0xff]
        %v4461 = vld [vmem:[#allocation21 + $0x790] sm:$0xff]
        %v4462 = vld [vmem:[#allocation21 + $0x798] sm:$0xff]
        %v4463 = vld [vmem:[#allocation21 + $0x7a0] sm:$0xff]
        %v4464 = vld [vmem:[#allocation21 + $0x7a8] sm:$0xff]
        %v4465 = vld [vmem:[#allocation21 + $0x7b0] sm:$0xff]
        %v4466 = vld [vmem:[#allocation21 + $0x7b8] sm:$0xff]
        %v4467 = vld [vmem:[#allocation21 + $0x7c0] sm:$0xff]
        %v4468 = vld [vmem:[#allocation21 + $0x7c8] sm:$0xff]
        %v4469 = vld [vmem:[#allocation21 + $0x7d0] sm:$0xff]
        %v4470 = vld [vmem:[#allocation21 + $0x7d8] sm:$0xff]
        %v4471 = vld [vmem:[#allocation21 + $0x7e0] sm:$0xff]
        %v4472 = vld [vmem:[#allocation21 + $0x7e8] sm:$0xff]
        %v4473 = vld [vmem:[#allocation21 + $0x7f0] sm:$0xff]
        %v4474 = vld [vmem:[#allocation21 + $0x7f8] sm:$0xff]
        %v4475 = vld [vmem:[#allocation21 + $0x800] sm:$0xff]
        %v4476 = vld [vmem:[#allocation21 + $0x808] sm:$0xff]
        %v4477 = vld [vmem:[#allocation21 + $0x810] sm:$0xff]
        %v4478 = vld [vmem:[#allocation21 + $0x818] sm:$0xff]
        %v4479 = vld [vmem:[#allocation21 + $0x820] sm:$0xff]
        %v4480 = vld [vmem:[#allocation21 + $0x828] sm:$0xff]
        %v4481 = vld [vmem:[#allocation21 + $0x830] sm:$0xff]
        %v4482 = vld [vmem:[#allocation21 + $0x838] sm:$0xff]
        %v4483 = vld [vmem:[#allocation21 + $0x840] sm:$0xff]
        %v4484 = vld [vmem:[#allocation21 + $0x848] sm:$0xff]
        %v4485 = vld [vmem:[#allocation21 + $0x850] sm:$0xff]
        %v4486 = vld [vmem:[#allocation21 + $0x858] sm:$0xff]
        %v4487 = vld [vmem:[#allocation21 + $0x860] sm:$0xff]
        %v4488 = vld [vmem:[#allocation21 + $0x868] sm:$0xff]
        %v4489 = vld [vmem:[#allocation21 + $0x870] sm:$0xff]
        %v4490 = vld [vmem:[#allocation21 + $0x878] sm:$0xff]
        %v4491 = vld [vmem:[#allocation21 + $0x880] sm:$0xff]
        %v4492 = vld [vmem:[#allocation21 + $0x888] sm:$0xff]
        %v4493 = vld [vmem:[#allocation21 + $0x890] sm:$0xff]
        %v4494 = vld [vmem:[#allocation21 + $0x898] sm:$0xff]
        %v4495 = vld [vmem:[#allocation21 + $0x8a0] sm:$0xff]
        %v4496 = vld [vmem:[#allocation21 + $0x8a8] sm:$0xff]
        %v4497 = vld [vmem:[#allocation21 + $0x8b0] sm:$0xff]
        %v4498 = vld [vmem:[#allocation21 + $0x8b8] sm:$0xff]
        %v4499 = vld [vmem:[#allocation21 + $0x8c0] sm:$0xff]
        %v4500 = vld [vmem:[#allocation21 + $0x8c8] sm:$0xff]
        %v4501 = vld [vmem:[#allocation21 + $0x8d0] sm:$0xff]
        %v4502 = vld [vmem:[#allocation21 + $0x8d8] sm:$0xff]
        %v4503 = vld [vmem:[#allocation21 + $0x8e0] sm:$0xff]
        %v4504 = vld [vmem:[#allocation21 + $0x8e8] sm:$0xff]
        %v4505 = vld [vmem:[#allocation21 + $0x8f0] sm:$0xff]
        %v4506 = vld [vmem:[#allocation21 + $0x8f8] sm:$0xff]
        %v4507 = vld [vmem:[#allocation21 + $0x900] sm:$0xff]
        %v4508 = vld [vmem:[#allocation21 + $0x908] sm:$0xff]
        %v4509 = vld [vmem:[#allocation21 + $0x910] sm:$0xff]
        %v4510 = vld [vmem:[#allocation21 + $0x918] sm:$0xff]
        %v4511 = vld [vmem:[#allocation21 + $0x920] sm:$0xff]
        %v4512 = vld [vmem:[#allocation21 + $0x928] sm:$0xff]
        %v4513 = vld [vmem:[#allocation21 + $0x930] sm:$0xff]
        %v4514 = vld [vmem:[#allocation21 + $0x938] sm:$0xff]
        %v4515 = vld [vmem:[#allocation21 + $0x940] sm:$0xff]
        %v4516 = vld [vmem:[#allocation21 + $0x948] sm:$0xff]
        %v4517 = vld [vmem:[#allocation21 + $0x950] sm:$0xff]
        %v4518 = vld [vmem:[#allocation21 + $0x958] sm:$0xff]
        %v4519 = vld [vmem:[#allocation21 + $0x960] sm:$0xff]
        %v4520 = vld [vmem:[#allocation21 + $0x968] sm:$0xff]
        %v4521 = vld [vmem:[#allocation21 + $0x970] sm:$0xff]
        %v4522 = vld [vmem:[#allocation21 + $0x978] sm:$0xff]
        %v4523 = vld [vmem:[#allocation21 + $0x980] sm:$0xff]
        %v4524 = vld [vmem:[#allocation21 + $0x988] sm:$0xff]
        %v4525 = vld [vmem:[#allocation21 + $0x990] sm:$0xff]
        %v4526 = vld [vmem:[#allocation21 + $0x998] sm:$0xff]
        %v4527 = vld [vmem:[#allocation21 + $0x9a0] sm:$0xff]
        %v4528 = vld [vmem:[#allocation21 + $0x9a8] sm:$0xff]
        %v4529 = vld [vmem:[#allocation21 + $0x9b0] sm:$0xff]
        %v4530 = vld [vmem:[#allocation21 + $0x9b8] sm:$0xff]
        %v4531 = vld [vmem:[#allocation21 + $0x9c0] sm:$0xff]
        %v4532 = vld [vmem:[#allocation21 + $0x9c8] sm:$0xff]
        %v4533 = vld [vmem:[#allocation21 + $0x9d0] sm:$0xff]
        %v4534 = vld [vmem:[#allocation21 + $0x9d8] sm:$0xff]
        %v4535 = vld [vmem:[#allocation21 + $0x9e0] sm:$0xff]
        %v4536 = vld [vmem:[#allocation21 + $0x9e8] sm:$0xff]
        %v4537 = vld [vmem:[#allocation21 + $0x9f0] sm:$0xff]
        %v4538 = vld [vmem:[#allocation21 + $0x9f8] sm:$0xff]
        %v4539 = vld [vmem:[#allocation21 + $0xa00] sm:$0xff]
        %v4540 = vld [vmem:[#allocation21 + $0xa08] sm:$0xff]
        %v4541 = vld [vmem:[#allocation21 + $0xa10] sm:$0xff]
        %v4542 = vld [vmem:[#allocation21 + $0xa18] sm:$0xff]
        %v4543 = vld [vmem:[#allocation21 + $0xa20] sm:$0xff]
        %v4544 = vld [vmem:[#allocation21 + $0xa28] sm:$0xff]
        %v4545 = vld [vmem:[#allocation21 + $0xa30] sm:$0xff]
        %v4546 = vld [vmem:[#allocation21 + $0xa38] sm:$0xff]
        %v4547 = vld [vmem:[#allocation21 + $0xa40] sm:$0xff]
        %v4548 = vld [vmem:[#allocation21 + $0xa48] sm:$0xff]
        %v4549 = vld [vmem:[#allocation21 + $0xa50] sm:$0xff]
        %v4550 = vld [vmem:[#allocation21 + $0xa58] sm:$0xff]
        %v4551 = vld [vmem:[#allocation21 + $0xa60] sm:$0xff]
        %v4552 = vld [vmem:[#allocation21 + $0xa68] sm:$0xff]
        %v4553 = vld [vmem:[#allocation21 + $0xa70] sm:$0xff]
        %v4554 = vld [vmem:[#allocation21 + $0xa78] sm:$0xff]
        %v4555 = vld [vmem:[#allocation21 + $0xa80] sm:$0xff]
        %v4556 = vld [vmem:[#allocation21 + $0xa88] sm:$0xff]
        %v4557 = vld [vmem:[#allocation21 + $0xa90] sm:$0xff]
        %v4558 = vld [vmem:[#allocation21 + $0xa98] sm:$0xff]
        %v4559 = vld [vmem:[#allocation21 + $0xaa0] sm:$0xff]
        %v4560 = vld [vmem:[#allocation21 + $0xaa8] sm:$0xff]
        %v4561 = vld [vmem:[#allocation21 + $0xab0] sm:$0xff]
        %v4562 = vld [vmem:[#allocation21 + $0xab8] sm:$0xff]
        %v4563 = vld [vmem:[#allocation21 + $0xac0] sm:$0xff]
        %v4564 = vld [vmem:[#allocation21 + $0xac8] sm:$0xff]
        %v4565 = vld [vmem:[#allocation21 + $0xad0] sm:$0xff]
        %v4566 = vld [vmem:[#allocation21 + $0xad8] sm:$0xff]
        %v4567 = vld [vmem:[#allocation21 + $0xae0] sm:$0xff]
        %v4568 = vld [vmem:[#allocation21 + $0xae8] sm:$0xff]
        %v4569 = vld [vmem:[#allocation21 + $0xaf0] sm:$0xff]
        %v4570 = vld [vmem:[#allocation21 + $0xaf8] sm:$0xff]
        %v4571 = vld [vmem:[#allocation21 + $0xb00] sm:$0xff]
        %v4572 = vld [vmem:[#allocation21 + $0xb08] sm:$0xff]
        %v4573 = vld [vmem:[#allocation21 + $0xb10] sm:$0xff]
        %v4574 = vld [vmem:[#allocation21 + $0xb18] sm:$0xff]
        %v4575 = vld [vmem:[#allocation21 + $0xb20] sm:$0xff]
        %v4576 = vld [vmem:[#allocation21 + $0xb28] sm:$0xff]
        %v4577 = vld [vmem:[#allocation21 + $0xb30] sm:$0xff]
        %v4578 = vld [vmem:[#allocation21 + $0xb38] sm:$0xff]
        %v4579 = vld [vmem:[#allocation21 + $0xb40] sm:$0xff]
        %v4580 = vld [vmem:[#allocation21 + $0xb48] sm:$0xff]
        %v4581 = vld [vmem:[#allocation21 + $0xb50] sm:$0xff]
        %v4582 = vld [vmem:[#allocation21 + $0xb58] sm:$0xff]
        %v4583 = vld [vmem:[#allocation21 + $0xb60] sm:$0xff]
        %v4584 = vld [vmem:[#allocation21 + $0xb68] sm:$0xff]
        %v4585 = vld [vmem:[#allocation21 + $0xb70] sm:$0xff]
        %v4586 = vld [vmem:[#allocation21 + $0xb78] sm:$0xff]
        %v4587 = vld [vmem:[#allocation21 + $0xb80] sm:$0xff]
        %v4588 = vld [vmem:[#allocation21 + $0xb88] sm:$0xff]
        %v4589 = vld [vmem:[#allocation21 + $0xb90] sm:$0xff]
        %v4590 = vld [vmem:[#allocation21 + $0xb98] sm:$0xff]
        %v4591 = vld [vmem:[#allocation21 + $0xba0] sm:$0xff]
        %v4592 = vld [vmem:[#allocation21 + $0xba8] sm:$0xff]
        %v4593 = vld [vmem:[#allocation21 + $0xbb0] sm:$0xff]
        %v4594 = vld [vmem:[#allocation21 + $0xbb8] sm:$0xff]
        %v4595 = vld [vmem:[#allocation21 + $0xbc0] sm:$0xff]
        %v4596 = vld [vmem:[#allocation21 + $0xbc8] sm:$0xff]
        %v4597 = vld [vmem:[#allocation21 + $0xbd0] sm:$0xff]
        %v4598 = vld [vmem:[#allocation21 + $0xbd8] sm:$0xff]
        %v4599 = vld [vmem:[#allocation21 + $0xbe0] sm:$0xff]
        %v4600 = vld [vmem:[#allocation21 + $0xbe8] sm:$0xff]
        %v4601 = vld [vmem:[#allocation21 + $0xbf0] sm:$0xff]
        %v4602 = vld [vmem:[#allocation21 + $0xbf8] sm:$0xff]
        %v4603 = vld [vmem:[#allocation21 + $0xc00] sm:$0xff]
        %v4604 = vld [vmem:[#allocation21 + $0xc08] sm:$0xff]
        %v4605 = vld [vmem:[#allocation21 + $0xc10] sm:$0xff]
        %v4606 = vld [vmem:[#allocation21 + $0xc18] sm:$0xff]
        %v4607 = vld [vmem:[#allocation21 + $0xc20] sm:$0xff]
        %v4608 = vld [vmem:[#allocation21 + $0xc28] sm:$0xff]
        %v4609 = vld [vmem:[#allocation21 + $0xc30] sm:$0xff]
        %v4610 = vld [vmem:[#allocation21 + $0xc38] sm:$0xff]
        %v4611 = vld [vmem:[#allocation21 + $0xc40] sm:$0xff]
        %v4612 = vld [vmem:[#allocation21 + $0xc48] sm:$0xff]
        %v4613 = vld [vmem:[#allocation21 + $0xc50] sm:$0xff]
        %v4614 = vld [vmem:[#allocation21 + $0xc58] sm:$0xff]
        %v4615 = vld [vmem:[#allocation21 + $0xc60] sm:$0xff]
        %v4616 = vld [vmem:[#allocation21 + $0xc68] sm:$0xff]
        %v4617 = vld [vmem:[#allocation21 + $0xc70] sm:$0xff]
        %v4618 = vld [vmem:[#allocation21 + $0xc78] sm:$0xff]
        %v4619 = vld [vmem:[#allocation21 + $0xc80] sm:$0xff]
        %v4620 = vld [vmem:[#allocation21 + $0xc88] sm:$0xff]
        %v4621 = vld [vmem:[#allocation21 + $0xc90] sm:$0xff]
        %v4622 = vld [vmem:[#allocation21 + $0xc98] sm:$0xff]
        %v4623 = vld [vmem:[#allocation21 + $0xca0] sm:$0xff]
        %v4624 = vld [vmem:[#allocation21 + $0xca8] sm:$0xff]
        %v4625 = vld [vmem:[#allocation21 + $0xcb0] sm:$0xff]
        %v4626 = vld [vmem:[#allocation21 + $0xcb8] sm:$0xff]
        %v4627 = vld [vmem:[#allocation21 + $0xcc0] sm:$0xff]
        %v4628 = vld [vmem:[#allocation21 + $0xcc8] sm:$0xff]
        %v4629 = vld [vmem:[#allocation21 + $0xcd0] sm:$0xff]
        %v4630 = vld [vmem:[#allocation21 + $0xcd8] sm:$0xff]
        %v4631 = vld [vmem:[#allocation21 + $0xce0] sm:$0xff]
        %v4632 = vld [vmem:[#allocation21 + $0xce8] sm:$0xff]
        %v4633 = vld [vmem:[#allocation21 + $0xcf0] sm:$0xff]
        %v4634 = vld [vmem:[#allocation21 + $0xcf8] sm:$0xff]
        %v4635 = vld [vmem:[#allocation21 + $0xd00] sm:$0xff]
        %v4636 = vld [vmem:[#allocation21 + $0xd08] sm:$0xff]
        %v4637 = vld [vmem:[#allocation21 + $0xd10] sm:$0xff]
        %v4638 = vld [vmem:[#allocation21 + $0xd18] sm:$0xff]
        %v4639 = vld [vmem:[#allocation21 + $0xd20] sm:$0xff]
        %v4640 = vld [vmem:[#allocation21 + $0xd28] sm:$0xff]
        %v4641 = vld [vmem:[#allocation21 + $0xd30] sm:$0xff]
        %v4642 = vld [vmem:[#allocation21 + $0xd38] sm:$0xff]
        %v4643 = vld [vmem:[#allocation21 + $0xd40] sm:$0xff]
        %v4644 = vld [vmem:[#allocation21 + $0xd48] sm:$0xff]
        %v4645 = vld [vmem:[#allocation21 + $0xd50] sm:$0xff]
        %v4646 = vld [vmem:[#allocation21 + $0xd58] sm:$0xff]
        %v4647 = vld [vmem:[#allocation21 + $0xd60] sm:$0xff]
        %v4648 = vld [vmem:[#allocation21 + $0xd68] sm:$0xff]
        %v4649 = vld [vmem:[#allocation21 + $0xd70] sm:$0xff]
        %v4650 = vld [vmem:[#allocation21 + $0xd78] sm:$0xff]
        %v4651 = vld [vmem:[#allocation21 + $0xd80] sm:$0xff]
        %v4652 = vld [vmem:[#allocation21 + $0xd88] sm:$0xff]
        %v4653 = vld [vmem:[#allocation21 + $0xd90] sm:$0xff]
        %v4654 = vld [vmem:[#allocation21 + $0xd98] sm:$0xff]
        %v4655 = vld [vmem:[#allocation21 + $0xda0] sm:$0xff]
        %v4656 = vld [vmem:[#allocation21 + $0xda8] sm:$0xff]
        %v4657 = vld [vmem:[#allocation21 + $0xdb0] sm:$0xff]
        %v4658 = vld [vmem:[#allocation21 + $0xdb8] sm:$0xff]
        %v4659 = vld [vmem:[#allocation21 + $0xdc0] sm:$0xff]
        %v4660 = vld [vmem:[#allocation21 + $0xdc8] sm:$0xff]
        %v4661 = vld [vmem:[#allocation21 + $0xdd0] sm:$0xff]
        %v4662 = vld [vmem:[#allocation21 + $0xdd8] sm:$0xff]
        %v4663 = vld [vmem:[#allocation21 + $0xde0] sm:$0xff]
        %v4664 = vld [vmem:[#allocation21 + $0xde8] sm:$0xff]
        %v4665 = vld [vmem:[#allocation21 + $0xdf0] sm:$0xff]
        %v4666 = vld [vmem:[#allocation21 + $0xdf8] sm:$0xff]
        %v4667 = vld [vmem:[#allocation21 + $0xe00] sm:$0xff]
        %v4668 = vld [vmem:[#allocation21 + $0xe08] sm:$0xff]
        %v4669 = vld [vmem:[#allocation21 + $0xe10] sm:$0xff]
        %v4670 = vld [vmem:[#allocation21 + $0xe18] sm:$0xff]
        %v4671 = vld [vmem:[#allocation21 + $0xe20] sm:$0xff]
        %v4672 = vld [vmem:[#allocation21 + $0xe28] sm:$0xff]
        %v4673 = vld [vmem:[#allocation21 + $0xe30] sm:$0xff]
        %v4674 = vld [vmem:[#allocation21 + $0xe38] sm:$0xff]
        %v4675 = vld [vmem:[#allocation21 + $0xe40] sm:$0xff]
        %v4676 = vld [vmem:[#allocation21 + $0xe48] sm:$0xff]
        %v4677 = vld [vmem:[#allocation21 + $0xe50] sm:$0xff]
        %v4678 = vld [vmem:[#allocation21 + $0xe58] sm:$0xff]
        %v4679 = vld [vmem:[#allocation21 + $0xe60] sm:$0xff]
        %v4680 = vld [vmem:[#allocation21 + $0xe68] sm:$0xff]
        %v4681 = vld [vmem:[#allocation21 + $0xe70] sm:$0xff]
        %v4682 = vld [vmem:[#allocation21 + $0xe78] sm:$0xff]
        %v4683 = vld [vmem:[#allocation21 + $0xe80] sm:$0xff]
        %v4684 = vld [vmem:[#allocation21 + $0xe88] sm:$0xff]
        %v4685 = vld [vmem:[#allocation21 + $0xe90] sm:$0xff]
        %v4686 = vld [vmem:[#allocation21 + $0xe98] sm:$0xff]
        %v4687 = vld [vmem:[#allocation21 + $0xea0] sm:$0xff]
        %v4688 = vld [vmem:[#allocation21 + $0xea8] sm:$0xff]
        %v4689 = vld [vmem:[#allocation21 + $0xeb0] sm:$0xff]
        %v4690 = vld [vmem:[#allocation21 + $0xeb8] sm:$0xff]
        %v4691 = vld [vmem:[#allocation21 + $0xec0] sm:$0xff]
        %v4692 = vld [vmem:[#allocation21 + $0xec8] sm:$0xff]
        %v4693 = vld [vmem:[#allocation21 + $0xed0] sm:$0xff]
        %v4694 = vld [vmem:[#allocation21 + $0xed8] sm:$0xff]
        %v4695 = vld [vmem:[#allocation21 + $0xee0] sm:$0xff]
        %v4696 = vld [vmem:[#allocation21 + $0xee8] sm:$0xff]
        %v4697 = vld [vmem:[#allocation21 + $0xef0] sm:$0xff]
        %v4698 = vld [vmem:[#allocation21 + $0xef8] sm:$0xff]
        %v4699 = vld [vmem:[#allocation21 + $0xf00] sm:$0xff]
        %v4700 = vld [vmem:[#allocation21 + $0xf08] sm:$0xff]
        %v4701 = vld [vmem:[#allocation21 + $0xf10] sm:$0xff]
        %v4702 = vld [vmem:[#allocation21 + $0xf18] sm:$0xff]
        %v4703 = vld [vmem:[#allocation21 + $0xf20] sm:$0xff]
        %v4704 = vld [vmem:[#allocation21 + $0xf28] sm:$0xff]
        %v4705 = vld [vmem:[#allocation21 + $0xf30] sm:$0xff]
        %v4706 = vld [vmem:[#allocation21 + $0xf38] sm:$0xff]
        %v4707 = vld [vmem:[#allocation21 + $0xf40] sm:$0xff]
        %v4708 = vld [vmem:[#allocation21 + $0xf48] sm:$0xff]
        %v4709 = vld [vmem:[#allocation21 + $0xf50] sm:$0xff]
        %v4710 = vld [vmem:[#allocation21 + $0xf58] sm:$0xff]
        %v4711 = vld [vmem:[#allocation21 + $0xf60] sm:$0xff]
        %v4712 = vld [vmem:[#allocation21 + $0xf68] sm:$0xff]
        %v4713 = vld [vmem:[#allocation21 + $0xf70] sm:$0xff]
        %v4714 = vld [vmem:[#allocation21 + $0xf78] sm:$0xff]
        %v4715 = vld [vmem:[#allocation21 + $0xf80] sm:$0xff]
        %v4716 = vld [vmem:[#allocation21 + $0xf88] sm:$0xff]
        %v4717 = vld [vmem:[#allocation21 + $0xf90] sm:$0xff]
        %v4718 = vld [vmem:[#allocation21 + $0xf98] sm:$0xff]
        %v4719 = vld [vmem:[#allocation21 + $0xfa0] sm:$0xff]
        %v4720 = vld [vmem:[#allocation21 + $0xfa8] sm:$0xff]
        %v4721 = vld [vmem:[#allocation21 + $0xfb0] sm:$0xff]
        %v4722 = vld [vmem:[#allocation21 + $0xfb8] sm:$0xff]
        %v4723 = vld [vmem:[#allocation21 + $0xfc0] sm:$0xff]
        %v4724 = vld [vmem:[#allocation21 + $0xfc8] sm:$0xff]
        %v4725 = vld [vmem:[#allocation21 + $0xfd0] sm:$0xff]
        %v4726 = vld [vmem:[#allocation21 + $0xfd8] sm:$0xff]
        %v4727 = vld [vmem:[#allocation21 + $0xfe0] sm:$0xff]
        %v4728 = vld [vmem:[#allocation21 + $0xfe8] sm:$0xff]
        %v4729 = vld [vmem:[#allocation21 + $0xff0] sm:$0xff]
        %v4730 = vld [vmem:[#allocation21 + $0xff8] sm:$0xff]
        %v4731 = vld [vmem:[#allocation22] sm:$0xff]
        %v4732 = vld [vmem:[#allocation22 + $0x8] sm:$0xff]
        %v4733 = vld [vmem:[#allocation22 + $0x10] sm:$0xff]
        %v4734 = vld [vmem:[#allocation22 + $0x18] sm:$0xff]
        %v4735 = vld [vmem:[#allocation22 + $0x20] sm:$0xff]
        %v4736 = vld [vmem:[#allocation22 + $0x28] sm:$0xff]
        %v4737 = vld [vmem:[#allocation22 + $0x30] sm:$0xff]
        %v4738 = vld [vmem:[#allocation22 + $0x38] sm:$0xff]
        %v4739 = vld [vmem:[#allocation22 + $0x40] sm:$0xff]
        %v4740 = vld [vmem:[#allocation22 + $0x48] sm:$0xff]
        %v4741 = vld [vmem:[#allocation22 + $0x50] sm:$0xff]
        %v4742 = vld [vmem:[#allocation22 + $0x58] sm:$0xff]
        %v4743 = vld [vmem:[#allocation22 + $0x60] sm:$0xff]
        %v4744 = vld [vmem:[#allocation22 + $0x68] sm:$0xff]
        %v4745 = vld [vmem:[#allocation22 + $0x70] sm:$0xff]
        %v4746 = vld [vmem:[#allocation22 + $0x78] sm:$0xff]
        %v5259 = vunpack.c.l.b16 %v4219
        %v5260 = vunpack.c.h.b16 %v4219
        %v5261 = vunpack.c.l.b16 %v4220
        %v5262 = vunpack.c.h.b16 %v4220
        %v5263 = vunpack.c.l.b16 %v4221
        %v5264 = vunpack.c.h.b16 %v4221
        %v5265 = vunpack.c.l.b16 %v4222
        %v5266 = vunpack.c.h.b16 %v4222
        %v5267 = vunpack.c.l.b16 %v4223
        %v5268 = vunpack.c.h.b16 %v4223
        %v5269 = vunpack.c.l.b16 %v4224
        %v5270 = vunpack.c.h.b16 %v4224
        %v5271 = vunpack.c.l.b16 %v4225
        %v5272 = vunpack.c.h.b16 %v4225
        %v5273 = vunpack.c.l.b16 %v4226
        %v5274 = vunpack.c.h.b16 %v4226
        %v5275 = vunpack.c.l.b16 %v4227
        %v5276 = vunpack.c.h.b16 %v4227
        %v5277 = vunpack.c.l.b16 %v4228
        %v5278 = vunpack.c.h.b16 %v4228
        %v5279 = vunpack.c.l.b16 %v4229
        %v5280 = vunpack.c.h.b16 %v4229
        %v5281 = vunpack.c.l.b16 %v4230
        %v5282 = vunpack.c.h.b16 %v4230
        %v5283 = vunpack.c.l.b16 %v4231
        %v5284 = vunpack.c.h.b16 %v4231
        %v5285 = vunpack.c.l.b16 %v4232
        %v5286 = vunpack.c.h.b16 %v4232
        %v5287 = vunpack.c.l.b16 %v4233
        %v5288 = vunpack.c.h.b16 %v4233
        %v5289 = vunpack.c.l.b16 %v4234
        %v5290 = vunpack.c.h.b16 %v4234
        %v5291 = vunpack.c.l.b16 %v4235
        %v5292 = vunpack.c.h.b16 %v4235
        %v5293 = vunpack.c.l.b16 %v4236
        %v5294 = vunpack.c.h.b16 %v4236
        %v5295 = vunpack.c.l.b16 %v4237
        %v5296 = vunpack.c.h.b16 %v4237
        %v5297 = vunpack.c.l.b16 %v4238
        %v5298 = vunpack.c.h.b16 %v4238
        %v5299 = vunpack.c.l.b16 %v4239
        %v5300 = vunpack.c.h.b16 %v4239
        %v5301 = vunpack.c.l.b16 %v4240
        %v5302 = vunpack.c.h.b16 %v4240
        %v5303 = vunpack.c.l.b16 %v4241
        %v5304 = vunpack.c.h.b16 %v4241
        %v5305 = vunpack.c.l.b16 %v4242
        %v5306 = vunpack.c.h.b16 %v4242
        %v5307 = vunpack.c.l.b16 %v4243
        %v5308 = vunpack.c.h.b16 %v4243
        %v5309 = vunpack.c.l.b16 %v4244
        %v5310 = vunpack.c.h.b16 %v4244
        %v5311 = vunpack.c.l.b16 %v4245
        %v5312 = vunpack.c.h.b16 %v4245
        %v5313 = vunpack.c.l.b16 %v4246
        %v5314 = vunpack.c.h.b16 %v4246
        %v5315 = vunpack.c.l.b16 %v4247
        %v5316 = vunpack.c.h.b16 %v4247
        %v5317 = vunpack.c.l.b16 %v4248
        %v5318 = vunpack.c.h.b16 %v4248
        %v5319 = vunpack.c.l.b16 %v4249
        %v5320 = vunpack.c.h.b16 %v4249
        %v5321 = vunpack.c.l.b16 %v4250
        %v5322 = vunpack.c.h.b16 %v4250
        %v5323 = vunpack.c.l.b16 %v4251
        %v5324 = vunpack.c.h.b16 %v4251
        %v5325 = vunpack.c.l.b16 %v4252
        %v5326 = vunpack.c.h.b16 %v4252
        %v5327 = vunpack.c.l.b16 %v4253
        %v5328 = vunpack.c.h.b16 %v4253
        %v5329 = vunpack.c.l.b16 %v4254
        %v5330 = vunpack.c.h.b16 %v4254
        %v5331 = vunpack.c.l.b16 %v4255
        %v5332 = vunpack.c.h.b16 %v4255
        %v5333 = vunpack.c.l.b16 %v4256
        %v5334 = vunpack.c.h.b16 %v4256
        %v5335 = vunpack.c.l.b16 %v4257
        %v5336 = vunpack.c.h.b16 %v4257
        %v5337 = vunpack.c.l.b16 %v4258
        %v5338 = vunpack.c.h.b16 %v4258
        %v5339 = vunpack.c.l.b16 %v4259
        %v5340 = vunpack.c.h.b16 %v4259
        %v5341 = vunpack.c.l.b16 %v4260
        %v5342 = vunpack.c.h.b16 %v4260
        %v5343 = vunpack.c.l.b16 %v4261
        %v5344 = vunpack.c.h.b16 %v4261
        %v5345 = vunpack.c.l.b16 %v4262
        %v5346 = vunpack.c.h.b16 %v4262
        %v5347 = vunpack.c.l.b16 %v4263
        %v5348 = vunpack.c.h.b16 %v4263
        %v5349 = vunpack.c.l.b16 %v4264
        %v5350 = vunpack.c.h.b16 %v4264
        %v5351 = vunpack.c.l.b16 %v4265
        %v5352 = vunpack.c.h.b16 %v4265
        %v5353 = vunpack.c.l.b16 %v4266
        %v5354 = vunpack.c.h.b16 %v4266
        %v5355 = vunpack.c.l.b16 %v4267
        %v5356 = vunpack.c.h.b16 %v4267
        %v5357 = vunpack.c.l.b16 %v4268
        %v5358 = vunpack.c.h.b16 %v4268
        %v5359 = vunpack.c.l.b16 %v4269
        %v5360 = vunpack.c.h.b16 %v4269
        %v5361 = vunpack.c.l.b16 %v4270
        %v5362 = vunpack.c.h.b16 %v4270
        %v5363 = vunpack.c.l.b16 %v4271
        %v5364 = vunpack.c.h.b16 %v4271
        %v5365 = vunpack.c.l.b16 %v4272
        %v5366 = vunpack.c.h.b16 %v4272
        %v5367 = vunpack.c.l.b16 %v4273
        %v5368 = vunpack.c.h.b16 %v4273
        %v5369 = vunpack.c.l.b16 %v4274
        %v5370 = vunpack.c.h.b16 %v4274
        %v5371 = vunpack.c.l.b16 %v4275
        %v5372 = vunpack.c.h.b16 %v4275
        %v5373 = vunpack.c.l.b16 %v4276
        %v5374 = vunpack.c.h.b16 %v4276
        %v5375 = vunpack.c.l.b16 %v4277
        %v5376 = vunpack.c.h.b16 %v4277
        %v5377 = vunpack.c.l.b16 %v4278
        %v5378 = vunpack.c.h.b16 %v4278
        %v5379 = vunpack.c.l.b16 %v4279
        %v5380 = vunpack.c.h.b16 %v4279
        %v5381 = vunpack.c.l.b16 %v4280
        %v5382 = vunpack.c.h.b16 %v4280
        %v5383 = vunpack.c.l.b16 %v4281
        %v5384 = vunpack.c.h.b16 %v4281
        %v5385 = vunpack.c.l.b16 %v4282
        %v5386 = vunpack.c.h.b16 %v4282
        %v5387 = vunpack.c.l.b16 %v4283
        %v5388 = vunpack.c.h.b16 %v4283
        %v5389 = vunpack.c.l.b16 %v4284
        %v5390 = vunpack.c.h.b16 %v4284
        %v5391 = vunpack.c.l.b16 %v4285
        %v5392 = vunpack.c.h.b16 %v4285
        %v5393 = vunpack.c.l.b16 %v4286
        %v5394 = vunpack.c.h.b16 %v4286
        %v5395 = vunpack.c.l.b16 %v4287
        %v5396 = vunpack.c.h.b16 %v4287
        %v5397 = vunpack.c.l.b16 %v4288
        %v5398 = vunpack.c.h.b16 %v4288
        %v5399 = vunpack.c.l.b16 %v4289
        %v5400 = vunpack.c.h.b16 %v4289
        %v5401 = vunpack.c.l.b16 %v4290
        %v5402 = vunpack.c.h.b16 %v4290
        %v5403 = vunpack.c.l.b16 %v4291
        %v5404 = vunpack.c.h.b16 %v4291
        %v5405 = vunpack.c.l.b16 %v4292
        %v5406 = vunpack.c.h.b16 %v4292
        %v5407 = vunpack.c.l.b16 %v4293
        %v5408 = vunpack.c.h.b16 %v4293
        %v5409 = vunpack.c.l.b16 %v4294
        %v5410 = vunpack.c.h.b16 %v4294
        %v5411 = vunpack.c.l.b16 %v4295
        %v5412 = vunpack.c.h.b16 %v4295
        %v5413 = vunpack.c.l.b16 %v4296
        %v5414 = vunpack.c.h.b16 %v4296
        %v5415 = vunpack.c.l.b16 %v4297
        %v5416 = vunpack.c.h.b16 %v4297
        %v5417 = vunpack.c.l.b16 %v4298
        %v5418 = vunpack.c.h.b16 %v4298
        %v5419 = vunpack.c.l.b16 %v4299
        %v5420 = vunpack.c.h.b16 %v4299
        %v5421 = vunpack.c.l.b16 %v4300
        %v5422 = vunpack.c.h.b16 %v4300
        %v5423 = vunpack.c.l.b16 %v4301
        %v5424 = vunpack.c.h.b16 %v4301
        %v5425 = vunpack.c.l.b16 %v4302
        %v5426 = vunpack.c.h.b16 %v4302
        %v5427 = vunpack.c.l.b16 %v4303
        %v5428 = vunpack.c.h.b16 %v4303
        %v5429 = vunpack.c.l.b16 %v4304
        %v5430 = vunpack.c.h.b16 %v4304
        %v5431 = vunpack.c.l.b16 %v4305
        %v5432 = vunpack.c.h.b16 %v4305
        %v5433 = vunpack.c.l.b16 %v4306
        %v5434 = vunpack.c.h.b16 %v4306
        %v5435 = vunpack.c.l.b16 %v4307
        %v5436 = vunpack.c.h.b16 %v4307
        %v5437 = vunpack.c.l.b16 %v4308
        %v5438 = vunpack.c.h.b16 %v4308
        %v5439 = vunpack.c.l.b16 %v4309
        %v5440 = vunpack.c.h.b16 %v4309
        %v5441 = vunpack.c.l.b16 %v4310
        %v5442 = vunpack.c.h.b16 %v4310
        %v5443 = vunpack.c.l.b16 %v4311
        %v5444 = vunpack.c.h.b16 %v4311
        %v5445 = vunpack.c.l.b16 %v4312
        %v5446 = vunpack.c.h.b16 %v4312
        %v5447 = vunpack.c.l.b16 %v4313
        %v5448 = vunpack.c.h.b16 %v4313
        %v5449 = vunpack.c.l.b16 %v4314
        %v5450 = vunpack.c.h.b16 %v4314
        %v5451 = vunpack.c.l.b16 %v4315
        %v5452 = vunpack.c.h.b16 %v4315
        %v5453 = vunpack.c.l.b16 %v4316
        %v5454 = vunpack.c.h.b16 %v4316
        %v5455 = vunpack.c.l.b16 %v4317
        %v5456 = vunpack.c.h.b16 %v4317
        %v5457 = vunpack.c.l.b16 %v4318
        %v5458 = vunpack.c.h.b16 %v4318
        %v5459 = vunpack.c.l.b16 %v4319
        %v5460 = vunpack.c.h.b16 %v4319
        %v5461 = vunpack.c.l.b16 %v4320
        %v5462 = vunpack.c.h.b16 %v4320
        %v5463 = vunpack.c.l.b16 %v4321
        %v5464 = vunpack.c.h.b16 %v4321
        %v5465 = vunpack.c.l.b16 %v4322
        %v5466 = vunpack.c.h.b16 %v4322
        %v5467 = vunpack.c.l.b16 %v4323
        %v5468 = vunpack.c.h.b16 %v4323
        %v5469 = vunpack.c.l.b16 %v4324
        %v5470 = vunpack.c.h.b16 %v4324
        %v5471 = vunpack.c.l.b16 %v4325
        %v5472 = vunpack.c.h.b16 %v4325
        %v5473 = vunpack.c.l.b16 %v4326
        %v5474 = vunpack.c.h.b16 %v4326
        %v5475 = vunpack.c.l.b16 %v4327
        %v5476 = vunpack.c.h.b16 %v4327
        %v5477 = vunpack.c.l.b16 %v4328
        %v5478 = vunpack.c.h.b16 %v4328
        %v5479 = vunpack.c.l.b16 %v4329
        %v5480 = vunpack.c.h.b16 %v4329
        %v5481 = vunpack.c.l.b16 %v4330
        %v5482 = vunpack.c.h.b16 %v4330
        %v5483 = vunpack.c.l.b16 %v4331
        %v5484 = vunpack.c.h.b16 %v4331
        %v5485 = vunpack.c.l.b16 %v4332
        %v5486 = vunpack.c.h.b16 %v4332
        %v5487 = vunpack.c.l.b16 %v4333
        %v5488 = vunpack.c.h.b16 %v4333
        %v5489 = vunpack.c.l.b16 %v4334
        %v5490 = vunpack.c.h.b16 %v4334
        %v5491 = vunpack.c.l.b16 %v4335
        %v5492 = vunpack.c.h.b16 %v4335
        %v5493 = vunpack.c.l.b16 %v4336
        %v5494 = vunpack.c.h.b16 %v4336
        %v5495 = vunpack.c.l.b16 %v4337
        %v5496 = vunpack.c.h.b16 %v4337
        %v5497 = vunpack.c.l.b16 %v4338
        %v5498 = vunpack.c.h.b16 %v4338
        %v5499 = vunpack.c.l.b16 %v4339
        %v5500 = vunpack.c.h.b16 %v4339
        %v5501 = vunpack.c.l.b16 %v4340
        %v5502 = vunpack.c.h.b16 %v4340
        %v5503 = vunpack.c.l.b16 %v4341
        %v5504 = vunpack.c.h.b16 %v4341
        %v5505 = vunpack.c.l.b16 %v4342
        %v5506 = vunpack.c.h.b16 %v4342
        %v5507 = vunpack.c.l.b16 %v4343
        %v5508 = vunpack.c.h.b16 %v4343
        %v5509 = vunpack.c.l.b16 %v4344
        %v5510 = vunpack.c.h.b16 %v4344
        %v5511 = vunpack.c.l.b16 %v4345
        %v5512 = vunpack.c.h.b16 %v4345
        %v5513 = vunpack.c.l.b16 %v4346
        %v5514 = vunpack.c.h.b16 %v4346
        %v5515 = vunpack.c.l.b16 %v4347
        %v5516 = vunpack.c.h.b16 %v4347
        %v5517 = vunpack.c.l.b16 %v4348
        %v5518 = vunpack.c.h.b16 %v4348
        %v5519 = vunpack.c.l.b16 %v4349
        %v5520 = vunpack.c.h.b16 %v4349
        %v5521 = vunpack.c.l.b16 %v4350
        %v5522 = vunpack.c.h.b16 %v4350
        %v5523 = vunpack.c.l.b16 %v4351
        %v5524 = vunpack.c.h.b16 %v4351
        %v5525 = vunpack.c.l.b16 %v4352
        %v5526 = vunpack.c.h.b16 %v4352
        %v5527 = vunpack.c.l.b16 %v4353
        %v5528 = vunpack.c.h.b16 %v4353
        %v5529 = vunpack.c.l.b16 %v4354
        %v5530 = vunpack.c.h.b16 %v4354
        %v5531 = vunpack.c.l.b16 %v4355
        %v5532 = vunpack.c.h.b16 %v4355
        %v5533 = vunpack.c.l.b16 %v4356
        %v5534 = vunpack.c.h.b16 %v4356
        %v5535 = vunpack.c.l.b16 %v4357
        %v5536 = vunpack.c.h.b16 %v4357
        %v5537 = vunpack.c.l.b16 %v4358
        %v5538 = vunpack.c.h.b16 %v4358
        %v5539 = vunpack.c.l.b16 %v4359
        %v5540 = vunpack.c.h.b16 %v4359
        %v5541 = vunpack.c.l.b16 %v4360
        %v5542 = vunpack.c.h.b16 %v4360
        %v5543 = vunpack.c.l.b16 %v4361
        %v5544 = vunpack.c.h.b16 %v4361
        %v5545 = vunpack.c.l.b16 %v4362
        %v5546 = vunpack.c.h.b16 %v4362
        %v5547 = vunpack.c.l.b16 %v4363
        %v5548 = vunpack.c.h.b16 %v4363
        %v5549 = vunpack.c.l.b16 %v4364
        %v5550 = vunpack.c.h.b16 %v4364
        %v5551 = vunpack.c.l.b16 %v4365
        %v5552 = vunpack.c.h.b16 %v4365
        %v5553 = vunpack.c.l.b16 %v4366
        %v5554 = vunpack.c.h.b16 %v4366
        %v5555 = vunpack.c.l.b16 %v4367
        %v5556 = vunpack.c.h.b16 %v4367
        %v5557 = vunpack.c.l.b16 %v4368
        %v5558 = vunpack.c.h.b16 %v4368
        %v5559 = vunpack.c.l.b16 %v4369
        %v5560 = vunpack.c.h.b16 %v4369
        %v5561 = vunpack.c.l.b16 %v4370
        %v5562 = vunpack.c.h.b16 %v4370
        %v5563 = vunpack.c.l.b16 %v4371
        %v5564 = vunpack.c.h.b16 %v4371
        %v5565 = vunpack.c.l.b16 %v4372
        %v5566 = vunpack.c.h.b16 %v4372
        %v5567 = vunpack.c.l.b16 %v4373
        %v5568 = vunpack.c.h.b16 %v4373
        %v5569 = vunpack.c.l.b16 %v4374
        %v5570 = vunpack.c.h.b16 %v4374
        %v5571 = vunpack.c.l.b16 %v4375
        %v5572 = vunpack.c.h.b16 %v4375
        %v5573 = vunpack.c.l.b16 %v4376
        %v5574 = vunpack.c.h.b16 %v4376
        %v5575 = vunpack.c.l.b16 %v4377
        %v5576 = vunpack.c.h.b16 %v4377
        %v5577 = vunpack.c.l.b16 %v4378
        %v5578 = vunpack.c.h.b16 %v4378
        %v5579 = vunpack.c.l.b16 %v4379
        %v5580 = vunpack.c.h.b16 %v4379
        %v5581 = vunpack.c.l.b16 %v4380
        %v5582 = vunpack.c.h.b16 %v4380
        %v5583 = vunpack.c.l.b16 %v4381
        %v5584 = vunpack.c.h.b16 %v4381
        %v5585 = vunpack.c.l.b16 %v4382
        %v5586 = vunpack.c.h.b16 %v4382
        %v5587 = vunpack.c.l.b16 %v4383
        %v5588 = vunpack.c.h.b16 %v4383
        %v5589 = vunpack.c.l.b16 %v4384
        %v5590 = vunpack.c.h.b16 %v4384
        %v5591 = vunpack.c.l.b16 %v4385
        %v5592 = vunpack.c.h.b16 %v4385
        %v5593 = vunpack.c.l.b16 %v4386
        %v5594 = vunpack.c.h.b16 %v4386
        %v5595 = vunpack.c.l.b16 %v4387
        %v5596 = vunpack.c.h.b16 %v4387
        %v5597 = vunpack.c.l.b16 %v4388
        %v5598 = vunpack.c.h.b16 %v4388
        %v5599 = vunpack.c.l.b16 %v4389
        %v5600 = vunpack.c.h.b16 %v4389
        %v5601 = vunpack.c.l.b16 %v4390
        %v5602 = vunpack.c.h.b16 %v4390
        %v5603 = vunpack.c.l.b16 %v4391
        %v5604 = vunpack.c.h.b16 %v4391
        %v5605 = vunpack.c.l.b16 %v4392
        %v5606 = vunpack.c.h.b16 %v4392
        %v5607 = vunpack.c.l.b16 %v4393
        %v5608 = vunpack.c.h.b16 %v4393
        %v5609 = vunpack.c.l.b16 %v4394
        %v5610 = vunpack.c.h.b16 %v4394
        %v5611 = vunpack.c.l.b16 %v4395
        %v5612 = vunpack.c.h.b16 %v4395
        %v5613 = vunpack.c.l.b16 %v4396
        %v5614 = vunpack.c.h.b16 %v4396
        %v5615 = vunpack.c.l.b16 %v4397
        %v5616 = vunpack.c.h.b16 %v4397
        %v5617 = vunpack.c.l.b16 %v4398
        %v5618 = vunpack.c.h.b16 %v4398
        %v5619 = vunpack.c.l.b16 %v4399
        %v5620 = vunpack.c.h.b16 %v4399
        %v5621 = vunpack.c.l.b16 %v4400
        %v5622 = vunpack.c.h.b16 %v4400
        %v5623 = vunpack.c.l.b16 %v4401
        %v5624 = vunpack.c.h.b16 %v4401
        %v5625 = vunpack.c.l.b16 %v4402
        %v5626 = vunpack.c.h.b16 %v4402
        %v5627 = vunpack.c.l.b16 %v4403
        %v5628 = vunpack.c.h.b16 %v4403
        %v5629 = vunpack.c.l.b16 %v4404
        %v5630 = vunpack.c.h.b16 %v4404
        %v5631 = vunpack.c.l.b16 %v4405
        %v5632 = vunpack.c.h.b16 %v4405
        %v5633 = vunpack.c.l.b16 %v4406
        %v5634 = vunpack.c.h.b16 %v4406
        %v5635 = vunpack.c.l.b16 %v4407
        %v5636 = vunpack.c.h.b16 %v4407
        %v5637 = vunpack.c.l.b16 %v4408
        %v5638 = vunpack.c.h.b16 %v4408
        %v5639 = vunpack.c.l.b16 %v4409
        %v5640 = vunpack.c.h.b16 %v4409
        %v5641 = vunpack.c.l.b16 %v4410
        %v5642 = vunpack.c.h.b16 %v4410
        %v5643 = vunpack.c.l.b16 %v4411
        %v5644 = vunpack.c.h.b16 %v4411
        %v5645 = vunpack.c.l.b16 %v4412
        %v5646 = vunpack.c.h.b16 %v4412
        %v5647 = vunpack.c.l.b16 %v4413
        %v5648 = vunpack.c.h.b16 %v4413
        %v5649 = vunpack.c.l.b16 %v4414
        %v5650 = vunpack.c.h.b16 %v4414
        %v5651 = vunpack.c.l.b16 %v4415
        %v5652 = vunpack.c.h.b16 %v4415
        %v5653 = vunpack.c.l.b16 %v4416
        %v5654 = vunpack.c.h.b16 %v4416
        %v5655 = vunpack.c.l.b16 %v4417
        %v5656 = vunpack.c.h.b16 %v4417
        %v5657 = vunpack.c.l.b16 %v4418
        %v5658 = vunpack.c.h.b16 %v4418
        %v5659 = vunpack.c.l.b16 %v4419
        %v5660 = vunpack.c.h.b16 %v4419
        %v5661 = vunpack.c.l.b16 %v4420
        %v5662 = vunpack.c.h.b16 %v4420
        %v5663 = vunpack.c.l.b16 %v4421
        %v5664 = vunpack.c.h.b16 %v4421
        %v5665 = vunpack.c.l.b16 %v4422
        %v5666 = vunpack.c.h.b16 %v4422
        %v5667 = vunpack.c.l.b16 %v4423
        %v5668 = vunpack.c.h.b16 %v4423
        %v5669 = vunpack.c.l.b16 %v4424
        %v5670 = vunpack.c.h.b16 %v4424
        %v5671 = vunpack.c.l.b16 %v4425
        %v5672 = vunpack.c.h.b16 %v4425
        %v5673 = vunpack.c.l.b16 %v4426
        %v5674 = vunpack.c.h.b16 %v4426
        %v5675 = vunpack.c.l.b16 %v4427
        %v5676 = vunpack.c.h.b16 %v4427
        %v5677 = vunpack.c.l.b16 %v4428
        %v5678 = vunpack.c.h.b16 %v4428
        %v5679 = vunpack.c.l.b16 %v4429
        %v5680 = vunpack.c.h.b16 %v4429
        %v5681 = vunpack.c.l.b16 %v4430
        %v5682 = vunpack.c.h.b16 %v4430
        %v5683 = vunpack.c.l.b16 %v4431
        %v5684 = vunpack.c.h.b16 %v4431
        %v5685 = vunpack.c.l.b16 %v4432
        %v5686 = vunpack.c.h.b16 %v4432
        %v5687 = vunpack.c.l.b16 %v4433
        %v5688 = vunpack.c.h.b16 %v4433
        %v5689 = vunpack.c.l.b16 %v4434
        %v5690 = vunpack.c.h.b16 %v4434
        %v5691 = vunpack.c.l.b16 %v4435
        %v5692 = vunpack.c.h.b16 %v4435
        %v5693 = vunpack.c.l.b16 %v4436
        %v5694 = vunpack.c.h.b16 %v4436
        %v5695 = vunpack.c.l.b16 %v4437
        %v5696 = vunpack.c.h.b16 %v4437
        %v5697 = vunpack.c.l.b16 %v4438
        %v5698 = vunpack.c.h.b16 %v4438
        %v5699 = vunpack.c.l.b16 %v4439
        %v5700 = vunpack.c.h.b16 %v4439
        %v5701 = vunpack.c.l.b16 %v4440
        %v5702 = vunpack.c.h.b16 %v4440
        %v5703 = vunpack.c.l.b16 %v4441
        %v5704 = vunpack.c.h.b16 %v4441
        %v5705 = vunpack.c.l.b16 %v4442
        %v5706 = vunpack.c.h.b16 %v4442
        %v5707 = vunpack.c.l.b16 %v4443
        %v5708 = vunpack.c.h.b16 %v4443
        %v5709 = vunpack.c.l.b16 %v4444
        %v5710 = vunpack.c.h.b16 %v4444
        %v5711 = vunpack.c.l.b16 %v4445
        %v5712 = vunpack.c.h.b16 %v4445
        %v5713 = vunpack.c.l.b16 %v4446
        %v5714 = vunpack.c.h.b16 %v4446
        %v5715 = vunpack.c.l.b16 %v4447
        %v5716 = vunpack.c.h.b16 %v4447
        %v5717 = vunpack.c.l.b16 %v4448
        %v5718 = vunpack.c.h.b16 %v4448
        %v5719 = vunpack.c.l.b16 %v4449
        %v5720 = vunpack.c.h.b16 %v4449
        %v5721 = vunpack.c.l.b16 %v4450
        %v5722 = vunpack.c.h.b16 %v4450
        %v5723 = vunpack.c.l.b16 %v4451
        %v5724 = vunpack.c.h.b16 %v4451
        %v5725 = vunpack.c.l.b16 %v4452
        %v5726 = vunpack.c.h.b16 %v4452
        %v5727 = vunpack.c.l.b16 %v4453
        %v5728 = vunpack.c.h.b16 %v4453
        %v5729 = vunpack.c.l.b16 %v4454
        %v5730 = vunpack.c.h.b16 %v4454
        %v5731 = vunpack.c.l.b16 %v4455
        %v5732 = vunpack.c.h.b16 %v4455
        %v5733 = vunpack.c.l.b16 %v4456
        %v5734 = vunpack.c.h.b16 %v4456
        %v5735 = vunpack.c.l.b16 %v4457
        %v5736 = vunpack.c.h.b16 %v4457
        %v5737 = vunpack.c.l.b16 %v4458
        %v5738 = vunpack.c.h.b16 %v4458
        %v5739 = vunpack.c.l.b16 %v4459
        %v5740 = vunpack.c.h.b16 %v4459
        %v5741 = vunpack.c.l.b16 %v4460
        %v5742 = vunpack.c.h.b16 %v4460
        %v5743 = vunpack.c.l.b16 %v4461
        %v5744 = vunpack.c.h.b16 %v4461
        %v5745 = vunpack.c.l.b16 %v4462
        %v5746 = vunpack.c.h.b16 %v4462
        %v5747 = vunpack.c.l.b16 %v4463
        %v5748 = vunpack.c.h.b16 %v4463
        %v5749 = vunpack.c.l.b16 %v4464
        %v5750 = vunpack.c.h.b16 %v4464
        %v5751 = vunpack.c.l.b16 %v4465
        %v5752 = vunpack.c.h.b16 %v4465
        %v5753 = vunpack.c.l.b16 %v4466
        %v5754 = vunpack.c.h.b16 %v4466
        %v5755 = vunpack.c.l.b16 %v4467
        %v5756 = vunpack.c.h.b16 %v4467
        %v5757 = vunpack.c.l.b16 %v4468
        %v5758 = vunpack.c.h.b16 %v4468
        %v5759 = vunpack.c.l.b16 %v4469
        %v5760 = vunpack.c.h.b16 %v4469
        %v5761 = vunpack.c.l.b16 %v4470
        %v5762 = vunpack.c.h.b16 %v4470
        %v5763 = vunpack.c.l.b16 %v4471
        %v5764 = vunpack.c.h.b16 %v4471
        %v5765 = vunpack.c.l.b16 %v4472
        %v5766 = vunpack.c.h.b16 %v4472
        %v5767 = vunpack.c.l.b16 %v4473
        %v5768 = vunpack.c.h.b16 %v4473
        %v5769 = vunpack.c.l.b16 %v4474
        %v5770 = vunpack.c.h.b16 %v4474
        %v5771 = vunpack.c.l.b16 %v4475
        %v5772 = vunpack.c.h.b16 %v4475
        %v5773 = vunpack.c.l.b16 %v4476
        %v5774 = vunpack.c.h.b16 %v4476
        %v5775 = vunpack.c.l.b16 %v4477
        %v5776 = vunpack.c.h.b16 %v4477
        %v5777 = vunpack.c.l.b16 %v4478
        %v5778 = vunpack.c.h.b16 %v4478
        %v5779 = vunpack.c.l.b16 %v4479
        %v5780 = vunpack.c.h.b16 %v4479
        %v5781 = vunpack.c.l.b16 %v4480
        %v5782 = vunpack.c.h.b16 %v4480
        %v5783 = vunpack.c.l.b16 %v4481
        %v5784 = vunpack.c.h.b16 %v4481
        %v5785 = vunpack.c.l.b16 %v4482
        %v5786 = vunpack.c.h.b16 %v4482
        %v5787 = vunpack.c.l.b16 %v4483
        %v5788 = vunpack.c.h.b16 %v4483
        %v5789 = vunpack.c.l.b16 %v4484
        %v5790 = vunpack.c.h.b16 %v4484
        %v5791 = vunpack.c.l.b16 %v4485
        %v5792 = vunpack.c.h.b16 %v4485
        %v5793 = vunpack.c.l.b16 %v4486
        %v5794 = vunpack.c.h.b16 %v4486
        %v5795 = vunpack.c.l.b16 %v4487
        %v5796 = vunpack.c.h.b16 %v4487
        %v5797 = vunpack.c.l.b16 %v4488
        %v5798 = vunpack.c.h.b16 %v4488
        %v5799 = vunpack.c.l.b16 %v4489
        %v5800 = vunpack.c.h.b16 %v4489
        %v5801 = vunpack.c.l.b16 %v4490
        %v5802 = vunpack.c.h.b16 %v4490
        %v5803 = vunpack.c.l.b16 %v4491
        %v5804 = vunpack.c.h.b16 %v4491
        %v5805 = vunpack.c.l.b16 %v4492
        %v5806 = vunpack.c.h.b16 %v4492
        %v5807 = vunpack.c.l.b16 %v4493
        %v5808 = vunpack.c.h.b16 %v4493
        %v5809 = vunpack.c.l.b16 %v4494
        %v5810 = vunpack.c.h.b16 %v4494
        %v5811 = vunpack.c.l.b16 %v4495
        %v5812 = vunpack.c.h.b16 %v4495
        %v5813 = vunpack.c.l.b16 %v4496
        %v5814 = vunpack.c.h.b16 %v4496
        %v5815 = vunpack.c.l.b16 %v4497
        %v5816 = vunpack.c.h.b16 %v4497
        %v5817 = vunpack.c.l.b16 %v4498
        %v5818 = vunpack.c.h.b16 %v4498
        %v5819 = vunpack.c.l.b16 %v4499
        %v5820 = vunpack.c.h.b16 %v4499
        %v5821 = vunpack.c.l.b16 %v4500
        %v5822 = vunpack.c.h.b16 %v4500
        %v5823 = vunpack.c.l.b16 %v4501
        %v5824 = vunpack.c.h.b16 %v4501
        %v5825 = vunpack.c.l.b16 %v4502
        %v5826 = vunpack.c.h.b16 %v4502
        %v5827 = vunpack.c.l.b16 %v4503
        %v5828 = vunpack.c.h.b16 %v4503
        %v5829 = vunpack.c.l.b16 %v4504
        %v5830 = vunpack.c.h.b16 %v4504
        %v5831 = vunpack.c.l.b16 %v4505
        %v5832 = vunpack.c.h.b16 %v4505
        %v5833 = vunpack.c.l.b16 %v4506
        %v5834 = vunpack.c.h.b16 %v4506
        %v5835 = vunpack.c.l.b16 %v4507
        %v5836 = vunpack.c.h.b16 %v4507
        %v5837 = vunpack.c.l.b16 %v4508
        %v5838 = vunpack.c.h.b16 %v4508
        %v5839 = vunpack.c.l.b16 %v4509
        %v5840 = vunpack.c.h.b16 %v4509
        %v5841 = vunpack.c.l.b16 %v4510
        %v5842 = vunpack.c.h.b16 %v4510
        %v5843 = vunpack.c.l.b16 %v4511
        %v5844 = vunpack.c.h.b16 %v4511
        %v5845 = vunpack.c.l.b16 %v4512
        %v5846 = vunpack.c.h.b16 %v4512
        %v5847 = vunpack.c.l.b16 %v4513
        %v5848 = vunpack.c.h.b16 %v4513
        %v5849 = vunpack.c.l.b16 %v4514
        %v5850 = vunpack.c.h.b16 %v4514
        %v5851 = vunpack.c.l.b16 %v4515
        %v5852 = vunpack.c.h.b16 %v4515
        %v5853 = vunpack.c.l.b16 %v4516
        %v5854 = vunpack.c.h.b16 %v4516
        %v5855 = vunpack.c.l.b16 %v4517
        %v5856 = vunpack.c.h.b16 %v4517
        %v5857 = vunpack.c.l.b16 %v4518
        %v5858 = vunpack.c.h.b16 %v4518
        %v5859 = vunpack.c.l.b16 %v4519
        %v5860 = vunpack.c.h.b16 %v4519
        %v5861 = vunpack.c.l.b16 %v4520
        %v5862 = vunpack.c.h.b16 %v4520
        %v5863 = vunpack.c.l.b16 %v4521
        %v5864 = vunpack.c.h.b16 %v4521
        %v5865 = vunpack.c.l.b16 %v4522
        %v5866 = vunpack.c.h.b16 %v4522
        %v5867 = vunpack.c.l.b16 %v4523
        %v5868 = vunpack.c.h.b16 %v4523
        %v5869 = vunpack.c.l.b16 %v4524
        %v5870 = vunpack.c.h.b16 %v4524
        %v5871 = vunpack.c.l.b16 %v4525
        %v5872 = vunpack.c.h.b16 %v4525
        %v5873 = vunpack.c.l.b16 %v4526
        %v5874 = vunpack.c.h.b16 %v4526
        %v5875 = vunpack.c.l.b16 %v4527
        %v5876 = vunpack.c.h.b16 %v4527
        %v5877 = vunpack.c.l.b16 %v4528
        %v5878 = vunpack.c.h.b16 %v4528
        %v5879 = vunpack.c.l.b16 %v4529
        %v5880 = vunpack.c.h.b16 %v4529
        %v5881 = vunpack.c.l.b16 %v4530
        %v5882 = vunpack.c.h.b16 %v4530
        %v5883 = vunpack.c.l.b16 %v4531
        %v5884 = vunpack.c.h.b16 %v4531
        %v5885 = vunpack.c.l.b16 %v4532
        %v5886 = vunpack.c.h.b16 %v4532
        %v5887 = vunpack.c.l.b16 %v4533
        %v5888 = vunpack.c.h.b16 %v4533
        %v5889 = vunpack.c.l.b16 %v4534
        %v5890 = vunpack.c.h.b16 %v4534
        %v5891 = vunpack.c.l.b16 %v4535
        %v5892 = vunpack.c.h.b16 %v4535
        %v5893 = vunpack.c.l.b16 %v4536
        %v5894 = vunpack.c.h.b16 %v4536
        %v5895 = vunpack.c.l.b16 %v4537
        %v5896 = vunpack.c.h.b16 %v4537
        %v5897 = vunpack.c.l.b16 %v4538
        %v5898 = vunpack.c.h.b16 %v4538
        %v5899 = vunpack.c.l.b16 %v4539
        %v5900 = vunpack.c.h.b16 %v4539
        %v5901 = vunpack.c.l.b16 %v4540
        %v5902 = vunpack.c.h.b16 %v4540
        %v5903 = vunpack.c.l.b16 %v4541
        %v5904 = vunpack.c.h.b16 %v4541
        %v5905 = vunpack.c.l.b16 %v4542
        %v5906 = vunpack.c.h.b16 %v4542
        %v5907 = vunpack.c.l.b16 %v4543
        %v5908 = vunpack.c.h.b16 %v4543
        %v5909 = vunpack.c.l.b16 %v4544
        %v5910 = vunpack.c.h.b16 %v4544
        %v5911 = vunpack.c.l.b16 %v4545
        %v5912 = vunpack.c.h.b16 %v4545
        %v5913 = vunpack.c.l.b16 %v4546
        %v5914 = vunpack.c.h.b16 %v4546
        %v5915 = vunpack.c.l.b16 %v4547
        %v5916 = vunpack.c.h.b16 %v4547
        %v5917 = vunpack.c.l.b16 %v4548
        %v5918 = vunpack.c.h.b16 %v4548
        %v5919 = vunpack.c.l.b16 %v4549
        %v5920 = vunpack.c.h.b16 %v4549
        %v5921 = vunpack.c.l.b16 %v4550
        %v5922 = vunpack.c.h.b16 %v4550
        %v5923 = vunpack.c.l.b16 %v4551
        %v5924 = vunpack.c.h.b16 %v4551
        %v5925 = vunpack.c.l.b16 %v4552
        %v5926 = vunpack.c.h.b16 %v4552
        %v5927 = vunpack.c.l.b16 %v4553
        %v5928 = vunpack.c.h.b16 %v4553
        %v5929 = vunpack.c.l.b16 %v4554
        %v5930 = vunpack.c.h.b16 %v4554
        %v5931 = vunpack.c.l.b16 %v4555
        %v5932 = vunpack.c.h.b16 %v4555
        %v5933 = vunpack.c.l.b16 %v4556
        %v5934 = vunpack.c.h.b16 %v4556
        %v5935 = vunpack.c.l.b16 %v4557
        %v5936 = vunpack.c.h.b16 %v4557
        %v5937 = vunpack.c.l.b16 %v4558
        %v5938 = vunpack.c.h.b16 %v4558
        %v5939 = vunpack.c.l.b16 %v4559
        %v5940 = vunpack.c.h.b16 %v4559
        %v5941 = vunpack.c.l.b16 %v4560
        %v5942 = vunpack.c.h.b16 %v4560
        %v5943 = vunpack.c.l.b16 %v4561
        %v5944 = vunpack.c.h.b16 %v4561
        %v5945 = vunpack.c.l.b16 %v4562
        %v5946 = vunpack.c.h.b16 %v4562
        %v5947 = vunpack.c.l.b16 %v4563
        %v5948 = vunpack.c.h.b16 %v4563
        %v5949 = vunpack.c.l.b16 %v4564
        %v5950 = vunpack.c.h.b16 %v4564
        %v5951 = vunpack.c.l.b16 %v4565
        %v5952 = vunpack.c.h.b16 %v4565
        %v5953 = vunpack.c.l.b16 %v4566
        %v5954 = vunpack.c.h.b16 %v4566
        %v5955 = vunpack.c.l.b16 %v4567
        %v5956 = vunpack.c.h.b16 %v4567
        %v5957 = vunpack.c.l.b16 %v4568
        %v5958 = vunpack.c.h.b16 %v4568
        %v5959 = vunpack.c.l.b16 %v4569
        %v5960 = vunpack.c.h.b16 %v4569
        %v5961 = vunpack.c.l.b16 %v4570
        %v5962 = vunpack.c.h.b16 %v4570
        %v5963 = vunpack.c.l.b16 %v4571
        %v5964 = vunpack.c.h.b16 %v4571
        %v5965 = vunpack.c.l.b16 %v4572
        %v5966 = vunpack.c.h.b16 %v4572
        %v5967 = vunpack.c.l.b16 %v4573
        %v5968 = vunpack.c.h.b16 %v4573
        %v5969 = vunpack.c.l.b16 %v4574
        %v5970 = vunpack.c.h.b16 %v4574
        %v5971 = vunpack.c.l.b16 %v4575
        %v5972 = vunpack.c.h.b16 %v4575
        %v5973 = vunpack.c.l.b16 %v4576
        %v5974 = vunpack.c.h.b16 %v4576
        %v5975 = vunpack.c.l.b16 %v4577
        %v5976 = vunpack.c.h.b16 %v4577
        %v5977 = vunpack.c.l.b16 %v4578
        %v5978 = vunpack.c.h.b16 %v4578
        %v5979 = vunpack.c.l.b16 %v4579
        %v5980 = vunpack.c.h.b16 %v4579
        %v5981 = vunpack.c.l.b16 %v4580
        %v5982 = vunpack.c.h.b16 %v4580
        %v5983 = vunpack.c.l.b16 %v4581
        %v5984 = vunpack.c.h.b16 %v4581
        %v5985 = vunpack.c.l.b16 %v4582
        %v5986 = vunpack.c.h.b16 %v4582
        %v5987 = vunpack.c.l.b16 %v4583
        %v5988 = vunpack.c.h.b16 %v4583
        %v5989 = vunpack.c.l.b16 %v4584
        %v5990 = vunpack.c.h.b16 %v4584
        %v5991 = vunpack.c.l.b16 %v4585
        %v5992 = vunpack.c.h.b16 %v4585
        %v5993 = vunpack.c.l.b16 %v4586
        %v5994 = vunpack.c.h.b16 %v4586
        %v5995 = vunpack.c.l.b16 %v4587
        %v5996 = vunpack.c.h.b16 %v4587
        %v5997 = vunpack.c.l.b16 %v4588
        %v5998 = vunpack.c.h.b16 %v4588
        %v5999 = vunpack.c.l.b16 %v4589
        %v6000 = vunpack.c.h.b16 %v4589
        %v6001 = vunpack.c.l.b16 %v4590
        %v6002 = vunpack.c.h.b16 %v4590
        %v6003 = vunpack.c.l.b16 %v4591
        %v6004 = vunpack.c.h.b16 %v4591
        %v6005 = vunpack.c.l.b16 %v4592
        %v6006 = vunpack.c.h.b16 %v4592
        %v6007 = vunpack.c.l.b16 %v4593
        %v6008 = vunpack.c.h.b16 %v4593
        %v6009 = vunpack.c.l.b16 %v4594
        %v6010 = vunpack.c.h.b16 %v4594
        %v6011 = vunpack.c.l.b16 %v4595
        %v6012 = vunpack.c.h.b16 %v4595
        %v6013 = vunpack.c.l.b16 %v4596
        %v6014 = vunpack.c.h.b16 %v4596
        %v6015 = vunpack.c.l.b16 %v4597
        %v6016 = vunpack.c.h.b16 %v4597
        %v6017 = vunpack.c.l.b16 %v4598
        %v6018 = vunpack.c.h.b16 %v4598
        %v6019 = vunpack.c.l.b16 %v4599
        %v6020 = vunpack.c.h.b16 %v4599
        %v6021 = vunpack.c.l.b16 %v4600
        %v6022 = vunpack.c.h.b16 %v4600
        %v6023 = vunpack.c.l.b16 %v4601
        %v6024 = vunpack.c.h.b16 %v4601
        %v6025 = vunpack.c.l.b16 %v4602
        %v6026 = vunpack.c.h.b16 %v4602
        %v6027 = vunpack.c.l.b16 %v4603
        %v6028 = vunpack.c.h.b16 %v4603
        %v6029 = vunpack.c.l.b16 %v4604
        %v6030 = vunpack.c.h.b16 %v4604
        %v6031 = vunpack.c.l.b16 %v4605
        %v6032 = vunpack.c.h.b16 %v4605
        %v6033 = vunpack.c.l.b16 %v4606
        %v6034 = vunpack.c.h.b16 %v4606
        %v6035 = vunpack.c.l.b16 %v4607
        %v6036 = vunpack.c.h.b16 %v4607
        %v6037 = vunpack.c.l.b16 %v4608
        %v6038 = vunpack.c.h.b16 %v4608
        %v6039 = vunpack.c.l.b16 %v4609
        %v6040 = vunpack.c.h.b16 %v4609
        %v6041 = vunpack.c.l.b16 %v4610
        %v6042 = vunpack.c.h.b16 %v4610
        %v6043 = vunpack.c.l.b16 %v4611
        %v6044 = vunpack.c.h.b16 %v4611
        %v6045 = vunpack.c.l.b16 %v4612
        %v6046 = vunpack.c.h.b16 %v4612
        %v6047 = vunpack.c.l.b16 %v4613
        %v6048 = vunpack.c.h.b16 %v4613
        %v6049 = vunpack.c.l.b16 %v4614
        %v6050 = vunpack.c.h.b16 %v4614
        %v6051 = vunpack.c.l.b16 %v4615
        %v6052 = vunpack.c.h.b16 %v4615
        %v6053 = vunpack.c.l.b16 %v4616
        %v6054 = vunpack.c.h.b16 %v4616
        %v6055 = vunpack.c.l.b16 %v4617
        %v6056 = vunpack.c.h.b16 %v4617
        %v6057 = vunpack.c.l.b16 %v4618
        %v6058 = vunpack.c.h.b16 %v4618
        %v6059 = vunpack.c.l.b16 %v4619
        %v6060 = vunpack.c.h.b16 %v4619
        %v6061 = vunpack.c.l.b16 %v4620
        %v6062 = vunpack.c.h.b16 %v4620
        %v6063 = vunpack.c.l.b16 %v4621
        %v6064 = vunpack.c.h.b16 %v4621
        %v6065 = vunpack.c.l.b16 %v4622
        %v6066 = vunpack.c.h.b16 %v4622
        %v6067 = vunpack.c.l.b16 %v4623
        %v6068 = vunpack.c.h.b16 %v4623
        %v6069 = vunpack.c.l.b16 %v4624
        %v6070 = vunpack.c.h.b16 %v4624
        %v6071 = vunpack.c.l.b16 %v4625
        %v6072 = vunpack.c.h.b16 %v4625
        %v6073 = vunpack.c.l.b16 %v4626
        %v6074 = vunpack.c.h.b16 %v4626
        %v6075 = vunpack.c.l.b16 %v4627
        %v6076 = vunpack.c.h.b16 %v4627
        %v6077 = vunpack.c.l.b16 %v4628
        %v6078 = vunpack.c.h.b16 %v4628
        %v6079 = vunpack.c.l.b16 %v4629
        %v6080 = vunpack.c.h.b16 %v4629
        %v6081 = vunpack.c.l.b16 %v4630
        %v6082 = vunpack.c.h.b16 %v4630
        %v6083 = vunpack.c.l.b16 %v4631
        %v6084 = vunpack.c.h.b16 %v4631
        %v6085 = vunpack.c.l.b16 %v4632
        %v6086 = vunpack.c.h.b16 %v4632
        %v6087 = vunpack.c.l.b16 %v4633
        %v6088 = vunpack.c.h.b16 %v4633
        %v6089 = vunpack.c.l.b16 %v4634
        %v6090 = vunpack.c.h.b16 %v4634
        %v6091 = vunpack.c.l.b16 %v4635
        %v6092 = vunpack.c.h.b16 %v4635
        %v6093 = vunpack.c.l.b16 %v4636
        %v6094 = vunpack.c.h.b16 %v4636
        %v6095 = vunpack.c.l.b16 %v4637
        %v6096 = vunpack.c.h.b16 %v4637
        %v6097 = vunpack.c.l.b16 %v4638
        %v6098 = vunpack.c.h.b16 %v4638
        %v6099 = vunpack.c.l.b16 %v4639
        %v6100 = vunpack.c.h.b16 %v4639
        %v6101 = vunpack.c.l.b16 %v4640
        %v6102 = vunpack.c.h.b16 %v4640
        %v6103 = vunpack.c.l.b16 %v4641
        %v6104 = vunpack.c.h.b16 %v4641
        %v6105 = vunpack.c.l.b16 %v4642
        %v6106 = vunpack.c.h.b16 %v4642
        %v6107 = vunpack.c.l.b16 %v4643
        %v6108 = vunpack.c.h.b16 %v4643
        %v6109 = vunpack.c.l.b16 %v4644
        %v6110 = vunpack.c.h.b16 %v4644
        %v6111 = vunpack.c.l.b16 %v4645
        %v6112 = vunpack.c.h.b16 %v4645
        %v6113 = vunpack.c.l.b16 %v4646
        %v6114 = vunpack.c.h.b16 %v4646
        %v6115 = vunpack.c.l.b16 %v4647
        %v6116 = vunpack.c.h.b16 %v4647
        %v6117 = vunpack.c.l.b16 %v4648
        %v6118 = vunpack.c.h.b16 %v4648
        %v6119 = vunpack.c.l.b16 %v4649
        %v6120 = vunpack.c.h.b16 %v4649
        %v6121 = vunpack.c.l.b16 %v4650
        %v6122 = vunpack.c.h.b16 %v4650
        %v6123 = vunpack.c.l.b16 %v4651
        %v6124 = vunpack.c.h.b16 %v4651
        %v6125 = vunpack.c.l.b16 %v4652
        %v6126 = vunpack.c.h.b16 %v4652
        %v6127 = vunpack.c.l.b16 %v4653
        %v6128 = vunpack.c.h.b16 %v4653
        %v6129 = vunpack.c.l.b16 %v4654
        %v6130 = vunpack.c.h.b16 %v4654
        %v6131 = vunpack.c.l.b16 %v4655
        %v6132 = vunpack.c.h.b16 %v4655
        %v6133 = vunpack.c.l.b16 %v4656
        %v6134 = vunpack.c.h.b16 %v4656
        %v6135 = vunpack.c.l.b16 %v4657
        %v6136 = vunpack.c.h.b16 %v4657
        %v6137 = vunpack.c.l.b16 %v4658
        %v6138 = vunpack.c.h.b16 %v4658
        %v6139 = vunpack.c.l.b16 %v4659
        %v6140 = vunpack.c.h.b16 %v4659
        %v6141 = vunpack.c.l.b16 %v4660
        %v6142 = vunpack.c.h.b16 %v4660
        %v6143 = vunpack.c.l.b16 %v4661
        %v6144 = vunpack.c.h.b16 %v4661
        %v6145 = vunpack.c.l.b16 %v4662
        %v6146 = vunpack.c.h.b16 %v4662
        %v6147 = vunpack.c.l.b16 %v4663
        %v6148 = vunpack.c.h.b16 %v4663
        %v6149 = vunpack.c.l.b16 %v4664
        %v6150 = vunpack.c.h.b16 %v4664
        %v6151 = vunpack.c.l.b16 %v4665
        %v6152 = vunpack.c.h.b16 %v4665
        %v6153 = vunpack.c.l.b16 %v4666
        %v6154 = vunpack.c.h.b16 %v4666
        %v6155 = vunpack.c.l.b16 %v4667
        %v6156 = vunpack.c.h.b16 %v4667
        %v6157 = vunpack.c.l.b16 %v4668
        %v6158 = vunpack.c.h.b16 %v4668
        %v6159 = vunpack.c.l.b16 %v4669
        %v6160 = vunpack.c.h.b16 %v4669
        %v6161 = vunpack.c.l.b16 %v4670
        %v6162 = vunpack.c.h.b16 %v4670
        %v6163 = vunpack.c.l.b16 %v4671
        %v6164 = vunpack.c.h.b16 %v4671
        %v6165 = vunpack.c.l.b16 %v4672
        %v6166 = vunpack.c.h.b16 %v4672
        %v6167 = vunpack.c.l.b16 %v4673
        %v6168 = vunpack.c.h.b16 %v4673
        %v6169 = vunpack.c.l.b16 %v4674
        %v6170 = vunpack.c.h.b16 %v4674
        %v6171 = vunpack.c.l.b16 %v4675
        %v6172 = vunpack.c.h.b16 %v4675
        %v6173 = vunpack.c.l.b16 %v4676
        %v6174 = vunpack.c.h.b16 %v4676
        %v6175 = vunpack.c.l.b16 %v4677
        %v6176 = vunpack.c.h.b16 %v4677
        %v6177 = vunpack.c.l.b16 %v4678
        %v6178 = vunpack.c.h.b16 %v4678
        %v6179 = vunpack.c.l.b16 %v4679
        %v6180 = vunpack.c.h.b16 %v4679
        %v6181 = vunpack.c.l.b16 %v4680
        %v6182 = vunpack.c.h.b16 %v4680
        %v6183 = vunpack.c.l.b16 %v4681
        %v6184 = vunpack.c.h.b16 %v4681
        %v6185 = vunpack.c.l.b16 %v4682
        %v6186 = vunpack.c.h.b16 %v4682
        %v6187 = vunpack.c.l.b16 %v4683
        %v6188 = vunpack.c.h.b16 %v4683
        %v6189 = vunpack.c.l.b16 %v4684
        %v6190 = vunpack.c.h.b16 %v4684
        %v6191 = vunpack.c.l.b16 %v4685
        %v6192 = vunpack.c.h.b16 %v4685
        %v6193 = vunpack.c.l.b16 %v4686
        %v6194 = vunpack.c.h.b16 %v4686
        %v6195 = vunpack.c.l.b16 %v4687
        %v6196 = vunpack.c.h.b16 %v4687
        %v6197 = vunpack.c.l.b16 %v4688
        %v6198 = vunpack.c.h.b16 %v4688
        %v6199 = vunpack.c.l.b16 %v4689
        %v6200 = vunpack.c.h.b16 %v4689
        %v6201 = vunpack.c.l.b16 %v4690
        %v6202 = vunpack.c.h.b16 %v4690
        %v6203 = vunpack.c.l.b16 %v4691
        %v6204 = vunpack.c.h.b16 %v4691
        %v6205 = vunpack.c.l.b16 %v4692
        %v6206 = vunpack.c.h.b16 %v4692
        %v6207 = vunpack.c.l.b16 %v4693
        %v6208 = vunpack.c.h.b16 %v4693
        %v6209 = vunpack.c.l.b16 %v4694
        %v6210 = vunpack.c.h.b16 %v4694
        %v6211 = vunpack.c.l.b16 %v4695
        %v6212 = vunpack.c.h.b16 %v4695
        %v6213 = vunpack.c.l.b16 %v4696
        %v6214 = vunpack.c.h.b16 %v4696
        %v6215 = vunpack.c.l.b16 %v4697
        %v6216 = vunpack.c.h.b16 %v4697
        %v6217 = vunpack.c.l.b16 %v4698
        %v6218 = vunpack.c.h.b16 %v4698
        %v6219 = vunpack.c.l.b16 %v4699
        %v6220 = vunpack.c.h.b16 %v4699
        %v6221 = vunpack.c.l.b16 %v4700
        %v6222 = vunpack.c.h.b16 %v4700
        %v6223 = vunpack.c.l.b16 %v4701
        %v6224 = vunpack.c.h.b16 %v4701
        %v6225 = vunpack.c.l.b16 %v4702
        %v6226 = vunpack.c.h.b16 %v4702
        %v6227 = vunpack.c.l.b16 %v4703
        %v6228 = vunpack.c.h.b16 %v4703
        %v6229 = vunpack.c.l.b16 %v4704
        %v6230 = vunpack.c.h.b16 %v4704
        %v6231 = vunpack.c.l.b16 %v4705
        %v6232 = vunpack.c.h.b16 %v4705
        %v6233 = vunpack.c.l.b16 %v4706
        %v6234 = vunpack.c.h.b16 %v4706
        %v6235 = vunpack.c.l.b16 %v4707
        %v6236 = vunpack.c.h.b16 %v4707
        %v6237 = vunpack.c.l.b16 %v4708
        %v6238 = vunpack.c.h.b16 %v4708
        %v6239 = vunpack.c.l.b16 %v4709
        %v6240 = vunpack.c.h.b16 %v4709
        %v6241 = vunpack.c.l.b16 %v4710
        %v6242 = vunpack.c.h.b16 %v4710
        %v6243 = vunpack.c.l.b16 %v4711
        %v6244 = vunpack.c.h.b16 %v4711
        %v6245 = vunpack.c.l.b16 %v4712
        %v6246 = vunpack.c.h.b16 %v4712
        %v6247 = vunpack.c.l.b16 %v4713
        %v6248 = vunpack.c.h.b16 %v4713
        %v6249 = vunpack.c.l.b16 %v4714
        %v6250 = vunpack.c.h.b16 %v4714
        %v6251 = vunpack.c.l.b16 %v4715
        %v6252 = vunpack.c.h.b16 %v4715
        %v6253 = vunpack.c.l.b16 %v4716
        %v6254 = vunpack.c.h.b16 %v4716
        %v6255 = vunpack.c.l.b16 %v4717
        %v6256 = vunpack.c.h.b16 %v4717
        %v6257 = vunpack.c.l.b16 %v4718
        %v6258 = vunpack.c.h.b16 %v4718
        %v6259 = vunpack.c.l.b16 %v4719
        %v6260 = vunpack.c.h.b16 %v4719
        %v6261 = vunpack.c.l.b16 %v4720
        %v6262 = vunpack.c.h.b16 %v4720
        %v6263 = vunpack.c.l.b16 %v4721
        %v6264 = vunpack.c.h.b16 %v4721
        %v6265 = vunpack.c.l.b16 %v4722
        %v6266 = vunpack.c.h.b16 %v4722
        %v6267 = vunpack.c.l.b16 %v4723
        %v6268 = vunpack.c.h.b16 %v4723
        %v6269 = vunpack.c.l.b16 %v4724
        %v6270 = vunpack.c.h.b16 %v4724
        %v6271 = vunpack.c.l.b16 %v4725
        %v6272 = vunpack.c.h.b16 %v4725
        %v6273 = vunpack.c.l.b16 %v4726
        %v6274 = vunpack.c.h.b16 %v4726
        %v6275 = vunpack.c.l.b16 %v4727
        %v6276 = vunpack.c.h.b16 %v4727
        %v6277 = vunpack.c.l.b16 %v4728
        %v6278 = vunpack.c.h.b16 %v4728
        %v6279 = vunpack.c.l.b16 %v4729
        %v6280 = vunpack.c.h.b16 %v4729
        %v6281 = vunpack.c.l.b16 %v4730
        %v6282 = vunpack.c.h.b16 %v4730
        %v6283 = vpack.c.b16 %v5261, %v5259
        %v6284 = vpack.c.b16 %v5262, %v5260
        %v6285 = vpack.c.b16 %v5265, %v5263
        %v6286 = vpack.c.b16 %v5266, %v5264
        %v6287 = vpack.c.b16 %v5269, %v5267
        %v6288 = vpack.c.b16 %v5270, %v5268
        %v6289 = vpack.c.b16 %v5273, %v5271
        %v6290 = vpack.c.b16 %v5274, %v5272
        %v6291 = vpack.c.b16 %v5277, %v5275
        %v6292 = vpack.c.b16 %v5278, %v5276
        %v6293 = vpack.c.b16 %v5281, %v5279
        %v6294 = vpack.c.b16 %v5282, %v5280
        %v6295 = vpack.c.b16 %v5285, %v5283
        %v6296 = vpack.c.b16 %v5286, %v5284
        %v6297 = vpack.c.b16 %v5289, %v5287
        %v6298 = vpack.c.b16 %v5290, %v5288
        %v6299 = vpack.c.b16 %v5293, %v5291
        %v6300 = vpack.c.b16 %v5294, %v5292
        %v6301 = vpack.c.b16 %v5297, %v5295
        %v6302 = vpack.c.b16 %v5298, %v5296
        %v6303 = vpack.c.b16 %v5301, %v5299
        %v6304 = vpack.c.b16 %v5302, %v5300
        %v6305 = vpack.c.b16 %v5305, %v5303
        %v6306 = vpack.c.b16 %v5306, %v5304
        %v6307 = vpack.c.b16 %v5309, %v5307
        %v6308 = vpack.c.b16 %v5310, %v5308
        %v6309 = vpack.c.b16 %v5313, %v5311
        %v6310 = vpack.c.b16 %v5314, %v5312
        %v6311 = vpack.c.b16 %v5317, %v5315
        %v6312 = vpack.c.b16 %v5318, %v5316
        %v6313 = vpack.c.b16 %v5321, %v5319
        %v6314 = vpack.c.b16 %v5322, %v5320
        %v6315 = vpack.c.b16 %v5325, %v5323
        %v6316 = vpack.c.b16 %v5326, %v5324
        %v6317 = vpack.c.b16 %v5329, %v5327
        %v6318 = vpack.c.b16 %v5330, %v5328
        %v6319 = vpack.c.b16 %v5333, %v5331
        %v6320 = vpack.c.b16 %v5334, %v5332
        %v6321 = vpack.c.b16 %v5337, %v5335
        %v6322 = vpack.c.b16 %v5338, %v5336
        %v6323 = vpack.c.b16 %v5341, %v5339
        %v6324 = vpack.c.b16 %v5342, %v5340
        %v6325 = vpack.c.b16 %v5345, %v5343
        %v6326 = vpack.c.b16 %v5346, %v5344
        %v6327 = vpack.c.b16 %v5349, %v5347
        %v6328 = vpack.c.b16 %v5350, %v5348
        %v6329 = vpack.c.b16 %v5353, %v5351
        %v6330 = vpack.c.b16 %v5354, %v5352
        %v6331 = vpack.c.b16 %v5357, %v5355
        %v6332 = vpack.c.b16 %v5358, %v5356
        %v6333 = vpack.c.b16 %v5361, %v5359
        %v6334 = vpack.c.b16 %v5362, %v5360
        %v6335 = vpack.c.b16 %v5365, %v5363
        %v6336 = vpack.c.b16 %v5366, %v5364
        %v6337 = vpack.c.b16 %v5369, %v5367
        %v6338 = vpack.c.b16 %v5370, %v5368
        %v6339 = vpack.c.b16 %v5373, %v5371
        %v6340 = vpack.c.b16 %v5374, %v5372
        %v6341 = vpack.c.b16 %v5377, %v5375
        %v6342 = vpack.c.b16 %v5378, %v5376
        %v6343 = vpack.c.b16 %v5381, %v5379
        %v6344 = vpack.c.b16 %v5382, %v5380
        %v6345 = vpack.c.b16 %v5385, %v5383
        %v6346 = vpack.c.b16 %v5386, %v5384
        %v6347 = vpack.c.b16 %v5389, %v5387
        %v6348 = vpack.c.b16 %v5390, %v5388
        %v6349 = vpack.c.b16 %v5393, %v5391
        %v6350 = vpack.c.b16 %v5394, %v5392
        %v6351 = vpack.c.b16 %v5397, %v5395
        %v6352 = vpack.c.b16 %v5398, %v5396
        %v6353 = vpack.c.b16 %v5401, %v5399
        %v6354 = vpack.c.b16 %v5402, %v5400
        %v6355 = vpack.c.b16 %v5405, %v5403
        %v6356 = vpack.c.b16 %v5406, %v5404
        %v6357 = vpack.c.b16 %v5409, %v5407
        %v6358 = vpack.c.b16 %v5410, %v5408
        %v6359 = vpack.c.b16 %v5413, %v5411
        %v6360 = vpack.c.b16 %v5414, %v5412
        %v6361 = vpack.c.b16 %v5417, %v5415
        %v6362 = vpack.c.b16 %v5418, %v5416
        %v6363 = vpack.c.b16 %v5421, %v5419
        %v6364 = vpack.c.b16 %v5422, %v5420
        %v6365 = vpack.c.b16 %v5425, %v5423
        %v6366 = vpack.c.b16 %v5426, %v5424
        %v6367 = vpack.c.b16 %v5429, %v5427
        %v6368 = vpack.c.b16 %v5430, %v5428
        %v6369 = vpack.c.b16 %v5433, %v5431
        %v6370 = vpack.c.b16 %v5434, %v5432
        %v6371 = vpack.c.b16 %v5437, %v5435
        %v6372 = vpack.c.b16 %v5438, %v5436
        %v6373 = vpack.c.b16 %v5441, %v5439
        %v6374 = vpack.c.b16 %v5442, %v5440
        %v6375 = vpack.c.b16 %v5445, %v5443
        %v6376 = vpack.c.b16 %v5446, %v5444
        %v6377 = vpack.c.b16 %v5449, %v5447
        %v6378 = vpack.c.b16 %v5450, %v5448
        %v6379 = vpack.c.b16 %v5453, %v5451
        %v6380 = vpack.c.b16 %v5454, %v5452
        %v6381 = vpack.c.b16 %v5457, %v5455
        %v6382 = vpack.c.b16 %v5458, %v5456
        %v6383 = vpack.c.b16 %v5461, %v5459
        %v6384 = vpack.c.b16 %v5462, %v5460
        %v6385 = vpack.c.b16 %v5465, %v5463
        %v6386 = vpack.c.b16 %v5466, %v5464
        %v6387 = vpack.c.b16 %v5469, %v5467
        %v6388 = vpack.c.b16 %v5470, %v5468
        %v6389 = vpack.c.b16 %v5473, %v5471
        %v6390 = vpack.c.b16 %v5474, %v5472
        %v6391 = vpack.c.b16 %v5477, %v5475
        %v6392 = vpack.c.b16 %v5478, %v5476
        %v6393 = vpack.c.b16 %v5481, %v5479
        %v6394 = vpack.c.b16 %v5482, %v5480
        %v6395 = vpack.c.b16 %v5485, %v5483
        %v6396 = vpack.c.b16 %v5486, %v5484
        %v6397 = vpack.c.b16 %v5489, %v5487
        %v6398 = vpack.c.b16 %v5490, %v5488
        %v6399 = vpack.c.b16 %v5493, %v5491
        %v6400 = vpack.c.b16 %v5494, %v5492
        %v6401 = vpack.c.b16 %v5497, %v5495
        %v6402 = vpack.c.b16 %v5498, %v5496
        %v6403 = vpack.c.b16 %v5501, %v5499
        %v6404 = vpack.c.b16 %v5502, %v5500
        %v6405 = vpack.c.b16 %v5505, %v5503
        %v6406 = vpack.c.b16 %v5506, %v5504
        %v6407 = vpack.c.b16 %v5509, %v5507
        %v6408 = vpack.c.b16 %v5510, %v5508
        %v6409 = vpack.c.b16 %v5513, %v5511
        %v6410 = vpack.c.b16 %v5514, %v5512
        %v6411 = vpack.c.b16 %v5517, %v5515
        %v6412 = vpack.c.b16 %v5518, %v5516
        %v6413 = vpack.c.b16 %v5521, %v5519
        %v6414 = vpack.c.b16 %v5522, %v5520
        %v6415 = vpack.c.b16 %v5525, %v5523
        %v6416 = vpack.c.b16 %v5526, %v5524
        %v6417 = vpack.c.b16 %v5529, %v5527
        %v6418 = vpack.c.b16 %v5530, %v5528
        %v6419 = vpack.c.b16 %v5533, %v5531
        %v6420 = vpack.c.b16 %v5534, %v5532
        %v6421 = vpack.c.b16 %v5537, %v5535
        %v6422 = vpack.c.b16 %v5538, %v5536
        %v6423 = vpack.c.b16 %v5541, %v5539
        %v6424 = vpack.c.b16 %v5542, %v5540
        %v6425 = vpack.c.b16 %v5545, %v5543
        %v6426 = vpack.c.b16 %v5546, %v5544
        %v6427 = vpack.c.b16 %v5549, %v5547
        %v6428 = vpack.c.b16 %v5550, %v5548
        %v6429 = vpack.c.b16 %v5553, %v5551
        %v6430 = vpack.c.b16 %v5554, %v5552
        %v6431 = vpack.c.b16 %v5557, %v5555
        %v6432 = vpack.c.b16 %v5558, %v5556
        %v6433 = vpack.c.b16 %v5561, %v5559
        %v6434 = vpack.c.b16 %v5562, %v5560
        %v6435 = vpack.c.b16 %v5565, %v5563
        %v6436 = vpack.c.b16 %v5566, %v5564
        %v6437 = vpack.c.b16 %v5569, %v5567
        %v6438 = vpack.c.b16 %v5570, %v5568
        %v6439 = vpack.c.b16 %v5573, %v5571
        %v6440 = vpack.c.b16 %v5574, %v5572
        %v6441 = vpack.c.b16 %v5577, %v5575
        %v6442 = vpack.c.b16 %v5578, %v5576
        %v6443 = vpack.c.b16 %v5581, %v5579
        %v6444 = vpack.c.b16 %v5582, %v5580
        %v6445 = vpack.c.b16 %v5585, %v5583
        %v6446 = vpack.c.b16 %v5586, %v5584
        %v6447 = vpack.c.b16 %v5589, %v5587
        %v6448 = vpack.c.b16 %v5590, %v5588
        %v6449 = vpack.c.b16 %v5593, %v5591
        %v6450 = vpack.c.b16 %v5594, %v5592
        %v6451 = vpack.c.b16 %v5597, %v5595
        %v6452 = vpack.c.b16 %v5598, %v5596
        %v6453 = vpack.c.b16 %v5601, %v5599
        %v6454 = vpack.c.b16 %v5602, %v5600
        %v6455 = vpack.c.b16 %v5605, %v5603
        %v6456 = vpack.c.b16 %v5606, %v5604
        %v6457 = vpack.c.b16 %v5609, %v5607
        %v6458 = vpack.c.b16 %v5610, %v5608
        %v6459 = vpack.c.b16 %v5613, %v5611
        %v6460 = vpack.c.b16 %v5614, %v5612
        %v6461 = vpack.c.b16 %v5617, %v5615
        %v6462 = vpack.c.b16 %v5618, %v5616
        %v6463 = vpack.c.b16 %v5621, %v5619
        %v6464 = vpack.c.b16 %v5622, %v5620
        %v6465 = vpack.c.b16 %v5625, %v5623
        %v6466 = vpack.c.b16 %v5626, %v5624
        %v6467 = vpack.c.b16 %v5629, %v5627
        %v6468 = vpack.c.b16 %v5630, %v5628
        %v6469 = vpack.c.b16 %v5633, %v5631
        %v6470 = vpack.c.b16 %v5634, %v5632
        %v6471 = vpack.c.b16 %v5637, %v5635
        %v6472 = vpack.c.b16 %v5638, %v5636
        %v6473 = vpack.c.b16 %v5641, %v5639
        %v6474 = vpack.c.b16 %v5642, %v5640
        %v6475 = vpack.c.b16 %v5645, %v5643
        %v6476 = vpack.c.b16 %v5646, %v5644
        %v6477 = vpack.c.b16 %v5649, %v5647
        %v6478 = vpack.c.b16 %v5650, %v5648
        %v6479 = vpack.c.b16 %v5653, %v5651
        %v6480 = vpack.c.b16 %v5654, %v5652
        %v6481 = vpack.c.b16 %v5657, %v5655
        %v6482 = vpack.c.b16 %v5658, %v5656
        %v6483 = vpack.c.b16 %v5661, %v5659
        %v6484 = vpack.c.b16 %v5662, %v5660
        %v6485 = vpack.c.b16 %v5665, %v5663
        %v6486 = vpack.c.b16 %v5666, %v5664
        %v6487 = vpack.c.b16 %v5669, %v5667
        %v6488 = vpack.c.b16 %v5670, %v5668
        %v6489 = vpack.c.b16 %v5673, %v5671
        %v6490 = vpack.c.b16 %v5674, %v5672
        %v6491 = vpack.c.b16 %v5677, %v5675
        %v6492 = vpack.c.b16 %v5678, %v5676
        %v6493 = vpack.c.b16 %v5681, %v5679
        %v6494 = vpack.c.b16 %v5682, %v5680
        %v6495 = vpack.c.b16 %v5685, %v5683
        %v6496 = vpack.c.b16 %v5686, %v5684
        %v6497 = vpack.c.b16 %v5689, %v5687
        %v6498 = vpack.c.b16 %v5690, %v5688
        %v6499 = vpack.c.b16 %v5693, %v5691
        %v6500 = vpack.c.b16 %v5694, %v5692
        %v6501 = vpack.c.b16 %v5697, %v5695
        %v6502 = vpack.c.b16 %v5698, %v5696
        %v6503 = vpack.c.b16 %v5701, %v5699
        %v6504 = vpack.c.b16 %v5702, %v5700
        %v6505 = vpack.c.b16 %v5705, %v5703
        %v6506 = vpack.c.b16 %v5706, %v5704
        %v6507 = vpack.c.b16 %v5709, %v5707
        %v6508 = vpack.c.b16 %v5710, %v5708
        %v6509 = vpack.c.b16 %v5713, %v5711
        %v6510 = vpack.c.b16 %v5714, %v5712
        %v6511 = vpack.c.b16 %v5717, %v5715
        %v6512 = vpack.c.b16 %v5718, %v5716
        %v6513 = vpack.c.b16 %v5721, %v5719
        %v6514 = vpack.c.b16 %v5722, %v5720
        %v6515 = vpack.c.b16 %v5725, %v5723
        %v6516 = vpack.c.b16 %v5726, %v5724
        %v6517 = vpack.c.b16 %v5729, %v5727
        %v6518 = vpack.c.b16 %v5730, %v5728
        %v6519 = vpack.c.b16 %v5733, %v5731
        %v6520 = vpack.c.b16 %v5734, %v5732
        %v6521 = vpack.c.b16 %v5737, %v5735
        %v6522 = vpack.c.b16 %v5738, %v5736
        %v6523 = vpack.c.b16 %v5741, %v5739
        %v6524 = vpack.c.b16 %v5742, %v5740
        %v6525 = vpack.c.b16 %v5745, %v5743
        %v6526 = vpack.c.b16 %v5746, %v5744
        %v6527 = vpack.c.b16 %v5749, %v5747
        %v6528 = vpack.c.b16 %v5750, %v5748
        %v6529 = vpack.c.b16 %v5753, %v5751
        %v6530 = vpack.c.b16 %v5754, %v5752
        %v6531 = vpack.c.b16 %v5757, %v5755
        %v6532 = vpack.c.b16 %v5758, %v5756
        %v6533 = vpack.c.b16 %v5761, %v5759
        %v6534 = vpack.c.b16 %v5762, %v5760
        %v6535 = vpack.c.b16 %v5765, %v5763
        %v6536 = vpack.c.b16 %v5766, %v5764
        %v6537 = vpack.c.b16 %v5769, %v5767
        %v6538 = vpack.c.b16 %v5770, %v5768
        %v6539 = vpack.c.b16 %v5773, %v5771
        %v6540 = vpack.c.b16 %v5774, %v5772
        %v6541 = vpack.c.b16 %v5777, %v5775
        %v6542 = vpack.c.b16 %v5778, %v5776
        %v6543 = vpack.c.b16 %v5781, %v5779
        %v6544 = vpack.c.b16 %v5782, %v5780
        %v6545 = vpack.c.b16 %v5785, %v5783
        %v6546 = vpack.c.b16 %v5786, %v5784
        %v6547 = vpack.c.b16 %v5789, %v5787
        %v6548 = vpack.c.b16 %v5790, %v5788
        %v6549 = vpack.c.b16 %v5793, %v5791
        %v6550 = vpack.c.b16 %v5794, %v5792
        %v6551 = vpack.c.b16 %v5797, %v5795
        %v6552 = vpack.c.b16 %v5798, %v5796
        %v6553 = vpack.c.b16 %v5801, %v5799
        %v6554 = vpack.c.b16 %v5802, %v5800
        %v6555 = vpack.c.b16 %v5805, %v5803
        %v6556 = vpack.c.b16 %v5806, %v5804
        %v6557 = vpack.c.b16 %v5809, %v5807
        %v6558 = vpack.c.b16 %v5810, %v5808
        %v6559 = vpack.c.b16 %v5813, %v5811
        %v6560 = vpack.c.b16 %v5814, %v5812
        %v6561 = vpack.c.b16 %v5817, %v5815
        %v6562 = vpack.c.b16 %v5818, %v5816
        %v6563 = vpack.c.b16 %v5821, %v5819
        %v6564 = vpack.c.b16 %v5822, %v5820
        %v6565 = vpack.c.b16 %v5825, %v5823
        %v6566 = vpack.c.b16 %v5826, %v5824
        %v6567 = vpack.c.b16 %v5829, %v5827
        %v6568 = vpack.c.b16 %v5830, %v5828
        %v6569 = vpack.c.b16 %v5833, %v5831
        %v6570 = vpack.c.b16 %v5834, %v5832
        %v6571 = vpack.c.b16 %v5837, %v5835
        %v6572 = vpack.c.b16 %v5838, %v5836
        %v6573 = vpack.c.b16 %v5841, %v5839
        %v6574 = vpack.c.b16 %v5842, %v5840
        %v6575 = vpack.c.b16 %v5845, %v5843
        %v6576 = vpack.c.b16 %v5846, %v5844
        %v6577 = vpack.c.b16 %v5849, %v5847
        %v6578 = vpack.c.b16 %v5850, %v5848
        %v6579 = vpack.c.b16 %v5853, %v5851
        %v6580 = vpack.c.b16 %v5854, %v5852
        %v6581 = vpack.c.b16 %v5857, %v5855
        %v6582 = vpack.c.b16 %v5858, %v5856
        %v6583 = vpack.c.b16 %v5861, %v5859
        %v6584 = vpack.c.b16 %v5862, %v5860
        %v6585 = vpack.c.b16 %v5865, %v5863
        %v6586 = vpack.c.b16 %v5866, %v5864
        %v6587 = vpack.c.b16 %v5869, %v5867
        %v6588 = vpack.c.b16 %v5870, %v5868
        %v6589 = vpack.c.b16 %v5873, %v5871
        %v6590 = vpack.c.b16 %v5874, %v5872
        %v6591 = vpack.c.b16 %v5877, %v5875
        %v6592 = vpack.c.b16 %v5878, %v5876
        %v6593 = vpack.c.b16 %v5881, %v5879
        %v6594 = vpack.c.b16 %v5882, %v5880
        %v6595 = vpack.c.b16 %v5885, %v5883
        %v6596 = vpack.c.b16 %v5886, %v5884
        %v6597 = vpack.c.b16 %v5889, %v5887
        %v6598 = vpack.c.b16 %v5890, %v5888
        %v6599 = vpack.c.b16 %v5893, %v5891
        %v6600 = vpack.c.b16 %v5894, %v5892
        %v6601 = vpack.c.b16 %v5897, %v5895
        %v6602 = vpack.c.b16 %v5898, %v5896
        %v6603 = vpack.c.b16 %v5901, %v5899
        %v6604 = vpack.c.b16 %v5902, %v5900
        %v6605 = vpack.c.b16 %v5905, %v5903
        %v6606 = vpack.c.b16 %v5906, %v5904
        %v6607 = vpack.c.b16 %v5909, %v5907
        %v6608 = vpack.c.b16 %v5910, %v5908
        %v6609 = vpack.c.b16 %v5913, %v5911
        %v6610 = vpack.c.b16 %v5914, %v5912
        %v6611 = vpack.c.b16 %v5917, %v5915
        %v6612 = vpack.c.b16 %v5918, %v5916
        %v6613 = vpack.c.b16 %v5921, %v5919
        %v6614 = vpack.c.b16 %v5922, %v5920
        %v6615 = vpack.c.b16 %v5925, %v5923
        %v6616 = vpack.c.b16 %v5926, %v5924
        %v6617 = vpack.c.b16 %v5929, %v5927
        %v6618 = vpack.c.b16 %v5930, %v5928
        %v6619 = vpack.c.b16 %v5933, %v5931
        %v6620 = vpack.c.b16 %v5934, %v5932
        %v6621 = vpack.c.b16 %v5937, %v5935
        %v6622 = vpack.c.b16 %v5938, %v5936
        %v6623 = vpack.c.b16 %v5941, %v5939
        %v6624 = vpack.c.b16 %v5942, %v5940
        %v6625 = vpack.c.b16 %v5945, %v5943
        %v6626 = vpack.c.b16 %v5946, %v5944
        %v6627 = vpack.c.b16 %v5949, %v5947
        %v6628 = vpack.c.b16 %v5950, %v5948
        %v6629 = vpack.c.b16 %v5953, %v5951
        %v6630 = vpack.c.b16 %v5954, %v5952
        %v6631 = vpack.c.b16 %v5957, %v5955
        %v6632 = vpack.c.b16 %v5958, %v5956
        %v6633 = vpack.c.b16 %v5961, %v5959
        %v6634 = vpack.c.b16 %v5962, %v5960
        %v6635 = vpack.c.b16 %v5965, %v5963
        %v6636 = vpack.c.b16 %v5966, %v5964
        %v6637 = vpack.c.b16 %v5969, %v5967
        %v6638 = vpack.c.b16 %v5970, %v5968
        %v6639 = vpack.c.b16 %v5973, %v5971
        %v6640 = vpack.c.b16 %v5974, %v5972
        %v6641 = vpack.c.b16 %v5977, %v5975
        %v6642 = vpack.c.b16 %v5978, %v5976
        %v6643 = vpack.c.b16 %v5981, %v5979
        %v6644 = vpack.c.b16 %v5982, %v5980
        %v6645 = vpack.c.b16 %v5985, %v5983
        %v6646 = vpack.c.b16 %v5986, %v5984
        %v6647 = vpack.c.b16 %v5989, %v5987
        %v6648 = vpack.c.b16 %v5990, %v5988
        %v6649 = vpack.c.b16 %v5993, %v5991
        %v6650 = vpack.c.b16 %v5994, %v5992
        %v6651 = vpack.c.b16 %v5997, %v5995
        %v6652 = vpack.c.b16 %v5998, %v5996
        %v6653 = vpack.c.b16 %v6001, %v5999
        %v6654 = vpack.c.b16 %v6002, %v6000
        %v6655 = vpack.c.b16 %v6005, %v6003
        %v6656 = vpack.c.b16 %v6006, %v6004
        %v6657 = vpack.c.b16 %v6009, %v6007
        %v6658 = vpack.c.b16 %v6010, %v6008
        %v6659 = vpack.c.b16 %v6013, %v6011
        %v6660 = vpack.c.b16 %v6014, %v6012
        %v6661 = vpack.c.b16 %v6017, %v6015
        %v6662 = vpack.c.b16 %v6018, %v6016
        %v6663 = vpack.c.b16 %v6021, %v6019
        %v6664 = vpack.c.b16 %v6022, %v6020
        %v6665 = vpack.c.b16 %v6025, %v6023
        %v6666 = vpack.c.b16 %v6026, %v6024
        %v6667 = vpack.c.b16 %v6029, %v6027
        %v6668 = vpack.c.b16 %v6030, %v6028
        %v6669 = vpack.c.b16 %v6033, %v6031
        %v6670 = vpack.c.b16 %v6034, %v6032
        %v6671 = vpack.c.b16 %v6037, %v6035
        %v6672 = vpack.c.b16 %v6038, %v6036
        %v6673 = vpack.c.b16 %v6041, %v6039
        %v6674 = vpack.c.b16 %v6042, %v6040
        %v6675 = vpack.c.b16 %v6045, %v6043
        %v6676 = vpack.c.b16 %v6046, %v6044
        %v6677 = vpack.c.b16 %v6049, %v6047
        %v6678 = vpack.c.b16 %v6050, %v6048
        %v6679 = vpack.c.b16 %v6053, %v6051
        %v6680 = vpack.c.b16 %v6054, %v6052
        %v6681 = vpack.c.b16 %v6057, %v6055
        %v6682 = vpack.c.b16 %v6058, %v6056
        %v6683 = vpack.c.b16 %v6061, %v6059
        %v6684 = vpack.c.b16 %v6062, %v6060
        %v6685 = vpack.c.b16 %v6065, %v6063
        %v6686 = vpack.c.b16 %v6066, %v6064
        %v6687 = vpack.c.b16 %v6069, %v6067
        %v6688 = vpack.c.b16 %v6070, %v6068
        %v6689 = vpack.c.b16 %v6073, %v6071
        %v6690 = vpack.c.b16 %v6074, %v6072
        %v6691 = vpack.c.b16 %v6077, %v6075
        %v6692 = vpack.c.b16 %v6078, %v6076
        %v6693 = vpack.c.b16 %v6081, %v6079
        %v6694 = vpack.c.b16 %v6082, %v6080
        %v6695 = vpack.c.b16 %v6085, %v6083
        %v6696 = vpack.c.b16 %v6086, %v6084
        %v6697 = vpack.c.b16 %v6089, %v6087
        %v6698 = vpack.c.b16 %v6090, %v6088
        %v6699 = vpack.c.b16 %v6093, %v6091
        %v6700 = vpack.c.b16 %v6094, %v6092
        %v6701 = vpack.c.b16 %v6097, %v6095
        %v6702 = vpack.c.b16 %v6098, %v6096
        %v6703 = vpack.c.b16 %v6101, %v6099
        %v6704 = vpack.c.b16 %v6102, %v6100
        %v6705 = vpack.c.b16 %v6105, %v6103
        %v6706 = vpack.c.b16 %v6106, %v6104
        %v6707 = vpack.c.b16 %v6109, %v6107
        %v6708 = vpack.c.b16 %v6110, %v6108
        %v6709 = vpack.c.b16 %v6113, %v6111
        %v6710 = vpack.c.b16 %v6114, %v6112
        %v6711 = vpack.c.b16 %v6117, %v6115
        %v6712 = vpack.c.b16 %v6118, %v6116
        %v6713 = vpack.c.b16 %v6121, %v6119
        %v6714 = vpack.c.b16 %v6122, %v6120
        %v6715 = vpack.c.b16 %v6125, %v6123
        %v6716 = vpack.c.b16 %v6126, %v6124
        %v6717 = vpack.c.b16 %v6129, %v6127
        %v6718 = vpack.c.b16 %v6130, %v6128
        %v6719 = vpack.c.b16 %v6133, %v6131
        %v6720 = vpack.c.b16 %v6134, %v6132
        %v6721 = vpack.c.b16 %v6137, %v6135
        %v6722 = vpack.c.b16 %v6138, %v6136
        %v6723 = vpack.c.b16 %v6141, %v6139
        %v6724 = vpack.c.b16 %v6142, %v6140
        %v6725 = vpack.c.b16 %v6145, %v6143
        %v6726 = vpack.c.b16 %v6146, %v6144
        %v6727 = vpack.c.b16 %v6149, %v6147
        %v6728 = vpack.c.b16 %v6150, %v6148
        %v6729 = vpack.c.b16 %v6153, %v6151
        %v6730 = vpack.c.b16 %v6154, %v6152
        %v6731 = vpack.c.b16 %v6157, %v6155
        %v6732 = vpack.c.b16 %v6158, %v6156
        %v6733 = vpack.c.b16 %v6161, %v6159
        %v6734 = vpack.c.b16 %v6162, %v6160
        %v6735 = vpack.c.b16 %v6165, %v6163
        %v6736 = vpack.c.b16 %v6166, %v6164
        %v6737 = vpack.c.b16 %v6169, %v6167
        %v6738 = vpack.c.b16 %v6170, %v6168
        %v6739 = vpack.c.b16 %v6173, %v6171
        %v6740 = vpack.c.b16 %v6174, %v6172
        %v6741 = vpack.c.b16 %v6177, %v6175
        %v6742 = vpack.c.b16 %v6178, %v6176
        %v6743 = vpack.c.b16 %v6181, %v6179
        %v6744 = vpack.c.b16 %v6182, %v6180
        %v6745 = vpack.c.b16 %v6185, %v6183
        %v6746 = vpack.c.b16 %v6186, %v6184
        %v6747 = vpack.c.b16 %v6189, %v6187
        %v6748 = vpack.c.b16 %v6190, %v6188
        %v6749 = vpack.c.b16 %v6193, %v6191
        %v6750 = vpack.c.b16 %v6194, %v6192
        %v6751 = vpack.c.b16 %v6197, %v6195
        %v6752 = vpack.c.b16 %v6198, %v6196
        %v6753 = vpack.c.b16 %v6201, %v6199
        %v6754 = vpack.c.b16 %v6202, %v6200
        %v6755 = vpack.c.b16 %v6205, %v6203
        %v6756 = vpack.c.b16 %v6206, %v6204
        %v6757 = vpack.c.b16 %v6209, %v6207
        %v6758 = vpack.c.b16 %v6210, %v6208
        %v6759 = vpack.c.b16 %v6213, %v6211
        %v6760 = vpack.c.b16 %v6214, %v6212
        %v6761 = vpack.c.b16 %v6217, %v6215
        %v6762 = vpack.c.b16 %v6218, %v6216
        %v6763 = vpack.c.b16 %v6221, %v6219
        %v6764 = vpack.c.b16 %v6222, %v6220
        %v6765 = vpack.c.b16 %v6225, %v6223
        %v6766 = vpack.c.b16 %v6226, %v6224
        %v6767 = vpack.c.b16 %v6229, %v6227
        %v6768 = vpack.c.b16 %v6230, %v6228
        %v6769 = vpack.c.b16 %v6233, %v6231
        %v6770 = vpack.c.b16 %v6234, %v6232
        %v6771 = vpack.c.b16 %v6237, %v6235
        %v6772 = vpack.c.b16 %v6238, %v6236
        %v6773 = vpack.c.b16 %v6241, %v6239
        %v6774 = vpack.c.b16 %v6242, %v6240
        %v6775 = vpack.c.b16 %v6245, %v6243
        %v6776 = vpack.c.b16 %v6246, %v6244
        %v6777 = vpack.c.b16 %v6249, %v6247
        %v6778 = vpack.c.b16 %v6250, %v6248
        %v6779 = vpack.c.b16 %v6253, %v6251
        %v6780 = vpack.c.b16 %v6254, %v6252
        %v6781 = vpack.c.b16 %v6257, %v6255
        %v6782 = vpack.c.b16 %v6258, %v6256
        %v6783 = vpack.c.b16 %v6261, %v6259
        %v6784 = vpack.c.b16 %v6262, %v6260
        %v6785 = vpack.c.b16 %v6265, %v6263
        %v6786 = vpack.c.b16 %v6266, %v6264
        %v6787 = vpack.c.b16 %v6269, %v6267
        %v6788 = vpack.c.b16 %v6270, %v6268
        %v6789 = vpack.c.b16 %v6273, %v6271
        %v6790 = vpack.c.b16 %v6274, %v6272
        %v6791 = vpack.c.b16 %v6277, %v6275
        %v6792 = vpack.c.b16 %v6278, %v6276
        %v6793 = vpack.c.b16 %v6281, %v6279
        %v6794 = vpack.c.b16 %v6282, %v6280
        %7307 = vmatpush.bf16.msra.mxu0 %v6297
        %7308 = vmatpush.bf16.msra.mxu0 %v6295
        %7309 = vmatpush.bf16.msra.mxu0 %v6293
        %7310 = vmatpush.bf16.msra.mxu0 %v6291
        %7311 = vmatpush.bf16.msra.mxu0 %v6289
        %7312 = vmatpush.bf16.msra.mxu0 %v6287
        %7313 = vmatpush.bf16.msra.mxu0 %v6285
        %7314 = vmatpush.bf16.msra.mxu0 %v6283
        %7315 = vmatmul.bf16.gmra.mxu0 %v4091
        %v7316 = vpop.f32.mrf.mxu0
        %v7317 = vadd.f32 %v4731, %v7316
        %v7318 = vpop.f32.mrf.mxu0
        %v7319 = vadd.f32 %v4733, %v7318
        %7320 = vmatmul.bf16.gmra.mxu0 %v4123
        %v7321 = vpop.f32.mrf.mxu0
        %v7322 = vadd.f32 %v4735, %v7321
        %v7323 = vpop.f32.mrf.mxu0
        %v7324 = vadd.f32 %v4737, %v7323
        %7325 = vmatmul.bf16.gmra.mxu0 %v4155
        %v7326 = vpop.f32.mrf.mxu0
        %v7327 = vadd.f32 %v4739, %v7326
        %v7328 = vpop.f32.mrf.mxu0
        %v7329 = vadd.f32 %v4741, %v7328
        %7330 = vmatmul.bf16.gmra.mxu0 %v4187
        %v7331 = vpop.f32.mrf.mxu0
        %v7332 = vadd.f32 %v4743, %v7331
        %v7333 = vpop.f32.mrf.mxu0
        %v7334 = vadd.f32 %v4745, %v7333
        %7335 = vdwg.mxu0
        %7336 = vmatpush.bf16.msra.mxu0 %v6313
        %7337 = vmatpush.bf16.msra.mxu0 %v6311
        %7338 = vmatpush.bf16.msra.mxu0 %v6309
        %7339 = vmatpush.bf16.msra.mxu0 %v6307
        %7340 = vmatpush.bf16.msra.mxu0 %v6305
        %7341 = vmatpush.bf16.msra.mxu0 %v6303
        %7342 = vmatpush.bf16.msra.mxu0 %v6301
        %7343 = vmatpush.bf16.msra.mxu0 %v6299
        %7344 = vmatmul.bf16.gmra.mxu0 %v4092
        %v7345 = vpop.f32.mrf.mxu0
        %v7346 = vadd.f32 %v7317, %v7345
        %v7347 = vpop.f32.mrf.mxu0
        %v7348 = vadd.f32 %v7319, %v7347
        %7349 = vmatmul.bf16.gmra.mxu0 %v4124
        %v7350 = vpop.f32.mrf.mxu0
        %v7351 = vadd.f32 %v7322, %v7350
        %v7352 = vpop.f32.mrf.mxu0
        %v7353 = vadd.f32 %v7324, %v7352
        %7354 = vmatmul.bf16.gmra.mxu0 %v4156
        %v7355 = vpop.f32.mrf.mxu0
        %v7356 = vadd.f32 %v7327, %v7355
        %v7357 = vpop.f32.mrf.mxu0
        %v7358 = vadd.f32 %v7329, %v7357
        %7359 = vmatmul.bf16.gmra.mxu0 %v4188
        %v7360 = vpop.f32.mrf.mxu0
        %v7361 = vadd.f32 %v7332, %v7360
        %v7362 = vpop.f32.mrf.mxu0
        %v7363 = vadd.f32 %v7334, %v7362
        %7364 = vdwg.mxu0
        %7365 = vmatpush.bf16.msra.mxu0 %v6329
        %7366 = vmatpush.bf16.msra.mxu0 %v6327
        %7367 = vmatpush.bf16.msra.mxu0 %v6325
        %7368 = vmatpush.bf16.msra.mxu0 %v6323
        %7369 = vmatpush.bf16.msra.mxu0 %v6321
        %7370 = vmatpush.bf16.msra.mxu0 %v6319
        %7371 = vmatpush.bf16.msra.mxu0 %v6317
        %7372 = vmatpush.bf16.msra.mxu0 %v6315
        %7373 = vmatmul.bf16.gmra.mxu0 %v4093
        %v7374 = vpop.f32.mrf.mxu0
        %v7375 = vadd.f32 %v7346, %v7374
        %v7376 = vpop.f32.mrf.mxu0
        %v7377 = vadd.f32 %v7348, %v7376
        %7378 = vmatmul.bf16.gmra.mxu0 %v4125
        %v7379 = vpop.f32.mrf.mxu0
        %v7380 = vadd.f32 %v7351, %v7379
        %v7381 = vpop.f32.mrf.mxu0
        %v7382 = vadd.f32 %v7353, %v7381
        %7383 = vmatmul.bf16.gmra.mxu0 %v4157
        %v7384 = vpop.f32.mrf.mxu0
        %v7385 = vadd.f32 %v7356, %v7384
        %v7386 = vpop.f32.mrf.mxu0
        %v7387 = vadd.f32 %v7358, %v7386
        %7388 = vmatmul.bf16.gmra.mxu0 %v4189
        %v7389 = vpop.f32.mrf.mxu0
        %v7390 = vadd.f32 %v7361, %v7389
        %v7391 = vpop.f32.mrf.mxu0
        %v7392 = vadd.f32 %v7363, %v7391
        %7393 = vdwg.mxu0
        %7394 = vmatpush.bf16.msra.mxu0 %v6345
        %7395 = vmatpush.bf16.msra.mxu0 %v6343
        %7396 = vmatpush.bf16.msra.mxu0 %v6341
        %7397 = vmatpush.bf16.msra.mxu0 %v6339
        %7398 = vmatpush.bf16.msra.mxu0 %v6337
        %7399 = vmatpush.bf16.msra.mxu0 %v6335
        %7400 = vmatpush.bf16.msra.mxu0 %v6333
        %7401 = vmatpush.bf16.msra.mxu0 %v6331
        %7402 = vmatmul.bf16.gmra.mxu0 %v4094
        %v7403 = vpop.f32.mrf.mxu0
        %v7404 = vadd.f32 %v7375, %v7403
        %v7405 = vpop.f32.mrf.mxu0
        %v7406 = vadd.f32 %v7377, %v7405
        %7407 = vmatmul.bf16.gmra.mxu0 %v4126
        %v7408 = vpop.f32.mrf.mxu0
        %v7409 = vadd.f32 %v7380, %v7408
        %v7410 = vpop.f32.mrf.mxu0
        %v7411 = vadd.f32 %v7382, %v7410
        %7412 = vmatmul.bf16.gmra.mxu0 %v4158
        %v7413 = vpop.f32.mrf.mxu0
        %v7414 = vadd.f32 %v7385, %v7413
        %v7415 = vpop.f32.mrf.mxu0
        %v7416 = vadd.f32 %v7387, %v7415
        %7417 = vmatmul.bf16.gmra.mxu0 %v4190
        %v7418 = vpop.f32.mrf.mxu0
        %v7419 = vadd.f32 %v7390, %v7418
        %v7420 = vpop.f32.mrf.mxu0
        %v7421 = vadd.f32 %v7392, %v7420
        %7422 = vdwg.mxu0
        %7423 = vmatpush.bf16.msra.mxu0 %v6361
        %7424 = vmatpush.bf16.msra.mxu0 %v6359
        %7425 = vmatpush.bf16.msra.mxu0 %v6357
        %7426 = vmatpush.bf16.msra.mxu0 %v6355
        %7427 = vmatpush.bf16.msra.mxu0 %v6353
        %7428 = vmatpush.bf16.msra.mxu0 %v6351
        %7429 = vmatpush.bf16.msra.mxu0 %v6349
        %7430 = vmatpush.bf16.msra.mxu0 %v6347
        %7431 = vmatmul.bf16.gmra.mxu0 %v4095
        %v7432 = vpop.f32.mrf.mxu0
        %v7433 = vadd.f32 %v7404, %v7432
        %v7434 = vpop.f32.mrf.mxu0
        %v7435 = vadd.f32 %v7406, %v7434
        %7436 = vmatmul.bf16.gmra.mxu0 %v4127
        %v7437 = vpop.f32.mrf.mxu0
        %v7438 = vadd.f32 %v7409, %v7437
        %v7439 = vpop.f32.mrf.mxu0
        %v7440 = vadd.f32 %v7411, %v7439
        %7441 = vmatmul.bf16.gmra.mxu0 %v4159
        %v7442 = vpop.f32.mrf.mxu0
        %v7443 = vadd.f32 %v7414, %v7442
        %v7444 = vpop.f32.mrf.mxu0
        %v7445 = vadd.f32 %v7416, %v7444
        %7446 = vmatmul.bf16.gmra.mxu0 %v4191
        %v7447 = vpop.f32.mrf.mxu0
        %v7448 = vadd.f32 %v7419, %v7447
        %v7449 = vpop.f32.mrf.mxu0
        %v7450 = vadd.f32 %v7421, %v7449
        %7451 = vdwg.mxu0
        %7452 = vmatpush.bf16.msra.mxu0 %v6377
        %7453 = vmatpush.bf16.msra.mxu0 %v6375
        %7454 = vmatpush.bf16.msra.mxu0 %v6373
        %7455 = vmatpush.bf16.msra.mxu0 %v6371
        %7456 = vmatpush.bf16.msra.mxu0 %v6369
        %7457 = vmatpush.bf16.msra.mxu0 %v6367
        %7458 = vmatpush.bf16.msra.mxu0 %v6365
        %7459 = vmatpush.bf16.msra.mxu0 %v6363
        %7460 = vmatmul.bf16.gmra.mxu0 %v4096
        %v7461 = vpop.f32.mrf.mxu0
        %v7462 = vadd.f32 %v7433, %v7461
        %v7463 = vpop.f32.mrf.mxu0
        %v7464 = vadd.f32 %v7435, %v7463
        %7465 = vmatmul.bf16.gmra.mxu0 %v4128
        %v7466 = vpop.f32.mrf.mxu0
        %v7467 = vadd.f32 %v7438, %v7466
        %v7468 = vpop.f32.mrf.mxu0
        %v7469 = vadd.f32 %v7440, %v7468
        %7470 = vmatmul.bf16.gmra.mxu0 %v4160
        %v7471 = vpop.f32.mrf.mxu0
        %v7472 = vadd.f32 %v7443, %v7471
        %v7473 = vpop.f32.mrf.mxu0
        %v7474 = vadd.f32 %v7445, %v7473
        %7475 = vmatmul.bf16.gmra.mxu0 %v4192
        %v7476 = vpop.f32.mrf.mxu0
        %v7477 = vadd.f32 %v7448, %v7476
        %v7478 = vpop.f32.mrf.mxu0
        %v7479 = vadd.f32 %v7450, %v7478
        %7480 = vdwg.mxu0
        %7481 = vmatpush.bf16.msra.mxu0 %v6393
        %7482 = vmatpush.bf16.msra.mxu0 %v6391
        %7483 = vmatpush.bf16.msra.mxu0 %v6389
        %7484 = vmatpush.bf16.msra.mxu0 %v6387
        %7485 = vmatpush.bf16.msra.mxu0 %v6385
        %7486 = vmatpush.bf16.msra.mxu0 %v6383
        %7487 = vmatpush.bf16.msra.mxu0 %v6381
        %7488 = vmatpush.bf16.msra.mxu0 %v6379
        %7489 = vmatmul.bf16.gmra.mxu0 %v4097
        %v7490 = vpop.f32.mrf.mxu0
        %v7491 = vadd.f32 %v7462, %v7490
        %v7492 = vpop.f32.mrf.mxu0
        %v7493 = vadd.f32 %v7464, %v7492
        %7494 = vmatmul.bf16.gmra.mxu0 %v4129
        %v7495 = vpop.f32.mrf.mxu0
        %v7496 = vadd.f32 %v7467, %v7495
        %v7497 = vpop.f32.mrf.mxu0
        %v7498 = vadd.f32 %v7469, %v7497
        %7499 = vmatmul.bf16.gmra.mxu0 %v4161
        %v7500 = vpop.f32.mrf.mxu0
        %v7501 = vadd.f32 %v7472, %v7500
        %v7502 = vpop.f32.mrf.mxu0
        %v7503 = vadd.f32 %v7474, %v7502
        %7504 = vmatmul.bf16.gmra.mxu0 %v4193
        %v7505 = vpop.f32.mrf.mxu0
        %v7506 = vadd.f32 %v7477, %v7505
        %v7507 = vpop.f32.mrf.mxu0
        %v7508 = vadd.f32 %v7479, %v7507
        %7509 = vdwg.mxu0
        %7510 = vmatpush.bf16.msra.mxu0 %v6409
        %7511 = vmatpush.bf16.msra.mxu0 %v6407
        %7512 = vmatpush.bf16.msra.mxu0 %v6405
        %7513 = vmatpush.bf16.msra.mxu0 %v6403
        %7514 = vmatpush.bf16.msra.mxu0 %v6401
        %7515 = vmatpush.bf16.msra.mxu0 %v6399
        %7516 = vmatpush.bf16.msra.mxu0 %v6397
        %7517 = vmatpush.bf16.msra.mxu0 %v6395
        %7518 = vmatmul.bf16.gmra.mxu0 %v4098
        %v7519 = vpop.f32.mrf.mxu0
        %v7520 = vadd.f32 %v7491, %v7519
        %v7521 = vpop.f32.mrf.mxu0
        %v7522 = vadd.f32 %v7493, %v7521
        %7523 = vmatmul.bf16.gmra.mxu0 %v4130
        %v7524 = vpop.f32.mrf.mxu0
        %v7525 = vadd.f32 %v7496, %v7524
        %v7526 = vpop.f32.mrf.mxu0
        %v7527 = vadd.f32 %v7498, %v7526
        %7528 = vmatmul.bf16.gmra.mxu0 %v4162
        %v7529 = vpop.f32.mrf.mxu0
        %v7530 = vadd.f32 %v7501, %v7529
        %v7531 = vpop.f32.mrf.mxu0
        %v7532 = vadd.f32 %v7503, %v7531
        %7533 = vmatmul.bf16.gmra.mxu0 %v4194
        %v7534 = vpop.f32.mrf.mxu0
        %v7535 = vadd.f32 %v7506, %v7534
        %v7536 = vpop.f32.mrf.mxu0
        %v7537 = vadd.f32 %v7508, %v7536
        %7538 = vdwg.mxu0
        %7539 = vmatpush.bf16.msra.mxu0 %v6425
        %7540 = vmatpush.bf16.msra.mxu0 %v6423
        %7541 = vmatpush.bf16.msra.mxu0 %v6421
        %7542 = vmatpush.bf16.msra.mxu0 %v6419
        %7543 = vmatpush.bf16.msra.mxu0 %v6417
        %7544 = vmatpush.bf16.msra.mxu0 %v6415
        %7545 = vmatpush.bf16.msra.mxu0 %v6413
        %7546 = vmatpush.bf16.msra.mxu0 %v6411
        %7547 = vmatmul.bf16.gmra.mxu0 %v4099
        %v7548 = vpop.f32.mrf.mxu0
        %v7549 = vadd.f32 %v7520, %v7548
        %v7550 = vpop.f32.mrf.mxu0
        %v7551 = vadd.f32 %v7522, %v7550
        %7552 = vmatmul.bf16.gmra.mxu0 %v4131
        %v7553 = vpop.f32.mrf.mxu0
        %v7554 = vadd.f32 %v7525, %v7553
        %v7555 = vpop.f32.mrf.mxu0
        %v7556 = vadd.f32 %v7527, %v7555
        %7557 = vmatmul.bf16.gmra.mxu0 %v4163
        %v7558 = vpop.f32.mrf.mxu0
        %v7559 = vadd.f32 %v7530, %v7558
        %v7560 = vpop.f32.mrf.mxu0
        %v7561 = vadd.f32 %v7532, %v7560
        %7562 = vmatmul.bf16.gmra.mxu0 %v4195
        %v7563 = vpop.f32.mrf.mxu0
        %v7564 = vadd.f32 %v7535, %v7563
        %v7565 = vpop.f32.mrf.mxu0
        %v7566 = vadd.f32 %v7537, %v7565
        %7567 = vdwg.mxu0
        %7568 = vmatpush.bf16.msra.mxu0 %v6441
        %7569 = vmatpush.bf16.msra.mxu0 %v6439
        %7570 = vmatpush.bf16.msra.mxu0 %v6437
        %7571 = vmatpush.bf16.msra.mxu0 %v6435
        %7572 = vmatpush.bf16.msra.mxu0 %v6433
        %7573 = vmatpush.bf16.msra.mxu0 %v6431
        %7574 = vmatpush.bf16.msra.mxu0 %v6429
        %7575 = vmatpush.bf16.msra.mxu0 %v6427
        %7576 = vmatmul.bf16.gmra.mxu0 %v4100
        %v7577 = vpop.f32.mrf.mxu0
        %v7578 = vadd.f32 %v7549, %v7577
        %v7579 = vpop.f32.mrf.mxu0
        %v7580 = vadd.f32 %v7551, %v7579
        %7581 = vmatmul.bf16.gmra.mxu0 %v4132
        %v7582 = vpop.f32.mrf.mxu0
        %v7583 = vadd.f32 %v7554, %v7582
        %v7584 = vpop.f32.mrf.mxu0
        %v7585 = vadd.f32 %v7556, %v7584
        %7586 = vmatmul.bf16.gmra.mxu0 %v4164
        %v7587 = vpop.f32.mrf.mxu0
        %v7588 = vadd.f32 %v7559, %v7587
        %v7589 = vpop.f32.mrf.mxu0
        %v7590 = vadd.f32 %v7561, %v7589
        %7591 = vmatmul.bf16.gmra.mxu0 %v4196
        %v7592 = vpop.f32.mrf.mxu0
        %v7593 = vadd.f32 %v7564, %v7592
        %v7594 = vpop.f32.mrf.mxu0
        %v7595 = vadd.f32 %v7566, %v7594
        %7596 = vdwg.mxu0
        %7597 = vmatpush.bf16.msra.mxu0 %v6457
        %7598 = vmatpush.bf16.msra.mxu0 %v6455
        %7599 = vmatpush.bf16.msra.mxu0 %v6453
        %7600 = vmatpush.bf16.msra.mxu0 %v6451
        %7601 = vmatpush.bf16.msra.mxu0 %v6449
        %7602 = vmatpush.bf16.msra.mxu0 %v6447
        %7603 = vmatpush.bf16.msra.mxu0 %v6445
        %7604 = vmatpush.bf16.msra.mxu0 %v6443
        %7605 = vmatmul.bf16.gmra.mxu0 %v4101
        %v7606 = vpop.f32.mrf.mxu0
        %v7607 = vadd.f32 %v7578, %v7606
        %v7608 = vpop.f32.mrf.mxu0
        %v7609 = vadd.f32 %v7580, %v7608
        %7610 = vmatmul.bf16.gmra.mxu0 %v4133
        %v7611 = vpop.f32.mrf.mxu0
        %v7612 = vadd.f32 %v7583, %v7611
        %v7613 = vpop.f32.mrf.mxu0
        %v7614 = vadd.f32 %v7585, %v7613
        %7615 = vmatmul.bf16.gmra.mxu0 %v4165
        %v7616 = vpop.f32.mrf.mxu0
        %v7617 = vadd.f32 %v7588, %v7616
        %v7618 = vpop.f32.mrf.mxu0
        %v7619 = vadd.f32 %v7590, %v7618
        %7620 = vmatmul.bf16.gmra.mxu0 %v4197
        %v7621 = vpop.f32.mrf.mxu0
        %v7622 = vadd.f32 %v7593, %v7621
        %v7623 = vpop.f32.mrf.mxu0
        %v7624 = vadd.f32 %v7595, %v7623
        %7625 = vdwg.mxu0
        %7626 = vmatpush.bf16.msra.mxu0 %v6473
        %7627 = vmatpush.bf16.msra.mxu0 %v6471
        %7628 = vmatpush.bf16.msra.mxu0 %v6469
        %7629 = vmatpush.bf16.msra.mxu0 %v6467
        %7630 = vmatpush.bf16.msra.mxu0 %v6465
        %7631 = vmatpush.bf16.msra.mxu0 %v6463
        %7632 = vmatpush.bf16.msra.mxu0 %v6461
        %7633 = vmatpush.bf16.msra.mxu0 %v6459
        %7634 = vmatmul.bf16.gmra.mxu0 %v4102
        %v7635 = vpop.f32.mrf.mxu0
        %v7636 = vadd.f32 %v7607, %v7635
        %v7637 = vpop.f32.mrf.mxu0
        %v7638 = vadd.f32 %v7609, %v7637
        %7639 = vmatmul.bf16.gmra.mxu0 %v4134
        %v7640 = vpop.f32.mrf.mxu0
        %v7641 = vadd.f32 %v7612, %v7640
        %v7642 = vpop.f32.mrf.mxu0
        %v7643 = vadd.f32 %v7614, %v7642
        %7644 = vmatmul.bf16.gmra.mxu0 %v4166
        %v7645 = vpop.f32.mrf.mxu0
        %v7646 = vadd.f32 %v7617, %v7645
        %v7647 = vpop.f32.mrf.mxu0
        %v7648 = vadd.f32 %v7619, %v7647
        %7649 = vmatmul.bf16.gmra.mxu0 %v4198
        %v7650 = vpop.f32.mrf.mxu0
        %v7651 = vadd.f32 %v7622, %v7650
        %v7652 = vpop.f32.mrf.mxu0
        %v7653 = vadd.f32 %v7624, %v7652
        %7654 = vdwg.mxu0
        %7655 = vmatpush.bf16.msra.mxu0 %v6489
        %7656 = vmatpush.bf16.msra.mxu0 %v6487
        %7657 = vmatpush.bf16.msra.mxu0 %v6485
        %7658 = vmatpush.bf16.msra.mxu0 %v6483
        %7659 = vmatpush.bf16.msra.mxu0 %v6481
        %7660 = vmatpush.bf16.msra.mxu0 %v6479
        %7661 = vmatpush.bf16.msra.mxu0 %v6477
        %7662 = vmatpush.bf16.msra.mxu0 %v6475
        %7663 = vmatmul.bf16.gmra.mxu0 %v4103
        %v7664 = vpop.f32.mrf.mxu0
        %v7665 = vadd.f32 %v7636, %v7664
        %v7666 = vpop.f32.mrf.mxu0
        %v7667 = vadd.f32 %v7638, %v7666
        %7668 = vmatmul.bf16.gmra.mxu0 %v4135
        %v7669 = vpop.f32.mrf.mxu0
        %v7670 = vadd.f32 %v7641, %v7669
        %v7671 = vpop.f32.mrf.mxu0
        %v7672 = vadd.f32 %v7643, %v7671
        %7673 = vmatmul.bf16.gmra.mxu0 %v4167
        %v7674 = vpop.f32.mrf.mxu0
        %v7675 = vadd.f32 %v7646, %v7674
        %v7676 = vpop.f32.mrf.mxu0
        %v7677 = vadd.f32 %v7648, %v7676
        %7678 = vmatmul.bf16.gmra.mxu0 %v4199
        %v7679 = vpop.f32.mrf.mxu0
        %v7680 = vadd.f32 %v7651, %v7679
        %v7681 = vpop.f32.mrf.mxu0
        %v7682 = vadd.f32 %v7653, %v7681
        %7683 = vdwg.mxu0
        %7684 = vmatpush.bf16.msra.mxu0 %v6505
        %7685 = vmatpush.bf16.msra.mxu0 %v6503
        %7686 = vmatpush.bf16.msra.mxu0 %v6501
        %7687 = vmatpush.bf16.msra.mxu0 %v6499
        %7688 = vmatpush.bf16.msra.mxu0 %v6497
        %7689 = vmatpush.bf16.msra.mxu0 %v6495
        %7690 = vmatpush.bf16.msra.mxu0 %v6493
        %7691 = vmatpush.bf16.msra.mxu0 %v6491
        %7692 = vmatmul.bf16.gmra.mxu0 %v4104
        %v7693 = vpop.f32.mrf.mxu0
        %v7694 = vadd.f32 %v7665, %v7693
        %v7695 = vpop.f32.mrf.mxu0
        %v7696 = vadd.f32 %v7667, %v7695
        %7697 = vmatmul.bf16.gmra.mxu0 %v4136
        %v7698 = vpop.f32.mrf.mxu0
        %v7699 = vadd.f32 %v7670, %v7698
        %v7700 = vpop.f32.mrf.mxu0
        %v7701 = vadd.f32 %v7672, %v7700
        %7702 = vmatmul.bf16.gmra.mxu0 %v4168
        %v7703 = vpop.f32.mrf.mxu0
        %v7704 = vadd.f32 %v7675, %v7703
        %v7705 = vpop.f32.mrf.mxu0
        %v7706 = vadd.f32 %v7677, %v7705
        %7707 = vmatmul.bf16.gmra.mxu0 %v4200
        %v7708 = vpop.f32.mrf.mxu0
        %v7709 = vadd.f32 %v7680, %v7708
        %v7710 = vpop.f32.mrf.mxu0
        %v7711 = vadd.f32 %v7682, %v7710
        %7712 = vdwg.mxu0
        %7713 = vmatpush.bf16.msra.mxu0 %v6521
        %7714 = vmatpush.bf16.msra.mxu0 %v6519
        %7715 = vmatpush.bf16.msra.mxu0 %v6517
        %7716 = vmatpush.bf16.msra.mxu0 %v6515
        %7717 = vmatpush.bf16.msra.mxu0 %v6513
        %7718 = vmatpush.bf16.msra.mxu0 %v6511
        %7719 = vmatpush.bf16.msra.mxu0 %v6509
        %7720 = vmatpush.bf16.msra.mxu0 %v6507
        %7721 = vmatmul.bf16.gmra.mxu0 %v4105
        %v7722 = vpop.f32.mrf.mxu0
        %v7723 = vadd.f32 %v7694, %v7722
        %v7724 = vpop.f32.mrf.mxu0
        %v7725 = vadd.f32 %v7696, %v7724
        %7726 = vmatmul.bf16.gmra.mxu0 %v4137
        %v7727 = vpop.f32.mrf.mxu0
        %v7728 = vadd.f32 %v7699, %v7727
        %v7729 = vpop.f32.mrf.mxu0
        %v7730 = vadd.f32 %v7701, %v7729
        %7731 = vmatmul.bf16.gmra.mxu0 %v4169
        %v7732 = vpop.f32.mrf.mxu0
        %v7733 = vadd.f32 %v7704, %v7732
        %v7734 = vpop.f32.mrf.mxu0
        %v7735 = vadd.f32 %v7706, %v7734
        %7736 = vmatmul.bf16.gmra.mxu0 %v4201
        %v7737 = vpop.f32.mrf.mxu0
        %v7738 = vadd.f32 %v7709, %v7737
        %v7739 = vpop.f32.mrf.mxu0
        %v7740 = vadd.f32 %v7711, %v7739
        %7741 = vdwg.mxu0
        %7742 = vmatpush.bf16.msra.mxu0 %v6537
        %7743 = vmatpush.bf16.msra.mxu0 %v6535
        %7744 = vmatpush.bf16.msra.mxu0 %v6533
        %7745 = vmatpush.bf16.msra.mxu0 %v6531
        %7746 = vmatpush.bf16.msra.mxu0 %v6529
        %7747 = vmatpush.bf16.msra.mxu0 %v6527
        %7748 = vmatpush.bf16.msra.mxu0 %v6525
        %7749 = vmatpush.bf16.msra.mxu0 %v6523
        %7750 = vmatmul.bf16.gmra.mxu0 %v4106
        %v7751 = vpop.f32.mrf.mxu0
        %v7752 = vadd.f32 %v7723, %v7751
        %v7753 = vpop.f32.mrf.mxu0
        %v7754 = vadd.f32 %v7725, %v7753
        %7755 = vmatmul.bf16.gmra.mxu0 %v4138
        %v7756 = vpop.f32.mrf.mxu0
        %v7757 = vadd.f32 %v7728, %v7756
        %v7758 = vpop.f32.mrf.mxu0
        %v7759 = vadd.f32 %v7730, %v7758
        %7760 = vmatmul.bf16.gmra.mxu0 %v4170
        %v7761 = vpop.f32.mrf.mxu0
        %v7762 = vadd.f32 %v7733, %v7761
        %v7763 = vpop.f32.mrf.mxu0
        %v7764 = vadd.f32 %v7735, %v7763
        %7765 = vmatmul.bf16.gmra.mxu0 %v4202
        %v7766 = vpop.f32.mrf.mxu0
        %v7767 = vadd.f32 %v7738, %v7766
        %v7768 = vpop.f32.mrf.mxu0
        %v7769 = vadd.f32 %v7740, %v7768
        %7770 = vdwg.mxu0
        %7771 = vmatpush.bf16.msra.mxu0 %v6553
        %7772 = vmatpush.bf16.msra.mxu0 %v6551
        %7773 = vmatpush.bf16.msra.mxu0 %v6549
        %7774 = vmatpush.bf16.msra.mxu0 %v6547
        %7775 = vmatpush.bf16.msra.mxu0 %v6545
        %7776 = vmatpush.bf16.msra.mxu0 %v6543
        %7777 = vmatpush.bf16.msra.mxu0 %v6541
        %7778 = vmatpush.bf16.msra.mxu0 %v6539
        %7779 = vmatmul.bf16.gmra.mxu0 %v4107
        %v7780 = vpop.f32.mrf.mxu0
        %v7781 = vadd.f32 %v7752, %v7780
        %v7782 = vpop.f32.mrf.mxu0
        %v7783 = vadd.f32 %v7754, %v7782
        %7784 = vmatmul.bf16.gmra.mxu0 %v4139
        %v7785 = vpop.f32.mrf.mxu0
        %v7786 = vadd.f32 %v7757, %v7785
        %v7787 = vpop.f32.mrf.mxu0
        %v7788 = vadd.f32 %v7759, %v7787
        %7789 = vmatmul.bf16.gmra.mxu0 %v4171
        %v7790 = vpop.f32.mrf.mxu0
        %v7791 = vadd.f32 %v7762, %v7790
        %v7792 = vpop.f32.mrf.mxu0
        %v7793 = vadd.f32 %v7764, %v7792
        %7794 = vmatmul.bf16.gmra.mxu0 %v4203
        %v7795 = vpop.f32.mrf.mxu0
        %v7796 = vadd.f32 %v7767, %v7795
        %v7797 = vpop.f32.mrf.mxu0
        %v7798 = vadd.f32 %v7769, %v7797
        %7799 = vdwg.mxu0
        %7800 = vmatpush.bf16.msra.mxu0 %v6569
        %7801 = vmatpush.bf16.msra.mxu0 %v6567
        %7802 = vmatpush.bf16.msra.mxu0 %v6565
        %7803 = vmatpush.bf16.msra.mxu0 %v6563
        %7804 = vmatpush.bf16.msra.mxu0 %v6561
        %7805 = vmatpush.bf16.msra.mxu0 %v6559
        %7806 = vmatpush.bf16.msra.mxu0 %v6557
        %7807 = vmatpush.bf16.msra.mxu0 %v6555
        %7808 = vmatmul.bf16.gmra.mxu0 %v4108
        %v7809 = vpop.f32.mrf.mxu0
        %v7810 = vadd.f32 %v7781, %v7809
        %v7811 = vpop.f32.mrf.mxu0
        %v7812 = vadd.f32 %v7783, %v7811
        %7813 = vmatmul.bf16.gmra.mxu0 %v4140
        %v7814 = vpop.f32.mrf.mxu0
        %v7815 = vadd.f32 %v7786, %v7814
        %v7816 = vpop.f32.mrf.mxu0
        %v7817 = vadd.f32 %v7788, %v7816
        %7818 = vmatmul.bf16.gmra.mxu0 %v4172
        %v7819 = vpop.f32.mrf.mxu0
        %v7820 = vadd.f32 %v7791, %v7819
        %v7821 = vpop.f32.mrf.mxu0
        %v7822 = vadd.f32 %v7793, %v7821
        %7823 = vmatmul.bf16.gmra.mxu0 %v4204
        %v7824 = vpop.f32.mrf.mxu0
        %v7825 = vadd.f32 %v7796, %v7824
        %v7826 = vpop.f32.mrf.mxu0
        %v7827 = vadd.f32 %v7798, %v7826
        %7828 = vdwg.mxu0
        %7829 = vmatpush.bf16.msra.mxu0 %v6585
        %7830 = vmatpush.bf16.msra.mxu0 %v6583
        %7831 = vmatpush.bf16.msra.mxu0 %v6581
        %7832 = vmatpush.bf16.msra.mxu0 %v6579
        %7833 = vmatpush.bf16.msra.mxu0 %v6577
        %7834 = vmatpush.bf16.msra.mxu0 %v6575
        %7835 = vmatpush.bf16.msra.mxu0 %v6573
        %7836 = vmatpush.bf16.msra.mxu0 %v6571
        %7837 = vmatmul.bf16.gmra.mxu0 %v4109
        %v7838 = vpop.f32.mrf.mxu0
        %v7839 = vadd.f32 %v7810, %v7838
        %v7840 = vpop.f32.mrf.mxu0
        %v7841 = vadd.f32 %v7812, %v7840
        %7842 = vmatmul.bf16.gmra.mxu0 %v4141
        %v7843 = vpop.f32.mrf.mxu0
        %v7844 = vadd.f32 %v7815, %v7843
        %v7845 = vpop.f32.mrf.mxu0
        %v7846 = vadd.f32 %v7817, %v7845
        %7847 = vmatmul.bf16.gmra.mxu0 %v4173
        %v7848 = vpop.f32.mrf.mxu0
        %v7849 = vadd.f32 %v7820, %v7848
        %v7850 = vpop.f32.mrf.mxu0
        %v7851 = vadd.f32 %v7822, %v7850
        %7852 = vmatmul.bf16.gmra.mxu0 %v4205
        %v7853 = vpop.f32.mrf.mxu0
        %v7854 = vadd.f32 %v7825, %v7853
        %v7855 = vpop.f32.mrf.mxu0
        %v7856 = vadd.f32 %v7827, %v7855
        %7857 = vdwg.mxu0
        %7858 = vmatpush.bf16.msra.mxu0 %v6601
        %7859 = vmatpush.bf16.msra.mxu0 %v6599
        %7860 = vmatpush.bf16.msra.mxu0 %v6597
        %7861 = vmatpush.bf16.msra.mxu0 %v6595
        %7862 = vmatpush.bf16.msra.mxu0 %v6593
        %7863 = vmatpush.bf16.msra.mxu0 %v6591
        %7864 = vmatpush.bf16.msra.mxu0 %v6589
        %7865 = vmatpush.bf16.msra.mxu0 %v6587
        %7866 = vmatmul.bf16.gmra.mxu0 %v4110
        %v7867 = vpop.f32.mrf.mxu0
        %v7868 = vadd.f32 %v7839, %v7867
        %v7869 = vpop.f32.mrf.mxu0
        %v7870 = vadd.f32 %v7841, %v7869
        %7871 = vmatmul.bf16.gmra.mxu0 %v4142
        %v7872 = vpop.f32.mrf.mxu0
        %v7873 = vadd.f32 %v7844, %v7872
        %v7874 = vpop.f32.mrf.mxu0
        %v7875 = vadd.f32 %v7846, %v7874
        %7876 = vmatmul.bf16.gmra.mxu0 %v4174
        %v7877 = vpop.f32.mrf.mxu0
        %v7878 = vadd.f32 %v7849, %v7877
        %v7879 = vpop.f32.mrf.mxu0
        %v7880 = vadd.f32 %v7851, %v7879
        %7881 = vmatmul.bf16.gmra.mxu0 %v4206
        %v7882 = vpop.f32.mrf.mxu0
        %v7883 = vadd.f32 %v7854, %v7882
        %v7884 = vpop.f32.mrf.mxu0
        %v7885 = vadd.f32 %v7856, %v7884
        %7886 = vdwg.mxu0
        %7887 = vmatpush.bf16.msra.mxu0 %v6617
        %7888 = vmatpush.bf16.msra.mxu0 %v6615
        %7889 = vmatpush.bf16.msra.mxu0 %v6613
        %7890 = vmatpush.bf16.msra.mxu0 %v6611
        %7891 = vmatpush.bf16.msra.mxu0 %v6609
        %7892 = vmatpush.bf16.msra.mxu0 %v6607
        %7893 = vmatpush.bf16.msra.mxu0 %v6605
        %7894 = vmatpush.bf16.msra.mxu0 %v6603
        %7895 = vmatmul.bf16.gmra.mxu0 %v4111
        %v7896 = vpop.f32.mrf.mxu0
        %v7897 = vadd.f32 %v7868, %v7896
        %v7898 = vpop.f32.mrf.mxu0
        %v7899 = vadd.f32 %v7870, %v7898
        %7900 = vmatmul.bf16.gmra.mxu0 %v4143
        %v7901 = vpop.f32.mrf.mxu0
        %v7902 = vadd.f32 %v7873, %v7901
        %v7903 = vpop.f32.mrf.mxu0
        %v7904 = vadd.f32 %v7875, %v7903
        %7905 = vmatmul.bf16.gmra.mxu0 %v4175
        %v7906 = vpop.f32.mrf.mxu0
        %v7907 = vadd.f32 %v7878, %v7906
        %v7908 = vpop.f32.mrf.mxu0
        %v7909 = vadd.f32 %v7880, %v7908
        %7910 = vmatmul.bf16.gmra.mxu0 %v4207
        %v7911 = vpop.f32.mrf.mxu0
        %v7912 = vadd.f32 %v7883, %v7911
        %v7913 = vpop.f32.mrf.mxu0
        %v7914 = vadd.f32 %v7885, %v7913
        %7915 = vdwg.mxu0
        %7916 = vmatpush.bf16.msra.mxu0 %v6633
        %7917 = vmatpush.bf16.msra.mxu0 %v6631
        %7918 = vmatpush.bf16.msra.mxu0 %v6629
        %7919 = vmatpush.bf16.msra.mxu0 %v6627
        %7920 = vmatpush.bf16.msra.mxu0 %v6625
        %7921 = vmatpush.bf16.msra.mxu0 %v6623
        %7922 = vmatpush.bf16.msra.mxu0 %v6621
        %7923 = vmatpush.bf16.msra.mxu0 %v6619
        %7924 = vmatmul.bf16.gmra.mxu0 %v4112
        %v7925 = vpop.f32.mrf.mxu0
        %v7926 = vadd.f32 %v7897, %v7925
        %v7927 = vpop.f32.mrf.mxu0
        %v7928 = vadd.f32 %v7899, %v7927
        %7929 = vmatmul.bf16.gmra.mxu0 %v4144
        %v7930 = vpop.f32.mrf.mxu0
        %v7931 = vadd.f32 %v7902, %v7930
        %v7932 = vpop.f32.mrf.mxu0
        %v7933 = vadd.f32 %v7904, %v7932
        %7934 = vmatmul.bf16.gmra.mxu0 %v4176
        %v7935 = vpop.f32.mrf.mxu0
        %v7936 = vadd.f32 %v7907, %v7935
        %v7937 = vpop.f32.mrf.mxu0
        %v7938 = vadd.f32 %v7909, %v7937
        %7939 = vmatmul.bf16.gmra.mxu0 %v4208
        %v7940 = vpop.f32.mrf.mxu0
        %v7941 = vadd.f32 %v7912, %v7940
        %v7942 = vpop.f32.mrf.mxu0
        %v7943 = vadd.f32 %v7914, %v7942
        %7944 = vdwg.mxu0
        %7945 = vmatpush.bf16.msra.mxu0 %v6649
        %7946 = vmatpush.bf16.msra.mxu0 %v6647
        %7947 = vmatpush.bf16.msra.mxu0 %v6645
        %7948 = vmatpush.bf16.msra.mxu0 %v6643
        %7949 = vmatpush.bf16.msra.mxu0 %v6641
        %7950 = vmatpush.bf16.msra.mxu0 %v6639
        %7951 = vmatpush.bf16.msra.mxu0 %v6637
        %7952 = vmatpush.bf16.msra.mxu0 %v6635
        %7953 = vmatmul.bf16.gmra.mxu0 %v4113
        %v7954 = vpop.f32.mrf.mxu0
        %v7955 = vadd.f32 %v7926, %v7954
        %v7956 = vpop.f32.mrf.mxu0
        %v7957 = vadd.f32 %v7928, %v7956
        %7958 = vmatmul.bf16.gmra.mxu0 %v4145
        %v7959 = vpop.f32.mrf.mxu0
        %v7960 = vadd.f32 %v7931, %v7959
        %v7961 = vpop.f32.mrf.mxu0
        %v7962 = vadd.f32 %v7933, %v7961
        %7963 = vmatmul.bf16.gmra.mxu0 %v4177
        %v7964 = vpop.f32.mrf.mxu0
        %v7965 = vadd.f32 %v7936, %v7964
        %v7966 = vpop.f32.mrf.mxu0
        %v7967 = vadd.f32 %v7938, %v7966
        %7968 = vmatmul.bf16.gmra.mxu0 %v4209
        %v7969 = vpop.f32.mrf.mxu0
        %v7970 = vadd.f32 %v7941, %v7969
        %v7971 = vpop.f32.mrf.mxu0
        %v7972 = vadd.f32 %v7943, %v7971
        %7973 = vdwg.mxu0
        %7974 = vmatpush.bf16.msra.mxu0 %v6665
        %7975 = vmatpush.bf16.msra.mxu0 %v6663
        %7976 = vmatpush.bf16.msra.mxu0 %v6661
        %7977 = vmatpush.bf16.msra.mxu0 %v6659
        %7978 = vmatpush.bf16.msra.mxu0 %v6657
        %7979 = vmatpush.bf16.msra.mxu0 %v6655
        %7980 = vmatpush.bf16.msra.mxu0 %v6653
        %7981 = vmatpush.bf16.msra.mxu0 %v6651
        %7982 = vmatmul.bf16.gmra.mxu0 %v4114
        %v7983 = vpop.f32.mrf.mxu0
        %v7984 = vadd.f32 %v7955, %v7983
        %v7985 = vpop.f32.mrf.mxu0
        %v7986 = vadd.f32 %v7957, %v7985
        %7987 = vmatmul.bf16.gmra.mxu0 %v4146
        %v7988 = vpop.f32.mrf.mxu0
        %v7989 = vadd.f32 %v7960, %v7988
        %v7990 = vpop.f32.mrf.mxu0
        %v7991 = vadd.f32 %v7962, %v7990
        %7992 = vmatmul.bf16.gmra.mxu0 %v4178
        %v7993 = vpop.f32.mrf.mxu0
        %v7994 = vadd.f32 %v7965, %v7993
        %v7995 = vpop.f32.mrf.mxu0
        %v7996 = vadd.f32 %v7967, %v7995
        %7997 = vmatmul.bf16.gmra.mxu0 %v4210
        %v7998 = vpop.f32.mrf.mxu0
        %v7999 = vadd.f32 %v7970, %v7998
        %v8000 = vpop.f32.mrf.mxu0
        %v8001 = vadd.f32 %v7972, %v8000
        %8002 = vdwg.mxu0
        %8003 = vmatpush.bf16.msra.mxu0 %v6681
        %8004 = vmatpush.bf16.msra.mxu0 %v6679
        %8005 = vmatpush.bf16.msra.mxu0 %v6677
        %8006 = vmatpush.bf16.msra.mxu0 %v6675
        %8007 = vmatpush.bf16.msra.mxu0 %v6673
        %8008 = vmatpush.bf16.msra.mxu0 %v6671
        %8009 = vmatpush.bf16.msra.mxu0 %v6669
        %8010 = vmatpush.bf16.msra.mxu0 %v6667
        %8011 = vmatmul.bf16.gmra.mxu0 %v4115
        %v8012 = vpop.f32.mrf.mxu0
        %v8013 = vadd.f32 %v7984, %v8012
        %v8014 = vpop.f32.mrf.mxu0
        %v8015 = vadd.f32 %v7986, %v8014
        %8016 = vmatmul.bf16.gmra.mxu0 %v4147
        %v8017 = vpop.f32.mrf.mxu0
        %v8018 = vadd.f32 %v7989, %v8017
        %v8019 = vpop.f32.mrf.mxu0
        %v8020 = vadd.f32 %v7991, %v8019
        %8021 = vmatmul.bf16.gmra.mxu0 %v4179
        %v8022 = vpop.f32.mrf.mxu0
        %v8023 = vadd.f32 %v7994, %v8022
        %v8024 = vpop.f32.mrf.mxu0
        %v8025 = vadd.f32 %v7996, %v8024
        %8026 = vmatmul.bf16.gmra.mxu0 %v4211
        %v8027 = vpop.f32.mrf.mxu0
        %v8028 = vadd.f32 %v7999, %v8027
        %v8029 = vpop.f32.mrf.mxu0
        %v8030 = vadd.f32 %v8001, %v8029
        %8031 = vdwg.mxu0
        %8032 = vmatpush.bf16.msra.mxu0 %v6697
        %8033 = vmatpush.bf16.msra.mxu0 %v6695
        %8034 = vmatpush.bf16.msra.mxu0 %v6693
        %8035 = vmatpush.bf16.msra.mxu0 %v6691
        %8036 = vmatpush.bf16.msra.mxu0 %v6689
        %8037 = vmatpush.bf16.msra.mxu0 %v6687
        %8038 = vmatpush.bf16.msra.mxu0 %v6685
        %8039 = vmatpush.bf16.msra.mxu0 %v6683
        %8040 = vmatmul.bf16.gmra.mxu0 %v4116
        %v8041 = vpop.f32.mrf.mxu0
        %v8042 = vadd.f32 %v8013, %v8041
        %v8043 = vpop.f32.mrf.mxu0
        %v8044 = vadd.f32 %v8015, %v8043
        %8045 = vmatmul.bf16.gmra.mxu0 %v4148
        %v8046 = vpop.f32.mrf.mxu0
        %v8047 = vadd.f32 %v8018, %v8046
        %v8048 = vpop.f32.mrf.mxu0
        %v8049 = vadd.f32 %v8020, %v8048
        %8050 = vmatmul.bf16.gmra.mxu0 %v4180
        %v8051 = vpop.f32.mrf.mxu0
        %v8052 = vadd.f32 %v8023, %v8051
        %v8053 = vpop.f32.mrf.mxu0
        %v8054 = vadd.f32 %v8025, %v8053
        %8055 = vmatmul.bf16.gmra.mxu0 %v4212
        %v8056 = vpop.f32.mrf.mxu0
        %v8057 = vadd.f32 %v8028, %v8056
        %v8058 = vpop.f32.mrf.mxu0
        %v8059 = vadd.f32 %v8030, %v8058
        %8060 = vdwg.mxu0
        %8061 = vmatpush.bf16.msra.mxu0 %v6713
        %8062 = vmatpush.bf16.msra.mxu0 %v6711
        %8063 = vmatpush.bf16.msra.mxu0 %v6709
        %8064 = vmatpush.bf16.msra.mxu0 %v6707
        %8065 = vmatpush.bf16.msra.mxu0 %v6705
        %8066 = vmatpush.bf16.msra.mxu0 %v6703
        %8067 = vmatpush.bf16.msra.mxu0 %v6701
        %8068 = vmatpush.bf16.msra.mxu0 %v6699
        %8069 = vmatmul.bf16.gmra.mxu0 %v4117
        %v8070 = vpop.f32.mrf.mxu0
        %v8071 = vadd.f32 %v8042, %v8070
        %v8072 = vpop.f32.mrf.mxu0
        %v8073 = vadd.f32 %v8044, %v8072
        %8074 = vmatmul.bf16.gmra.mxu0 %v4149
        %v8075 = vpop.f32.mrf.mxu0
        %v8076 = vadd.f32 %v8047, %v8075
        %v8077 = vpop.f32.mrf.mxu0
        %v8078 = vadd.f32 %v8049, %v8077
        %8079 = vmatmul.bf16.gmra.mxu0 %v4181
        %v8080 = vpop.f32.mrf.mxu0
        %v8081 = vadd.f32 %v8052, %v8080
        %v8082 = vpop.f32.mrf.mxu0
        %v8083 = vadd.f32 %v8054, %v8082
        %8084 = vmatmul.bf16.gmra.mxu0 %v4213
        %v8085 = vpop.f32.mrf.mxu0
        %v8086 = vadd.f32 %v8057, %v8085
        %v8087 = vpop.f32.mrf.mxu0
        %v8088 = vadd.f32 %v8059, %v8087
        %8089 = vdwg.mxu0
        %8090 = vmatpush.bf16.msra.mxu0 %v6729
        %8091 = vmatpush.bf16.msra.mxu0 %v6727
        %8092 = vmatpush.bf16.msra.mxu0 %v6725
        %8093 = vmatpush.bf16.msra.mxu0 %v6723
        %8094 = vmatpush.bf16.msra.mxu0 %v6721
        %8095 = vmatpush.bf16.msra.mxu0 %v6719
        %8096 = vmatpush.bf16.msra.mxu0 %v6717
        %8097 = vmatpush.bf16.msra.mxu0 %v6715
        %8098 = vmatmul.bf16.gmra.mxu0 %v4118
        %v8099 = vpop.f32.mrf.mxu0
        %v8100 = vadd.f32 %v8071, %v8099
        %v8101 = vpop.f32.mrf.mxu0
        %v8102 = vadd.f32 %v8073, %v8101
        %8103 = vmatmul.bf16.gmra.mxu0 %v4150
        %v8104 = vpop.f32.mrf.mxu0
        %v8105 = vadd.f32 %v8076, %v8104
        %v8106 = vpop.f32.mrf.mxu0
        %v8107 = vadd.f32 %v8078, %v8106
        %8108 = vmatmul.bf16.gmra.mxu0 %v4182
        %v8109 = vpop.f32.mrf.mxu0
        %v8110 = vadd.f32 %v8081, %v8109
        %v8111 = vpop.f32.mrf.mxu0
        %v8112 = vadd.f32 %v8083, %v8111
        %8113 = vmatmul.bf16.gmra.mxu0 %v4214
        %v8114 = vpop.f32.mrf.mxu0
        %v8115 = vadd.f32 %v8086, %v8114
        %v8116 = vpop.f32.mrf.mxu0
        %v8117 = vadd.f32 %v8088, %v8116
        %8118 = vdwg.mxu0
        %8119 = vmatpush.bf16.msra.mxu0 %v6745
        %8120 = vmatpush.bf16.msra.mxu0 %v6743
        %8121 = vmatpush.bf16.msra.mxu0 %v6741
        %8122 = vmatpush.bf16.msra.mxu0 %v6739
        %8123 = vmatpush.bf16.msra.mxu0 %v6737
        %8124 = vmatpush.bf16.msra.mxu0 %v6735
        %8125 = vmatpush.bf16.msra.mxu0 %v6733
        %8126 = vmatpush.bf16.msra.mxu0 %v6731
        %8127 = vmatmul.bf16.gmra.mxu0 %v4119
        %v8128 = vpop.f32.mrf.mxu0
        %v8129 = vadd.f32 %v8100, %v8128
        %v8130 = vpop.f32.mrf.mxu0
        %v8131 = vadd.f32 %v8102, %v8130
        %8132 = vmatmul.bf16.gmra.mxu0 %v4151
        %v8133 = vpop.f32.mrf.mxu0
        %v8134 = vadd.f32 %v8105, %v8133
        %v8135 = vpop.f32.mrf.mxu0
        %v8136 = vadd.f32 %v8107, %v8135
        %8137 = vmatmul.bf16.gmra.mxu0 %v4183
        %v8138 = vpop.f32.mrf.mxu0
        %v8139 = vadd.f32 %v8110, %v8138
        %v8140 = vpop.f32.mrf.mxu0
        %v8141 = vadd.f32 %v8112, %v8140
        %8142 = vmatmul.bf16.gmra.mxu0 %v4215
        %v8143 = vpop.f32.mrf.mxu0
        %v8144 = vadd.f32 %v8115, %v8143
        %v8145 = vpop.f32.mrf.mxu0
        %v8146 = vadd.f32 %v8117, %v8145
        %8147 = vdwg.mxu0
        %8148 = vmatpush.bf16.msra.mxu0 %v6761
        %8149 = vmatpush.bf16.msra.mxu0 %v6759
        %8150 = vmatpush.bf16.msra.mxu0 %v6757
        %8151 = vmatpush.bf16.msra.mxu0 %v6755
        %8152 = vmatpush.bf16.msra.mxu0 %v6753
        %8153 = vmatpush.bf16.msra.mxu0 %v6751
        %8154 = vmatpush.bf16.msra.mxu0 %v6749
        %8155 = vmatpush.bf16.msra.mxu0 %v6747
        %8156 = vmatmul.bf16.gmra.mxu0 %v4120
        %v8157 = vpop.f32.mrf.mxu0
        %v8158 = vadd.f32 %v8129, %v8157
        %v8159 = vpop.f32.mrf.mxu0
        %v8160 = vadd.f32 %v8131, %v8159
        %8161 = vmatmul.bf16.gmra.mxu0 %v4152
        %v8162 = vpop.f32.mrf.mxu0
        %v8163 = vadd.f32 %v8134, %v8162
        %v8164 = vpop.f32.mrf.mxu0
        %v8165 = vadd.f32 %v8136, %v8164
        %8166 = vmatmul.bf16.gmra.mxu0 %v4184
        %v8167 = vpop.f32.mrf.mxu0
        %v8168 = vadd.f32 %v8139, %v8167
        %v8169 = vpop.f32.mrf.mxu0
        %v8170 = vadd.f32 %v8141, %v8169
        %8171 = vmatmul.bf16.gmra.mxu0 %v4216
        %v8172 = vpop.f32.mrf.mxu0
        %v8173 = vadd.f32 %v8144, %v8172
        %v8174 = vpop.f32.mrf.mxu0
        %v8175 = vadd.f32 %v8146, %v8174
        %8176 = vdwg.mxu0
        %8177 = vmatpush.bf16.msra.mxu0 %v6777
        %8178 = vmatpush.bf16.msra.mxu0 %v6775
        %8179 = vmatpush.bf16.msra.mxu0 %v6773
        %8180 = vmatpush.bf16.msra.mxu0 %v6771
        %8181 = vmatpush.bf16.msra.mxu0 %v6769
        %8182 = vmatpush.bf16.msra.mxu0 %v6767
        %8183 = vmatpush.bf16.msra.mxu0 %v6765
        %8184 = vmatpush.bf16.msra.mxu0 %v6763
        %8185 = vmatmul.bf16.gmra.mxu0 %v4121
        %v8186 = vpop.f32.mrf.mxu0
        %v8187 = vadd.f32 %v8158, %v8186
        %v8188 = vpop.f32.mrf.mxu0
        %v8189 = vadd.f32 %v8160, %v8188
        %8190 = vmatmul.bf16.gmra.mxu0 %v4153
        %v8191 = vpop.f32.mrf.mxu0
        %v8192 = vadd.f32 %v8163, %v8191
        %v8193 = vpop.f32.mrf.mxu0
        %v8194 = vadd.f32 %v8165, %v8193
        %8195 = vmatmul.bf16.gmra.mxu0 %v4185
        %v8196 = vpop.f32.mrf.mxu0
        %v8197 = vadd.f32 %v8168, %v8196
        %v8198 = vpop.f32.mrf.mxu0
        %v8199 = vadd.f32 %v8170, %v8198
        %8200 = vmatmul.bf16.gmra.mxu0 %v4217
        %v8201 = vpop.f32.mrf.mxu0
        %v8202 = vadd.f32 %v8173, %v8201
        %v8203 = vpop.f32.mrf.mxu0
        %v8204 = vadd.f32 %v8175, %v8203
        %8205 = vdwg.mxu0
        %8206 = vmatpush.bf16.msra.mxu0 %v6793
        %8207 = vmatpush.bf16.msra.mxu0 %v6791
        %8208 = vmatpush.bf16.msra.mxu0 %v6789
        %8209 = vmatpush.bf16.msra.mxu0 %v6787
        %8210 = vmatpush.bf16.msra.mxu0 %v6785
        %8211 = vmatpush.bf16.msra.mxu0 %v6783
        %8212 = vmatpush.bf16.msra.mxu0 %v6781
        %8213 = vmatpush.bf16.msra.mxu0 %v6779
        %8214 = vmatmul.bf16.gmra.mxu0 %v4122
        %v8215 = vpop.f32.mrf.mxu0
        %v8216 = vadd.f32 %v8187, %v8215
        %v8217 = vpop.f32.mrf.mxu0
        %v8218 = vadd.f32 %v8189, %v8217
        %8219 = vmatmul.bf16.gmra.mxu0 %v4154
        %v8220 = vpop.f32.mrf.mxu0
        %v8221 = vadd.f32 %v8192, %v8220
        %v8222 = vpop.f32.mrf.mxu0
        %v8223 = vadd.f32 %v8194, %v8222
        %8224 = vmatmul.bf16.gmra.mxu0 %v4186
        %v8225 = vpop.f32.mrf.mxu0
        %v8226 = vadd.f32 %v8197, %v8225
        %v8227 = vpop.f32.mrf.mxu0
        %v8228 = vadd.f32 %v8199, %v8227
        %8229 = vmatmul.bf16.gmra.mxu0 %v4218
        %v8230 = vpop.f32.mrf.mxu0
        %v8231 = vadd.f32 %v8202, %v8230
        %v8232 = vpop.f32.mrf.mxu0
        %v8233 = vadd.f32 %v8204, %v8232
        %8234 = vdwg.mxu0
        %8235 = vmatpush.bf16.msra.mxu0 %v6298
        %8236 = vmatpush.bf16.msra.mxu0 %v6296
        %8237 = vmatpush.bf16.msra.mxu0 %v6294
        %8238 = vmatpush.bf16.msra.mxu0 %v6292
        %8239 = vmatpush.bf16.msra.mxu0 %v6290
        %8240 = vmatpush.bf16.msra.mxu0 %v6288
        %8241 = vmatpush.bf16.msra.mxu0 %v6286
        %8242 = vmatpush.bf16.msra.mxu0 %v6284
        %8243 = vmatmul.bf16.gmra.mxu0 %v4091
        %v8244 = vpop.f32.mrf.mxu0
        %v8245 = vadd.f32 %v4732, %v8244
        %v8246 = vpop.f32.mrf.mxu0
        %v8247 = vadd.f32 %v4734, %v8246
        %8248 = vmatmul.bf16.gmra.mxu0 %v4123
        %v8249 = vpop.f32.mrf.mxu0
        %v8250 = vadd.f32 %v4736, %v8249
        %v8251 = vpop.f32.mrf.mxu0
        %v8252 = vadd.f32 %v4738, %v8251
        %8253 = vmatmul.bf16.gmra.mxu0 %v4155
        %v8254 = vpop.f32.mrf.mxu0
        %v8255 = vadd.f32 %v4740, %v8254
        %v8256 = vpop.f32.mrf.mxu0
        %v8257 = vadd.f32 %v4742, %v8256
        %8258 = vmatmul.bf16.gmra.mxu0 %v4187
        %v8259 = vpop.f32.mrf.mxu0
        %v8260 = vadd.f32 %v4744, %v8259
        %v8261 = vpop.f32.mrf.mxu0
        %v8262 = vadd.f32 %v4746, %v8261
        %8263 = vdwg.mxu0
        %8264 = vmatpush.bf16.msra.mxu0 %v6314
        %8265 = vmatpush.bf16.msra.mxu0 %v6312
        %8266 = vmatpush.bf16.msra.mxu0 %v6310
        %8267 = vmatpush.bf16.msra.mxu0 %v6308
        %8268 = vmatpush.bf16.msra.mxu0 %v6306
        %8269 = vmatpush.bf16.msra.mxu0 %v6304
        %8270 = vmatpush.bf16.msra.mxu0 %v6302
        %8271 = vmatpush.bf16.msra.mxu0 %v6300
        %8272 = vmatmul.bf16.gmra.mxu0 %v4092
        %v8273 = vpop.f32.mrf.mxu0
        %v8274 = vadd.f32 %v8245, %v8273
        %v8275 = vpop.f32.mrf.mxu0
        %v8276 = vadd.f32 %v8247, %v8275
        %8277 = vmatmul.bf16.gmra.mxu0 %v4124
        %v8278 = vpop.f32.mrf.mxu0
        %v8279 = vadd.f32 %v8250, %v8278
        %v8280 = vpop.f32.mrf.mxu0
        %v8281 = vadd.f32 %v8252, %v8280
        %8282 = vmatmul.bf16.gmra.mxu0 %v4156
        %v8283 = vpop.f32.mrf.mxu0
        %v8284 = vadd.f32 %v8255, %v8283
        %v8285 = vpop.f32.mrf.mxu0
        %v8286 = vadd.f32 %v8257, %v8285
        %8287 = vmatmul.bf16.gmra.mxu0 %v4188
        %v8288 = vpop.f32.mrf.mxu0
        %v8289 = vadd.f32 %v8260, %v8288
        %v8290 = vpop.f32.mrf.mxu0
        %v8291 = vadd.f32 %v8262, %v8290
        %8292 = vdwg.mxu0
        %8293 = vmatpush.bf16.msra.mxu0 %v6330
        %8294 = vmatpush.bf16.msra.mxu0 %v6328
        %8295 = vmatpush.bf16.msra.mxu0 %v6326
        %8296 = vmatpush.bf16.msra.mxu0 %v6324
        %8297 = vmatpush.bf16.msra.mxu0 %v6322
        %8298 = vmatpush.bf16.msra.mxu0 %v6320
        %8299 = vmatpush.bf16.msra.mxu0 %v6318
        %8300 = vmatpush.bf16.msra.mxu0 %v6316
        %8301 = vmatmul.bf16.gmra.mxu0 %v4093
        %v8302 = vpop.f32.mrf.mxu0
        %v8303 = vadd.f32 %v8274, %v8302
        %v8304 = vpop.f32.mrf.mxu0
        %v8305 = vadd.f32 %v8276, %v8304
        %8306 = vmatmul.bf16.gmra.mxu0 %v4125
        %v8307 = vpop.f32.mrf.mxu0
        %v8308 = vadd.f32 %v8279, %v8307
        %v8309 = vpop.f32.mrf.mxu0
        %v8310 = vadd.f32 %v8281, %v8309
        %8311 = vmatmul.bf16.gmra.mxu0 %v4157
        %v8312 = vpop.f32.mrf.mxu0
        %v8313 = vadd.f32 %v8284, %v8312
        %v8314 = vpop.f32.mrf.mxu0
        %v8315 = vadd.f32 %v8286, %v8314
        %8316 = vmatmul.bf16.gmra.mxu0 %v4189
        %v8317 = vpop.f32.mrf.mxu0
        %v8318 = vadd.f32 %v8289, %v8317
        %v8319 = vpop.f32.mrf.mxu0
        %v8320 = vadd.f32 %v8291, %v8319
        %8321 = vdwg.mxu0
        %8322 = vmatpush.bf16.msra.mxu0 %v6346
        %8323 = vmatpush.bf16.msra.mxu0 %v6344
        %8324 = vmatpush.bf16.msra.mxu0 %v6342
        %8325 = vmatpush.bf16.msra.mxu0 %v6340
        %8326 = vmatpush.bf16.msra.mxu0 %v6338
        %8327 = vmatpush.bf16.msra.mxu0 %v6336
        %8328 = vmatpush.bf16.msra.mxu0 %v6334
        %8329 = vmatpush.bf16.msra.mxu0 %v6332
        %8330 = vmatmul.bf16.gmra.mxu0 %v4094
        %v8331 = vpop.f32.mrf.mxu0
        %v8332 = vadd.f32 %v8303, %v8331
        %v8333 = vpop.f32.mrf.mxu0
        %v8334 = vadd.f32 %v8305, %v8333
        %8335 = vmatmul.bf16.gmra.mxu0 %v4126
        %v8336 = vpop.f32.mrf.mxu0
        %v8337 = vadd.f32 %v8308, %v8336
        %v8338 = vpop.f32.mrf.mxu0
        %v8339 = vadd.f32 %v8310, %v8338
        %8340 = vmatmul.bf16.gmra.mxu0 %v4158
        %v8341 = vpop.f32.mrf.mxu0
        %v8342 = vadd.f32 %v8313, %v8341
        %v8343 = vpop.f32.mrf.mxu0
        %v8344 = vadd.f32 %v8315, %v8343
        %8345 = vmatmul.bf16.gmra.mxu0 %v4190
        %v8346 = vpop.f32.mrf.mxu0
        %v8347 = vadd.f32 %v8318, %v8346
        %v8348 = vpop.f32.mrf.mxu0
        %v8349 = vadd.f32 %v8320, %v8348
        %8350 = vdwg.mxu0
        %8351 = vmatpush.bf16.msra.mxu0 %v6362
        %8352 = vmatpush.bf16.msra.mxu0 %v6360
        %8353 = vmatpush.bf16.msra.mxu0 %v6358
        %8354 = vmatpush.bf16.msra.mxu0 %v6356
        %8355 = vmatpush.bf16.msra.mxu0 %v6354
        %8356 = vmatpush.bf16.msra.mxu0 %v6352
        %8357 = vmatpush.bf16.msra.mxu0 %v6350
        %8358 = vmatpush.bf16.msra.mxu0 %v6348
        %8359 = vmatmul.bf16.gmra.mxu0 %v4095
        %v8360 = vpop.f32.mrf.mxu0
        %v8361 = vadd.f32 %v8332, %v8360
        %v8362 = vpop.f32.mrf.mxu0
        %v8363 = vadd.f32 %v8334, %v8362
        %8364 = vmatmul.bf16.gmra.mxu0 %v4127
        %v8365 = vpop.f32.mrf.mxu0
        %v8366 = vadd.f32 %v8337, %v8365
        %v8367 = vpop.f32.mrf.mxu0
        %v8368 = vadd.f32 %v8339, %v8367
        %8369 = vmatmul.bf16.gmra.mxu0 %v4159
        %v8370 = vpop.f32.mrf.mxu0
        %v8371 = vadd.f32 %v8342, %v8370
        %v8372 = vpop.f32.mrf.mxu0
        %v8373 = vadd.f32 %v8344, %v8372
        %8374 = vmatmul.bf16.gmra.mxu0 %v4191
        %v8375 = vpop.f32.mrf.mxu0
        %v8376 = vadd.f32 %v8347, %v8375
        %v8377 = vpop.f32.mrf.mxu0
        %v8378 = vadd.f32 %v8349, %v8377
        %8379 = vdwg.mxu0
        %8380 = vmatpush.bf16.msra.mxu0 %v6378
        %8381 = vmatpush.bf16.msra.mxu0 %v6376
        %8382 = vmatpush.bf16.msra.mxu0 %v6374
        %8383 = vmatpush.bf16.msra.mxu0 %v6372
        %8384 = vmatpush.bf16.msra.mxu0 %v6370
        %8385 = vmatpush.bf16.msra.mxu0 %v6368
        %8386 = vmatpush.bf16.msra.mxu0 %v6366
        %8387 = vmatpush.bf16.msra.mxu0 %v6364
        %8388 = vmatmul.bf16.gmra.mxu0 %v4096
        %v8389 = vpop.f32.mrf.mxu0
        %v8390 = vadd.f32 %v8361, %v8389
        %v8391 = vpop.f32.mrf.mxu0
        %v8392 = vadd.f32 %v8363, %v8391
        %8393 = vmatmul.bf16.gmra.mxu0 %v4128
        %v8394 = vpop.f32.mrf.mxu0
        %v8395 = vadd.f32 %v8366, %v8394
        %v8396 = vpop.f32.mrf.mxu0
        %v8397 = vadd.f32 %v8368, %v8396
        %8398 = vmatmul.bf16.gmra.mxu0 %v4160
        %v8399 = vpop.f32.mrf.mxu0
        %v8400 = vadd.f32 %v8371, %v8399
        %v8401 = vpop.f32.mrf.mxu0
        %v8402 = vadd.f32 %v8373, %v8401
        %8403 = vmatmul.bf16.gmra.mxu0 %v4192
        %v8404 = vpop.f32.mrf.mxu0
        %v8405 = vadd.f32 %v8376, %v8404
        %v8406 = vpop.f32.mrf.mxu0
        %v8407 = vadd.f32 %v8378, %v8406
        %8408 = vdwg.mxu0
        %8409 = vmatpush.bf16.msra.mxu0 %v6394
        %8410 = vmatpush.bf16.msra.mxu0 %v6392
        %8411 = vmatpush.bf16.msra.mxu0 %v6390
        %8412 = vmatpush.bf16.msra.mxu0 %v6388
        %8413 = vmatpush.bf16.msra.mxu0 %v6386
        %8414 = vmatpush.bf16.msra.mxu0 %v6384
        %8415 = vmatpush.bf16.msra.mxu0 %v6382
        %8416 = vmatpush.bf16.msra.mxu0 %v6380
        %8417 = vmatmul.bf16.gmra.mxu0 %v4097
        %v8418 = vpop.f32.mrf.mxu0
        %v8419 = vadd.f32 %v8390, %v8418
        %v8420 = vpop.f32.mrf.mxu0
        %v8421 = vadd.f32 %v8392, %v8420
        %8422 = vmatmul.bf16.gmra.mxu0 %v4129
        %v8423 = vpop.f32.mrf.mxu0
        %v8424 = vadd.f32 %v8395, %v8423
        %v8425 = vpop.f32.mrf.mxu0
        %v8426 = vadd.f32 %v8397, %v8425
        %8427 = vmatmul.bf16.gmra.mxu0 %v4161
        %v8428 = vpop.f32.mrf.mxu0
        %v8429 = vadd.f32 %v8400, %v8428
        %v8430 = vpop.f32.mrf.mxu0
        %v8431 = vadd.f32 %v8402, %v8430
        %8432 = vmatmul.bf16.gmra.mxu0 %v4193
        %v8433 = vpop.f32.mrf.mxu0
        %v8434 = vadd.f32 %v8405, %v8433
        %v8435 = vpop.f32.mrf.mxu0
        %v8436 = vadd.f32 %v8407, %v8435
        %8437 = vdwg.mxu0
        %8438 = vmatpush.bf16.msra.mxu0 %v6410
        %8439 = vmatpush.bf16.msra.mxu0 %v6408
        %8440 = vmatpush.bf16.msra.mxu0 %v6406
        %8441 = vmatpush.bf16.msra.mxu0 %v6404
        %8442 = vmatpush.bf16.msra.mxu0 %v6402
        %8443 = vmatpush.bf16.msra.mxu0 %v6400
        %8444 = vmatpush.bf16.msra.mxu0 %v6398
        %8445 = vmatpush.bf16.msra.mxu0 %v6396
        %8446 = vmatmul.bf16.gmra.mxu0 %v4098
        %v8447 = vpop.f32.mrf.mxu0
        %v8448 = vadd.f32 %v8419, %v8447
        %v8449 = vpop.f32.mrf.mxu0
        %v8450 = vadd.f32 %v8421, %v8449
        %8451 = vmatmul.bf16.gmra.mxu0 %v4130
        %v8452 = vpop.f32.mrf.mxu0
        %v8453 = vadd.f32 %v8424, %v8452
        %v8454 = vpop.f32.mrf.mxu0
        %v8455 = vadd.f32 %v8426, %v8454
        %8456 = vmatmul.bf16.gmra.mxu0 %v4162
        %v8457 = vpop.f32.mrf.mxu0
        %v8458 = vadd.f32 %v8429, %v8457
        %v8459 = vpop.f32.mrf.mxu0
        %v8460 = vadd.f32 %v8431, %v8459
        %8461 = vmatmul.bf16.gmra.mxu0 %v4194
        %v8462 = vpop.f32.mrf.mxu0
        %v8463 = vadd.f32 %v8434, %v8462
        %v8464 = vpop.f32.mrf.mxu0
        %v8465 = vadd.f32 %v8436, %v8464
        %8466 = vdwg.mxu0
        %8467 = vmatpush.bf16.msra.mxu0 %v6426
        %8468 = vmatpush.bf16.msra.mxu0 %v6424
        %8469 = vmatpush.bf16.msra.mxu0 %v6422
        %8470 = vmatpush.bf16.msra.mxu0 %v6420
        %8471 = vmatpush.bf16.msra.mxu0 %v6418
        %8472 = vmatpush.bf16.msra.mxu0 %v6416
        %8473 = vmatpush.bf16.msra.mxu0 %v6414
        %8474 = vmatpush.bf16.msra.mxu0 %v6412
        %8475 = vmatmul.bf16.gmra.mxu0 %v4099
        %v8476 = vpop.f32.mrf.mxu0
        %v8477 = vadd.f32 %v8448, %v8476
        %v8478 = vpop.f32.mrf.mxu0
        %v8479 = vadd.f32 %v8450, %v8478
        %8480 = vmatmul.bf16.gmra.mxu0 %v4131
        %v8481 = vpop.f32.mrf.mxu0
        %v8482 = vadd.f32 %v8453, %v8481
        %v8483 = vpop.f32.mrf.mxu0
        %v8484 = vadd.f32 %v8455, %v8483
        %8485 = vmatmul.bf16.gmra.mxu0 %v4163
        %v8486 = vpop.f32.mrf.mxu0
        %v8487 = vadd.f32 %v8458, %v8486
        %v8488 = vpop.f32.mrf.mxu0
        %v8489 = vadd.f32 %v8460, %v8488
        %8490 = vmatmul.bf16.gmra.mxu0 %v4195
        %v8491 = vpop.f32.mrf.mxu0
        %v8492 = vadd.f32 %v8463, %v8491
        %v8493 = vpop.f32.mrf.mxu0
        %v8494 = vadd.f32 %v8465, %v8493
        %8495 = vdwg.mxu0
        %8496 = vmatpush.bf16.msra.mxu0 %v6442
        %8497 = vmatpush.bf16.msra.mxu0 %v6440
        %8498 = vmatpush.bf16.msra.mxu0 %v6438
        %8499 = vmatpush.bf16.msra.mxu0 %v6436
        %8500 = vmatpush.bf16.msra.mxu0 %v6434
        %8501 = vmatpush.bf16.msra.mxu0 %v6432
        %8502 = vmatpush.bf16.msra.mxu0 %v6430
        %8503 = vmatpush.bf16.msra.mxu0 %v6428
        %8504 = vmatmul.bf16.gmra.mxu0 %v4100
        %v8505 = vpop.f32.mrf.mxu0
        %v8506 = vadd.f32 %v8477, %v8505
        %v8507 = vpop.f32.mrf.mxu0
        %v8508 = vadd.f32 %v8479, %v8507
        %8509 = vmatmul.bf16.gmra.mxu0 %v4132
        %v8510 = vpop.f32.mrf.mxu0
        %v8511 = vadd.f32 %v8482, %v8510
        %v8512 = vpop.f32.mrf.mxu0
        %v8513 = vadd.f32 %v8484, %v8512
        %8514 = vmatmul.bf16.gmra.mxu0 %v4164
        %v8515 = vpop.f32.mrf.mxu0
        %v8516 = vadd.f32 %v8487, %v8515
        %v8517 = vpop.f32.mrf.mxu0
        %v8518 = vadd.f32 %v8489, %v8517
        %8519 = vmatmul.bf16.gmra.mxu0 %v4196
        %v8520 = vpop.f32.mrf.mxu0
        %v8521 = vadd.f32 %v8492, %v8520
        %v8522 = vpop.f32.mrf.mxu0
        %v8523 = vadd.f32 %v8494, %v8522
        %8524 = vdwg.mxu0
        %8525 = vmatpush.bf16.msra.mxu0 %v6458
        %8526 = vmatpush.bf16.msra.mxu0 %v6456
        %8527 = vmatpush.bf16.msra.mxu0 %v6454
        %8528 = vmatpush.bf16.msra.mxu0 %v6452
        %8529 = vmatpush.bf16.msra.mxu0 %v6450
        %8530 = vmatpush.bf16.msra.mxu0 %v6448
        %8531 = vmatpush.bf16.msra.mxu0 %v6446
        %8532 = vmatpush.bf16.msra.mxu0 %v6444
        %8533 = vmatmul.bf16.gmra.mxu0 %v4101
        %v8534 = vpop.f32.mrf.mxu0
        %v8535 = vadd.f32 %v8506, %v8534
        %v8536 = vpop.f32.mrf.mxu0
        %v8537 = vadd.f32 %v8508, %v8536
        %8538 = vmatmul.bf16.gmra.mxu0 %v4133
        %v8539 = vpop.f32.mrf.mxu0
        %v8540 = vadd.f32 %v8511, %v8539
        %v8541 = vpop.f32.mrf.mxu0
        %v8542 = vadd.f32 %v8513, %v8541
        %8543 = vmatmul.bf16.gmra.mxu0 %v4165
        %v8544 = vpop.f32.mrf.mxu0
        %v8545 = vadd.f32 %v8516, %v8544
        %v8546 = vpop.f32.mrf.mxu0
        %v8547 = vadd.f32 %v8518, %v8546
        %8548 = vmatmul.bf16.gmra.mxu0 %v4197
        %v8549 = vpop.f32.mrf.mxu0
        %v8550 = vadd.f32 %v8521, %v8549
        %v8551 = vpop.f32.mrf.mxu0
        %v8552 = vadd.f32 %v8523, %v8551
        %8553 = vdwg.mxu0
        %8554 = vmatpush.bf16.msra.mxu0 %v6474
        %8555 = vmatpush.bf16.msra.mxu0 %v6472
        %8556 = vmatpush.bf16.msra.mxu0 %v6470
        %8557 = vmatpush.bf16.msra.mxu0 %v6468
        %8558 = vmatpush.bf16.msra.mxu0 %v6466
        %8559 = vmatpush.bf16.msra.mxu0 %v6464
        %8560 = vmatpush.bf16.msra.mxu0 %v6462
        %8561 = vmatpush.bf16.msra.mxu0 %v6460
        %8562 = vmatmul.bf16.gmra.mxu0 %v4102
        %v8563 = vpop.f32.mrf.mxu0
        %v8564 = vadd.f32 %v8535, %v8563
        %v8565 = vpop.f32.mrf.mxu0
        %v8566 = vadd.f32 %v8537, %v8565
        %8567 = vmatmul.bf16.gmra.mxu0 %v4134
        %v8568 = vpop.f32.mrf.mxu0
        %v8569 = vadd.f32 %v8540, %v8568
        %v8570 = vpop.f32.mrf.mxu0
        %v8571 = vadd.f32 %v8542, %v8570
        %8572 = vmatmul.bf16.gmra.mxu0 %v4166
        %v8573 = vpop.f32.mrf.mxu0
        %v8574 = vadd.f32 %v8545, %v8573
        %v8575 = vpop.f32.mrf.mxu0
        %v8576 = vadd.f32 %v8547, %v8575
        %8577 = vmatmul.bf16.gmra.mxu0 %v4198
        %v8578 = vpop.f32.mrf.mxu0
        %v8579 = vadd.f32 %v8550, %v8578
        %v8580 = vpop.f32.mrf.mxu0
        %v8581 = vadd.f32 %v8552, %v8580
        %8582 = vdwg.mxu0
        %8583 = vmatpush.bf16.msra.mxu0 %v6490
        %8584 = vmatpush.bf16.msra.mxu0 %v6488
        %8585 = vmatpush.bf16.msra.mxu0 %v6486
        %8586 = vmatpush.bf16.msra.mxu0 %v6484
        %8587 = vmatpush.bf16.msra.mxu0 %v6482
        %8588 = vmatpush.bf16.msra.mxu0 %v6480
        %8589 = vmatpush.bf16.msra.mxu0 %v6478
        %8590 = vmatpush.bf16.msra.mxu0 %v6476
        %8591 = vmatmul.bf16.gmra.mxu0 %v4103
        %v8592 = vpop.f32.mrf.mxu0
        %v8593 = vadd.f32 %v8564, %v8592
        %v8594 = vpop.f32.mrf.mxu0
        %v8595 = vadd.f32 %v8566, %v8594
        %8596 = vmatmul.bf16.gmra.mxu0 %v4135
        %v8597 = vpop.f32.mrf.mxu0
        %v8598 = vadd.f32 %v8569, %v8597
        %v8599 = vpop.f32.mrf.mxu0
        %v8600 = vadd.f32 %v8571, %v8599
        %8601 = vmatmul.bf16.gmra.mxu0 %v4167
        %v8602 = vpop.f32.mrf.mxu0
        %v8603 = vadd.f32 %v8574, %v8602
        %v8604 = vpop.f32.mrf.mxu0
        %v8605 = vadd.f32 %v8576, %v8604
        %8606 = vmatmul.bf16.gmra.mxu0 %v4199
        %v8607 = vpop.f32.mrf.mxu0
        %v8608 = vadd.f32 %v8579, %v8607
        %v8609 = vpop.f32.mrf.mxu0
        %v8610 = vadd.f32 %v8581, %v8609
        %8611 = vdwg.mxu0
        %8612 = vmatpush.bf16.msra.mxu0 %v6506
        %8613 = vmatpush.bf16.msra.mxu0 %v6504
        %8614 = vmatpush.bf16.msra.mxu0 %v6502
        %8615 = vmatpush.bf16.msra.mxu0 %v6500
        %8616 = vmatpush.bf16.msra.mxu0 %v6498
        %8617 = vmatpush.bf16.msra.mxu0 %v6496
        %8618 = vmatpush.bf16.msra.mxu0 %v6494
        %8619 = vmatpush.bf16.msra.mxu0 %v6492
        %8620 = vmatmul.bf16.gmra.mxu0 %v4104
        %v8621 = vpop.f32.mrf.mxu0
        %v8622 = vadd.f32 %v8593, %v8621
        %v8623 = vpop.f32.mrf.mxu0
        %v8624 = vadd.f32 %v8595, %v8623
        %8625 = vmatmul.bf16.gmra.mxu0 %v4136
        %v8626 = vpop.f32.mrf.mxu0
        %v8627 = vadd.f32 %v8598, %v8626
        %v8628 = vpop.f32.mrf.mxu0
        %v8629 = vadd.f32 %v8600, %v8628
        %8630 = vmatmul.bf16.gmra.mxu0 %v4168
        %v8631 = vpop.f32.mrf.mxu0
        %v8632 = vadd.f32 %v8603, %v8631
        %v8633 = vpop.f32.mrf.mxu0
        %v8634 = vadd.f32 %v8605, %v8633
        %8635 = vmatmul.bf16.gmra.mxu0 %v4200
        %v8636 = vpop.f32.mrf.mxu0
        %v8637 = vadd.f32 %v8608, %v8636
        %v8638 = vpop.f32.mrf.mxu0
        %v8639 = vadd.f32 %v8610, %v8638
        %8640 = vdwg.mxu0
        %8641 = vmatpush.bf16.msra.mxu0 %v6522
        %8642 = vmatpush.bf16.msra.mxu0 %v6520
        %8643 = vmatpush.bf16.msra.mxu0 %v6518
        %8644 = vmatpush.bf16.msra.mxu0 %v6516
        %8645 = vmatpush.bf16.msra.mxu0 %v6514
        %8646 = vmatpush.bf16.msra.mxu0 %v6512
        %8647 = vmatpush.bf16.msra.mxu0 %v6510
        %8648 = vmatpush.bf16.msra.mxu0 %v6508
        %8649 = vmatmul.bf16.gmra.mxu0 %v4105
        %v8650 = vpop.f32.mrf.mxu0
        %v8651 = vadd.f32 %v8622, %v8650
        %v8652 = vpop.f32.mrf.mxu0
        %v8653 = vadd.f32 %v8624, %v8652
        %8654 = vmatmul.bf16.gmra.mxu0 %v4137
        %v8655 = vpop.f32.mrf.mxu0
        %v8656 = vadd.f32 %v8627, %v8655
        %v8657 = vpop.f32.mrf.mxu0
        %v8658 = vadd.f32 %v8629, %v8657
        %8659 = vmatmul.bf16.gmra.mxu0 %v4169
        %v8660 = vpop.f32.mrf.mxu0
        %v8661 = vadd.f32 %v8632, %v8660
        %v8662 = vpop.f32.mrf.mxu0
        %v8663 = vadd.f32 %v8634, %v8662
        %8664 = vmatmul.bf16.gmra.mxu0 %v4201
        %v8665 = vpop.f32.mrf.mxu0
        %v8666 = vadd.f32 %v8637, %v8665
        %v8667 = vpop.f32.mrf.mxu0
        %v8668 = vadd.f32 %v8639, %v8667
        %8669 = vdwg.mxu0
        %8670 = vmatpush.bf16.msra.mxu0 %v6538
        %8671 = vmatpush.bf16.msra.mxu0 %v6536
        %8672 = vmatpush.bf16.msra.mxu0 %v6534
        %8673 = vmatpush.bf16.msra.mxu0 %v6532
        %8674 = vmatpush.bf16.msra.mxu0 %v6530
        %8675 = vmatpush.bf16.msra.mxu0 %v6528
        %8676 = vmatpush.bf16.msra.mxu0 %v6526
        %8677 = vmatpush.bf16.msra.mxu0 %v6524
        %8678 = vmatmul.bf16.gmra.mxu0 %v4106
        %v8679 = vpop.f32.mrf.mxu0
        %v8680 = vadd.f32 %v8651, %v8679
        %v8681 = vpop.f32.mrf.mxu0
        %v8682 = vadd.f32 %v8653, %v8681
        %8683 = vmatmul.bf16.gmra.mxu0 %v4138
        %v8684 = vpop.f32.mrf.mxu0
        %v8685 = vadd.f32 %v8656, %v8684
        %v8686 = vpop.f32.mrf.mxu0
        %v8687 = vadd.f32 %v8658, %v8686
        %8688 = vmatmul.bf16.gmra.mxu0 %v4170
        %v8689 = vpop.f32.mrf.mxu0
        %v8690 = vadd.f32 %v8661, %v8689
        %v8691 = vpop.f32.mrf.mxu0
        %v8692 = vadd.f32 %v8663, %v8691
        %8693 = vmatmul.bf16.gmra.mxu0 %v4202
        %v8694 = vpop.f32.mrf.mxu0
        %v8695 = vadd.f32 %v8666, %v8694
        %v8696 = vpop.f32.mrf.mxu0
        %v8697 = vadd.f32 %v8668, %v8696
        %8698 = vdwg.mxu0
        %8699 = vmatpush.bf16.msra.mxu0 %v6554
        %8700 = vmatpush.bf16.msra.mxu0 %v6552
        %8701 = vmatpush.bf16.msra.mxu0 %v6550
        %8702 = vmatpush.bf16.msra.mxu0 %v6548
        %8703 = vmatpush.bf16.msra.mxu0 %v6546
        %8704 = vmatpush.bf16.msra.mxu0 %v6544
        %8705 = vmatpush.bf16.msra.mxu0 %v6542
        %8706 = vmatpush.bf16.msra.mxu0 %v6540
        %8707 = vmatmul.bf16.gmra.mxu0 %v4107
        %v8708 = vpop.f32.mrf.mxu0
        %v8709 = vadd.f32 %v8680, %v8708
        %v8710 = vpop.f32.mrf.mxu0
        %v8711 = vadd.f32 %v8682, %v8710
        %8712 = vmatmul.bf16.gmra.mxu0 %v4139
        %v8713 = vpop.f32.mrf.mxu0
        %v8714 = vadd.f32 %v8685, %v8713
        %v8715 = vpop.f32.mrf.mxu0
        %v8716 = vadd.f32 %v8687, %v8715
        %8717 = vmatmul.bf16.gmra.mxu0 %v4171
        %v8718 = vpop.f32.mrf.mxu0
        %v8719 = vadd.f32 %v8690, %v8718
        %v8720 = vpop.f32.mrf.mxu0
        %v8721 = vadd.f32 %v8692, %v8720
        %8722 = vmatmul.bf16.gmra.mxu0 %v4203
        %v8723 = vpop.f32.mrf.mxu0
        %v8724 = vadd.f32 %v8695, %v8723
        %v8725 = vpop.f32.mrf.mxu0
        %v8726 = vadd.f32 %v8697, %v8725
        %8727 = vdwg.mxu0
        %8728 = vmatpush.bf16.msra.mxu0 %v6570
        %8729 = vmatpush.bf16.msra.mxu0 %v6568
        %8730 = vmatpush.bf16.msra.mxu0 %v6566
        %8731 = vmatpush.bf16.msra.mxu0 %v6564
        %8732 = vmatpush.bf16.msra.mxu0 %v6562
        %8733 = vmatpush.bf16.msra.mxu0 %v6560
        %8734 = vmatpush.bf16.msra.mxu0 %v6558
        %8735 = vmatpush.bf16.msra.mxu0 %v6556
        %8736 = vmatmul.bf16.gmra.mxu0 %v4108
        %v8737 = vpop.f32.mrf.mxu0
        %v8738 = vadd.f32 %v8709, %v8737
        %v8739 = vpop.f32.mrf.mxu0
        %v8740 = vadd.f32 %v8711, %v8739
        %8741 = vmatmul.bf16.gmra.mxu0 %v4140
        %v8742 = vpop.f32.mrf.mxu0
        %v8743 = vadd.f32 %v8714, %v8742
        %v8744 = vpop.f32.mrf.mxu0
        %v8745 = vadd.f32 %v8716, %v8744
        %8746 = vmatmul.bf16.gmra.mxu0 %v4172
        %v8747 = vpop.f32.mrf.mxu0
        %v8748 = vadd.f32 %v8719, %v8747
        %v8749 = vpop.f32.mrf.mxu0
        %v8750 = vadd.f32 %v8721, %v8749
        %8751 = vmatmul.bf16.gmra.mxu0 %v4204
        %v8752 = vpop.f32.mrf.mxu0
        %v8753 = vadd.f32 %v8724, %v8752
        %v8754 = vpop.f32.mrf.mxu0
        %v8755 = vadd.f32 %v8726, %v8754
        %8756 = vdwg.mxu0
        %8757 = vmatpush.bf16.msra.mxu0 %v6586
        %8758 = vmatpush.bf16.msra.mxu0 %v6584
        %8759 = vmatpush.bf16.msra.mxu0 %v6582
        %8760 = vmatpush.bf16.msra.mxu0 %v6580
        %8761 = vmatpush.bf16.msra.mxu0 %v6578
        %8762 = vmatpush.bf16.msra.mxu0 %v6576
        %8763 = vmatpush.bf16.msra.mxu0 %v6574
        %8764 = vmatpush.bf16.msra.mxu0 %v6572
        %8765 = vmatmul.bf16.gmra.mxu0 %v4109
        %v8766 = vpop.f32.mrf.mxu0
        %v8767 = vadd.f32 %v8738, %v8766
        %v8768 = vpop.f32.mrf.mxu0
        %v8769 = vadd.f32 %v8740, %v8768
        %8770 = vmatmul.bf16.gmra.mxu0 %v4141
        %v8771 = vpop.f32.mrf.mxu0
        %v8772 = vadd.f32 %v8743, %v8771
        %v8773 = vpop.f32.mrf.mxu0
        %v8774 = vadd.f32 %v8745, %v8773
        %8775 = vmatmul.bf16.gmra.mxu0 %v4173
        %v8776 = vpop.f32.mrf.mxu0
        %v8777 = vadd.f32 %v8748, %v8776
        %v8778 = vpop.f32.mrf.mxu0
        %v8779 = vadd.f32 %v8750, %v8778
        %8780 = vmatmul.bf16.gmra.mxu0 %v4205
        %v8781 = vpop.f32.mrf.mxu0
        %v8782 = vadd.f32 %v8753, %v8781
        %v8783 = vpop.f32.mrf.mxu0
        %v8784 = vadd.f32 %v8755, %v8783
        %8785 = vdwg.mxu0
        %8786 = vmatpush.bf16.msra.mxu0 %v6602
        %8787 = vmatpush.bf16.msra.mxu0 %v6600
        %8788 = vmatpush.bf16.msra.mxu0 %v6598
        %8789 = vmatpush.bf16.msra.mxu0 %v6596
        %8790 = vmatpush.bf16.msra.mxu0 %v6594
        %8791 = vmatpush.bf16.msra.mxu0 %v6592
        %8792 = vmatpush.bf16.msra.mxu0 %v6590
        %8793 = vmatpush.bf16.msra.mxu0 %v6588
        %8794 = vmatmul.bf16.gmra.mxu0 %v4110
        %v8795 = vpop.f32.mrf.mxu0
        %v8796 = vadd.f32 %v8767, %v8795
        %v8797 = vpop.f32.mrf.mxu0
        %v8798 = vadd.f32 %v8769, %v8797
        %8799 = vmatmul.bf16.gmra.mxu0 %v4142
        %v8800 = vpop.f32.mrf.mxu0
        %v8801 = vadd.f32 %v8772, %v8800
        %v8802 = vpop.f32.mrf.mxu0
        %v8803 = vadd.f32 %v8774, %v8802
        %8804 = vmatmul.bf16.gmra.mxu0 %v4174
        %v8805 = vpop.f32.mrf.mxu0
        %v8806 = vadd.f32 %v8777, %v8805
        %v8807 = vpop.f32.mrf.mxu0
        %v8808 = vadd.f32 %v8779, %v8807
        %8809 = vmatmul.bf16.gmra.mxu0 %v4206
        %v8810 = vpop.f32.mrf.mxu0
        %v8811 = vadd.f32 %v8782, %v8810
        %v8812 = vpop.f32.mrf.mxu0
        %v8813 = vadd.f32 %v8784, %v8812
        %8814 = vdwg.mxu0
        %8815 = vmatpush.bf16.msra.mxu0 %v6618
        %8816 = vmatpush.bf16.msra.mxu0 %v6616
        %8817 = vmatpush.bf16.msra.mxu0 %v6614
        %8818 = vmatpush.bf16.msra.mxu0 %v6612
        %8819 = vmatpush.bf16.msra.mxu0 %v6610
        %8820 = vmatpush.bf16.msra.mxu0 %v6608
        %8821 = vmatpush.bf16.msra.mxu0 %v6606
        %8822 = vmatpush.bf16.msra.mxu0 %v6604
        %8823 = vmatmul.bf16.gmra.mxu0 %v4111
        %v8824 = vpop.f32.mrf.mxu0
        %v8825 = vadd.f32 %v8796, %v8824
        %v8826 = vpop.f32.mrf.mxu0
        %v8827 = vadd.f32 %v8798, %v8826
        %8828 = vmatmul.bf16.gmra.mxu0 %v4143
        %v8829 = vpop.f32.mrf.mxu0
        %v8830 = vadd.f32 %v8801, %v8829
        %v8831 = vpop.f32.mrf.mxu0
        %v8832 = vadd.f32 %v8803, %v8831
        %8833 = vmatmul.bf16.gmra.mxu0 %v4175
        %v8834 = vpop.f32.mrf.mxu0
        %v8835 = vadd.f32 %v8806, %v8834
        %v8836 = vpop.f32.mrf.mxu0
        %v8837 = vadd.f32 %v8808, %v8836
        %8838 = vmatmul.bf16.gmra.mxu0 %v4207
        %v8839 = vpop.f32.mrf.mxu0
        %v8840 = vadd.f32 %v8811, %v8839
        %v8841 = vpop.f32.mrf.mxu0
        %v8842 = vadd.f32 %v8813, %v8841
        %8843 = vdwg.mxu0
        %8844 = vmatpush.bf16.msra.mxu0 %v6634
        %8845 = vmatpush.bf16.msra.mxu0 %v6632
        %8846 = vmatpush.bf16.msra.mxu0 %v6630
        %8847 = vmatpush.bf16.msra.mxu0 %v6628
        %8848 = vmatpush.bf16.msra.mxu0 %v6626
        %8849 = vmatpush.bf16.msra.mxu0 %v6624
        %8850 = vmatpush.bf16.msra.mxu0 %v6622
        %8851 = vmatpush.bf16.msra.mxu0 %v6620
        %8852 = vmatmul.bf16.gmra.mxu0 %v4112
        %v8853 = vpop.f32.mrf.mxu0
        %v8854 = vadd.f32 %v8825, %v8853
        %v8855 = vpop.f32.mrf.mxu0
        %v8856 = vadd.f32 %v8827, %v8855
        %8857 = vmatmul.bf16.gmra.mxu0 %v4144
        %v8858 = vpop.f32.mrf.mxu0
        %v8859 = vadd.f32 %v8830, %v8858
        %v8860 = vpop.f32.mrf.mxu0
        %v8861 = vadd.f32 %v8832, %v8860
        %8862 = vmatmul.bf16.gmra.mxu0 %v4176
        %v8863 = vpop.f32.mrf.mxu0
        %v8864 = vadd.f32 %v8835, %v8863
        %v8865 = vpop.f32.mrf.mxu0
        %v8866 = vadd.f32 %v8837, %v8865
        %8867 = vmatmul.bf16.gmra.mxu0 %v4208
        %v8868 = vpop.f32.mrf.mxu0
        %v8869 = vadd.f32 %v8840, %v8868
        %v8870 = vpop.f32.mrf.mxu0
        %v8871 = vadd.f32 %v8842, %v8870
        %8872 = vdwg.mxu0
        %8873 = vmatpush.bf16.msra.mxu0 %v6650
        %8874 = vmatpush.bf16.msra.mxu0 %v6648
        %8875 = vmatpush.bf16.msra.mxu0 %v6646
        %8876 = vmatpush.bf16.msra.mxu0 %v6644
        %8877 = vmatpush.bf16.msra.mxu0 %v6642
        %8878 = vmatpush.bf16.msra.mxu0 %v6640
        %8879 = vmatpush.bf16.msra.mxu0 %v6638
        %8880 = vmatpush.bf16.msra.mxu0 %v6636
        %8881 = vmatmul.bf16.gmra.mxu0 %v4113
        %v8882 = vpop.f32.mrf.mxu0
        %v8883 = vadd.f32 %v8854, %v8882
        %v8884 = vpop.f32.mrf.mxu0
        %v8885 = vadd.f32 %v8856, %v8884
        %8886 = vmatmul.bf16.gmra.mxu0 %v4145
        %v8887 = vpop.f32.mrf.mxu0
        %v8888 = vadd.f32 %v8859, %v8887
        %v8889 = vpop.f32.mrf.mxu0
        %v8890 = vadd.f32 %v8861, %v8889
        %8891 = vmatmul.bf16.gmra.mxu0 %v4177
        %v8892 = vpop.f32.mrf.mxu0
        %v8893 = vadd.f32 %v8864, %v8892
        %v8894 = vpop.f32.mrf.mxu0
        %v8895 = vadd.f32 %v8866, %v8894
        %8896 = vmatmul.bf16.gmra.mxu0 %v4209
        %v8897 = vpop.f32.mrf.mxu0
        %v8898 = vadd.f32 %v8869, %v8897
        %v8899 = vpop.f32.mrf.mxu0
        %v8900 = vadd.f32 %v8871, %v8899
        %8901 = vdwg.mxu0
        %8902 = vmatpush.bf16.msra.mxu0 %v6666
        %8903 = vmatpush.bf16.msra.mxu0 %v6664
        %8904 = vmatpush.bf16.msra.mxu0 %v6662
        %8905 = vmatpush.bf16.msra.mxu0 %v6660
        %8906 = vmatpush.bf16.msra.mxu0 %v6658
        %8907 = vmatpush.bf16.msra.mxu0 %v6656
        %8908 = vmatpush.bf16.msra.mxu0 %v6654
        %8909 = vmatpush.bf16.msra.mxu0 %v6652
        %8910 = vmatmul.bf16.gmra.mxu0 %v4114
        %v8911 = vpop.f32.mrf.mxu0
        %v8912 = vadd.f32 %v8883, %v8911
        %v8913 = vpop.f32.mrf.mxu0
        %v8914 = vadd.f32 %v8885, %v8913
        %8915 = vmatmul.bf16.gmra.mxu0 %v4146
        %v8916 = vpop.f32.mrf.mxu0
        %v8917 = vadd.f32 %v8888, %v8916
        %v8918 = vpop.f32.mrf.mxu0
        %v8919 = vadd.f32 %v8890, %v8918
        %8920 = vmatmul.bf16.gmra.mxu0 %v4178
        %v8921 = vpop.f32.mrf.mxu0
        %v8922 = vadd.f32 %v8893, %v8921
        %v8923 = vpop.f32.mrf.mxu0
        %v8924 = vadd.f32 %v8895, %v8923
        %8925 = vmatmul.bf16.gmra.mxu0 %v4210
        %v8926 = vpop.f32.mrf.mxu0
        %v8927 = vadd.f32 %v8898, %v8926
        %v8928 = vpop.f32.mrf.mxu0
        %v8929 = vadd.f32 %v8900, %v8928
        %8930 = vdwg.mxu0
        %8931 = vmatpush.bf16.msra.mxu0 %v6682
        %8932 = vmatpush.bf16.msra.mxu0 %v6680
        %8933 = vmatpush.bf16.msra.mxu0 %v6678
        %8934 = vmatpush.bf16.msra.mxu0 %v6676
        %8935 = vmatpush.bf16.msra.mxu0 %v6674
        %8936 = vmatpush.bf16.msra.mxu0 %v6672
        %8937 = vmatpush.bf16.msra.mxu0 %v6670
        %8938 = vmatpush.bf16.msra.mxu0 %v6668
        %8939 = vmatmul.bf16.gmra.mxu0 %v4115
        %v8940 = vpop.f32.mrf.mxu0
        %v8941 = vadd.f32 %v8912, %v8940
        %v8942 = vpop.f32.mrf.mxu0
        %v8943 = vadd.f32 %v8914, %v8942
        %8944 = vmatmul.bf16.gmra.mxu0 %v4147
        %v8945 = vpop.f32.mrf.mxu0
        %v8946 = vadd.f32 %v8917, %v8945
        %v8947 = vpop.f32.mrf.mxu0
        %v8948 = vadd.f32 %v8919, %v8947
        %8949 = vmatmul.bf16.gmra.mxu0 %v4179
        %v8950 = vpop.f32.mrf.mxu0
        %v8951 = vadd.f32 %v8922, %v8950
        %v8952 = vpop.f32.mrf.mxu0
        %v8953 = vadd.f32 %v8924, %v8952
        %8954 = vmatmul.bf16.gmra.mxu0 %v4211
        %v8955 = vpop.f32.mrf.mxu0
        %v8956 = vadd.f32 %v8927, %v8955
        %v8957 = vpop.f32.mrf.mxu0
        %v8958 = vadd.f32 %v8929, %v8957
        %8959 = vdwg.mxu0
        %8960 = vmatpush.bf16.msra.mxu0 %v6698
        %8961 = vmatpush.bf16.msra.mxu0 %v6696
        %8962 = vmatpush.bf16.msra.mxu0 %v6694
        %8963 = vmatpush.bf16.msra.mxu0 %v6692
        %8964 = vmatpush.bf16.msra.mxu0 %v6690
        %8965 = vmatpush.bf16.msra.mxu0 %v6688
        %8966 = vmatpush.bf16.msra.mxu0 %v6686
        %8967 = vmatpush.bf16.msra.mxu0 %v6684
        %8968 = vmatmul.bf16.gmra.mxu0 %v4116
        %v8969 = vpop.f32.mrf.mxu0
        %v8970 = vadd.f32 %v8941, %v8969
        %v8971 = vpop.f32.mrf.mxu0
        %v8972 = vadd.f32 %v8943, %v8971
        %8973 = vmatmul.bf16.gmra.mxu0 %v4148
        %v8974 = vpop.f32.mrf.mxu0
        %v8975 = vadd.f32 %v8946, %v8974
        %v8976 = vpop.f32.mrf.mxu0
        %v8977 = vadd.f32 %v8948, %v8976
        %8978 = vmatmul.bf16.gmra.mxu0 %v4180
        %v8979 = vpop.f32.mrf.mxu0
        %v8980 = vadd.f32 %v8951, %v8979
        %v8981 = vpop.f32.mrf.mxu0
        %v8982 = vadd.f32 %v8953, %v8981
        %8983 = vmatmul.bf16.gmra.mxu0 %v4212
        %v8984 = vpop.f32.mrf.mxu0
        %v8985 = vadd.f32 %v8956, %v8984
        %v8986 = vpop.f32.mrf.mxu0
        %v8987 = vadd.f32 %v8958, %v8986
        %8988 = vdwg.mxu0
        %8989 = vmatpush.bf16.msra.mxu0 %v6714
        %8990 = vmatpush.bf16.msra.mxu0 %v6712
        %8991 = vmatpush.bf16.msra.mxu0 %v6710
        %8992 = vmatpush.bf16.msra.mxu0 %v6708
        %8993 = vmatpush.bf16.msra.mxu0 %v6706
        %8994 = vmatpush.bf16.msra.mxu0 %v6704
        %8995 = vmatpush.bf16.msra.mxu0 %v6702
        %8996 = vmatpush.bf16.msra.mxu0 %v6700
        %8997 = vmatmul.bf16.gmra.mxu0 %v4117
        %v8998 = vpop.f32.mrf.mxu0
        %v8999 = vadd.f32 %v8970, %v8998
        %v9000 = vpop.f32.mrf.mxu0
        %v9001 = vadd.f32 %v8972, %v9000
        %9002 = vmatmul.bf16.gmra.mxu0 %v4149
        %v9003 = vpop.f32.mrf.mxu0
        %v9004 = vadd.f32 %v8975, %v9003
        %v9005 = vpop.f32.mrf.mxu0
        %v9006 = vadd.f32 %v8977, %v9005
        %9007 = vmatmul.bf16.gmra.mxu0 %v4181
        %v9008 = vpop.f32.mrf.mxu0
        %v9009 = vadd.f32 %v8980, %v9008
        %v9010 = vpop.f32.mrf.mxu0
        %v9011 = vadd.f32 %v8982, %v9010
        %9012 = vmatmul.bf16.gmra.mxu0 %v4213
        %v9013 = vpop.f32.mrf.mxu0
        %v9014 = vadd.f32 %v8985, %v9013
        %v9015 = vpop.f32.mrf.mxu0
        %v9016 = vadd.f32 %v8987, %v9015
        %9017 = vdwg.mxu0
        %9018 = vmatpush.bf16.msra.mxu0 %v6730
        %9019 = vmatpush.bf16.msra.mxu0 %v6728
        %9020 = vmatpush.bf16.msra.mxu0 %v6726
        %9021 = vmatpush.bf16.msra.mxu0 %v6724
        %9022 = vmatpush.bf16.msra.mxu0 %v6722
        %9023 = vmatpush.bf16.msra.mxu0 %v6720
        %9024 = vmatpush.bf16.msra.mxu0 %v6718
        %9025 = vmatpush.bf16.msra.mxu0 %v6716
        %9026 = vmatmul.bf16.gmra.mxu0 %v4118
        %v9027 = vpop.f32.mrf.mxu0
        %v9028 = vadd.f32 %v8999, %v9027
        %v9029 = vpop.f32.mrf.mxu0
        %v9030 = vadd.f32 %v9001, %v9029
        %9031 = vmatmul.bf16.gmra.mxu0 %v4150
        %v9032 = vpop.f32.mrf.mxu0
        %v9033 = vadd.f32 %v9004, %v9032
        %v9034 = vpop.f32.mrf.mxu0
        %v9035 = vadd.f32 %v9006, %v9034
        %9036 = vmatmul.bf16.gmra.mxu0 %v4182
        %v9037 = vpop.f32.mrf.mxu0
        %v9038 = vadd.f32 %v9009, %v9037
        %v9039 = vpop.f32.mrf.mxu0
        %v9040 = vadd.f32 %v9011, %v9039
        %9041 = vmatmul.bf16.gmra.mxu0 %v4214
        %v9042 = vpop.f32.mrf.mxu0
        %v9043 = vadd.f32 %v9014, %v9042
        %v9044 = vpop.f32.mrf.mxu0
        %v9045 = vadd.f32 %v9016, %v9044
        %9046 = vdwg.mxu0
        %9047 = vmatpush.bf16.msra.mxu0 %v6746
        %9048 = vmatpush.bf16.msra.mxu0 %v6744
        %9049 = vmatpush.bf16.msra.mxu0 %v6742
        %9050 = vmatpush.bf16.msra.mxu0 %v6740
        %9051 = vmatpush.bf16.msra.mxu0 %v6738
        %9052 = vmatpush.bf16.msra.mxu0 %v6736
        %9053 = vmatpush.bf16.msra.mxu0 %v6734
        %9054 = vmatpush.bf16.msra.mxu0 %v6732
        %9055 = vmatmul.bf16.gmra.mxu0 %v4119
        %v9056 = vpop.f32.mrf.mxu0
        %v9057 = vadd.f32 %v9028, %v9056
        %v9058 = vpop.f32.mrf.mxu0
        %v9059 = vadd.f32 %v9030, %v9058
        %9060 = vmatmul.bf16.gmra.mxu0 %v4151
        %v9061 = vpop.f32.mrf.mxu0
        %v9062 = vadd.f32 %v9033, %v9061
        %v9063 = vpop.f32.mrf.mxu0
        %v9064 = vadd.f32 %v9035, %v9063
        %9065 = vmatmul.bf16.gmra.mxu0 %v4183
        %v9066 = vpop.f32.mrf.mxu0
        %v9067 = vadd.f32 %v9038, %v9066
        %v9068 = vpop.f32.mrf.mxu0
        %v9069 = vadd.f32 %v9040, %v9068
        %9070 = vmatmul.bf16.gmra.mxu0 %v4215
        %v9071 = vpop.f32.mrf.mxu0
        %v9072 = vadd.f32 %v9043, %v9071
        %v9073 = vpop.f32.mrf.mxu0
        %v9074 = vadd.f32 %v9045, %v9073
        %9075 = vdwg.mxu0
        %9076 = vmatpush.bf16.msra.mxu0 %v6762
        %9077 = vmatpush.bf16.msra.mxu0 %v6760
        %9078 = vmatpush.bf16.msra.mxu0 %v6758
        %9079 = vmatpush.bf16.msra.mxu0 %v6756
        %9080 = vmatpush.bf16.msra.mxu0 %v6754
        %9081 = vmatpush.bf16.msra.mxu0 %v6752
        %9082 = vmatpush.bf16.msra.mxu0 %v6750
        %9083 = vmatpush.bf16.msra.mxu0 %v6748
        %9084 = vmatmul.bf16.gmra.mxu0 %v4120
        %v9085 = vpop.f32.mrf.mxu0
        %v9086 = vadd.f32 %v9057, %v9085
        %v9087 = vpop.f32.mrf.mxu0
        %v9088 = vadd.f32 %v9059, %v9087
        %9089 = vmatmul.bf16.gmra.mxu0 %v4152
        %v9090 = vpop.f32.mrf.mxu0
        %v9091 = vadd.f32 %v9062, %v9090
        %v9092 = vpop.f32.mrf.mxu0
        %v9093 = vadd.f32 %v9064, %v9092
        %9094 = vmatmul.bf16.gmra.mxu0 %v4184
        %v9095 = vpop.f32.mrf.mxu0
        %v9096 = vadd.f32 %v9067, %v9095
        %v9097 = vpop.f32.mrf.mxu0
        %v9098 = vadd.f32 %v9069, %v9097
        %9099 = vmatmul.bf16.gmra.mxu0 %v4216
        %v9100 = vpop.f32.mrf.mxu0
        %v9101 = vadd.f32 %v9072, %v9100
        %v9102 = vpop.f32.mrf.mxu0
        %v9103 = vadd.f32 %v9074, %v9102
        %9104 = vdwg.mxu0
        %9105 = vmatpush.bf16.msra.mxu0 %v6778
        %9106 = vmatpush.bf16.msra.mxu0 %v6776
        %9107 = vmatpush.bf16.msra.mxu0 %v6774
        %9108 = vmatpush.bf16.msra.mxu0 %v6772
        %9109 = vmatpush.bf16.msra.mxu0 %v6770
        %9110 = vmatpush.bf16.msra.mxu0 %v6768
        %9111 = vmatpush.bf16.msra.mxu0 %v6766
        %9112 = vmatpush.bf16.msra.mxu0 %v6764
        %9113 = vmatmul.bf16.gmra.mxu0 %v4121
        %v9114 = vpop.f32.mrf.mxu0
        %v9115 = vadd.f32 %v9086, %v9114
        %v9116 = vpop.f32.mrf.mxu0
        %v9117 = vadd.f32 %v9088, %v9116
        %9118 = vmatmul.bf16.gmra.mxu0 %v4153
        %v9119 = vpop.f32.mrf.mxu0
        %v9120 = vadd.f32 %v9091, %v9119
        %v9121 = vpop.f32.mrf.mxu0
        %v9122 = vadd.f32 %v9093, %v9121
        %9123 = vmatmul.bf16.gmra.mxu0 %v4185
        %v9124 = vpop.f32.mrf.mxu0
        %v9125 = vadd.f32 %v9096, %v9124
        %v9126 = vpop.f32.mrf.mxu0
        %v9127 = vadd.f32 %v9098, %v9126
        %9128 = vmatmul.bf16.gmra.mxu0 %v4217
        %v9129 = vpop.f32.mrf.mxu0
        %v9130 = vadd.f32 %v9101, %v9129
        %v9131 = vpop.f32.mrf.mxu0
        %v9132 = vadd.f32 %v9103, %v9131
        %9133 = vdwg.mxu0
        %9134 = vmatpush.bf16.msra.mxu0 %v6794
        %9135 = vmatpush.bf16.msra.mxu0 %v6792
        %9136 = vmatpush.bf16.msra.mxu0 %v6790
        %9137 = vmatpush.bf16.msra.mxu0 %v6788
        %9138 = vmatpush.bf16.msra.mxu0 %v6786
        %9139 = vmatpush.bf16.msra.mxu0 %v6784
        %9140 = vmatpush.bf16.msra.mxu0 %v6782
        %9141 = vmatpush.bf16.msra.mxu0 %v6780
        %9142 = vmatmul.bf16.gmra.mxu0 %v4122
        %v9143 = vpop.f32.mrf.mxu0
        %v9144 = vadd.f32 %v9115, %v9143
        %v9145 = vpop.f32.mrf.mxu0
        %v9146 = vadd.f32 %v9117, %v9145
        %9147 = vmatmul.bf16.gmra.mxu0 %v4154
        %v9148 = vpop.f32.mrf.mxu0
        %v9149 = vadd.f32 %v9120, %v9148
        %v9150 = vpop.f32.mrf.mxu0
        %v9151 = vadd.f32 %v9122, %v9150
        %9152 = vmatmul.bf16.gmra.mxu0 %v4186
        %v9153 = vpop.f32.mrf.mxu0
        %v9154 = vadd.f32 %v9125, %v9153
        %v9155 = vpop.f32.mrf.mxu0
        %v9156 = vadd.f32 %v9127, %v9155
        %9157 = vmatmul.bf16.gmra.mxu0 %v4218
        %v9158 = vpop.f32.mrf.mxu0
        %v9159 = vadd.f32 %v9130, %v9158
        %v9160 = vpop.f32.mrf.mxu0
        %v9161 = vadd.f32 %v9132, %v9160
        %9162 = vdwg.mxu0
        %v9163 = vpack.c.bf16 %v8218, %v8216
        %v9164 = vpack.c.bf16 %v9146, %v9144
        %v9165 = vpack.c.bf16 %v8223, %v8221
        %v9166 = vpack.c.bf16 %v9151, %v9149
        %v9167 = vpack.c.bf16 %v8228, %v8226
        %v9168 = vpack.c.bf16 %v9156, %v9154
        %v9169 = vpack.c.bf16 %v8233, %v8231
        %v9170 = vpack.c.bf16 %v9161, %v9159
        %9171 = vmatpush.bf16.msra.mxu0 0
        %9172 = vmatpush.bf16.msra.mxu0 0
        %9173 = vmatpush.bf16.msra.mxu0 0
        %9174 = vmatpush.bf16.msra.mxu0 0
        %9175 = vmatpush.bf16.msra.mxu0 %v9169
        %9176 = vmatpush.bf16.msra.mxu0 %v9167
        %9177 = vmatpush.bf16.msra.mxu0 %v9165
        %9178 = vmatpush.bf16.msra.mxu0 %v9163
        %9179 = vmatmul.bf16.gmra.mxu0 %v1345
        %v9180 = vpop.f32.mrf.mxu0
        %v9181 = vadd.f32 0.0, %v9180
        %v9182 = vpop.f32.mrf.mxu0
        %v9183 = vadd.f32 0.0, %v9182
        %9184 = vmatmul.bf16.gmra.mxu0 %v1348
        %v9185 = vpop.f32.mrf.mxu0
        %v9186 = vadd.f32 0.0, %v9185
        %v9187 = vpop.f32.mrf.mxu0
        %v9188 = vadd.f32 0.0, %v9187
        %9189 = vmatmul.bf16.gmra.mxu0 %v1351
        %v9190 = vpop.f32.mrf.mxu0
        %v9191 = vadd.f32 0.0, %v9190
        %v9192 = vpop.f32.mrf.mxu0
        %v9193 = vadd.f32 0.0, %v9192
        %9194 = vmatmul.bf16.gmra.mxu0 %v1354
        %v9195 = vpop.f32.mrf.mxu0
        %v9196 = vadd.f32 0.0, %v9195
        %v9197 = vpop.f32.mrf.mxu0
        %v9198 = vadd.f32 0.0, %v9197
        %9199 = vdwg.mxu0
        %9200 = vmatpush.bf16.msra.mxu0 0
        %9201 = vmatpush.bf16.msra.mxu0 0
        %9202 = vmatpush.bf16.msra.mxu0 0
        %9203 = vmatpush.bf16.msra.mxu0 0
        %9204 = vmatpush.bf16.msra.mxu0 %v9170
        %9205 = vmatpush.bf16.msra.mxu0 %v9168
        %9206 = vmatpush.bf16.msra.mxu0 %v9166
        %9207 = vmatpush.bf16.msra.mxu0 %v9164
        %9208 = vmatmul.bf16.gmra.mxu0 %v1345
        %v9209 = vpop.f32.mrf.mxu0
        %v9210 = vadd.f32 0.0, %v9209
        %v9211 = vpop.f32.mrf.mxu0
        %v9212 = vadd.f32 0.0, %v9211
        %9213 = vmatmul.bf16.gmra.mxu0 %v1348
        %v9214 = vpop.f32.mrf.mxu0
        %v9215 = vadd.f32 0.0, %v9214
        %v9216 = vpop.f32.mrf.mxu0
        %v9217 = vadd.f32 0.0, %v9216
        %9218 = vmatmul.bf16.gmra.mxu0 %v1351
        %v9219 = vpop.f32.mrf.mxu0
        %v9220 = vadd.f32 0.0, %v9219
        %v9221 = vpop.f32.mrf.mxu0
        %v9222 = vadd.f32 0.0, %v9221
        %9223 = vmatmul.bf16.gmra.mxu0 %v1354
        %v9224 = vpop.f32.mrf.mxu0
        %v9225 = vadd.f32 0.0, %v9224
        %v9226 = vpop.f32.mrf.mxu0
        %v9227 = vadd.f32 0.0, %v9226
        %9228 = vdwg.mxu0
        %v9229 = vld [vmem:[#allocation24] sm:$0x1]
        %v9230 = vperm.slane %v9229, 0
        %v9231 = vmul.f32 %v9181, %v9230
        %v9232 = vmul.f32 %v9183, %v9230
        %v9233 = vmul.f32 %v9186, %v9230
        %v9234 = vmul.f32 %v9188, %v9230
        %v9235 = vmul.f32 %v9191, %v9230
        %v9236 = vmul.f32 %v9193, %v9230
        %v9237 = vmul.f32 %v9196, %v9230
        %v9238 = vmul.f32 %v9198, %v9230
        %v9239 = vld [vmem:[#allocation24 + $0x1] sm:$0x1]
        %v9240 = vperm.slane %v9239, 0
        %v9241 = vadd.f32 %v9231, %v9240
        %v9242 = vadd.f32 %v9232, %v9240
        %v9243 = vadd.f32 %v9233, %v9240
        %v9244 = vadd.f32 %v9234, %v9240
        %v9245 = vadd.f32 %v9235, %v9240
        %v9246 = vadd.f32 %v9236, %v9240
        %v9247 = vadd.f32 %v9237, %v9240
        %v9248 = vadd.f32 %v9238, %v9240
        %v9249 = vmax.f32 %v9241, 0.0
        %v9250 = vmax.f32 %v9242, 0.0
        %v9251 = vmax.f32 %v9243, 0.0
        %v9252 = vmax.f32 %v9244, 0.0
        %v9253 = vmax.f32 %v9245, 0.0
        %v9254 = vmax.f32 %v9246, 0.0
        %v9255 = vmax.f32 %v9247, 0.0
        %v9256 = vmax.f32 %v9248, 0.0
        %v9257 = vpack.c.bf16 %v9250, %v9249
        %v9258 = vpack.c.bf16 %v9252, %v9251
        %v9259 = vpack.c.bf16 %v9254, %v9253
        %v9260 = vpack.c.bf16 %v9256, %v9255
        %v9261 = vld [vmem:[%s18] sm:$0xf]
        %v9262 = vld [vmem:[%s18 + $0x4] sm:$0xf]
        %v9263 = vld [vmem:[%s18 + $0x8] sm:$0xf]
        %v9264 = vld [vmem:[%s18 + $0xc] sm:$0xf]
        %v9265 = vld [vmem:[%s18 + $0x10] sm:$0xf]
        %v9266 = vld [vmem:[%s18 + $0x14] sm:$0xf]
        %v9267 = vld [vmem:[%s18 + $0x18] sm:$0xf]
        %v9268 = vld [vmem:[%s18 + $0x1c] sm:$0xf]
        %v9269 = vld [vmem:[%s18 + $0x20] sm:$0xf]
        %v9270 = vld [vmem:[%s18 + $0x24] sm:$0xf]
        %v9271 = vld [vmem:[%s18 + $0x28] sm:$0xf]
        %v9272 = vld [vmem:[%s18 + $0x2c] sm:$0xf]
        %v9273 = vld [vmem:[%s18 + $0x30] sm:$0xf]
        %v9274 = vld [vmem:[%s18 + $0x34] sm:$0xf]
        %v9275 = vld [vmem:[%s18 + $0x38] sm:$0xf]
        %v9276 = vld [vmem:[%s18 + $0x3c] sm:$0xf]
        %v9293 = vunpack.c.l.b16 %v9261
        %v9294 = vunpack.c.l.b16 %v9262
        %v9295 = vunpack.c.l.b16 %v9263
        %v9296 = vunpack.c.l.b16 %v9264
        %v9297 = vunpack.c.l.b16 %v9265
        %v9298 = vunpack.c.l.b16 %v9266
        %v9299 = vunpack.c.l.b16 %v9267
        %v9300 = vunpack.c.l.b16 %v9268
        %v9301 = vunpack.c.l.b16 %v9269
        %v9302 = vunpack.c.l.b16 %v9270
        %v9303 = vunpack.c.l.b16 %v9271
        %v9304 = vunpack.c.l.b16 %v9272
        %v9305 = vunpack.c.l.b16 %v9273
        %v9306 = vunpack.c.l.b16 %v9274
        %v9307 = vunpack.c.l.b16 %v9275
        %v9308 = vunpack.c.l.b16 %v9276
        %v9309 = vpack.c.b16 %v9294, %v9293
        %v9310 = vpack.c.b16 %v9296, %v9295
        %v9311 = vpack.c.b16 %v9298, %v9297
        %v9312 = vpack.c.b16 %v9300, %v9299
        %v9313 = vpack.c.b16 %v9302, %v9301
        %v9314 = vpack.c.b16 %v9304, %v9303
        %v9315 = vpack.c.b16 %v9306, %v9305
        %v9316 = vpack.c.b16 %v9308, %v9307
        %9325 = vmatpush.bf16.msra.mxu0 %v9316
        %9326 = vmatpush.bf16.msra.mxu0 %v9315
        %9327 = vmatpush.bf16.msra.mxu0 %v9314
        %9328 = vmatpush.bf16.msra.mxu0 %v9313
        %9329 = vmatpush.bf16.msra.mxu0 %v9312
        %9330 = vmatpush.bf16.msra.mxu0 %v9311
        %9331 = vmatpush.bf16.msra.mxu0 %v9310
        %9332 = vmatpush.bf16.msra.mxu0 %v9309
        %9333 = vmatmul.bf16.gmra.mxu0 %v9257
        %v9334 = vpop.f32.mrf.mxu0
        %v9335 = vadd.f32 0.0, %v9334
        %v9336 = vpop.f32.mrf.mxu0
        %v9337 = vadd.f32 0.0, %v9336
        %9338 = vmatmul.bf16.gmra.mxu0 %v9258
        %v9339 = vpop.f32.mrf.mxu0
        %v9340 = vadd.f32 0.0, %v9339
        %v9341 = vpop.f32.mrf.mxu0
        %v9342 = vadd.f32 0.0, %v9341
        %9343 = vmatmul.bf16.gmra.mxu0 %v9259
        %v9344 = vpop.f32.mrf.mxu0
        %v9345 = vadd.f32 0.0, %v9344
        %v9346 = vpop.f32.mrf.mxu0
        %v9347 = vadd.f32 0.0, %v9346
        %9348 = vmatmul.bf16.gmra.mxu0 %v9260
        %v9349 = vpop.f32.mrf.mxu0
        %v9350 = vadd.f32 0.0, %v9349
        %v9351 = vpop.f32.mrf.mxu0
        %v9352 = vadd.f32 0.0, %v9351
        %9353 = vdwg.mxu0
        %v9354 = vld [vmem:[#allocation25] sm:$0x1]
        %v9355 = vperm.slane %v9354, 0
        %v9356 = vmul.f32 %v9335, %v9355
        %v9357 = vmul.f32 %v9337, %v9355
        %v9358 = vmul.f32 %v9340, %v9355
        %v9359 = vmul.f32 %v9342, %v9355
        %v9360 = vmul.f32 %v9345, %v9355
        %v9361 = vmul.f32 %v9347, %v9355
        %v9362 = vmul.f32 %v9350, %v9355
        %v9363 = vmul.f32 %v9352, %v9355
        %v9364 = vld [vmem:[#allocation25 + $0x1] sm:$0x1]
        %v9365 = vperm.slane %v9364, 0
        %v9366 = vadd.f32 %v9356, %v9365
        %v9367 = vadd.f32 %v9357, %v9365
        %v9368 = vadd.f32 %v9358, %v9365
        %v9369 = vadd.f32 %v9359, %v9365
        %v9370 = vadd.f32 %v9360, %v9365
        %v9371 = vadd.f32 %v9361, %v9365
        %v9372 = vadd.f32 %v9362, %v9365
        %v9373 = vadd.f32 %v9363, %v9365
        %v9374 = vmax.f32 %v9366, 0.0
        %v9375 = vmax.f32 %v9367, 0.0
        %v9376 = vmax.f32 %v9368, 0.0
        %v9377 = vmax.f32 %v9369, 0.0
        %v9378 = vmax.f32 %v9370, 0.0
        %v9379 = vmax.f32 %v9371, 0.0
        %v9380 = vmax.f32 %v9372, 0.0
        %v9381 = vmax.f32 %v9373, 0.0
        %vm9382 = vcmask 785408
        %v9383 = vsel %vm9382, %v9374, -inf
        %v9384 = vsel %vm9382, %v9375, -inf
        %v9385 = vsel %vm9382, %v9376, -inf
        %v9386 = vsel %vm9382, %v9377, -inf
        %v9387 = vsel %vm9382, %v9378, -inf
        %v9388 = vmax.f32 %v9383, %v9387
        %v9389 = vsel %vm9382, %v9379, -inf
        %v9390 = vmax.f32 %v9384, %v9389
        %v9391 = vsel %vm9382, %v9380, -inf
        %v9392 = vmax.f32 %v9385, %v9391
        %v9393 = vsel %vm9382, %v9381, -inf
        %v9394 = vmax.f32 %v9386, %v9393
        %v9395 = vmax.f32 %v9388, %v9390
        %v9396 = vmax.f32 %v9392, %v9394
        %v9397 = vmax.f32 %v9395, %v9396
        %v9398 = vrot.slane %v9397, 4
        %v9399 = vmax.f32 %v9397, %v9398
        %v9400 = vrot.slane %v9399, 2
        %v9401 = vmax.f32 %v9399, %v9400
        %v9402 = vrot.slane %v9401, 1
        %v9403 = vmax.f32 %v9401, %v9402
        %v9404 = vpack.c.bf16 %v9403, %v9403
        %v9405 = vld [vmem:[#allocation27] sm:$0xf]
        %v9406 = vld [vmem:[#allocation27 + $0x4] sm:$0xf]
        %v9407 = vld [vmem:[#allocation27 + $0x8] sm:$0xf]
        %v9408 = vld [vmem:[#allocation27 + $0xc] sm:$0xf]
        %v9409 = vld [vmem:[#allocation27 + $0x10] sm:$0xf]
        %v9410 = vld [vmem:[#allocation27 + $0x14] sm:$0xf]
        %v9411 = vld [vmem:[#allocation27 + $0x18] sm:$0xf]
        %v9412 = vld [vmem:[#allocation27 + $0x1c] sm:$0xf]
        %v9413 = vld [vmem:[#allocation27 + $0x20] sm:$0xf]
        %v9414 = vld [vmem:[#allocation27 + $0x24] sm:$0xf]
        %v9415 = vld [vmem:[#allocation27 + $0x28] sm:$0xf]
        %v9416 = vld [vmem:[#allocation27 + $0x2c] sm:$0xf]
        %v9429 = vunpack.c.l.b16 %v9405
        %v9430 = vunpack.c.l.b16 %v9406
        %v9431 = vunpack.c.l.b16 %v9407
        %v9432 = vunpack.c.l.b16 %v9408
        %v9433 = vunpack.c.l.b16 %v9409
        %v9434 = vunpack.c.l.b16 %v9410
        %v9435 = vunpack.c.l.b16 %v9411
        %v9436 = vunpack.c.l.b16 %v9412
        %v9437 = vunpack.c.l.b16 %v9413
        %v9438 = vunpack.c.l.b16 %v9414
        %v9439 = vunpack.c.l.b16 %v9415
        %v9440 = vunpack.c.l.b16 %v9416
        %v9441 = vpack.c.b16 %v9430, %v9429
        %v9442 = vpack.c.b16 %v9432, %v9431
        %v9443 = vpack.c.b16 %v9434, %v9433
        %v9444 = vpack.c.b16 %v9436, %v9435
        %v9445 = vpack.c.b16 %v9438, %v9437
        %v9446 = vpack.c.b16 %v9440, %v9439
        %v9454 = vsel %vm9382, %v9404, 0
        %9456 = vmatpush.bf16.msra.mxu0 0
        %9457 = vmatpush.bf16.msra.mxu0 0
        %9458 = vmatpush.bf16.msra.mxu0 %v9446
        %9459 = vmatpush.bf16.msra.mxu0 %v9445
        %9460 = vmatpush.bf16.msra.mxu0 %v9444
        %9461 = vmatpush.bf16.msra.mxu0 %v9443
        %9462 = vmatpush.bf16.msra.mxu0 %v9442
        %9463 = vmatpush.bf16.msra.mxu0 %v9441
        %9464 = vmatmul.bf16.gmra.mxu0 %v9454
        %v9465 = vpop.f32.mrf.mxu0
        %v9466 = vadd.f32 0.0, %v9465
        %v9467 = vpop.f32.mrf.mxu0
        %9468 = vdwg.mxu0
        %v9469 = vperm.slane %v9466, 0
        %v9470 = vadd.f32 %v9210, %v9469
        %v9471 = vadd.f32 %v9212, %v9469
        %v9472 = vadd.f32 %v9215, %v9469
        %v9473 = vadd.f32 %v9217, %v9469
        %v9474 = vadd.f32 %v9220, %v9469
        %v9475 = vadd.f32 %v9222, %v9469
        %v9476 = vadd.f32 %v9225, %v9469
        %v9477 = vadd.f32 %v9227, %v9469
        %v9478 = vld [vmem:[#allocation28] sm:$0x1]
        %v9479 = vperm.slane %v9478, 0
        %v9480 = vmul.f32 %v9470, %v9479
        %v9481 = vmul.f32 %v9471, %v9479
        %v9482 = vmul.f32 %v9472, %v9479
        %v9483 = vmul.f32 %v9473, %v9479
        %v9484 = vmul.f32 %v9474, %v9479
        %v9485 = vmul.f32 %v9475, %v9479
        %v9486 = vmul.f32 %v9476, %v9479
        %v9487 = vmul.f32 %v9477, %v9479
        %v9488 = vld [vmem:[#allocation28 + $0x1] sm:$0x1]
        %v9489 = vperm.slane %v9488, 0
        %v9490 = vadd.f32 %v9480, %v9489
        %v9491 = vadd.f32 %v9481, %v9489
        %v9492 = vadd.f32 %v9482, %v9489
        %v9493 = vadd.f32 %v9483, %v9489
        %v9494 = vadd.f32 %v9484, %v9489
        %v9495 = vadd.f32 %v9485, %v9489
        %v9496 = vadd.f32 %v9486, %v9489
        %v9497 = vadd.f32 %v9487, %v9489
        %v9498 = vmax.f32 %v9490, 0.0
        %v9499 = vmax.f32 %v9491, 0.0
        %v9500 = vmax.f32 %v9492, 0.0
        %v9501 = vmax.f32 %v9493, 0.0
        %v9502 = vmax.f32 %v9494, 0.0
        %v9503 = vmax.f32 %v9495, 0.0
        %v9504 = vmax.f32 %v9496, 0.0
        %v9505 = vmax.f32 %v9497, 0.0
        %v9506 = vpack.c.bf16 %v9499, %v9498
        %v9507 = vpack.c.bf16 %v9501, %v9500
        %v9508 = vpack.c.bf16 %v9503, %v9502
        %v9509 = vpack.c.bf16 %v9505, %v9504
        %v9510 = vld [vmem:[#allocation30] sm:$0xf]
        %v9511 = vld [vmem:[#allocation30 + $0x4] sm:$0xf]
        %v9512 = vld [vmem:[#allocation30 + $0x8] sm:$0xf]
        %v9513 = vld [vmem:[#allocation30 + $0xc] sm:$0xf]
        %v9514 = vld [vmem:[#allocation30 + $0x10] sm:$0xf]
        %v9515 = vld [vmem:[#allocation30 + $0x14] sm:$0xf]
        %v9516 = vld [vmem:[#allocation30 + $0x18] sm:$0xf]
        %v9517 = vld [vmem:[#allocation30 + $0x1c] sm:$0xf]
        %v9518 = vld [vmem:[#allocation30 + $0x20] sm:$0xf]
        %v9519 = vld [vmem:[#allocation30 + $0x24] sm:$0xf]
        %v9520 = vld [vmem:[#allocation30 + $0x28] sm:$0xf]
        %v9521 = vld [vmem:[#allocation30 + $0x2c] sm:$0xf]
        %v9522 = vld [vmem:[#allocation30 + $0x30] sm:$0xf]
        %v9523 = vld [vmem:[#allocation30 + $0x34] sm:$0xf]
        %v9524 = vld [vmem:[#allocation30 + $0x38] sm:$0xf]
        %v9525 = vld [vmem:[#allocation30 + $0x3c] sm:$0xf]
        %v9542 = vunpack.c.l.b16 %v9510
        %v9543 = vunpack.c.l.b16 %v9511
        %v9544 = vunpack.c.l.b16 %v9512
        %v9545 = vunpack.c.l.b16 %v9513
        %v9546 = vunpack.c.l.b16 %v9514
        %v9547 = vunpack.c.l.b16 %v9515
        %v9548 = vunpack.c.l.b16 %v9516
        %v9549 = vunpack.c.l.b16 %v9517
        %v9550 = vunpack.c.l.b16 %v9518
        %v9551 = vunpack.c.l.b16 %v9519
        %v9552 = vunpack.c.l.b16 %v9520
        %v9553 = vunpack.c.l.b16 %v9521
        %v9554 = vunpack.c.l.b16 %v9522
        %v9555 = vunpack.c.l.b16 %v9523
        %v9556 = vunpack.c.l.b16 %v9524
        %v9557 = vunpack.c.l.b16 %v9525
        %v9558 = vpack.c.b16 %v9543, %v9542
        %v9559 = vpack.c.b16 %v9545, %v9544
        %v9560 = vpack.c.b16 %v9547, %v9546
        %v9561 = vpack.c.b16 %v9549, %v9548
        %v9562 = vpack.c.b16 %v9551, %v9550
        %v9563 = vpack.c.b16 %v9553, %v9552
        %v9564 = vpack.c.b16 %v9555, %v9554
        %v9565 = vpack.c.b16 %v9557, %v9556
        %9574 = vmatpush.bf16.msra.mxu0 %v9565
        %9575 = vmatpush.bf16.msra.mxu0 %v9564
        %9576 = vmatpush.bf16.msra.mxu0 %v9563
        %9577 = vmatpush.bf16.msra.mxu0 %v9562
        %9578 = vmatpush.bf16.msra.mxu0 %v9561
        %9579 = vmatpush.bf16.msra.mxu0 %v9560
        %9580 = vmatpush.bf16.msra.mxu0 %v9559
        %9581 = vmatpush.bf16.msra.mxu0 %v9558
        %9582 = vmatmul.bf16.gmra.mxu0 %v9506
        %v9583 = vpop.f32.mrf.mxu0
        %v9584 = vadd.f32 0.0, %v9583
        %v9585 = vpop.f32.mrf.mxu0
        %v9586 = vadd.f32 0.0, %v9585
        %9587 = vmatmul.bf16.gmra.mxu0 %v9507
        %v9588 = vpop.f32.mrf.mxu0
        %v9589 = vadd.f32 0.0, %v9588
        %v9590 = vpop.f32.mrf.mxu0
        %v9591 = vadd.f32 0.0, %v9590
        %9592 = vmatmul.bf16.gmra.mxu0 %v9508
        %v9593 = vpop.f32.mrf.mxu0
        %v9594 = vadd.f32 0.0, %v9593
        %v9595 = vpop.f32.mrf.mxu0
        %v9596 = vadd.f32 0.0, %v9595
        %9597 = vmatmul.bf16.gmra.mxu0 %v9509
        %v9598 = vpop.f32.mrf.mxu0
        %v9599 = vadd.f32 0.0, %v9598
        %v9600 = vpop.f32.mrf.mxu0
        %v9601 = vadd.f32 0.0, %v9600
        %9602 = vdwg.mxu0
        %v9603 = vld [vmem:[#allocation31] sm:$0x1]
        %v9604 = vperm.slane %v9603, 0
        %v9605 = vmul.f32 %v9584, %v9604
        %v9606 = vmul.f32 %v9586, %v9604
        %v9607 = vmul.f32 %v9589, %v9604
        %v9608 = vmul.f32 %v9591, %v9604
        %v9609 = vmul.f32 %v9594, %v9604
        %v9610 = vmul.f32 %v9596, %v9604
        %v9611 = vmul.f32 %v9599, %v9604
        %v9612 = vmul.f32 %v9601, %v9604
        %v9613 = vld [vmem:[#allocation31 + $0x1] sm:$0x1]
        %v9614 = vperm.slane %v9613, 0
        %v9615 = vadd.f32 %v9605, %v9614
        %v9616 = vadd.f32 %v9606, %v9614
        %v9617 = vadd.f32 %v9607, %v9614
        %v9618 = vadd.f32 %v9608, %v9614
        %v9619 = vadd.f32 %v9609, %v9614
        %v9620 = vadd.f32 %v9610, %v9614
        %v9621 = vadd.f32 %v9611, %v9614
        %v9622 = vadd.f32 %v9612, %v9614
        %v9623 = vmax.f32 %v9615, 0.0
        %v9624 = vmax.f32 %v9616, 0.0
        %v9625 = vmax.f32 %v9617, 0.0
        %v9626 = vmax.f32 %v9618, 0.0
        %v9627 = vmax.f32 %v9619, 0.0
        %v9628 = vmax.f32 %v9620, 0.0
        %v9629 = vmax.f32 %v9621, 0.0
        %v9630 = vmax.f32 %v9622, 0.0
        %v9631 = vpack.c.bf16 %v9624, %v9623
        %v9632 = vpack.c.bf16 %v9626, %v9625
        %v9633 = vpack.c.bf16 %v9628, %v9627
        %v9634 = vpack.c.bf16 %v9630, %v9629
        %v9635 = vld [vmem:[%s24] sm:$0xf]
        %v9636 = vld [vmem:[%s24 + $0x4] sm:$0xf]
        %v9637 = vld [vmem:[%s24 + $0x8] sm:$0xf]
        %v9638 = vld [vmem:[%s24 + $0xc] sm:$0xf]
        %v9639 = vld [vmem:[%s24 + $0x10] sm:$0xf]
        %v9640 = vld [vmem:[%s24 + $0x14] sm:$0xf]
        %v9641 = vld [vmem:[%s24 + $0x18] sm:$0xf]
        %v9642 = vld [vmem:[%s24 + $0x1c] sm:$0xf]
        %v9643 = vld [vmem:[%s24 + $0x20] sm:$0xf]
        %v9644 = vld [vmem:[%s24 + $0x24] sm:$0xf]
        %v9645 = vld [vmem:[%s24 + $0x28] sm:$0xf]
        %v9646 = vld [vmem:[%s24 + $0x2c] sm:$0xf]
        %v9647 = vld [vmem:[%s24 + $0x30] sm:$0xf]
        %v9648 = vld [vmem:[%s24 + $0x34] sm:$0xf]
        %v9649 = vld [vmem:[%s24 + $0x38] sm:$0xf]
        %v9650 = vld [vmem:[%s24 + $0x3c] sm:$0xf]
        %v9667 = vunpack.c.l.b16 %v9635
        %v9668 = vunpack.c.l.b16 %v9636
        %v9669 = vunpack.c.l.b16 %v9637
        %v9670 = vunpack.c.l.b16 %v9638
        %v9671 = vunpack.c.l.b16 %v9639
        %v9672 = vunpack.c.l.b16 %v9640
        %v9673 = vunpack.c.l.b16 %v9641
        %v9674 = vunpack.c.l.b16 %v9642
        %v9675 = vunpack.c.l.b16 %v9643
        %v9676 = vunpack.c.l.b16 %v9644
        %v9677 = vunpack.c.l.b16 %v9645
        %v9678 = vunpack.c.l.b16 %v9646
        %v9679 = vunpack.c.l.b16 %v9647
        %v9680 = vunpack.c.l.b16 %v9648
        %v9681 = vunpack.c.l.b16 %v9649
        %v9682 = vunpack.c.l.b16 %v9650
        %v9683 = vpack.c.b16 %v9668, %v9667
        %v9684 = vpack.c.b16 %v9670, %v9669
        %v9685 = vpack.c.b16 %v9672, %v9671
        %v9686 = vpack.c.b16 %v9674, %v9673
        %v9687 = vpack.c.b16 %v9676, %v9675
        %v9688 = vpack.c.b16 %v9678, %v9677
        %v9689 = vpack.c.b16 %v9680, %v9679
        %v9690 = vpack.c.b16 %v9682, %v9681
        %9699 = vmatpush.bf16.msra.mxu0 %v9690
        %9700 = vmatpush.bf16.msra.mxu0 %v9689
        %9701 = vmatpush.bf16.msra.mxu0 %v9688
        %9702 = vmatpush.bf16.msra.mxu0 %v9687
        %9703 = vmatpush.bf16.msra.mxu0 %v9686
        %9704 = vmatpush.bf16.msra.mxu0 %v9685
        %9705 = vmatpush.bf16.msra.mxu0 %v9684
        %9706 = vmatpush.bf16.msra.mxu0 %v9683
        %9707 = vmatmul.bf16.gmra.mxu0 %v9631
        %v9708 = vpop.f32.mrf.mxu0
        %v9709 = vadd.f32 0.0, %v9708
        %v9710 = vpop.f32.mrf.mxu0
        %v9711 = vadd.f32 0.0, %v9710
        %9712 = vmatmul.bf16.gmra.mxu0 %v9632
        %v9713 = vpop.f32.mrf.mxu0
        %v9714 = vadd.f32 0.0, %v9713
        %v9715 = vpop.f32.mrf.mxu0
        %v9716 = vadd.f32 0.0, %v9715
        %9717 = vmatmul.bf16.gmra.mxu0 %v9633
        %v9718 = vpop.f32.mrf.mxu0
        %v9719 = vadd.f32 0.0, %v9718
        %v9720 = vpop.f32.mrf.mxu0
        %v9721 = vadd.f32 0.0, %v9720
        %9722 = vmatmul.bf16.gmra.mxu0 %v9634
        %v9723 = vpop.f32.mrf.mxu0
        %v9724 = vadd.f32 0.0, %v9723
        %v9725 = vpop.f32.mrf.mxu0
        %v9726 = vadd.f32 0.0, %v9725
        %9727 = vdwg.mxu0
        %v9728 = vld [vmem:[#allocation33] sm:$0x1]
        %v9729 = vperm.slane %v9728, 0
        %v9730 = vmul.f32 %v9709, %v9729
        %v9731 = vmul.f32 %v9711, %v9729
        %v9732 = vmul.f32 %v9714, %v9729
        %v9733 = vmul.f32 %v9716, %v9729
        %v9734 = vmul.f32 %v9719, %v9729
        %v9735 = vmul.f32 %v9721, %v9729
        %v9736 = vmul.f32 %v9724, %v9729
        %v9737 = vmul.f32 %v9726, %v9729
        %v9738 = vld [vmem:[#allocation33 + $0x1] sm:$0x1]
        %v9739 = vperm.slane %v9738, 0
        %v9740 = vadd.f32 %v9730, %v9739
        %v9741 = vadd.f32 %v9731, %v9739
        %v9742 = vadd.f32 %v9732, %v9739
        %v9743 = vadd.f32 %v9733, %v9739
        %v9744 = vadd.f32 %v9734, %v9739
        %v9745 = vadd.f32 %v9735, %v9739
        %v9746 = vadd.f32 %v9736, %v9739
        %v9747 = vadd.f32 %v9737, %v9739
        %v9748 = vmax.f32 %v9740, 0.0
        %v9749 = vmax.f32 %v9741, 0.0
        %v9750 = vmax.f32 %v9742, 0.0
        %v9751 = vmax.f32 %v9743, 0.0
        %v9752 = vmax.f32 %v9744, 0.0
        %v9753 = vmax.f32 %v9745, 0.0
        %v9754 = vmax.f32 %v9746, 0.0
        %v9755 = vmax.f32 %v9747, 0.0
        %v9756 = vpack.c.bf16 %v9749, %v9748
        %v9757 = vpack.c.bf16 %v9751, %v9750
        %v9758 = vpack.c.bf16 %v9753, %v9752
        %v9759 = vpack.c.bf16 %v9755, %v9754
        %v9760 = vld [vmem:[%s26] sm:$0xf]
        %v9761 = vld [vmem:[%s26 + $0x4] sm:$0xf]
        %v9762 = vld [vmem:[%s26 + $0x8] sm:$0xf]
        %v9763 = vld [vmem:[%s26 + $0xc] sm:$0xf]
        %v9764 = vld [vmem:[%s26 + $0x10] sm:$0xf]
        %v9765 = vld [vmem:[%s26 + $0x14] sm:$0xf]
        %v9766 = vld [vmem:[%s26 + $0x18] sm:$0xf]
        %v9767 = vld [vmem:[%s26 + $0x1c] sm:$0xf]
        %v9768 = vld [vmem:[#allocation34] sm:$0x1]
        %v9770 = vperm.slane %v9768, 0
        %v9780 = vunpack.c.l.b16 %v9760
        %v9781 = vunpack.c.l.b16 %v9761
        %v9782 = vunpack.c.l.b16 %v9762
        %v9783 = vunpack.c.l.b16 %v9763
        %v9784 = vunpack.c.l.b16 %v9764
        %v9785 = vunpack.c.l.b16 %v9765
        %v9786 = vunpack.c.l.b16 %v9766
        %v9787 = vunpack.c.l.b16 %v9767
        %v9788 = vpack.c.b16 %v9781, %v9780
        %v9789 = vpack.c.b16 %v9783, %v9782
        %v9790 = vpack.c.b16 %v9785, %v9784
        %v9791 = vpack.c.b16 %v9787, %v9786
        %v9797 = vsel %vm1343, %v9756, 0
        %v9800 = vsel %vm1343, %v9757, 0
        %v9803 = vsel %vm1343, %v9758, 0
        %v9806 = vsel %vm1343, %v9759, 0
        %9808 = vmatpush.bf16.msra.mxu0 0
        %9809 = vmatpush.bf16.msra.mxu0 0
        %9810 = vmatpush.bf16.msra.mxu0 0
        %9811 = vmatpush.bf16.msra.mxu0 0
        %9812 = vmatpush.bf16.msra.mxu0 %v9791
        %9813 = vmatpush.bf16.msra.mxu0 %v9790
        %9814 = vmatpush.bf16.msra.mxu0 %v9789
        %9815 = vmatpush.bf16.msra.mxu0 %v9788
        %9816 = vmatmul.bf16.gmra.mxu0 %v9797
        %v9817 = vpop.f32.mrf.mxu0
        %v9818 = vadd.f32 %v9770, %v9817
        %v9819 = vpop.f32.mrf.mxu0
        %v9820 = vadd.f32 %v9770, %v9819
        %9821 = vmatmul.bf16.gmra.mxu0 %v9800
        %v9822 = vpop.f32.mrf.mxu0
        %v9823 = vadd.f32 %v9770, %v9822
        %v9824 = vpop.f32.mrf.mxu0
        %v9825 = vadd.f32 %v9770, %v9824
        %9826 = vmatmul.bf16.gmra.mxu0 %v9803
        %v9827 = vpop.f32.mrf.mxu0
        %v9828 = vadd.f32 %v9770, %v9827
        %v9829 = vpop.f32.mrf.mxu0
        %v9830 = vadd.f32 %v9770, %v9829
        %9831 = vmatmul.bf16.gmra.mxu0 %v9806
        %v9832 = vpop.f32.mrf.mxu0
        %v9833 = vadd.f32 %v9770, %v9832
        %v9834 = vpop.f32.mrf.mxu0
        %v9835 = vadd.f32 %v9770, %v9834
        %9836 = vdwg.mxu0
        %vm9837 = vcmask 39936
        %v9838 = vsel %vm9837, %v9818, -inf
        %9839 = vmax.xlane.f32.xlu0 %v9838
        %v9840 = vpop.xlane.xlu0 %9839
        %v9841 = vsel %vm9837, %v9820, -inf
        %9842 = vmax.xlane.f32.xlu0 %v9841
        %v9843 = vpop.xlane.xlu0 %9842
        %v9844 = vsel %vm9837, %v9823, -inf
        %9845 = vmax.xlane.f32.xlu0 %v9844
        %v9846 = vpop.xlane.xlu0 %9845
        %v9847 = vsel %vm9837, %v9825, -inf
        %9848 = vmax.xlane.f32.xlu0 %v9847
        %v9849 = vpop.xlane.xlu0 %9848
        %v9850 = vsel %vm9837, %v9828, -inf
        %9851 = vmax.xlane.f32.xlu0 %v9850
        %v9852 = vpop.xlane.xlu0 %9851
        %v9853 = vsel %vm9837, %v9830, -inf
        %9854 = vmax.xlane.f32.xlu0 %v9853
        %v9855 = vpop.xlane.xlu0 %9854
        %v9856 = vsel %vm9837, %v9833, -inf
        %9857 = vmax.xlane.f32.xlu0 %v9856
        %v9858 = vpop.xlane.xlu0 %9857
        %v9859 = vsel %vm9837, %v9835, -inf
        %9860 = vmax.xlane.f32.xlu0 %v9859
        %v9861 = vpop.xlane.xlu0 %9860
        %v9862 = vsub.f32 %v9818, %v9840
        %v9863 = vsub.f32 %v9820, %v9843
        %v9864 = vsub.f32 %v9823, %v9846
        %v9865 = vsub.f32 %v9825, %v9849
        %v9866 = vsub.f32 %v9828, %v9852
        %v9867 = vsub.f32 %v9830, %v9855
        %v9868 = vsub.f32 %v9833, %v9858
        %v9869 = vsub.f32 %v9835, %v9861
        %v9870 = vmul.f32 %v9862, 1.442695
        %v9871 = vpow.pop %v9870
        %v9872 = vmul.f32 %v9863, 1.442695
        %v9873 = vpow.pop %v9872
        %v9874 = vmul.f32 %v9864, 1.442695
        %v9875 = vpow.pop %v9874
        %v9876 = vmul.f32 %v9865, 1.442695
        %v9877 = vpow.pop %v9876
        %v9878 = vmul.f32 %v9866, 1.442695
        %v9879 = vpow.pop %v9878
        %v9880 = vmul.f32 %v9867, 1.442695
        %v9881 = vpow.pop %v9880
        %v9882 = vmul.f32 %v9868, 1.442695
        %v9883 = vpow.pop %v9882
        %v9884 = vmul.f32 %v9869, 1.442695
        %v9885 = vpow.pop %v9884
        %v9886 = vsel %vm9837, %v9871, 0.0
        %9887 = vadd.xlane.f32.xlu0 %v9886
        %v9888 = vpop.xlane.xlu0 %9887
        %v9889 = vsel %vm9837, %v9873, 0.0
        %9890 = vadd.xlane.f32.xlu0 %v9889
        %v9891 = vpop.xlane.xlu0 %9890
        %v9892 = vsel %vm9837, %v9875, 0.0
        %9893 = vadd.xlane.f32.xlu0 %v9892
        %v9894 = vpop.xlane.xlu0 %9893
        %v9895 = vsel %vm9837, %v9877, 0.0
        %9896 = vadd.xlane.f32.xlu0 %v9895
        %v9897 = vpop.xlane.xlu0 %9896
        %v9898 = vsel %vm9837, %v9879, 0.0
        %9899 = vadd.xlane.f32.xlu0 %v9898
        %v9900 = vpop.xlane.xlu0 %9899
        %v9901 = vsel %vm9837, %v9881, 0.0
        %9902 = vadd.xlane.f32.xlu0 %v9901
        %v9903 = vpop.xlane.xlu0 %9902
        %v9904 = vsel %vm9837, %v9883, 0.0
        %9905 = vadd.xlane.f32.xlu0 %v9904
        %v9906 = vpop.xlane.xlu0 %9905
        %v9907 = vsel %vm9837, %v9885, 0.0
        %9908 = vadd.xlane.f32.xlu0 %v9907
        %v9909 = vpop.xlane.xlu0 %9908
        %v9910 = vlog2.pop %v9888
        %v9911 = vmul.f32 %v9910, 0.6931472
        %v9912 = vlog2.pop %v9891
        %v9913 = vmul.f32 %v9912, 0.6931472
        %v9914 = vlog2.pop %v9894
        %v9915 = vmul.f32 %v9914, 0.6931472
        %v9916 = vlog2.pop %v9897
        %v9917 = vmul.f32 %v9916, 0.6931472
        %v9918 = vlog2.pop %v9900
        %v9919 = vmul.f32 %v9918, 0.6931472
        %v9920 = vlog2.pop %v9903
        %v9921 = vmul.f32 %v9920, 0.6931472
        %v9922 = vlog2.pop %v9906
        %v9923 = vmul.f32 %v9922, 0.6931472
        %v9924 = vlog2.pop %v9909
        %v9925 = vmul.f32 %v9924, 0.6931472
        %v9926 = vsub.f32 %v9862, %v9911
        %v9927 = vsub.f32 %v9863, %v9913
        %v9928 = vsub.f32 %v9864, %v9915
        %v9929 = vsub.f32 %v9865, %v9917
        %v9930 = vsub.f32 %v9866, %v9919
        %v9931 = vsub.f32 %v9867, %v9921
        %v9932 = vsub.f32 %v9868, %v9923
        %v9933 = vsub.f32 %v9869, %v9925
        %9934 = vst.msk [vmem:[%s1202] sm:$0xff] %vm9837, %v9926
        %9935 = vst.msk [vmem:[%s1202 + $0x8] sm:$0xff] %vm9837, %v9927
        %9936 = vst.msk [vmem:[%s1202 + $0x10] sm:$0xff] %vm9837, %v9928
        %9937 = vst.msk [vmem:[%s1202 + $0x18] sm:$0xff] %vm9837, %v9929
        %9938 = vst.msk [vmem:[%s1202 + $0x20] sm:$0xff] %vm9837, %v9930
        %9939 = vst.msk [vmem:[%s1202 + $0x28] sm:$0xff] %vm9837, %v9931
        %9940 = vst.msk [vmem:[%s1202 + $0x30] sm:$0xff] %vm9837, %v9932
        %9941 = vst.msk [vmem:[%s1202 + $0x38] sm:$0xff] %vm9837, %v9933
        %p9942 = scmp.lt.s32.totalorder %s51, 1
        %s9943 = scalar_select %p9942, %s51, 1
        %s9944 = smul.addr %s9943, 8
        %s9945 = smul.addr %s9944, 8
        %s9946 = scalar_lea.vmem %s28, %s9945
        // Predicated region
        $region221: #{pointnet_seg_forward.3} parent=131 // pred_check
          %p9947 = pneg %p667
        $region222: #{pointnet_seg_forward.3} parent=131 // pred_check_branch
          %9949 = sbr.rel (%p9947) target = $region224
        $region223: #{pointnet_seg_forward.3} parent=131 // pred_region
          _
        $region224: #{pointnet_seg_forward.3} parent=131 // pred_fallthru
          _
      $region132: #{pointnet_seg_forward.3} parent=5 // pred_fallthru
        _
      %p9950 = scmp.le.s32.totalorder 2, %s46
      // Predicated region
      $region225: #{pointnet_seg_forward.3} parent=5 // pred_check
        %p9951 = pneg %p9950
      $region226: #{pointnet_seg_forward.3} parent=5 // pred_check_branch
        %9953 = sbr.rel (%p9951) target = $region228
      $region227: #{pointnet_seg_forward.3} parent=5 // pred_region
        %s9954 = ssub.s32 %s46, 2
        // Predicated region
        $region229: #{pointnet_seg_forward.3} parent=227 // pred_check
          %p9955 = pneg %p673
        $region230: #{pointnet_seg_forward.3} parent=227 // pred_check_branch
          %9957 = sbr.rel (%p9955) target = $region232
        $region231: #{pointnet_seg_forward.3} parent=227 // pred_region
          %p9958 = scmp.lt.s32.totalorder %s52, 1
          %s9959 = scalar_select %p9958, %s52, 1
          %s9960 = smul.addr %s9959, 8
          %s9961 = smul.addr %s9960, 8
          %s9962 = scalar_lea.vmem %s28, %s9961
        $region232: #{pointnet_seg_forward.3} parent=227 // pred_fallthru
          _
      $region228: #{pointnet_seg_forward.3} parent=5 // pred_fallthru
        _
    $region6: #{pointnet_seg_forward.3} parent=1 // loop_footer
      %s50 = sadd.s32 1, %s46
    $region7: #{pointnet_seg_forward.3} parent=1 // loop_footer_branch
      %45 = sbr.rel target = $region3
    $region8: #{pointnet_seg_forward.3} parent=1 // loop_exit
      _
    %9963 = vsyncpa [#allocation3], 1
    %s9964 = scalar_lea.sflag [#allocation3], 1
    %9965 = vsyncpa %s9964, 1
    %9966 = vsyncpa [#allocation5], 1
    %9967 = vsyncpa [#allocation8], 1
    %9968 = vsyncpa [#allocation11], 1
    %9969 = vsyncpa [#allocation14], 1
    %9970 = vsyncpa [#allocation17], 1
    %9971 = vsyncpa [#allocation20], 1
    %9972 = vsyncpa [#allocation23], 1
    %9973 = vsyncpa [#allocation26], 1
    %9974 = vsyncpa [#allocation29], 1
    %9975 = vsyncpa [#allocation32], 1
    %9976 = vsyncpa [#allocation35], 1

</llo_original>
